<compile_context>
chip_gen: v7x
topology: tpu7x:2x2x1
jax: 0.10.0
libtpu: 0.0.40
codegen_flags: <defaults>
</compile_context>

<pallas_src>
import jax
import jax.numpy as jnp
import numpy as np
from jax import lax
from jax.experimental import pallas as pl
from jax.experimental.pallas import tpu as pltpu


def _round_up(x, m):
    return (x + m - 1) // m * m


def _make_kernel(H, W, C):
    C2 = C // 2
    HW = H * W
    # Left/right zero-halo widths of the flat (channels, pad+HW+pad) scratches.
    # Rounded to 128 so the interior stores are lane-aligned.
    P0 = _round_up(2 * W + 2, 128)   # conv0: 5x5, pad 2
    P1 = _round_up(9 * W + 9, 128)   # conv_spatial: 7x7, dilation 3, pad 9
    P2 = _round_up(3 * W + 3, 128)   # conv_squeeze: 7x7, pad 3
    pow2_w = (W & (W - 1)) == 0

    def kernel(x_ref, w0_ref, b0_ref, ws_ref, bs_ref,
               w1_ref, b1_ref, w2_ref, b2_ref,
               wsqa_ref, wsqm_ref, bsq_ref, wf_ref, bf_ref,
               out_ref, xflat, a1flat, aggflat):
        f32 = jnp.float32

        # ---- re-zero the halo bands every step (megacore-safe, no step-0 init);
        #      interiors are fully overwritten below. ---------------------------
        xflat[:, 0:P0] = jnp.zeros((C, P0), f32)
        xflat[:, P0 + HW:] = jnp.zeros((C, P0), f32)
        a1flat[:, 0:P1] = jnp.zeros((C, P1), f32)
        a1flat[:, P1 + HW:] = jnp.zeros((C, P1), f32)
        aggflat[:, 0:P2] = jnp.zeros((2, P2), f32)
        aggflat[:, P2 + HW:] = jnp.zeros((2, P2), f32)

        xflat[:, P0:P0 + HW] = x_ref[0]                        # (C, HW), lane-aligned

        # ---- column-validity masks, built once, shared by all three convs -----
        pix = lax.broadcasted_iota(jnp.int32, (1, HW), 1)
        wcol = (pix & (W - 1)) if pow2_w else (pix % W)
        dj_conv0 = [j - 2 for j in range(5)]
        dj_spat = [3 * j - 9 for j in range(7)]
        dj_sq = [j - 3 for j in range(7)]
        col_ok = {dj: (wcol >= -dj) & (wcol < W - dj)
                  for dj in sorted(set(dj_conv0 + dj_spat + dj_sq)) if dj != 0}

        # ---- hoisted weight loads (one vld each; tap slices stay in vregs) ----
        w0 = w0_ref[...]        # (C, 25)
        ws = ws_ref[...]        # (C, 49)
        wsqa = wsqa_ref[...]    # (2, 49) avg-channel taps
        wsqm = wsqm_ref[...]    # (2, 49) max-channel taps

        # ---- conv0: depthwise 5x5, pad 2 -- register accumulation -------------
        acc1 = None
        for j in range(5):
            dj = dj_conv0[j]
            pj = None
            for i in range(5):
                t = i * 5 + j
                s = P0 + (i - 2) * W + dj
                term = xflat[:, s:s + HW] * w0[:, t:t + 1]
                pj = term if pj is None else pj + term
            if dj != 0:
                pj = jnp.where(col_ok[dj], pj, 0.0)
            acc1 = pj if acc1 is None else acc1 + pj
        attn1 = acc1 + b0_ref[...]                             # (C, HW)
        a1flat[:, P1:P1 + HW] = attn1                          # lane-aligned store

        # ---- conv_spatial: depthwise 7x7, dilation 3, pad 9 --------------------
        acc2 = None
        for j in range(7):
            dj = dj_spat[j]
            pj = None
            for i in range(7):
                t = i * 7 + j
                s = P1 + (3 * i - 9) * W + dj
                term = a1flat[:, s:s + HW] * ws[:, t:t + 1]
                pj = term if pj is None else pj + term
            if dj != 0:
                pj = jnp.where(col_ok[dj], pj, 0.0)
            acc2 = pj if acc2 is None else acc2 + pj
        attn2 = acc2 + bs_ref[...]                             # (C, HW)

        # ---- conv1 / conv2: 1x1 convs on the MXU (HW fills the N axis).  Each
        # weight carries one extra row so the channel mean of cat(a1, a2) drops
        # straight out of the matmuls. ------------------------------------------
        y1 = jnp.dot(w1_ref[...], attn1, preferred_element_type=jnp.float32) + b1_ref[...]
        y2 = jnp.dot(w2_ref[...], attn2, preferred_element_type=jnp.float32) + b2_ref[...]
        a1 = y1[0:C2]
        a2 = y2[0:C2]
        avg = y1[C2:C2 + 1] + y2[C2:C2 + 1]                    # (1, HW)
        mx = jnp.maximum(jnp.max(a1, axis=0, keepdims=True),
                         jnp.max(a2, axis=0, keepdims=True))   # (1, HW)

        # ---- conv_squeeze: 2 -> 2 channels, 7x7, pad 3 (lane-dense 2-row slab) --
        aggflat[0:1, P2:P2 + HW] = avg
        aggflat[1:2, P2:P2 + HW] = mx
        presig = None
        for j in range(7):
            dj = dj_sq[j]
            pj = None
            for i in range(7):
                t = i * 7 + j
                s = P2 + (i - 3) * W + dj
                tap = aggflat[:, s:s + HW]                     # (2, HW)
                term = tap[0:1] * wsqa[:, t:t + 1] + tap[1:2] * wsqm[:, t:t + 1]
                pj = term if pj is None else pj + term
            if dj != 0:
                pj = jnp.where(col_ok[dj], pj, 0.0)
            presig = pj if presig is None else presig + pj
        sig = jax.nn.sigmoid(presig + bsq_ref[...])            # (2, HW)

        # ---- blend, final 1x1 conv dim//2 -> dim, residual multiply ------------
        blended = a1 * sig[0:1] + a2 * sig[1:2]                # (C2, HW)
        attn = (jnp.dot(wf_ref[...], blended, preferred_element_type=jnp.float32)
                + bf_ref[...])                                 # (C, HW)
        out_ref[0] = x_ref[0] * attn                           # lane-dense store

    return kernel, P0, P1, P2


def lsk_block(x_nchw, params):
    (w0, b0, ws, bs, w1, b1, w2, b2, wsq, bsq, wf, bf) = params
    B, C, H, W = x_nchw.shape
    C2 = C // 2
    HW = H * W
    f32 = jnp.float32

    x = x_nchw.reshape(B, C, HW).astype(f32)       # NCHW stays native; reshape is free

    w0_k = w0[:, 0].reshape(C, 25).astype(f32)     # tap t = i*5 + j
    ws_k = ws[:, 0].reshape(C, 49).astype(f32)     # tap t = i*7 + j
    b0_k = b0.reshape(C, 1).astype(f32)
    bs_k = bs.reshape(C, 1).astype(f32)

    # 1x1 convs with the channel-mean folded in as one extra output row each.
    w1_2d = w1[:, :, 0, 0].astype(f32)             # (C2, C)
    w2_2d = w2[:, :, 0, 0].astype(f32)
    w1_k = jnp.concatenate([w1_2d, jnp.sum(w1_2d, axis=0, keepdims=True) / C], axis=0)
    w2_k = jnp.concatenate([w2_2d, jnp.sum(w2_2d, axis=0, keepdims=True) / C], axis=0)
    b1_k = jnp.concatenate([b1, jnp.sum(b1, keepdims=True) / C]).reshape(C2 + 1, 1).astype(f32)
    b2_k = jnp.concatenate([b2, jnp.sum(b2, keepdims=True) / C]).reshape(C2 + 1, 1).astype(f32)

    wsq_a = wsq[:, 0].reshape(2, 49).astype(f32)   # avg-channel taps per output ch
    wsq_m = wsq[:, 1].reshape(2, 49).astype(f32)   # max-channel taps per output ch
    bsq_k = bsq.reshape(2, 1).astype(f32)
    wf_k = wf[:, :, 0, 0].astype(f32)              # (C, C2)
    bf_k = bf.reshape(C, 1).astype(f32)

    kernel, P0, P1, P2 = _make_kernel(H, W, C)

    weights = (w0_k, b0_k, ws_k, bs_k, w1_k, b1_k, w2_k, b2_k,
               wsq_a, wsq_m, bsq_k, wf_k, bf_k)

    def vspec(arr):
        shape = arr.shape
        return pl.BlockSpec(shape, lambda b: (0,) * len(shape))

    # VMEM budget derived from actual footprint (scratches + double-buffered
    # x/out blocks + weights), instead of a hardcoded limit.
    def pad8(n):
        return _round_up(n, 8)

    def pad128(n):
        return _round_up(n, 128)

    scratch_bytes = 4 * (pad8(C) * pad128(2 * P0 + HW)
                         + pad8(C) * pad128(2 * P1 + HW)
                         + pad8(2) * pad128(2 * P2 + HW))
    io_bytes = 2 * 2 * 4 * pad8(C) * pad128(HW)           # in + out, double-buffered
    wt_bytes = sum(int(np.prod(w.shape)) * 4 for w in weights)
    vmem_limit = int(min(100 * 2 ** 20,
                         max(16 * 2 ** 20,
                             2 * (scratch_bytes + io_bytes + 2 * wt_bytes))))

    out = pl.pallas_call(
        kernel,
        out_shape=jax.ShapeDtypeStruct((B, C, HW), f32),
        grid=(B,),
        in_specs=[pl.BlockSpec((1, C, HW), lambda b: (b, 0, 0))]
                 + [vspec(w) for w in weights],
        out_specs=pl.BlockSpec((1, C, HW), lambda b: (b, 0, 0)),
        scratch_shapes=[
            pltpu.VMEM((C, 2 * P0 + HW), f32),   # zero-halo flat input
            pltpu.VMEM((C, 2 * P1 + HW), f32),   # zero-halo flat attn1
            pltpu.VMEM((2, 2 * P2 + HW), f32),   # zero-halo flat avg/max slab
        ],
        compiler_params=pltpu.CompilerParams(
            # Halos are re-zeroed every step and steps are independent, so the
            # batch axis is megacore-safe (v7x dual-TC) as "parallel".
            dimension_semantics=("parallel",),
            vmem_limit_bytes=vmem_limit),
    )(x, *weights)

    return out.reshape(B, C, H, W)


# ---------------- pure-JAX reference (matches the PyTorch forward) ----------------
def _conv(x, w, b, pad, dil=1, groups=1):
    y = lax.conv_general_dilated(
        x, w, window_strides=(1, 1),
        padding=[(pad, pad), (pad, pad)],
        rhs_dilation=(dil, dil),
        dimension_numbers=("NCHW", "OIHW", "NCHW"),
        feature_group_count=groups)
    return y + b[None, :, None, None]


def lsk_reference(x, params):
    (w0, b0, ws, bs, w1, b1, w2, b2, wsq, bsq, wf, bf) = params
    dim = x.shape[1]
    attn1 = _conv(x, w0, b0, 2, groups=dim)
    attn2 = _conv(attn1, ws, bs, 9, dil=3, groups=dim)
    attn1 = _conv(attn1, w1, b1, 0)
    attn2 = _conv(attn2, w2, b2, 0)
    attn = jnp.concatenate([attn1, attn2], axis=1)
    avg = jnp.mean(attn, axis=1, keepdims=True)
    mx = jnp.max(attn, axis=1, keepdims=True)
    agg = jnp.concatenate([avg, mx], axis=1)
    sig = jax.nn.sigmoid(_conv(agg, wsq, bsq, 3))
    attn = attn1 * sig[:, 0:1] + attn2 * sig[:, 1:2]
    attn = _conv(attn, wf, bf, 0)
    return x * attn


if __name__ == "__main__":
    dim, B, H, W = 4, 2, 16, 16
    key = jax.random.PRNGKey(0)
    ks = jax.random.split(key, 13)

    def rnd(k, shape, scale=0.2):
        return (scale * jax.random.normal(k, shape)).astype(jnp.float32)

    params = (
        rnd(ks[0], (dim, 1, 5, 5)), rnd(ks[1], (dim,), 0.1),              # conv0
        rnd(ks[2], (dim, 1, 7, 7)), rnd(ks[3], (dim,), 0.1),              # conv_spatial
        rnd(ks[4], (dim // 2, dim, 1, 1)), rnd(ks[5], (dim // 2,), 0.1),  # conv1
        rnd(ks[6], (dim // 2, dim, 1, 1)), rnd(ks[7], (dim // 2,), 0.1),  # conv2
        rnd(ks[8], (2, 2, 7, 7)), rnd(ks[9], (2,), 0.1),                  # conv_squeeze
        rnd(ks[10], (dim, dim // 2, 1, 1)), rnd(ks[11], (dim,), 0.1),     # conv (final)
    )
    x = rnd(ks[12], (B, dim, H, W), 1.0)

    out = jax.block_until_ready(lsk_block(x, params))
    ref = jax.block_until_ready(lsk_reference(x, params))
    np.testing.assert_allclose(np.asarray(out), np.asarray(ref),
                               rtol=1e-4, atol=1e-4)
    print("KERNEL_OK")
</pallas_src>

<mosaic_0001>
module attributes {stable_mosaic.version = 11 : i64} {
  func.func @kernel(%arg0: i32, %arg1: memref<1x4x256xf32, #tpu.memory_space<vmem>>, %arg2: memref<4x25xf32, #tpu.memory_space<vmem>>, %arg3: memref<4x1xf32, #tpu.memory_space<vmem>>, %arg4: memref<4x49xf32, #tpu.memory_space<vmem>>, %arg5: memref<4x1xf32, #tpu.memory_space<vmem>>, %arg6: memref<3x4xf32, #tpu.memory_space<vmem>>, %arg7: memref<3x1xf32, #tpu.memory_space<vmem>>, %arg8: memref<3x4xf32, #tpu.memory_space<vmem>>, %arg9: memref<3x1xf32, #tpu.memory_space<vmem>>, %arg10: memref<2x49xf32, #tpu.memory_space<vmem>>, %arg11: memref<2x49xf32, #tpu.memory_space<vmem>>, %arg12: memref<2x1xf32, #tpu.memory_space<vmem>>, %arg13: memref<4x2xf32, #tpu.memory_space<vmem>>, %arg14: memref<4x1xf32, #tpu.memory_space<vmem>>, %arg15: memref<1x4x256xf32, #tpu.memory_space<vmem>>, %arg16: memref<4x512xf32, #tpu.memory_space<vmem>>, %arg17: memref<4x768xf32, #tpu.memory_space<vmem>>, %arg18: memref<2x512xf32, #tpu.memory_space<vmem>>) attributes {dimension_semantics = [#tpu.dimension_semantics<parallel>], iteration_bounds = array<i64: 2>, scalar_prefetch = 0 : i64, scratch_operands = 3 : i64, tpu.core_type = #tpu.core_type<tc>, window_params = [{transform_indices = @transform_0, window_bounds = array<i64: 1, 4, 256>}, {pipeline_mode = #tpu.pipeline_mode<synchronous>, transform_indices = @transform_1, window_bounds = array<i64: 4, 25>}, {pipeline_mode = #tpu.pipeline_mode<synchronous>, transform_indices = @transform_2, window_bounds = array<i64: 4, 1>}, {pipeline_mode = #tpu.pipeline_mode<synchronous>, transform_indices = @transform_3, window_bounds = array<i64: 4, 49>}, {pipeline_mode = #tpu.pipeline_mode<synchronous>, transform_indices = @transform_4, window_bounds = array<i64: 4, 1>}, {pipeline_mode = #tpu.pipeline_mode<synchronous>, transform_indices = @transform_5, window_bounds = array<i64: 3, 4>}, {pipeline_mode = #tpu.pipeline_mode<synchronous>, transform_indices = @transform_6, window_bounds = array<i64: 3, 1>}, {pipeline_mode = #tpu.pipeline_mode<synchronous>, transform_indices = @transform_7, window_bounds = array<i64: 3, 4>}, {pipeline_mode = #tpu.pipeline_mode<synchronous>, transform_indices = @transform_8, window_bounds = array<i64: 3, 1>}, {pipeline_mode = #tpu.pipeline_mode<synchronous>, transform_indices = @transform_9, window_bounds = array<i64: 2, 49>}, {pipeline_mode = #tpu.pipeline_mode<synchronous>, transform_indices = @transform_10, window_bounds = array<i64: 2, 49>}, {pipeline_mode = #tpu.pipeline_mode<synchronous>, transform_indices = @transform_11, window_bounds = array<i64: 2, 1>}, {pipeline_mode = #tpu.pipeline_mode<synchronous>, transform_indices = @transform_12, window_bounds = array<i64: 4, 2>}, {pipeline_mode = #tpu.pipeline_mode<synchronous>, transform_indices = @transform_13, window_bounds = array<i64: 4, 1>}, {transform_indices = @transform_14, window_bounds = array<i64: 1, 4, 256>}]} {
    %cst = arith.constant 0.000000e+00 : f32
    %0 = vector.broadcast %cst : f32 to vector<4x128xf32>
    %c0 = arith.constant 0 : index
    %c0_0 = arith.constant 0 : index
    %1 = vector.load %arg16[%c0, %c0_0] : memref<4x512xf32, #tpu.memory_space<vmem>>, vector<4x128xf32>
    tpu.vector_store %arg16[%c0, %c0_0], %0 {strides = array<i32>} : memref<4x512xf32, #tpu.memory_space<vmem>>, vector<4x128xf32>,
    %cst_1 = arith.constant 0.000000e+00 : f32
    %2 = vector.broadcast %cst_1 : f32 to vector<4x128xf32>
    %c0_2 = arith.constant 0 : index
    %c384 = arith.constant 384 : index
    %3 = vector.load %arg16[%c0_2, %c384] : memref<4x512xf32, #tpu.memory_space<vmem>>, vector<4x128xf32>
    tpu.vector_store %arg16[%c0_2, %c384], %2 {strides = array<i32>} : memref<4x512xf32, #tpu.memory_space<vmem>>, vector<4x128xf32>,
    %cst_3 = arith.constant 0.000000e+00 : f32
    %4 = vector.broadcast %cst_3 : f32 to vector<4x256xf32>
    %c0_4 = arith.constant 0 : index
    %c0_5 = arith.constant 0 : index
    %5 = vector.load %arg17[%c0_4, %c0_5] : memref<4x768xf32, #tpu.memory_space<vmem>>, vector<4x256xf32>
    tpu.vector_store %arg17[%c0_4, %c0_5], %4 {strides = array<i32>} : memref<4x768xf32, #tpu.memory_space<vmem>>, vector<4x256xf32>,
    %cst_6 = arith.constant 0.000000e+00 : f32
    %6 = vector.broadcast %cst_6 : f32 to vector<4x256xf32>
    %c0_7 = arith.constant 0 : index
    %c512 = arith.constant 512 : index
    %7 = vector.load %arg17[%c0_7, %c512] : memref<4x768xf32, #tpu.memory_space<vmem>>, vector<4x256xf32>
    tpu.vector_store %arg17[%c0_7, %c512], %6 {strides = array<i32>} : memref<4x768xf32, #tpu.memory_space<vmem>>, vector<4x256xf32>,
    %cst_8 = arith.constant 0.000000e+00 : f32
    %8 = vector.broadcast %cst_8 : f32 to vector<2x128xf32>
    %c0_9 = arith.constant 0 : index
    %c0_10 = arith.constant 0 : index
    %9 = vector.load %arg18[%c0_9, %c0_10] : memref<2x512xf32, #tpu.memory_space<vmem>>, vector<2x128xf32>
    tpu.vector_store %arg18[%c0_9, %c0_10], %8 {strides = array<i32>} : memref<2x512xf32, #tpu.memory_space<vmem>>, vector<2x128xf32>,
    %cst_11 = arith.constant 0.000000e+00 : f32
    %10 = vector.broadcast %cst_11 : f32 to vector<2x128xf32>
    %c0_12 = arith.constant 0 : index
    %c384_13 = arith.constant 384 : index
    %11 = vector.load %arg18[%c0_12, %c384_13] : memref<2x512xf32, #tpu.memory_space<vmem>>, vector<2x128xf32>
    tpu.vector_store %arg18[%c0_12, %c384_13], %10 {strides = array<i32>} : memref<2x512xf32, #tpu.memory_space<vmem>>, vector<2x128xf32>,
    %c0_14 = arith.constant 0 : index
    %c0_15 = arith.constant 0 : index
    %c0_16 = arith.constant 0 : index
    %12 = vector.load %arg1[%c0_14, %c0_15, %c0_16] : memref<1x4x256xf32, #tpu.memory_space<vmem>>, vector<1x4x256xf32>
    %13 = vector.shape_cast %12 : vector<1x4x256xf32> to vector<4x256xf32>
    %c0_17 = arith.constant 0 : index
    %c128 = arith.constant 128 : index
    %14 = vector.load %arg16[%c0_17, %c128] : memref<4x512xf32, #tpu.memory_space<vmem>>, vector<4x256xf32>
    tpu.vector_store %arg16[%c0_17, %c128], %13 {strides = array<i32>} : memref<4x512xf32, #tpu.memory_space<vmem>>, vector<4x256xf32>,
    %15 = tpu.iota {dimensions = array<i32: 1>} : vector<1x256xi32>
    %c15_i32 = arith.constant 15 : i32
    %16 = vector.broadcast %c15_i32 : i32 to vector<1x256xi32>
    %17 = arith.andi %15, %16 : vector<1x256xi32>
    %c9_i32 = arith.constant 9 : i32
    %18 = vector.broadcast %c9_i32 : i32 to vector<1x256xi32>
    %19 = arith.cmpi sge, %17, %18 : vector<1x256xi32>
    %c25_i32 = arith.constant 25 : i32
    %20 = vector.broadcast %c25_i32 : i32 to vector<1x256xi32>
    %21 = arith.cmpi slt, %17, %20 : vector<1x256xi32>
    %22 = arith.andi %19, %21 : vector<1x256xi1>
    %c6_i32 = arith.constant 6 : i32
    %23 = vector.broadcast %c6_i32 : i32 to vector<1x256xi32>
    %24 = arith.cmpi sge, %17, %23 : vector<1x256xi32>
    %c22_i32 = arith.constant 22 : i32
    %25 = vector.broadcast %c22_i32 : i32 to vector<1x256xi32>
    %26 = arith.cmpi slt, %17, %25 : vector<1x256xi32>
    %27 = arith.andi %24, %26 : vector<1x256xi1>
    %c3_i32 = arith.constant 3 : i32
    %28 = vector.broadcast %c3_i32 : i32 to vector<1x256xi32>
    %29 = arith.cmpi sge, %17, %28 : vector<1x256xi32>
    %c19_i32 = arith.constant 19 : i32
    %30 = vector.broadcast %c19_i32 : i32 to vector<1x256xi32>
    %31 = arith.cmpi slt, %17, %30 : vector<1x256xi32>
    %32 = arith.andi %29, %31 : vector<1x256xi1>
    %c2_i32 = arith.constant 2 : i32
    %33 = vector.broadcast %c2_i32 : i32 to vector<1x256xi32>
    %34 = arith.cmpi sge, %17, %33 : vector<1x256xi32>
    %c18_i32 = arith.constant 18 : i32
    %35 = vector.broadcast %c18_i32 : i32 to vector<1x256xi32>
    %36 = arith.cmpi slt, %17, %35 : vector<1x256xi32>
    %37 = arith.andi %34, %36 : vector<1x256xi1>
    %c1_i32 = arith.constant 1 : i32
    %38 = vector.broadcast %c1_i32 : i32 to vector<1x256xi32>
    %39 = arith.cmpi sge, %17, %38 : vector<1x256xi32>
    %c17_i32 = arith.constant 17 : i32
    %40 = vector.broadcast %c17_i32 : i32 to vector<1x256xi32>
    %41 = arith.cmpi slt, %17, %40 : vector<1x256xi32>
    %42 = arith.andi %39, %41 : vector<1x256xi1>
    %c-1_i32 = arith.constant -1 : i32
    %43 = vector.broadcast %c-1_i32 : i32 to vector<1x256xi32>
    %44 = arith.cmpi sge, %17, %43 : vector<1x256xi32>
    %c15_i32_18 = arith.constant 15 : i32
    %45 = vector.broadcast %c15_i32_18 : i32 to vector<1x256xi32>
    %46 = arith.cmpi slt, %17, %45 : vector<1x256xi32>
    %47 = arith.andi %44, %46 : vector<1x256xi1>
    %c-2_i32 = arith.constant -2 : i32
    %48 = vector.broadcast %c-2_i32 : i32 to vector<1x256xi32>
    %49 = arith.cmpi sge, %17, %48 : vector<1x256xi32>
    %c14_i32 = arith.constant 14 : i32
    %50 = vector.broadcast %c14_i32 : i32 to vector<1x256xi32>
    %51 = arith.cmpi slt, %17, %50 : vector<1x256xi32>
    %52 = arith.andi %49, %51 : vector<1x256xi1>
    %c-3_i32 = arith.constant -3 : i32
    %53 = vector.broadcast %c-3_i32 : i32 to vector<1x256xi32>
    %54 = arith.cmpi sge, %17, %53 : vector<1x256xi32>
    %c13_i32 = arith.constant 13 : i32
    %55 = vector.broadcast %c13_i32 : i32 to vector<1x256xi32>
    %56 = arith.cmpi slt, %17, %55 : vector<1x256xi32>
    %57 = arith.andi %54, %56 : vector<1x256xi1>
    %c-6_i32 = arith.constant -6 : i32
    %58 = vector.broadcast %c-6_i32 : i32 to vector<1x256xi32>
    %59 = arith.cmpi sge, %17, %58 : vector<1x256xi32>
    %c10_i32 = arith.constant 10 : i32
    %60 = vector.broadcast %c10_i32 : i32 to vector<1x256xi32>
    %61 = arith.cmpi slt, %17, %60 : vector<1x256xi32>
    %62 = arith.andi %59, %61 : vector<1x256xi1>
    %c-9_i32 = arith.constant -9 : i32
    %63 = vector.broadcast %c-9_i32 : i32 to vector<1x256xi32>
    %64 = arith.cmpi sge, %17, %63 : vector<1x256xi32>
    %c7_i32 = arith.constant 7 : i32
    %65 = vector.broadcast %c7_i32 : i32 to vector<1x256xi32>
    %66 = arith.cmpi slt, %17, %65 : vector<1x256xi32>
    %67 = arith.andi %64, %66 : vector<1x256xi1>
    %c0_19 = arith.constant 0 : index
    %c0_20 = arith.constant 0 : index
    %68 = vector.load %arg2[%c0_19, %c0_20] : memref<4x25xf32, #tpu.memory_space<vmem>>, vector<4x25xf32>
    %c0_21 = arith.constant 0 : index
    %c0_22 = arith.constant 0 : index
    %69 = vector.load %arg4[%c0_21, %c0_22] : memref<4x49xf32, #tpu.memory_space<vmem>>, vector<4x49xf32>
    %c0_23 = arith.constant 0 : index
    %c0_24 = arith.constant 0 : index
    %70 = vector.load %arg10[%c0_23, %c0_24] : memref<2x49xf32, #tpu.memory_space<vmem>>, vector<2x49xf32>
    %c0_25 = arith.constant 0 : index
    %c0_26 = arith.constant 0 : index
    %71 = vector.load %arg11[%c0_25, %c0_26] : memref<2x49xf32, #tpu.memory_space<vmem>>, vector<2x49xf32>
    %c0_27 = arith.constant 0 : index
    %c94 = arith.constant 94 : index
    %72 = vector.load %arg16[%c0_27, %c94] : memref<4x512xf32, #tpu.memory_space<vmem>>, vector<4x256xf32>
    %73 = vector.extract_strided_slice %68 {offsets = [0, 0], sizes = [4, 1], strides = [1, 1]} : vector<4x25xf32> to vector<4x1xf32>
    %74 = vector.broadcast %73 : vector<4x1xf32> to vector<4x256xf32>
    %75 = arith.mulf %72, %74 : vector<4x256xf32>
    %c0_28 = arith.constant 0 : index
    %c110 = arith.constant 110 : index
    %76 = vector.load %arg16[%c0_28, %c110] : memref<4x512xf32, #tpu.memory_space<vmem>>, vector<4x256xf32>
    %77 = vector.extract_strided_slice %68 {offsets = [0, 5], sizes = [4, 1], strides = [1, 1]} : vector<4x25xf32> to vector<4x1xf32>
    %78 = vector.broadcast %77 : vector<4x1xf32> to vector<4x256xf32>
    %79 = arith.mulf %76, %78 : vector<4x256xf32>
    %80 = arith.addf %75, %79 : vector<4x256xf32>
    %c0_29 = arith.constant 0 : index
    %c126 = arith.constant 126 : index
    %81 = vector.load %arg16[%c0_29, %c126] : memref<4x512xf32, #tpu.memory_space<vmem>>, vector<4x256xf32>
    %82 = vector.extract_strided_slice %68 {offsets = [0, 10], sizes = [4, 1], strides = [1, 1]} : vector<4x25xf32> to vector<4x1xf32>
    %83 = vector.broadcast %82 : vector<4x1xf32> to vector<4x256xf32>
    %84 = arith.mulf %81, %83 : vector<4x256xf32>
    %85 = arith.addf %80, %84 : vector<4x256xf32>
    %c0_30 = arith.constant 0 : index
    %c142 = arith.constant 142 : index
    %86 = vector.load %arg16[%c0_30, %c142] : memref<4x512xf32, #tpu.memory_space<vmem>>, vector<4x256xf32>
    %87 = vector.extract_strided_slice %68 {offsets = [0, 15], sizes = [4, 1], strides = [1, 1]} : vector<4x25xf32> to vector<4x1xf32>
    %88 = vector.broadcast %87 : vector<4x1xf32> to vector<4x256xf32>
    %89 = arith.mulf %86, %88 : vector<4x256xf32>
    %90 = arith.addf %85, %89 : vector<4x256xf32>
    %c0_31 = arith.constant 0 : index
    %c158 = arith.constant 158 : index
    %91 = vector.load %arg16[%c0_31, %c158] : memref<4x512xf32, #tpu.memory_space<vmem>>, vector<4x256xf32>
    %92 = vector.extract_strided_slice %68 {offsets = [0, 20], sizes = [4, 1], strides = [1, 1]} : vector<4x25xf32> to vector<4x1xf32>
    %93 = vector.broadcast %92 : vector<4x1xf32> to vector<4x256xf32>
    %94 = arith.mulf %91, %93 : vector<4x256xf32>
    %95 = arith.addf %90, %94 : vector<4x256xf32>
    %cst_32 = arith.constant 0.000000e+00 : f32
    %96 = vector.shape_cast %37 : vector<1x256xi1> to vector<1x256xi1>
    %97 = vector.broadcast %96 : vector<1x256xi1> to vector<4x256xi1>
    %98 = vector.broadcast %cst_32 : f32 to vector<4x256xf32>
    %99 = arith.select %97, %95, %98 : vector<4x256xi1>, vector<4x256xf32>
    %c0_33 = arith.constant 0 : index
    %c95 = arith.constant 95 : index
    %100 = vector.load %arg16[%c0_33, %c95] : memref<4x512xf32, #tpu.memory_space<vmem>>, vector<4x256xf32>
    %101 = vector.extract_strided_slice %68 {offsets = [0, 1], sizes = [4, 1], strides = [1, 1]} : vector<4x25xf32> to vector<4x1xf32>
    %102 = vector.broadcast %101 : vector<4x1xf32> to vector<4x256xf32>
    %103 = arith.mulf %100, %102 : vector<4x256xf32>
    %c0_34 = arith.constant 0 : index
    %c111 = arith.constant 111 : index
    %104 = vector.load %arg16[%c0_34, %c111] : memref<4x512xf32, #tpu.memory_space<vmem>>, vector<4x256xf32>
    %105 = vector.extract_strided_slice %68 {offsets = [0, 6], sizes = [4, 1], strides = [1, 1]} : vector<4x25xf32> to vector<4x1xf32>
    %106 = vector.broadcast %105 : vector<4x1xf32> to vector<4x256xf32>
    %107 = arith.mulf %104, %106 : vector<4x256xf32>
    %108 = arith.addf %103, %107 : vector<4x256xf32>
    %c0_35 = arith.constant 0 : index
    %c127 = arith.constant 127 : index
    %109 = vector.load %arg16[%c0_35, %c127] : memref<4x512xf32, #tpu.memory_space<vmem>>, vector<4x256xf32>
    %110 = vector.extract_strided_slice %68 {offsets = [0, 11], sizes = [4, 1], strides = [1, 1]} : vector<4x25xf32> to vector<4x1xf32>
    %111 = vector.broadcast %110 : vector<4x1xf32> to vector<4x256xf32>
    %112 = arith.mulf %109, %111 : vector<4x256xf32>
    %113 = arith.addf %108, %112 : vector<4x256xf32>
    %c0_36 = arith.constant 0 : index
    %c143 = arith.constant 143 : index
    %114 = vector.load %arg16[%c0_36, %c143] : memref<4x512xf32, #tpu.memory_space<vmem>>, vector<4x256xf32>
    %115 = vector.extract_strided_slice %68 {offsets = [0, 16], sizes = [4, 1], strides = [1, 1]} : vector<4x25xf32> to vector<4x1xf32>
    %116 = vector.broadcast %115 : vector<4x1xf32> to vector<4x256xf32>
    %117 = arith.mulf %114, %116 : vector<4x256xf32>
    %118 = arith.addf %113, %117 : vector<4x256xf32>
    %c0_37 = arith.constant 0 : index
    %c159 = arith.constant 159 : index
    %119 = vector.load %arg16[%c0_37, %c159] : memref<4x512xf32, #tpu.memory_space<vmem>>, vector<4x256xf32>
    %120 = vector.extract_strided_slice %68 {offsets = [0, 21], sizes = [4, 1], strides = [1, 1]} : vector<4x25xf32> to vector<4x1xf32>
    %121 = vector.broadcast %120 : vector<4x1xf32> to vector<4x256xf32>
    %122 = arith.mulf %119, %121 : vector<4x256xf32>
    %123 = arith.addf %118, %122 : vector<4x256xf32>
    %cst_38 = arith.constant 0.000000e+00 : f32
    %124 = vector.shape_cast %42 : vector<1x256xi1> to vector<1x256xi1>
    %125 = vector.broadcast %124 : vector<1x256xi1> to vector<4x256xi1>
    %126 = vector.broadcast %cst_38 : f32 to vector<4x256xf32>
    %127 = arith.select %125, %123, %126 : vector<4x256xi1>, vector<4x256xf32>
    %128 = arith.addf %99, %127 : vector<4x256xf32>
    %c0_39 = arith.constant 0 : index
    %c96 = arith.constant 96 : index
    %129 = vector.load %arg16[%c0_39, %c96] : memref<4x512xf32, #tpu.memory_space<vmem>>, vector<4x256xf32>
    %130 = vector.extract_strided_slice %68 {offsets = [0, 2], sizes = [4, 1], strides = [1, 1]} : vector<4x25xf32> to vector<4x1xf32>
    %131 = vector.broadcast %130 : vector<4x1xf32> to vector<4x256xf32>
    %132 = arith.mulf %129, %131 : vector<4x256xf32>
    %c0_40 = arith.constant 0 : index
    %c112 = arith.constant 112 : index
    %133 = vector.load %arg16[%c0_40, %c112] : memref<4x512xf32, #tpu.memory_space<vmem>>, vector<4x256xf32>
    %134 = vector.extract_strided_slice %68 {offsets = [0, 7], sizes = [4, 1], strides = [1, 1]} : vector<4x25xf32> to vector<4x1xf32>
    %135 = vector.broadcast %134 : vector<4x1xf32> to vector<4x256xf32>
    %136 = arith.mulf %133, %135 : vector<4x256xf32>
    %137 = arith.addf %132, %136 : vector<4x256xf32>
    %c0_41 = arith.constant 0 : index
    %c128_42 = arith.constant 128 : index
    %138 = vector.load %arg16[%c0_41, %c128_42] : memref<4x512xf32, #tpu.memory_space<vmem>>, vector<4x256xf32>
    %139 = vector.extract_strided_slice %68 {offsets = [0, 12], sizes = [4, 1], strides = [1, 1]} : vector<4x25xf32> to vector<4x1xf32>
    %140 = vector.broadcast %139 : vector<4x1xf32> to vector<4x256xf32>
    %141 = arith.mulf %138, %140 : vector<4x256xf32>
    %142 = arith.addf %137, %141 : vector<4x256xf32>
    %c0_43 = arith.constant 0 : index
    %c144 = arith.constant 144 : index
    %143 = vector.load %arg16[%c0_43, %c144] : memref<4x512xf32, #tpu.memory_space<vmem>>, vector<4x256xf32>
    %144 = vector.extract_strided_slice %68 {offsets = [0, 17], sizes = [4, 1], strides = [1, 1]} : vector<4x25xf32> to vector<4x1xf32>
    %145 = vector.broadcast %144 : vector<4x1xf32> to vector<4x256xf32>
    %146 = arith.mulf %143, %145 : vector<4x256xf32>
    %147 = arith.addf %142, %146 : vector<4x256xf32>
    %c0_44 = arith.constant 0 : index
    %c160 = arith.constant 160 : index
    %148 = vector.load %arg16[%c0_44, %c160] : memref<4x512xf32, #tpu.memory_space<vmem>>, vector<4x256xf32>
    %149 = vector.extract_strided_slice %68 {offsets = [0, 22], sizes = [4, 1], strides = [1, 1]} : vector<4x25xf32> to vector<4x1xf32>
    %150 = vector.broadcast %149 : vector<4x1xf32> to vector<4x256xf32>
    %151 = arith.mulf %148, %150 : vector<4x256xf32>
    %152 = arith.addf %147, %151 : vector<4x256xf32>
    %153 = arith.addf %128, %152 : vector<4x256xf32>
    %c0_45 = arith.constant 0 : index
    %c97 = arith.constant 97 : index
    %154 = vector.load %arg16[%c0_45, %c97] : memref<4x512xf32, #tpu.memory_space<vmem>>, vector<4x256xf32>
    %155 = vector.extract_strided_slice %68 {offsets = [0, 3], sizes = [4, 1], strides = [1, 1]} : vector<4x25xf32> to vector<4x1xf32>
    %156 = vector.broadcast %155 : vector<4x1xf32> to vector<4x256xf32>
    %157 = arith.mulf %154, %156 : vector<4x256xf32>
    %c0_46 = arith.constant 0 : index
    %c113 = arith.constant 113 : index
    %158 = vector.load %arg16[%c0_46, %c113] : memref<4x512xf32, #tpu.memory_space<vmem>>, vector<4x256xf32>
    %159 = vector.extract_strided_slice %68 {offsets = [0, 8], sizes = [4, 1], strides = [1, 1]} : vector<4x25xf32> to vector<4x1xf32>
    %160 = vector.broadcast %159 : vector<4x1xf32> to vector<4x256xf32>
    %161 = arith.mulf %158, %160 : vector<4x256xf32>
    %162 = arith.addf %157, %161 : vector<4x256xf32>
    %c0_47 = arith.constant 0 : index
    %c129 = arith.constant 129 : index
    %163 = vector.load %arg16[%c0_47, %c129] : memref<4x512xf32, #tpu.memory_space<vmem>>, vector<4x256xf32>
    %164 = vector.extract_strided_slice %68 {offsets = [0, 13], sizes = [4, 1], strides = [1, 1]} : vector<4x25xf32> to vector<4x1xf32>
    %165 = vector.broadcast %164 : vector<4x1xf32> to vector<4x256xf32>
    %166 = arith.mulf %163, %165 : vector<4x256xf32>
    %167 = arith.addf %162, %166 : vector<4x256xf32>
    %c0_48 = arith.constant 0 : index
    %c145 = arith.constant 145 : index
    %168 = vector.load %arg16[%c0_48, %c145] : memref<4x512xf32, #tpu.memory_space<vmem>>, vector<4x256xf32>
    %169 = vector.extract_strided_slice %68 {offsets = [0, 18], sizes = [4, 1], strides = [1, 1]} : vector<4x25xf32> to vector<4x1xf32>
    %170 = vector.broadcast %169 : vector<4x1xf32> to vector<4x256xf32>
    %171 = arith.mulf %168, %170 : vector<4x256xf32>
    %172 = arith.addf %167, %171 : vector<4x256xf32>
    %c0_49 = arith.constant 0 : index
    %c161 = arith.constant 161 : index
    %173 = vector.load %arg16[%c0_49, %c161] : memref<4x512xf32, #tpu.memory_space<vmem>>, vector<4x256xf32>
    %174 = vector.extract_strided_slice %68 {offsets = [0, 23], sizes = [4, 1], strides = [1, 1]} : vector<4x25xf32> to vector<4x1xf32>
    %175 = vector.broadcast %174 : vector<4x1xf32> to vector<4x256xf32>
    %176 = arith.mulf %173, %175 : vector<4x256xf32>
    %177 = arith.addf %172, %176 : vector<4x256xf32>
    %cst_50 = arith.constant 0.000000e+00 : f32
    %178 = vector.shape_cast %47 : vector<1x256xi1> to vector<1x256xi1>
    %179 = vector.broadcast %178 : vector<1x256xi1> to vector<4x256xi1>
    %180 = vector.broadcast %cst_50 : f32 to vector<4x256xf32>
    %181 = arith.select %179, %177, %180 : vector<4x256xi1>, vector<4x256xf32>
    %182 = arith.addf %153, %181 : vector<4x256xf32>
    %c0_51 = arith.constant 0 : index
    %c98 = arith.constant 98 : index
    %183 = vector.load %arg16[%c0_51, %c98] : memref<4x512xf32, #tpu.memory_space<vmem>>, vector<4x256xf32>
    %184 = vector.extract_strided_slice %68 {offsets = [0, 4], sizes = [4, 1], strides = [1, 1]} : vector<4x25xf32> to vector<4x1xf32>
    %185 = vector.broadcast %184 : vector<4x1xf32> to vector<4x256xf32>
    %186 = arith.mulf %183, %185 : vector<4x256xf32>
    %c0_52 = arith.constant 0 : index
    %c114 = arith.constant 114 : index
    %187 = vector.load %arg16[%c0_52, %c114] : memref<4x512xf32, #tpu.memory_space<vmem>>, vector<4x256xf32>
    %188 = vector.extract_strided_slice %68 {offsets = [0, 9], sizes = [4, 1], strides = [1, 1]} : vector<4x25xf32> to vector<4x1xf32>
    %189 = vector.broadcast %188 : vector<4x1xf32> to vector<4x256xf32>
    %190 = arith.mulf %187, %189 : vector<4x256xf32>
    %191 = arith.addf %186, %190 : vector<4x256xf32>
    %c0_53 = arith.constant 0 : index
    %c130 = arith.constant 130 : index
    %192 = vector.load %arg16[%c0_53, %c130] : memref<4x512xf32, #tpu.memory_space<vmem>>, vector<4x256xf32>
    %193 = vector.extract_strided_slice %68 {offsets = [0, 14], sizes = [4, 1], strides = [1, 1]} : vector<4x25xf32> to vector<4x1xf32>
    %194 = vector.broadcast %193 : vector<4x1xf32> to vector<4x256xf32>
    %195 = arith.mulf %192, %194 : vector<4x256xf32>
    %196 = arith.addf %191, %195 : vector<4x256xf32>
    %c0_54 = arith.constant 0 : index
    %c146 = arith.constant 146 : index
    %197 = vector.load %arg16[%c0_54, %c146] : memref<4x512xf32, #tpu.memory_space<vmem>>, vector<4x256xf32>
    %198 = vector.extract_strided_slice %68 {offsets = [0, 19], sizes = [4, 1], strides = [1, 1]} : vector<4x25xf32> to vector<4x1xf32>
    %199 = vector.broadcast %198 : vector<4x1xf32> to vector<4x256xf32>
    %200 = arith.mulf %197, %199 : vector<4x256xf32>
    %201 = arith.addf %196, %200 : vector<4x256xf32>
    %c0_55 = arith.constant 0 : index
    %c162 = arith.constant 162 : index
    %202 = vector.load %arg16[%c0_55, %c162] : memref<4x512xf32, #tpu.memory_space<vmem>>, vector<4x256xf32>
    %203 = vector.extract_strided_slice %68 {offsets = [0, 24], sizes = [4, 1], strides = [1, 1]} : vector<4x25xf32> to vector<4x1xf32>
    %204 = vector.broadcast %203 : vector<4x1xf32> to vector<4x256xf32>
    %205 = arith.mulf %202, %204 : vector<4x256xf32>
    %206 = arith.addf %201, %205 : vector<4x256xf32>
    %cst_56 = arith.constant 0.000000e+00 : f32
    %207 = vector.shape_cast %52 : vector<1x256xi1> to vector<1x256xi1>
    %208 = vector.broadcast %207 : vector<1x256xi1> to vector<4x256xi1>
    %209 = vector.broadcast %cst_56 : f32 to vector<4x256xf32>
    %210 = arith.select %208, %206, %209 : vector<4x256xi1>, vector<4x256xf32>
    %211 = arith.addf %182, %210 : vector<4x256xf32>
    %c0_57 = arith.constant 0 : index
    %c0_58 = arith.constant 0 : index
    %212 = vector.load %arg3[%c0_57, %c0_58] : memref<4x1xf32, #tpu.memory_space<vmem>>, vector<4x1xf32>
    %213 = vector.broadcast %212 : vector<4x1xf32> to vector<4x256xf32>
    %214 = arith.addf %211, %213 : vector<4x256xf32>
    %c0_59 = arith.constant 0 : index
    %c256 = arith.constant 256 : index
    %215 = vector.load %arg17[%c0_59, %c256] : memref<4x768xf32, #tpu.memory_space<vmem>>, vector<4x256xf32>
    tpu.vector_store %arg17[%c0_59, %c256], %214 {strides = array<i32>} : memref<4x768xf32, #tpu.memory_space<vmem>>, vector<4x256xf32>,
    %c0_60 = arith.constant 0 : index
    %c103 = arith.constant 103 : index
    %216 = vector.load %arg17[%c0_60, %c103] : memref<4x768xf32, #tpu.memory_space<vmem>>, vector<4x256xf32>
    %217 = vector.extract_strided_slice %69 {offsets = [0, 0], sizes = [4, 1], strides = [1, 1]} : vector<4x49xf32> to vector<4x1xf32>
    %218 = vector.broadcast %217 : vector<4x1xf32> to vector<4x256xf32>
    %219 = arith.mulf %216, %218 : vector<4x256xf32>
    %c0_61 = arith.constant 0 : index
    %c151 = arith.constant 151 : index
    %220 = vector.load %arg17[%c0_61, %c151] : memref<4x768xf32, #tpu.memory_space<vmem>>, vector<4x256xf32>
    %221 = vector.extract_strided_slice %69 {offsets = [0, 7], sizes = [4, 1], strides = [1, 1]} : vector<4x49xf32> to vector<4x1xf32>
    %222 = vector.broadcast %221 : vector<4x1xf32> to vector<4x256xf32>
    %223 = arith.mulf %220, %222 : vector<4x256xf32>
    %224 = arith.addf %219, %223 : vector<4x256xf32>
    %c0_62 = arith.constant 0 : index
    %c199 = arith.constant 199 : index
    %225 = vector.load %arg17[%c0_62, %c199] : memref<4x768xf32, #tpu.memory_space<vmem>>, vector<4x256xf32>
    %226 = vector.extract_strided_slice %69 {offsets = [0, 14], sizes = [4, 1], strides = [1, 1]} : vector<4x49xf32> to vector<4x1xf32>
    %227 = vector.broadcast %226 : vector<4x1xf32> to vector<4x256xf32>
    %228 = arith.mulf %225, %227 : vector<4x256xf32>
    %229 = arith.addf %224, %228 : vector<4x256xf32>
    %c0_63 = arith.constant 0 : index
    %c247 = arith.constant 247 : index
    %230 = vector.load %arg17[%c0_63, %c247] : memref<4x768xf32, #tpu.memory_space<vmem>>, vector<4x256xf32>
    %231 = vector.extract_strided_slice %69 {offsets = [0, 21], sizes = [4, 1], strides = [1, 1]} : vector<4x49xf32> to vector<4x1xf32>
    %232 = vector.broadcast %231 : vector<4x1xf32> to vector<4x256xf32>
    %233 = arith.mulf %230, %232 : vector<4x256xf32>
    %234 = arith.addf %229, %233 : vector<4x256xf32>
    %c0_64 = arith.constant 0 : index
    %c295 = arith.constant 295 : index
    %235 = vector.load %arg17[%c0_64, %c295] : memref<4x768xf32, #tpu.memory_space<vmem>>, vector<4x256xf32>
    %236 = vector.extract_strided_slice %69 {offsets = [0, 28], sizes = [4, 1], strides = [1, 1]} : vector<4x49xf32> to vector<4x1xf32>
    %237 = vector.broadcast %236 : vector<4x1xf32> to vector<4x256xf32>
    %238 = arith.mulf %235, %237 : vector<4x256xf32>
    %239 = arith.addf %234, %238 : vector<4x256xf32>
    %c0_65 = arith.constant 0 : index
    %c343 = arith.constant 343 : index
    %240 = vector.load %arg17[%c0_65, %c343] : memref<4x768xf32, #tpu.memory_space<vmem>>, vector<4x256xf32>
    %241 = vector.extract_strided_slice %69 {offsets = [0, 35], sizes = [4, 1], strides = [1, 1]} : vector<4x49xf32> to vector<4x1xf32>
    %242 = vector.broadcast %241 : vector<4x1xf32> to vector<4x256xf32>
    %243 = arith.mulf %240, %242 : vector<4x256xf32>
    %244 = arith.addf %239, %243 : vector<4x256xf32>
    %c0_66 = arith.constant 0 : index
    %c391 = arith.constant 391 : index
    %245 = vector.load %arg17[%c0_66, %c391] : memref<4x768xf32, #tpu.memory_space<vmem>>, vector<4x256xf32>
    %246 = vector.extract_strided_slice %69 {offsets = [0, 42], sizes = [4, 1], strides = [1, 1]} : vector<4x49xf32> to vector<4x1xf32>
    %247 = vector.broadcast %246 : vector<4x1xf32> to vector<4x256xf32>
    %248 = arith.mulf %245, %247 : vector<4x256xf32>
    %249 = arith.addf %244, %248 : vector<4x256xf32>
    %cst_67 = arith.constant 0.000000e+00 : f32
    %250 = vector.shape_cast %22 : vector<1x256xi1> to vector<1x256xi1>
    %251 = vector.broadcast %250 : vector<1x256xi1> to vector<4x256xi1>
    %252 = vector.broadcast %cst_67 : f32 to vector<4x256xf32>
    %253 = arith.select %251, %249, %252 : vector<4x256xi1>, vector<4x256xf32>
    %c0_68 = arith.constant 0 : index
    %c106 = arith.constant 106 : index
    %254 = vector.load %arg17[%c0_68, %c106] : memref<4x768xf32, #tpu.memory_space<vmem>>, vector<4x256xf32>
    %255 = vector.extract_strided_slice %69 {offsets = [0, 1], sizes = [4, 1], strides = [1, 1]} : vector<4x49xf32> to vector<4x1xf32>
    %256 = vector.broadcast %255 : vector<4x1xf32> to vector<4x256xf32>
    %257 = arith.mulf %254, %256 : vector<4x256xf32>
    %c0_69 = arith.constant 0 : index
    %c154 = arith.constant 154 : index
    %258 = vector.load %arg17[%c0_69, %c154] : memref<4x768xf32, #tpu.memory_space<vmem>>, vector<4x256xf32>
    %259 = vector.extract_strided_slice %69 {offsets = [0, 8], sizes = [4, 1], strides = [1, 1]} : vector<4x49xf32> to vector<4x1xf32>
    %260 = vector.broadcast %259 : vector<4x1xf32> to vector<4x256xf32>
    %261 = arith.mulf %258, %260 : vector<4x256xf32>
    %262 = arith.addf %257, %261 : vector<4x256xf32>
    %c0_70 = arith.constant 0 : index
    %c202 = arith.constant 202 : index
    %263 = vector.load %arg17[%c0_70, %c202] : memref<4x768xf32, #tpu.memory_space<vmem>>, vector<4x256xf32>
    %264 = vector.extract_strided_slice %69 {offsets = [0, 15], sizes = [4, 1], strides = [1, 1]} : vector<4x49xf32> to vector<4x1xf32>
    %265 = vector.broadcast %264 : vector<4x1xf32> to vector<4x256xf32>
    %266 = arith.mulf %263, %265 : vector<4x256xf32>
    %267 = arith.addf %262, %266 : vector<4x256xf32>
    %c0_71 = arith.constant 0 : index
    %c250 = arith.constant 250 : index
    %268 = vector.load %arg17[%c0_71, %c250] : memref<4x768xf32, #tpu.memory_space<vmem>>, vector<4x256xf32>
    %269 = vector.extract_strided_slice %69 {offsets = [0, 22], sizes = [4, 1], strides = [1, 1]} : vector<4x49xf32> to vector<4x1xf32>
    %270 = vector.broadcast %269 : vector<4x1xf32> to vector<4x256xf32>
    %271 = arith.mulf %268, %270 : vector<4x256xf32>
    %272 = arith.addf %267, %271 : vector<4x256xf32>
    %c0_72 = arith.constant 0 : index
    %c298 = arith.constant 298 : index
    %273 = vector.load %arg17[%c0_72, %c298] : memref<4x768xf32, #tpu.memory_space<vmem>>, vector<4x256xf32>
    %274 = vector.extract_strided_slice %69 {offsets = [0, 29], sizes = [4, 1], strides = [1, 1]} : vector<4x49xf32> to vector<4x1xf32>
    %275 = vector.broadcast %274 : vector<4x1xf32> to vector<4x256xf32>
    %276 = arith.mulf %273, %275 : vector<4x256xf32>
    %277 = arith.addf %272, %276 : vector<4x256xf32>
    %c0_73 = arith.constant 0 : index
    %c346 = arith.constant 346 : index
    %278 = vector.load %arg17[%c0_73, %c346] : memref<4x768xf32, #tpu.memory_space<vmem>>, vector<4x256xf32>
    %279 = vector.extract_strided_slice %69 {offsets = [0, 36], sizes = [4, 1], strides = [1, 1]} : vector<4x49xf32> to vector<4x1xf32>
    %280 = vector.broadcast %279 : vector<4x1xf32> to vector<4x256xf32>
    %281 = arith.mulf %278, %280 : vector<4x256xf32>
    %282 = arith.addf %277, %281 : vector<4x256xf32>
    %c0_74 = arith.constant 0 : index
    %c394 = arith.constant 394 : index
    %283 = vector.load %arg17[%c0_74, %c394] : memref<4x768xf32, #tpu.memory_space<vmem>>, vector<4x256xf32>
    %284 = vector.extract_strided_slice %69 {offsets = [0, 43], sizes = [4, 1], strides = [1, 1]} : vector<4x49xf32> to vector<4x1xf32>
    %285 = vector.broadcast %284 : vector<4x1xf32> to vector<4x256xf32>
    %286 = arith.mulf %283, %285 : vector<4x256xf32>
    %287 = arith.addf %282, %286 : vector<4x256xf32>
    %cst_75 = arith.constant 0.000000e+00 : f32
    %288 = vector.shape_cast %27 : vector<1x256xi1> to vector<1x256xi1>
    %289 = vector.broadcast %288 : vector<1x256xi1> to vector<4x256xi1>
    %290 = vector.broadcast %cst_75 : f32 to vector<4x256xf32>
    %291 = arith.select %289, %287, %290 : vector<4x256xi1>, vector<4x256xf32>
    %292 = arith.addf %253, %291 : vector<4x256xf32>
    %c0_76 = arith.constant 0 : index
    %c109 = arith.constant 109 : index
    %293 = vector.load %arg17[%c0_76, %c109] : memref<4x768xf32, #tpu.memory_space<vmem>>, vector<4x256xf32>
    %294 = vector.extract_strided_slice %69 {offsets = [0, 2], sizes = [4, 1], strides = [1, 1]} : vector<4x49xf32> to vector<4x1xf32>
    %295 = vector.broadcast %294 : vector<4x1xf32> to vector<4x256xf32>
    %296 = arith.mulf %293, %295 : vector<4x256xf32>
    %c0_77 = arith.constant 0 : index
    %c157 = arith.constant 157 : index
    %297 = vector.load %arg17[%c0_77, %c157] : memref<4x768xf32, #tpu.memory_space<vmem>>, vector<4x256xf32>
    %298 = vector.extract_strided_slice %69 {offsets = [0, 9], sizes = [4, 1], strides = [1, 1]} : vector<4x49xf32> to vector<4x1xf32>
    %299 = vector.broadcast %298 : vector<4x1xf32> to vector<4x256xf32>
    %300 = arith.mulf %297, %299 : vector<4x256xf32>
    %301 = arith.addf %296, %300 : vector<4x256xf32>
    %c0_78 = arith.constant 0 : index
    %c205 = arith.constant 205 : index
    %302 = vector.load %arg17[%c0_78, %c205] : memref<4x768xf32, #tpu.memory_space<vmem>>, vector<4x256xf32>
    %303 = vector.extract_strided_slice %69 {offsets = [0, 16], sizes = [4, 1], strides = [1, 1]} : vector<4x49xf32> to vector<4x1xf32>
    %304 = vector.broadcast %303 : vector<4x1xf32> to vector<4x256xf32>
    %305 = arith.mulf %302, %304 : vector<4x256xf32>
    %306 = arith.addf %301, %305 : vector<4x256xf32>
    %c0_79 = arith.constant 0 : index
    %c253 = arith.constant 253 : index
    %307 = vector.load %arg17[%c0_79, %c253] : memref<4x768xf32, #tpu.memory_space<vmem>>, vector<4x256xf32>
    %308 = vector.extract_strided_slice %69 {offsets = [0, 23], sizes = [4, 1], strides = [1, 1]} : vector<4x49xf32> to vector<4x1xf32>
    %309 = vector.broadcast %308 : vector<4x1xf32> to vector<4x256xf32>
    %310 = arith.mulf %307, %309 : vector<4x256xf32>
    %311 = arith.addf %306, %310 : vector<4x256xf32>
    %c0_80 = arith.constant 0 : index
    %c301 = arith.constant 301 : index
    %312 = vector.load %arg17[%c0_80, %c301] : memref<4x768xf32, #tpu.memory_space<vmem>>, vector<4x256xf32>
    %313 = vector.extract_strided_slice %69 {offsets = [0, 30], sizes = [4, 1], strides = [1, 1]} : vector<4x49xf32> to vector<4x1xf32>
    %314 = vector.broadcast %313 : vector<4x1xf32> to vector<4x256xf32>
    %315 = arith.mulf %312, %314 : vector<4x256xf32>
    %316 = arith.addf %311, %315 : vector<4x256xf32>
    %c0_81 = arith.constant 0 : index
    %c349 = arith.constant 349 : index
    %317 = vector.load %arg17[%c0_81, %c349] : memref<4x768xf32, #tpu.memory_space<vmem>>, vector<4x256xf32>
    %318 = vector.extract_strided_slice %69 {offsets = [0, 37], sizes = [4, 1], strides = [1, 1]} : vector<4x49xf32> to vector<4x1xf32>
    %319 = vector.broadcast %318 : vector<4x1xf32> to vector<4x256xf32>
    %320 = arith.mulf %317, %319 : vector<4x256xf32>
    %321 = arith.addf %316, %320 : vector<4x256xf32>
    %c0_82 = arith.constant 0 : index
    %c397 = arith.constant 397 : index
    %322 = vector.load %arg17[%c0_82, %c397] : memref<4x768xf32, #tpu.memory_space<vmem>>, vector<4x256xf32>
    %323 = vector.extract_strided_slice %69 {offsets = [0, 44], sizes = [4, 1], strides = [1, 1]} : vector<4x49xf32> to vector<4x1xf32>
    %324 = vector.broadcast %323 : vector<4x1xf32> to vector<4x256xf32>
    %325 = arith.mulf %322, %324 : vector<4x256xf32>
    %326 = arith.addf %321, %325 : vector<4x256xf32>
    %cst_83 = arith.constant 0.000000e+00 : f32
    %327 = vector.shape_cast %32 : vector<1x256xi1> to vector<1x256xi1>
    %328 = vector.broadcast %327 : vector<1x256xi1> to vector<4x256xi1>
    %329 = vector.broadcast %cst_83 : f32 to vector<4x256xf32>
    %330 = arith.select %328, %326, %329 : vector<4x256xi1>, vector<4x256xf32>
    %331 = arith.addf %292, %330 : vector<4x256xf32>
    %c0_84 = arith.constant 0 : index
    %c112_85 = arith.constant 112 : index
    %332 = vector.load %arg17[%c0_84, %c112_85] : memref<4x768xf32, #tpu.memory_space<vmem>>, vector<4x256xf32>
    %333 = vector.extract_strided_slice %69 {offsets = [0, 3], sizes = [4, 1], strides = [1, 1]} : vector<4x49xf32> to vector<4x1xf32>
    %334 = vector.broadcast %333 : vector<4x1xf32> to vector<4x256xf32>
    %335 = arith.mulf %332, %334 : vector<4x256xf32>
    %c0_86 = arith.constant 0 : index
    %c160_87 = arith.constant 160 : index
    %336 = vector.load %arg17[%c0_86, %c160_87] : memref<4x768xf32, #tpu.memory_space<vmem>>, vector<4x256xf32>
    %337 = vector.extract_strided_slice %69 {offsets = [0, 10], sizes = [4, 1], strides = [1, 1]} : vector<4x49xf32> to vector<4x1xf32>
    %338 = vector.broadcast %337 : vector<4x1xf32> to vector<4x256xf32>
    %339 = arith.mulf %336, %338 : vector<4x256xf32>
    %340 = arith.addf %335, %339 : vector<4x256xf32>
    %c0_88 = arith.constant 0 : index
    %c208 = arith.constant 208 : index
    %341 = vector.load %arg17[%c0_88, %c208] : memref<4x768xf32, #tpu.memory_space<vmem>>, vector<4x256xf32>
    %342 = vector.extract_strided_slice %69 {offsets = [0, 17], sizes = [4, 1], strides = [1, 1]} : vector<4x49xf32> to vector<4x1xf32>
    %343 = vector.broadcast %342 : vector<4x1xf32> to vector<4x256xf32>
    %344 = arith.mulf %341, %343 : vector<4x256xf32>
    %345 = arith.addf %340, %344 : vector<4x256xf32>
    %c0_89 = arith.constant 0 : index
    %c256_90 = arith.constant 256 : index
    %346 = vector.load %arg17[%c0_89, %c256_90] : memref<4x768xf32, #tpu.memory_space<vmem>>, vector<4x256xf32>
    %347 = vector.extract_strided_slice %69 {offsets = [0, 24], sizes = [4, 1], strides = [1, 1]} : vector<4x49xf32> to vector<4x1xf32>
    %348 = vector.broadcast %347 : vector<4x1xf32> to vector<4x256xf32>
    %349 = arith.mulf %346, %348 : vector<4x256xf32>
    %350 = arith.addf %345, %349 : vector<4x256xf32>
    %c0_91 = arith.constant 0 : index
    %c304 = arith.constant 304 : index
    %351 = vector.load %arg17[%c0_91, %c304] : memref<4x768xf32, #tpu.memory_space<vmem>>, vector<4x256xf32>
    %352 = vector.extract_strided_slice %69 {offsets = [0, 31], sizes = [4, 1], strides = [1, 1]} : vector<4x49xf32> to vector<4x1xf32>
    %353 = vector.broadcast %352 : vector<4x1xf32> to vector<4x256xf32>
    %354 = arith.mulf %351, %353 : vector<4x256xf32>
    %355 = arith.addf %350, %354 : vector<4x256xf32>
    %c0_92 = arith.constant 0 : index
    %c352 = arith.constant 352 : index
    %356 = vector.load %arg17[%c0_92, %c352] : memref<4x768xf32, #tpu.memory_space<vmem>>, vector<4x256xf32>
    %357 = vector.extract_strided_slice %69 {offsets = [0, 38], sizes = [4, 1], strides = [1, 1]} : vector<4x49xf32> to vector<4x1xf32>
    %358 = vector.broadcast %357 : vector<4x1xf32> to vector<4x256xf32>
    %359 = arith.mulf %356, %358 : vector<4x256xf32>
    %360 = arith.addf %355, %359 : vector<4x256xf32>
    %c0_93 = arith.constant 0 : index
    %c400 = arith.constant 400 : index
    %361 = vector.load %arg17[%c0_93, %c400] : memref<4x768xf32, #tpu.memory_space<vmem>>, vector<4x256xf32>
    %362 = vector.extract_strided_slice %69 {offsets = [0, 45], sizes = [4, 1], strides = [1, 1]} : vector<4x49xf32> to vector<4x1xf32>
    %363 = vector.broadcast %362 : vector<4x1xf32> to vector<4x256xf32>
    %364 = arith.mulf %361, %363 : vector<4x256xf32>
    %365 = arith.addf %360, %364 : vector<4x256xf32>
    %366 = arith.addf %331, %365 : vector<4x256xf32>
    %c0_94 = arith.constant 0 : index
    %c115 = arith.constant 115 : index
    %367 = vector.load %arg17[%c0_94, %c115] : memref<4x768xf32, #tpu.memory_space<vmem>>, vector<4x256xf32>
    %368 = vector.extract_strided_slice %69 {offsets = [0, 4], sizes = [4, 1], strides = [1, 1]} : vector<4x49xf32> to vector<4x1xf32>
    %369 = vector.broadcast %368 : vector<4x1xf32> to vector<4x256xf32>
    %370 = arith.mulf %367, %369 : vector<4x256xf32>
    %c0_95 = arith.constant 0 : index
    %c163 = arith.constant 163 : index
    %371 = vector.load %arg17[%c0_95, %c163] : memref<4x768xf32, #tpu.memory_space<vmem>>, vector<4x256xf32>
    %372 = vector.extract_strided_slice %69 {offsets = [0, 11], sizes = [4, 1], strides = [1, 1]} : vector<4x49xf32> to vector<4x1xf32>
    %373 = vector.broadcast %372 : vector<4x1xf32> to vector<4x256xf32>
    %374 = arith.mulf %371, %373 : vector<4x256xf32>
    %375 = arith.addf %370, %374 : vector<4x256xf32>
    %c0_96 = arith.constant 0 : index
    %c211 = arith.constant 211 : index
    %376 = vector.load %arg17[%c0_96, %c211] : memref<4x768xf32, #tpu.memory_space<vmem>>, vector<4x256xf32>
    %377 = vector.extract_strided_slice %69 {offsets = [0, 18], sizes = [4, 1], strides = [1, 1]} : vector<4x49xf32> to vector<4x1xf32>
    %378 = vector.broadcast %377 : vector<4x1xf32> to vector<4x256xf32>
    %379 = arith.mulf %376, %378 : vector<4x256xf32>
    %380 = arith.addf %375, %379 : vector<4x256xf32>
    %c0_97 = arith.constant 0 : index
    %c259 = arith.constant 259 : index
    %381 = vector.load %arg17[%c0_97, %c259] : memref<4x768xf32, #tpu.memory_space<vmem>>, vector<4x256xf32>
    %382 = vector.extract_strided_slice %69 {offsets = [0, 25], sizes = [4, 1], strides = [1, 1]} : vector<4x49xf32> to vector<4x1xf32>
    %383 = vector.broadcast %382 : vector<4x1xf32> to vector<4x256xf32>
    %384 = arith.mulf %381, %383 : vector<4x256xf32>
    %385 = arith.addf %380, %384 : vector<4x256xf32>
    %c0_98 = arith.constant 0 : index
    %c307 = arith.constant 307 : index
    %386 = vector.load %arg17[%c0_98, %c307] : memref<4x768xf32, #tpu.memory_space<vmem>>, vector<4x256xf32>
    %387 = vector.extract_strided_slice %69 {offsets = [0, 32], sizes = [4, 1], strides = [1, 1]} : vector<4x49xf32> to vector<4x1xf32>
    %388 = vector.broadcast %387 : vector<4x1xf32> to vector<4x256xf32>
    %389 = arith.mulf %386, %388 : vector<4x256xf32>
    %390 = arith.addf %385, %389 : vector<4x256xf32>
    %c0_99 = arith.constant 0 : index
    %c355 = arith.constant 355 : index
    %391 = vector.load %arg17[%c0_99, %c355] : memref<4x768xf32, #tpu.memory_space<vmem>>, vector<4x256xf32>
    %392 = vector.extract_strided_slice %69 {offsets = [0, 39], sizes = [4, 1], strides = [1, 1]} : vector<4x49xf32> to vector<4x1xf32>
    %393 = vector.broadcast %392 : vector<4x1xf32> to vector<4x256xf32>
    %394 = arith.mulf %391, %393 : vector<4x256xf32>
    %395 = arith.addf %390, %394 : vector<4x256xf32>
    %c0_100 = arith.constant 0 : index
    %c403 = arith.constant 403 : index
    %396 = vector.load %arg17[%c0_100, %c403] : memref<4x768xf32, #tpu.memory_space<vmem>>, vector<4x256xf32>
    %397 = vector.extract_strided_slice %69 {offsets = [0, 46], sizes = [4, 1], strides = [1, 1]} : vector<4x49xf32> to vector<4x1xf32>
    %398 = vector.broadcast %397 : vector<4x1xf32> to vector<4x256xf32>
    %399 = arith.mulf %396, %398 : vector<4x256xf32>
    %400 = arith.addf %395, %399 : vector<4x256xf32>
    %cst_101 = arith.constant 0.000000e+00 : f32
    %401 = vector.shape_cast %57 : vector<1x256xi1> to vector<1x256xi1>
    %402 = vector.broadcast %401 : vector<1x256xi1> to vector<4x256xi1>
    %403 = vector.broadcast %cst_101 : f32 to vector<4x256xf32>
    %404 = arith.select %402, %400, %403 : vector<4x256xi1>, vector<4x256xf32>
    %405 = arith.addf %366, %404 : vector<4x256xf32>
    %c0_102 = arith.constant 0 : index
    %c118 = arith.constant 118 : index
    %406 = vector.load %arg17[%c0_102, %c118] : memref<4x768xf32, #tpu.memory_space<vmem>>, vector<4x256xf32>
    %407 = vector.extract_strided_slice %69 {offsets = [0, 5], sizes = [4, 1], strides = [1, 1]} : vector<4x49xf32> to vector<4x1xf32>
    %408 = vector.broadcast %407 : vector<4x1xf32> to vector<4x256xf32>
    %409 = arith.mulf %406, %408 : vector<4x256xf32>
    %c0_103 = arith.constant 0 : index
    %c166 = arith.constant 166 : index
    %410 = vector.load %arg17[%c0_103, %c166] : memref<4x768xf32, #tpu.memory_space<vmem>>, vector<4x256xf32>
    %411 = vector.extract_strided_slice %69 {offsets = [0, 12], sizes = [4, 1], strides = [1, 1]} : vector<4x49xf32> to vector<4x1xf32>
    %412 = vector.broadcast %411 : vector<4x1xf32> to vector<4x256xf32>
    %413 = arith.mulf %410, %412 : vector<4x256xf32>
    %414 = arith.addf %409, %413 : vector<4x256xf32>
    %c0_104 = arith.constant 0 : index
    %c214 = arith.constant 214 : index
    %415 = vector.load %arg17[%c0_104, %c214] : memref<4x768xf32, #tpu.memory_space<vmem>>, vector<4x256xf32>
    %416 = vector.extract_strided_slice %69 {offsets = [0, 19], sizes = [4, 1], strides = [1, 1]} : vector<4x49xf32> to vector<4x1xf32>
    %417 = vector.broadcast %416 : vector<4x1xf32> to vector<4x256xf32>
    %418 = arith.mulf %415, %417 : vector<4x256xf32>
    %419 = arith.addf %414, %418 : vector<4x256xf32>
    %c0_105 = arith.constant 0 : index
    %c262 = arith.constant 262 : index
    %420 = vector.load %arg17[%c0_105, %c262] : memref<4x768xf32, #tpu.memory_space<vmem>>, vector<4x256xf32>
    %421 = vector.extract_strided_slice %69 {offsets = [0, 26], sizes = [4, 1], strides = [1, 1]} : vector<4x49xf32> to vector<4x1xf32>
    %422 = vector.broadcast %421 : vector<4x1xf32> to vector<4x256xf32>
    %423 = arith.mulf %420, %422 : vector<4x256xf32>
    %424 = arith.addf %419, %423 : vector<4x256xf32>
    %c0_106 = arith.constant 0 : index
    %c310 = arith.constant 310 : index
    %425 = vector.load %arg17[%c0_106, %c310] : memref<4x768xf32, #tpu.memory_space<vmem>>, vector<4x256xf32>
    %426 = vector.extract_strided_slice %69 {offsets = [0, 33], sizes = [4, 1], strides = [1, 1]} : vector<4x49xf32> to vector<4x1xf32>
    %427 = vector.broadcast %426 : vector<4x1xf32> to vector<4x256xf32>
    %428 = arith.mulf %425, %427 : vector<4x256xf32>
    %429 = arith.addf %424, %428 : vector<4x256xf32>
    %c0_107 = arith.constant 0 : index
    %c358 = arith.constant 358 : index
    %430 = vector.load %arg17[%c0_107, %c358] : memref<4x768xf32, #tpu.memory_space<vmem>>, vector<4x256xf32>
    %431 = vector.extract_strided_slice %69 {offsets = [0, 40], sizes = [4, 1], strides = [1, 1]} : vector<4x49xf32> to vector<4x1xf32>
    %432 = vector.broadcast %431 : vector<4x1xf32> to vector<4x256xf32>
    %433 = arith.mulf %430, %432 : vector<4x256xf32>
    %434 = arith.addf %429, %433 : vector<4x256xf32>
    %c0_108 = arith.constant 0 : index
    %c406 = arith.constant 406 : index
    %435 = vector.load %arg17[%c0_108, %c406] : memref<4x768xf32, #tpu.memory_space<vmem>>, vector<4x256xf32>
    %436 = vector.extract_strided_slice %69 {offsets = [0, 47], sizes = [4, 1], strides = [1, 1]} : vector<4x49xf32> to vector<4x1xf32>
    %437 = vector.broadcast %436 : vector<4x1xf32> to vector<4x256xf32>
    %438 = arith.mulf %435, %437 : vector<4x256xf32>
    %439 = arith.addf %434, %438 : vector<4x256xf32>
    %cst_109 = arith.constant 0.000000e+00 : f32
    %440 = vector.shape_cast %62 : vector<1x256xi1> to vector<1x256xi1>
    %441 = vector.broadcast %440 : vector<1x256xi1> to vector<4x256xi1>
    %442 = vector.broadcast %cst_109 : f32 to vector<4x256xf32>
    %443 = arith.select %441, %439, %442 : vector<4x256xi1>, vector<4x256xf32>
    %444 = arith.addf %405, %443 : vector<4x256xf32>
    %c0_110 = arith.constant 0 : index
    %c121 = arith.constant 121 : index
    %445 = vector.load %arg17[%c0_110, %c121] : memref<4x768xf32, #tpu.memory_space<vmem>>, vector<4x256xf32>
    %446 = vector.extract_strided_slice %69 {offsets = [0, 6], sizes = [4, 1], strides = [1, 1]} : vector<4x49xf32> to vector<4x1xf32>
    %447 = vector.broadcast %446 : vector<4x1xf32> to vector<4x256xf32>
    %448 = arith.mulf %445, %447 : vector<4x256xf32>
    %c0_111 = arith.constant 0 : index
    %c169 = arith.constant 169 : index
    %449 = vector.load %arg17[%c0_111, %c169] : memref<4x768xf32, #tpu.memory_space<vmem>>, vector<4x256xf32>
    %450 = vector.extract_strided_slice %69 {offsets = [0, 13], sizes = [4, 1], strides = [1, 1]} : vector<4x49xf32> to vector<4x1xf32>
    %451 = vector.broadcast %450 : vector<4x1xf32> to vector<4x256xf32>
    %452 = arith.mulf %449, %451 : vector<4x256xf32>
    %453 = arith.addf %448, %452 : vector<4x256xf32>
    %c0_112 = arith.constant 0 : index
    %c217 = arith.constant 217 : index
    %454 = vector.load %arg17[%c0_112, %c217] : memref<4x768xf32, #tpu.memory_space<vmem>>, vector<4x256xf32>
    %455 = vector.extract_strided_slice %69 {offsets = [0, 20], sizes = [4, 1], strides = [1, 1]} : vector<4x49xf32> to vector<4x1xf32>
    %456 = vector.broadcast %455 : vector<4x1xf32> to vector<4x256xf32>
    %457 = arith.mulf %454, %456 : vector<4x256xf32>
    %458 = arith.addf %453, %457 : vector<4x256xf32>
    %c0_113 = arith.constant 0 : index
    %c265 = arith.constant 265 : index
    %459 = vector.load %arg17[%c0_113, %c265] : memref<4x768xf32, #tpu.memory_space<vmem>>, vector<4x256xf32>
    %460 = vector.extract_strided_slice %69 {offsets = [0, 27], sizes = [4, 1], strides = [1, 1]} : vector<4x49xf32> to vector<4x1xf32>
    %461 = vector.broadcast %460 : vector<4x1xf32> to vector<4x256xf32>
    %462 = arith.mulf %459, %461 : vector<4x256xf32>
    %463 = arith.addf %458, %462 : vector<4x256xf32>
    %c0_114 = arith.constant 0 : index
    %c313 = arith.constant 313 : index
    %464 = vector.load %arg17[%c0_114, %c313] : memref<4x768xf32, #tpu.memory_space<vmem>>, vector<4x256xf32>
    %465 = vector.extract_strided_slice %69 {offsets = [0, 34], sizes = [4, 1], strides = [1, 1]} : vector<4x49xf32> to vector<4x1xf32>
    %466 = vector.broadcast %465 : vector<4x1xf32> to vector<4x256xf32>
    %467 = arith.mulf %464, %466 : vector<4x256xf32>
    %468 = arith.addf %463, %467 : vector<4x256xf32>
    %c0_115 = arith.constant 0 : index
    %c361 = arith.constant 361 : index
    %469 = vector.load %arg17[%c0_115, %c361] : memref<4x768xf32, #tpu.memory_space<vmem>>, vector<4x256xf32>
    %470 = vector.extract_strided_slice %69 {offsets = [0, 41], sizes = [4, 1], strides = [1, 1]} : vector<4x49xf32> to vector<4x1xf32>
    %471 = vector.broadcast %470 : vector<4x1xf32> to vector<4x256xf32>
    %472 = arith.mulf %469, %471 : vector<4x256xf32>
    %473 = arith.addf %468, %472 : vector<4x256xf32>
    %c0_116 = arith.constant 0 : index
    %c409 = arith.constant 409 : index
    %474 = vector.load %arg17[%c0_116, %c409] : memref<4x768xf32, #tpu.memory_space<vmem>>, vector<4x256xf32>
    %475 = vector.extract_strided_slice %69 {offsets = [0, 48], sizes = [4, 1], strides = [1, 1]} : vector<4x49xf32> to vector<4x1xf32>
    %476 = vector.broadcast %475 : vector<4x1xf32> to vector<4x256xf32>
    %477 = arith.mulf %474, %476 : vector<4x256xf32>
    %478 = arith.addf %473, %477 : vector<4x256xf32>
    %cst_117 = arith.constant 0.000000e+00 : f32
    %479 = vector.shape_cast %67 : vector<1x256xi1> to vector<1x256xi1>
    %480 = vector.broadcast %479 : vector<1x256xi1> to vector<4x256xi1>
    %481 = vector.broadcast %cst_117 : f32 to vector<4x256xf32>
    %482 = arith.select %480, %478, %481 : vector<4x256xi1>, vector<4x256xf32>
    %483 = arith.addf %444, %482 : vector<4x256xf32>
    %c0_118 = arith.constant 0 : index
    %c0_119 = arith.constant 0 : index
    %484 = vector.load %arg5[%c0_118, %c0_119] : memref<4x1xf32, #tpu.memory_space<vmem>>, vector<4x1xf32>
    %485 = vector.broadcast %484 : vector<4x1xf32> to vector<4x256xf32>
    %486 = arith.addf %483, %485 : vector<4x256xf32>
    %c0_120 = arith.constant 0 : index
    %c0_121 = arith.constant 0 : index
    %487 = vector.load %arg6[%c0_120, %c0_121] : memref<3x4xf32, #tpu.memory_space<vmem>>, vector<3x4xf32>
    %cst_122 = arith.constant dense<0.000000e+00> : vector<3x256xf32>
    %488 = tpu.matmul %487, %214, %cst_122 {dimension_numbers = #tpu.dot_dimension_numbers<[1], [0], [0], [1], [0, 0, 1, 1], [], []>} : vector<3x4xf32>, vector<4x256xf32>, vector<3x256xf32> -> vector<3x256xf32>
    %c0_123 = arith.constant 0 : index
    %c0_124 = arith.constant 0 : index
    %489 = vector.load %arg7[%c0_123, %c0_124] : memref<3x1xf32, #tpu.memory_space<vmem>>, vector<3x1xf32>
    %490 = vector.broadcast %489 : vector<3x1xf32> to vector<3x256xf32>
    %491 = arith.addf %488, %490 : vector<3x256xf32>
    %c0_125 = arith.constant 0 : index
    %c0_126 = arith.constant 0 : index
    %492 = vector.load %arg8[%c0_125, %c0_126] : memref<3x4xf32, #tpu.memory_space<vmem>>, vector<3x4xf32>
    %cst_127 = arith.constant dense<0.000000e+00> : vector<3x256xf32>
    %493 = tpu.matmul %492, %486, %cst_127 {dimension_numbers = #tpu.dot_dimension_numbers<[1], [0], [0], [1], [0, 0, 1, 1], [], []>} : vector<3x4xf32>, vector<4x256xf32>, vector<3x256xf32> -> vector<3x256xf32>
    %c0_128 = arith.constant 0 : index
    %c0_129 = arith.constant 0 : index
    %494 = vector.load %arg9[%c0_128, %c0_129] : memref<3x1xf32, #tpu.memory_space<vmem>>, vector<3x1xf32>
    %495 = vector.broadcast %494 : vector<3x1xf32> to vector<3x256xf32>
    %496 = arith.addf %493, %495 : vector<3x256xf32>
    %497 = vector.extract_strided_slice %491 {offsets = [0, 0], sizes = [2, 256], strides = [1, 1]} : vector<3x256xf32> to vector<2x256xf32>
    %498 = vector.extract_strided_slice %496 {offsets = [0, 0], sizes = [2, 256], strides = [1, 1]} : vector<3x256xf32> to vector<2x256xf32>
    %499 = vector.extract_strided_slice %491 {offsets = [2, 0], sizes = [1, 256], strides = [1, 1]} : vector<3x256xf32> to vector<1x256xf32>
    %500 = vector.extract_strided_slice %496 {offsets = [2, 0], sizes = [1, 256], strides = [1, 1]} : vector<3x256xf32> to vector<1x256xf32>
    %501 = arith.addf %499, %500 : vector<1x256xf32>
    %cst_130 = arith.constant dense<0xFF800000> : vector<256xf32>
    %502 = vector.multi_reduction <maximumf>, %497, %cst_130 [0] : vector<2x256xf32> to vector<256xf32>
    %503 = vector.shape_cast %502 : vector<256xf32> to vector<1x256xf32>
    %cst_131 = arith.constant dense<0xFF800000> : vector<256xf32>
    %504 = vector.multi_reduction <maximumf>, %498, %cst_131 [0] : vector<2x256xf32> to vector<256xf32>
    %505 = vector.shape_cast %504 : vector<256xf32> to vector<1x256xf32>
    %506 = arith.maximumf %503, %505 : vector<1x256xf32>
    %c0_132 = arith.constant 0 : index
    %c128_133 = arith.constant 128 : index
    %507 = vector.load %arg18[%c0_132, %c128_133] : memref<2x512xf32, #tpu.memory_space<vmem>>, vector<1x256xf32>
    tpu.vector_store %arg18[%c0_132, %c128_133], %501 {strides = array<i32>} : memref<2x512xf32, #tpu.memory_space<vmem>>, vector<1x256xf32>,
    %c1 = arith.constant 1 : index
    %c128_134 = arith.constant 128 : index
    %508 = vector.load %arg18[%c1, %c128_134] : memref<2x512xf32, #tpu.memory_space<vmem>>, vector<1x256xf32>
    tpu.vector_store %arg18[%c1, %c128_134], %506 {strides = array<i32>} : memref<2x512xf32, #tpu.memory_space<vmem>>, vector<1x256xf32>,
    %c0_135 = arith.constant 0 : index
    %c77 = arith.constant 77 : index
    %509 = vector.load %arg18[%c0_135, %c77] : memref<2x512xf32, #tpu.memory_space<vmem>>, vector<2x256xf32>
    %510 = vector.extract_strided_slice %509 {offsets = [0, 0], sizes = [1, 256], strides = [1, 1]} : vector<2x256xf32> to vector<1x256xf32>
    %511 = vector.extract_strided_slice %70 {offsets = [0, 0], sizes = [2, 1], strides = [1, 1]} : vector<2x49xf32> to vector<2x1xf32>
    %512 = vector.broadcast %510 : vector<1x256xf32> to vector<2x256xf32>
    %513 = vector.broadcast %511 : vector<2x1xf32> to vector<2x256xf32>
    %514 = arith.mulf %512, %513 : vector<2x256xf32>
    %515 = vector.extract_strided_slice %509 {offsets = [1, 0], sizes = [1, 256], strides = [1, 1]} : vector<2x256xf32> to vector<1x256xf32>
    %516 = vector.extract_strided_slice %71 {offsets = [0, 0], sizes = [2, 1], strides = [1, 1]} : vector<2x49xf32> to vector<2x1xf32>
    %517 = vector.broadcast %515 : vector<1x256xf32> to vector<2x256xf32>
    %518 = vector.broadcast %516 : vector<2x1xf32> to vector<2x256xf32>
    %519 = arith.mulf %517, %518 : vector<2x256xf32>
    %520 = arith.addf %514, %519 : vector<2x256xf32>
    %c0_136 = arith.constant 0 : index
    %c93 = arith.constant 93 : index
    %521 = vector.load %arg18[%c0_136, %c93] : memref<2x512xf32, #tpu.memory_space<vmem>>, vector<2x256xf32>
    %522 = vector.extract_strided_slice %521 {offsets = [0, 0], sizes = [1, 256], strides = [1, 1]} : vector<2x256xf32> to vector<1x256xf32>
    %523 = vector.extract_strided_slice %70 {offsets = [0, 7], sizes = [2, 1], strides = [1, 1]} : vector<2x49xf32> to vector<2x1xf32>
    %524 = vector.broadcast %522 : vector<1x256xf32> to vector<2x256xf32>
    %525 = vector.broadcast %523 : vector<2x1xf32> to vector<2x256xf32>
    %526 = arith.mulf %524, %525 : vector<2x256xf32>
    %527 = vector.extract_strided_slice %521 {offsets = [1, 0], sizes = [1, 256], strides = [1, 1]} : vector<2x256xf32> to vector<1x256xf32>
    %528 = vector.extract_strided_slice %71 {offsets = [0, 7], sizes = [2, 1], strides = [1, 1]} : vector<2x49xf32> to vector<2x1xf32>
    %529 = vector.broadcast %527 : vector<1x256xf32> to vector<2x256xf32>
    %530 = vector.broadcast %528 : vector<2x1xf32> to vector<2x256xf32>
    %531 = arith.mulf %529, %530 : vector<2x256xf32>
    %532 = arith.addf %526, %531 : vector<2x256xf32>
    %533 = arith.addf %520, %532 : vector<2x256xf32>
    %c0_137 = arith.constant 0 : index
    %c109_138 = arith.constant 109 : index
    %534 = vector.load %arg18[%c0_137, %c109_138] : memref<2x512xf32, #tpu.memory_space<vmem>>, vector<2x256xf32>
    %535 = vector.extract_strided_slice %534 {offsets = [0, 0], sizes = [1, 256], strides = [1, 1]} : vector<2x256xf32> to vector<1x256xf32>
    %536 = vector.extract_strided_slice %70 {offsets = [0, 14], sizes = [2, 1], strides = [1, 1]} : vector<2x49xf32> to vector<2x1xf32>
    %537 = vector.broadcast %535 : vector<1x256xf32> to vector<2x256xf32>
    %538 = vector.broadcast %536 : vector<2x1xf32> to vector<2x256xf32>
    %539 = arith.mulf %537, %538 : vector<2x256xf32>
    %540 = vector.extract_strided_slice %534 {offsets = [1, 0], sizes = [1, 256], strides = [1, 1]} : vector<2x256xf32> to vector<1x256xf32>
    %541 = vector.extract_strided_slice %71 {offsets = [0, 14], sizes = [2, 1], strides = [1, 1]} : vector<2x49xf32> to vector<2x1xf32>
    %542 = vector.broadcast %540 : vector<1x256xf32> to vector<2x256xf32>
    %543 = vector.broadcast %541 : vector<2x1xf32> to vector<2x256xf32>
    %544 = arith.mulf %542, %543 : vector<2x256xf32>
    %545 = arith.addf %539, %544 : vector<2x256xf32>
    %546 = arith.addf %533, %545 : vector<2x256xf32>
    %c0_139 = arith.constant 0 : index
    %c125 = arith.constant 125 : index
    %547 = vector.load %arg18[%c0_139, %c125] : memref<2x512xf32, #tpu.memory_space<vmem>>, vector<2x256xf32>
    %548 = vector.extract_strided_slice %547 {offsets = [0, 0], sizes = [1, 256], strides = [1, 1]} : vector<2x256xf32> to vector<1x256xf32>
    %549 = vector.extract_strided_slice %70 {offsets = [0, 21], sizes = [2, 1], strides = [1, 1]} : vector<2x49xf32> to vector<2x1xf32>
    %550 = vector.broadcast %548 : vector<1x256xf32> to vector<2x256xf32>
    %551 = vector.broadcast %549 : vector<2x1xf32> to vector<2x256xf32>
    %552 = arith.mulf %550, %551 : vector<2x256xf32>
    %553 = vector.extract_strided_slice %547 {offsets = [1, 0], sizes = [1, 256], strides = [1, 1]} : vector<2x256xf32> to vector<1x256xf32>
    %554 = vector.extract_strided_slice %71 {offsets = [0, 21], sizes = [2, 1], strides = [1, 1]} : vector<2x49xf32> to vector<2x1xf32>
    %555 = vector.broadcast %553 : vector<1x256xf32> to vector<2x256xf32>
    %556 = vector.broadcast %554 : vector<2x1xf32> to vector<2x256xf32>
    %557 = arith.mulf %555, %556 : vector<2x256xf32>
    %558 = arith.addf %552, %557 : vector<2x256xf32>
    %559 = arith.addf %546, %558 : vector<2x256xf32>
    %c0_140 = arith.constant 0 : index
    %c141 = arith.constant 141 : index
    %560 = vector.load %arg18[%c0_140, %c141] : memref<2x512xf32, #tpu.memory_space<vmem>>, vector<2x256xf32>
    %561 = vector.extract_strided_slice %560 {offsets = [0, 0], sizes = [1, 256], strides = [1, 1]} : vector<2x256xf32> to vector<1x256xf32>
    %562 = vector.extract_strided_slice %70 {offsets = [0, 28], sizes = [2, 1], strides = [1, 1]} : vector<2x49xf32> to vector<2x1xf32>
    %563 = vector.broadcast %561 : vector<1x256xf32> to vector<2x256xf32>
    %564 = vector.broadcast %562 : vector<2x1xf32> to vector<2x256xf32>
    %565 = arith.mulf %563, %564 : vector<2x256xf32>
    %566 = vector.extract_strided_slice %560 {offsets = [1, 0], sizes = [1, 256], strides = [1, 1]} : vector<2x256xf32> to vector<1x256xf32>
    %567 = vector.extract_strided_slice %71 {offsets = [0, 28], sizes = [2, 1], strides = [1, 1]} : vector<2x49xf32> to vector<2x1xf32>
    %568 = vector.broadcast %566 : vector<1x256xf32> to vector<2x256xf32>
    %569 = vector.broadcast %567 : vector<2x1xf32> to vector<2x256xf32>
    %570 = arith.mulf %568, %569 : vector<2x256xf32>
    %571 = arith.addf %565, %570 : vector<2x256xf32>
    %572 = arith.addf %559, %571 : vector<2x256xf32>
    %c0_141 = arith.constant 0 : index
    %c157_142 = arith.constant 157 : index
    %573 = vector.load %arg18[%c0_141, %c157_142] : memref<2x512xf32, #tpu.memory_space<vmem>>, vector<2x256xf32>
    %574 = vector.extract_strided_slice %573 {offsets = [0, 0], sizes = [1, 256], strides = [1, 1]} : vector<2x256xf32> to vector<1x256xf32>
    %575 = vector.extract_strided_slice %70 {offsets = [0, 35], sizes = [2, 1], strides = [1, 1]} : vector<2x49xf32> to vector<2x1xf32>
    %576 = vector.broadcast %574 : vector<1x256xf32> to vector<2x256xf32>
    %577 = vector.broadcast %575 : vector<2x1xf32> to vector<2x256xf32>
    %578 = arith.mulf %576, %577 : vector<2x256xf32>
    %579 = vector.extract_strided_slice %573 {offsets = [1, 0], sizes = [1, 256], strides = [1, 1]} : vector<2x256xf32> to vector<1x256xf32>
    %580 = vector.extract_strided_slice %71 {offsets = [0, 35], sizes = [2, 1], strides = [1, 1]} : vector<2x49xf32> to vector<2x1xf32>
    %581 = vector.broadcast %579 : vector<1x256xf32> to vector<2x256xf32>
    %582 = vector.broadcast %580 : vector<2x1xf32> to vector<2x256xf32>
    %583 = arith.mulf %581, %582 : vector<2x256xf32>
    %584 = arith.addf %578, %583 : vector<2x256xf32>
    %585 = arith.addf %572, %584 : vector<2x256xf32>
    %c0_143 = arith.constant 0 : index
    %c173 = arith.constant 173 : index
    %586 = vector.load %arg18[%c0_143, %c173] : memref<2x512xf32, #tpu.memory_space<vmem>>, vector<2x256xf32>
    %587 = vector.extract_strided_slice %586 {offsets = [0, 0], sizes = [1, 256], strides = [1, 1]} : vector<2x256xf32> to vector<1x256xf32>
    %588 = vector.extract_strided_slice %70 {offsets = [0, 42], sizes = [2, 1], strides = [1, 1]} : vector<2x49xf32> to vector<2x1xf32>
    %589 = vector.broadcast %587 : vector<1x256xf32> to vector<2x256xf32>
    %590 = vector.broadcast %588 : vector<2x1xf32> to vector<2x256xf32>
    %591 = arith.mulf %589, %590 : vector<2x256xf32>
    %592 = vector.extract_strided_slice %586 {offsets = [1, 0], sizes = [1, 256], strides = [1, 1]} : vector<2x256xf32> to vector<1x256xf32>
    %593 = vector.extract_strided_slice %71 {offsets = [0, 42], sizes = [2, 1], strides = [1, 1]} : vector<2x49xf32> to vector<2x1xf32>
    %594 = vector.broadcast %592 : vector<1x256xf32> to vector<2x256xf32>
    %595 = vector.broadcast %593 : vector<2x1xf32> to vector<2x256xf32>
    %596 = arith.mulf %594, %595 : vector<2x256xf32>
    %597 = arith.addf %591, %596 : vector<2x256xf32>
    %598 = arith.addf %585, %597 : vector<2x256xf32>
    %cst_144 = arith.constant 0.000000e+00 : f32
    %599 = vector.shape_cast %32 : vector<1x256xi1> to vector<1x256xi1>
    %600 = vector.broadcast %599 : vector<1x256xi1> to vector<2x256xi1>
    %601 = vector.broadcast %cst_144 : f32 to vector<2x256xf32>
    %602 = arith.select %600, %598, %601 : vector<2x256xi1>, vector<2x256xf32>
    %c0_145 = arith.constant 0 : index
    %c78 = arith.constant 78 : index
    %603 = vector.load %arg18[%c0_145, %c78] : memref<2x512xf32, #tpu.memory_space<vmem>>, vector<2x256xf32>
    %604 = vector.extract_strided_slice %603 {offsets = [0, 0], sizes = [1, 256], strides = [1, 1]} : vector<2x256xf32> to vector<1x256xf32>
    %605 = vector.extract_strided_slice %70 {offsets = [0, 1], sizes = [2, 1], strides = [1, 1]} : vector<2x49xf32> to vector<2x1xf32>
    %606 = vector.broadcast %604 : vector<1x256xf32> to vector<2x256xf32>
    %607 = vector.broadcast %605 : vector<2x1xf32> to vector<2x256xf32>
    %608 = arith.mulf %606, %607 : vector<2x256xf32>
    %609 = vector.extract_strided_slice %603 {offsets = [1, 0], sizes = [1, 256], strides = [1, 1]} : vector<2x256xf32> to vector<1x256xf32>
    %610 = vector.extract_strided_slice %71 {offsets = [0, 1], sizes = [2, 1], strides = [1, 1]} : vector<2x49xf32> to vector<2x1xf32>
    %611 = vector.broadcast %609 : vector<1x256xf32> to vector<2x256xf32>
    %612 = vector.broadcast %610 : vector<2x1xf32> to vector<2x256xf32>
    %613 = arith.mulf %611, %612 : vector<2x256xf32>
    %614 = arith.addf %608, %613 : vector<2x256xf32>
    %c0_146 = arith.constant 0 : index
    %c94_147 = arith.constant 94 : index
    %615 = vector.load %arg18[%c0_146, %c94_147] : memref<2x512xf32, #tpu.memory_space<vmem>>, vector<2x256xf32>
    %616 = vector.extract_strided_slice %615 {offsets = [0, 0], sizes = [1, 256], strides = [1, 1]} : vector<2x256xf32> to vector<1x256xf32>
    %617 = vector.extract_strided_slice %70 {offsets = [0, 8], sizes = [2, 1], strides = [1, 1]} : vector<2x49xf32> to vector<2x1xf32>
    %618 = vector.broadcast %616 : vector<1x256xf32> to vector<2x256xf32>
    %619 = vector.broadcast %617 : vector<2x1xf32> to vector<2x256xf32>
    %620 = arith.mulf %618, %619 : vector<2x256xf32>
    %621 = vector.extract_strided_slice %615 {offsets = [1, 0], sizes = [1, 256], strides = [1, 1]} : vector<2x256xf32> to vector<1x256xf32>
    %622 = vector.extract_strided_slice %71 {offsets = [0, 8], sizes = [2, 1], strides = [1, 1]} : vector<2x49xf32> to vector<2x1xf32>
    %623 = vector.broadcast %621 : vector<1x256xf32> to vector<2x256xf32>
    %624 = vector.broadcast %622 : vector<2x1xf32> to vector<2x256xf32>
    %625 = arith.mulf %623, %624 : vector<2x256xf32>
    %626 = arith.addf %620, %625 : vector<2x256xf32>
    %627 = arith.addf %614, %626 : vector<2x256xf32>
    %c0_148 = arith.constant 0 : index
    %c110_149 = arith.constant 110 : index
    %628 = vector.load %arg18[%c0_148, %c110_149] : memref<2x512xf32, #tpu.memory_space<vmem>>, vector<2x256xf32>
    %629 = vector.extract_strided_slice %628 {offsets = [0, 0], sizes = [1, 256], strides = [1, 1]} : vector<2x256xf32> to vector<1x256xf32>
    %630 = vector.extract_strided_slice %70 {offsets = [0, 15], sizes = [2, 1], strides = [1, 1]} : vector<2x49xf32> to vector<2x1xf32>
    %631 = vector.broadcast %629 : vector<1x256xf32> to vector<2x256xf32>
    %632 = vector.broadcast %630 : vector<2x1xf32> to vector<2x256xf32>
    %633 = arith.mulf %631, %632 : vector<2x256xf32>
    %634 = vector.extract_strided_slice %628 {offsets = [1, 0], sizes = [1, 256], strides = [1, 1]} : vector<2x256xf32> to vector<1x256xf32>
    %635 = vector.extract_strided_slice %71 {offsets = [0, 15], sizes = [2, 1], strides = [1, 1]} : vector<2x49xf32> to vector<2x1xf32>
    %636 = vector.broadcast %634 : vector<1x256xf32> to vector<2x256xf32>
    %637 = vector.broadcast %635 : vector<2x1xf32> to vector<2x256xf32>
    %638 = arith.mulf %636, %637 : vector<2x256xf32>
    %639 = arith.addf %633, %638 : vector<2x256xf32>
    %640 = arith.addf %627, %639 : vector<2x256xf32>
    %c0_150 = arith.constant 0 : index
    %c126_151 = arith.constant 126 : index
    %641 = vector.load %arg18[%c0_150, %c126_151] : memref<2x512xf32, #tpu.memory_space<vmem>>, vector<2x256xf32>
    %642 = vector.extract_strided_slice %641 {offsets = [0, 0], sizes = [1, 256], strides = [1, 1]} : vector<2x256xf32> to vector<1x256xf32>
    %643 = vector.extract_strided_slice %70 {offsets = [0, 22], sizes = [2, 1], strides = [1, 1]} : vector<2x49xf32> to vector<2x1xf32>
    %644 = vector.broadcast %642 : vector<1x256xf32> to vector<2x256xf32>
    %645 = vector.broadcast %643 : vector<2x1xf32> to vector<2x256xf32>
    %646 = arith.mulf %644, %645 : vector<2x256xf32>
    %647 = vector.extract_strided_slice %641 {offsets = [1, 0], sizes = [1, 256], strides = [1, 1]} : vector<2x256xf32> to vector<1x256xf32>
    %648 = vector.extract_strided_slice %71 {offsets = [0, 22], sizes = [2, 1], strides = [1, 1]} : vector<2x49xf32> to vector<2x1xf32>
    %649 = vector.broadcast %647 : vector<1x256xf32> to vector<2x256xf32>
    %650 = vector.broadcast %648 : vector<2x1xf32> to vector<2x256xf32>
    %651 = arith.mulf %649, %650 : vector<2x256xf32>
    %652 = arith.addf %646, %651 : vector<2x256xf32>
    %653 = arith.addf %640, %652 : vector<2x256xf32>
    %c0_152 = arith.constant 0 : index
    %c142_153 = arith.constant 142 : index
    %654 = vector.load %arg18[%c0_152, %c142_153] : memref<2x512xf32, #tpu.memory_space<vmem>>, vector<2x256xf32>
    %655 = vector.extract_strided_slice %654 {offsets = [0, 0], sizes = [1, 256], strides = [1, 1]} : vector<2x256xf32> to vector<1x256xf32>
    %656 = vector.extract_strided_slice %70 {offsets = [0, 29], sizes = [2, 1], strides = [1, 1]} : vector<2x49xf32> to vector<2x1xf32>
    %657 = vector.broadcast %655 : vector<1x256xf32> to vector<2x256xf32>
    %658 = vector.broadcast %656 : vector<2x1xf32> to vector<2x256xf32>
    %659 = arith.mulf %657, %658 : vector<2x256xf32>
    %660 = vector.extract_strided_slice %654 {offsets = [1, 0], sizes = [1, 256], strides = [1, 1]} : vector<2x256xf32> to vector<1x256xf32>
    %661 = vector.extract_strided_slice %71 {offsets = [0, 29], sizes = [2, 1], strides = [1, 1]} : vector<2x49xf32> to vector<2x1xf32>
    %662 = vector.broadcast %660 : vector<1x256xf32> to vector<2x256xf32>
    %663 = vector.broadcast %661 : vector<2x1xf32> to vector<2x256xf32>
    %664 = arith.mulf %662, %663 : vector<2x256xf32>
    %665 = arith.addf %659, %664 : vector<2x256xf32>
    %666 = arith.addf %653, %665 : vector<2x256xf32>
    %c0_154 = arith.constant 0 : index
    %c158_155 = arith.constant 158 : index
    %667 = vector.load %arg18[%c0_154, %c158_155] : memref<2x512xf32, #tpu.memory_space<vmem>>, vector<2x256xf32>
    %668 = vector.extract_strided_slice %667 {offsets = [0, 0], sizes = [1, 256], strides = [1, 1]} : vector<2x256xf32> to vector<1x256xf32>
    %669 = vector.extract_strided_slice %70 {offsets = [0, 36], sizes = [2, 1], strides = [1, 1]} : vector<2x49xf32> to vector<2x1xf32>
    %670 = vector.broadcast %668 : vector<1x256xf32> to vector<2x256xf32>
    %671 = vector.broadcast %669 : vector<2x1xf32> to vector<2x256xf32>
    %672 = arith.mulf %670, %671 : vector<2x256xf32>
    %673 = vector.extract_strided_slice %667 {offsets = [1, 0], sizes = [1, 256], strides = [1, 1]} : vector<2x256xf32> to vector<1x256xf32>
    %674 = vector.extract_strided_slice %71 {offsets = [0, 36], sizes = [2, 1], strides = [1, 1]} : vector<2x49xf32> to vector<2x1xf32>
    %675 = vector.broadcast %673 : vector<1x256xf32> to vector<2x256xf32>
    %676 = vector.broadcast %674 : vector<2x1xf32> to vector<2x256xf32>
    %677 = arith.mulf %675, %676 : vector<2x256xf32>
    %678 = arith.addf %672, %677 : vector<2x256xf32>
    %679 = arith.addf %666, %678 : vector<2x256xf32>
    %c0_156 = arith.constant 0 : index
    %c174 = arith.constant 174 : index
    %680 = vector.load %arg18[%c0_156, %c174] : memref<2x512xf32, #tpu.memory_space<vmem>>, vector<2x256xf32>
    %681 = vector.extract_strided_slice %680 {offsets = [0, 0], sizes = [1, 256], strides = [1, 1]} : vector<2x256xf32> to vector<1x256xf32>
    %682 = vector.extract_strided_slice %70 {offsets = [0, 43], sizes = [2, 1], strides = [1, 1]} : vector<2x49xf32> to vector<2x1xf32>
    %683 = vector.broadcast %681 : vector<1x256xf32> to vector<2x256xf32>
    %684 = vector.broadcast %682 : vector<2x1xf32> to vector<2x256xf32>
    %685 = arith.mulf %683, %684 : vector<2x256xf32>
    %686 = vector.extract_strided_slice %680 {offsets = [1, 0], sizes = [1, 256], strides = [1, 1]} : vector<2x256xf32> to vector<1x256xf32>
    %687 = vector.extract_strided_slice %71 {offsets = [0, 43], sizes = [2, 1], strides = [1, 1]} : vector<2x49xf32> to vector<2x1xf32>
    %688 = vector.broadcast %686 : vector<1x256xf32> to vector<2x256xf32>
    %689 = vector.broadcast %687 : vector<2x1xf32> to vector<2x256xf32>
    %690 = arith.mulf %688, %689 : vector<2x256xf32>
    %691 = arith.addf %685, %690 : vector<2x256xf32>
    %692 = arith.addf %679, %691 : vector<2x256xf32>
    %cst_157 = arith.constant 0.000000e+00 : f32
    %693 = vector.shape_cast %37 : vector<1x256xi1> to vector<1x256xi1>
    %694 = vector.broadcast %693 : vector<1x256xi1> to vector<2x256xi1>
    %695 = vector.broadcast %cst_157 : f32 to vector<2x256xf32>
    %696 = arith.select %694, %692, %695 : vector<2x256xi1>, vector<2x256xf32>
    %697 = arith.addf %602, %696 : vector<2x256xf32>
    %c0_158 = arith.constant 0 : index
    %c79 = arith.constant 79 : index
    %698 = vector.load %arg18[%c0_158, %c79] : memref<2x512xf32, #tpu.memory_space<vmem>>, vector<2x256xf32>
    %699 = vector.extract_strided_slice %698 {offsets = [0, 0], sizes = [1, 256], strides = [1, 1]} : vector<2x256xf32> to vector<1x256xf32>
    %700 = vector.extract_strided_slice %70 {offsets = [0, 2], sizes = [2, 1], strides = [1, 1]} : vector<2x49xf32> to vector<2x1xf32>
    %701 = vector.broadcast %699 : vector<1x256xf32> to vector<2x256xf32>
    %702 = vector.broadcast %700 : vector<2x1xf32> to vector<2x256xf32>
    %703 = arith.mulf %701, %702 : vector<2x256xf32>
    %704 = vector.extract_strided_slice %698 {offsets = [1, 0], sizes = [1, 256], strides = [1, 1]} : vector<2x256xf32> to vector<1x256xf32>
    %705 = vector.extract_strided_slice %71 {offsets = [0, 2], sizes = [2, 1], strides = [1, 1]} : vector<2x49xf32> to vector<2x1xf32>
    %706 = vector.broadcast %704 : vector<1x256xf32> to vector<2x256xf32>
    %707 = vector.broadcast %705 : vector<2x1xf32> to vector<2x256xf32>
    %708 = arith.mulf %706, %707 : vector<2x256xf32>
    %709 = arith.addf %703, %708 : vector<2x256xf32>
    %c0_159 = arith.constant 0 : index
    %c95_160 = arith.constant 95 : index
    %710 = vector.load %arg18[%c0_159, %c95_160] : memref<2x512xf32, #tpu.memory_space<vmem>>, vector<2x256xf32>
    %711 = vector.extract_strided_slice %710 {offsets = [0, 0], sizes = [1, 256], strides = [1, 1]} : vector<2x256xf32> to vector<1x256xf32>
    %712 = vector.extract_strided_slice %70 {offsets = [0, 9], sizes = [2, 1], strides = [1, 1]} : vector<2x49xf32> to vector<2x1xf32>
    %713 = vector.broadcast %711 : vector<1x256xf32> to vector<2x256xf32>
    %714 = vector.broadcast %712 : vector<2x1xf32> to vector<2x256xf32>
    %715 = arith.mulf %713, %714 : vector<2x256xf32>
    %716 = vector.extract_strided_slice %710 {offsets = [1, 0], sizes = [1, 256], strides = [1, 1]} : vector<2x256xf32> to vector<1x256xf32>
    %717 = vector.extract_strided_slice %71 {offsets = [0, 9], sizes = [2, 1], strides = [1, 1]} : vector<2x49xf32> to vector<2x1xf32>
    %718 = vector.broadcast %716 : vector<1x256xf32> to vector<2x256xf32>
    %719 = vector.broadcast %717 : vector<2x1xf32> to vector<2x256xf32>
    %720 = arith.mulf %718, %719 : vector<2x256xf32>
    %721 = arith.addf %715, %720 : vector<2x256xf32>
    %722 = arith.addf %709, %721 : vector<2x256xf32>
    %c0_161 = arith.constant 0 : index
    %c111_162 = arith.constant 111 : index
    %723 = vector.load %arg18[%c0_161, %c111_162] : memref<2x512xf32, #tpu.memory_space<vmem>>, vector<2x256xf32>
    %724 = vector.extract_strided_slice %723 {offsets = [0, 0], sizes = [1, 256], strides = [1, 1]} : vector<2x256xf32> to vector<1x256xf32>
    %725 = vector.extract_strided_slice %70 {offsets = [0, 16], sizes = [2, 1], strides = [1, 1]} : vector<2x49xf32> to vector<2x1xf32>
    %726 = vector.broadcast %724 : vector<1x256xf32> to vector<2x256xf32>
    %727 = vector.broadcast %725 : vector<2x1xf32> to vector<2x256xf32>
    %728 = arith.mulf %726, %727 : vector<2x256xf32>
    %729 = vector.extract_strided_slice %723 {offsets = [1, 0], sizes = [1, 256], strides = [1, 1]} : vector<2x256xf32> to vector<1x256xf32>
    %730 = vector.extract_strided_slice %71 {offsets = [0, 16], sizes = [2, 1], strides = [1, 1]} : vector<2x49xf32> to vector<2x1xf32>
    %731 = vector.broadcast %729 : vector<1x256xf32> to vector<2x256xf32>
    %732 = vector.broadcast %730 : vector<2x1xf32> to vector<2x256xf32>
    %733 = arith.mulf %731, %732 : vector<2x256xf32>
    %734 = arith.addf %728, %733 : vector<2x256xf32>
    %735 = arith.addf %722, %734 : vector<2x256xf32>
    %c0_163 = arith.constant 0 : index
    %c127_164 = arith.constant 127 : index
    %736 = vector.load %arg18[%c0_163, %c127_164] : memref<2x512xf32, #tpu.memory_space<vmem>>, vector<2x256xf32>
    %737 = vector.extract_strided_slice %736 {offsets = [0, 0], sizes = [1, 256], strides = [1, 1]} : vector<2x256xf32> to vector<1x256xf32>
    %738 = vector.extract_strided_slice %70 {offsets = [0, 23], sizes = [2, 1], strides = [1, 1]} : vector<2x49xf32> to vector<2x1xf32>
    %739 = vector.broadcast %737 : vector<1x256xf32> to vector<2x256xf32>
    %740 = vector.broadcast %738 : vector<2x1xf32> to vector<2x256xf32>
    %741 = arith.mulf %739, %740 : vector<2x256xf32>
    %742 = vector.extract_strided_slice %736 {offsets = [1, 0], sizes = [1, 256], strides = [1, 1]} : vector<2x256xf32> to vector<1x256xf32>
    %743 = vector.extract_strided_slice %71 {offsets = [0, 23], sizes = [2, 1], strides = [1, 1]} : vector<2x49xf32> to vector<2x1xf32>
    %744 = vector.broadcast %742 : vector<1x256xf32> to vector<2x256xf32>
    %745 = vector.broadcast %743 : vector<2x1xf32> to vector<2x256xf32>
    %746 = arith.mulf %744, %745 : vector<2x256xf32>
    %747 = arith.addf %741, %746 : vector<2x256xf32>
    %748 = arith.addf %735, %747 : vector<2x256xf32>
    %c0_165 = arith.constant 0 : index
    %c143_166 = arith.constant 143 : index
    %749 = vector.load %arg18[%c0_165, %c143_166] : memref<2x512xf32, #tpu.memory_space<vmem>>, vector<2x256xf32>
    %750 = vector.extract_strided_slice %749 {offsets = [0, 0], sizes = [1, 256], strides = [1, 1]} : vector<2x256xf32> to vector<1x256xf32>
    %751 = vector.extract_strided_slice %70 {offsets = [0, 30], sizes = [2, 1], strides = [1, 1]} : vector<2x49xf32> to vector<2x1xf32>
    %752 = vector.broadcast %750 : vector<1x256xf32> to vector<2x256xf32>
    %753 = vector.broadcast %751 : vector<2x1xf32> to vector<2x256xf32>
    %754 = arith.mulf %752, %753 : vector<2x256xf32>
    %755 = vector.extract_strided_slice %749 {offsets = [1, 0], sizes = [1, 256], strides = [1, 1]} : vector<2x256xf32> to vector<1x256xf32>
    %756 = vector.extract_strided_slice %71 {offsets = [0, 30], sizes = [2, 1], strides = [1, 1]} : vector<2x49xf32> to vector<2x1xf32>
    %757 = vector.broadcast %755 : vector<1x256xf32> to vector<2x256xf32>
    %758 = vector.broadcast %756 : vector<2x1xf32> to vector<2x256xf32>
    %759 = arith.mulf %757, %758 : vector<2x256xf32>
    %760 = arith.addf %754, %759 : vector<2x256xf32>
    %761 = arith.addf %748, %760 : vector<2x256xf32>
    %c0_167 = arith.constant 0 : index
    %c159_168 = arith.constant 159 : index
    %762 = vector.load %arg18[%c0_167, %c159_168] : memref<2x512xf32, #tpu.memory_space<vmem>>, vector<2x256xf32>
    %763 = vector.extract_strided_slice %762 {offsets = [0, 0], sizes = [1, 256], strides = [1, 1]} : vector<2x256xf32> to vector<1x256xf32>
    %764 = vector.extract_strided_slice %70 {offsets = [0, 37], sizes = [2, 1], strides = [1, 1]} : vector<2x49xf32> to vector<2x1xf32>
    %765 = vector.broadcast %763 : vector<1x256xf32> to vector<2x256xf32>
    %766 = vector.broadcast %764 : vector<2x1xf32> to vector<2x256xf32>
    %767 = arith.mulf %765, %766 : vector<2x256xf32>
    %768 = vector.extract_strided_slice %762 {offsets = [1, 0], sizes = [1, 256], strides = [1, 1]} : vector<2x256xf32> to vector<1x256xf32>
    %769 = vector.extract_strided_slice %71 {offsets = [0, 37], sizes = [2, 1], strides = [1, 1]} : vector<2x49xf32> to vector<2x1xf32>
    %770 = vector.broadcast %768 : vector<1x256xf32> to vector<2x256xf32>
    %771 = vector.broadcast %769 : vector<2x1xf32> to vector<2x256xf32>
    %772 = arith.mulf %770, %771 : vector<2x256xf32>
    %773 = arith.addf %767, %772 : vector<2x256xf32>
    %774 = arith.addf %761, %773 : vector<2x256xf32>
    %c0_169 = arith.constant 0 : index
    %c175 = arith.constant 175 : index
    %775 = vector.load %arg18[%c0_169, %c175] : memref<2x512xf32, #tpu.memory_space<vmem>>, vector<2x256xf32>
    %776 = vector.extract_strided_slice %775 {offsets = [0, 0], sizes = [1, 256], strides = [1, 1]} : vector<2x256xf32> to vector<1x256xf32>
    %777 = vector.extract_strided_slice %70 {offsets = [0, 44], sizes = [2, 1], strides = [1, 1]} : vector<2x49xf32> to vector<2x1xf32>
    %778 = vector.broadcast %776 : vector<1x256xf32> to vector<2x256xf32>
    %779 = vector.broadcast %777 : vector<2x1xf32> to vector<2x256xf32>
    %780 = arith.mulf %778, %779 : vector<2x256xf32>
    %781 = vector.extract_strided_slice %775 {offsets = [1, 0], sizes = [1, 256], strides = [1, 1]} : vector<2x256xf32> to vector<1x256xf32>
    %782 = vector.extract_strided_slice %71 {offsets = [0, 44], sizes = [2, 1], strides = [1, 1]} : vector<2x49xf32> to vector<2x1xf32>
    %783 = vector.broadcast %781 : vector<1x256xf32> to vector<2x256xf32>
    %784 = vector.broadcast %782 : vector<2x1xf32> to vector<2x256xf32>
    %785 = arith.mulf %783, %784 : vector<2x256xf32>
    %786 = arith.addf %780, %785 : vector<2x256xf32>
    %787 = arith.addf %774, %786 : vector<2x256xf32>
    %cst_170 = arith.constant 0.000000e+00 : f32
    %788 = vector.shape_cast %42 : vector<1x256xi1> to vector<1x256xi1>
    %789 = vector.broadcast %788 : vector<1x256xi1> to vector<2x256xi1>
    %790 = vector.broadcast %cst_170 : f32 to vector<2x256xf32>
    %791 = arith.select %789, %787, %790 : vector<2x256xi1>, vector<2x256xf32>
    %792 = arith.addf %697, %791 : vector<2x256xf32>
    %c0_171 = arith.constant 0 : index
    %c80 = arith.constant 80 : index
    %793 = vector.load %arg18[%c0_171, %c80] : memref<2x512xf32, #tpu.memory_space<vmem>>, vector<2x256xf32>
    %794 = vector.extract_strided_slice %793 {offsets = [0, 0], sizes = [1, 256], strides = [1, 1]} : vector<2x256xf32> to vector<1x256xf32>
    %795 = vector.extract_strided_slice %70 {offsets = [0, 3], sizes = [2, 1], strides = [1, 1]} : vector<2x49xf32> to vector<2x1xf32>
    %796 = vector.broadcast %794 : vector<1x256xf32> to vector<2x256xf32>
    %797 = vector.broadcast %795 : vector<2x1xf32> to vector<2x256xf32>
    %798 = arith.mulf %796, %797 : vector<2x256xf32>
    %799 = vector.extract_strided_slice %793 {offsets = [1, 0], sizes = [1, 256], strides = [1, 1]} : vector<2x256xf32> to vector<1x256xf32>
    %800 = vector.extract_strided_slice %71 {offsets = [0, 3], sizes = [2, 1], strides = [1, 1]} : vector<2x49xf32> to vector<2x1xf32>
    %801 = vector.broadcast %799 : vector<1x256xf32> to vector<2x256xf32>
    %802 = vector.broadcast %800 : vector<2x1xf32> to vector<2x256xf32>
    %803 = arith.mulf %801, %802 : vector<2x256xf32>
    %804 = arith.addf %798, %803 : vector<2x256xf32>
    %c0_172 = arith.constant 0 : index
    %c96_173 = arith.constant 96 : index
    %805 = vector.load %arg18[%c0_172, %c96_173] : memref<2x512xf32, #tpu.memory_space<vmem>>, vector<2x256xf32>
    %806 = vector.extract_strided_slice %805 {offsets = [0, 0], sizes = [1, 256], strides = [1, 1]} : vector<2x256xf32> to vector<1x256xf32>
    %807 = vector.extract_strided_slice %70 {offsets = [0, 10], sizes = [2, 1], strides = [1, 1]} : vector<2x49xf32> to vector<2x1xf32>
    %808 = vector.broadcast %806 : vector<1x256xf32> to vector<2x256xf32>
    %809 = vector.broadcast %807 : vector<2x1xf32> to vector<2x256xf32>
    %810 = arith.mulf %808, %809 : vector<2x256xf32>
    %811 = vector.extract_strided_slice %805 {offsets = [1, 0], sizes = [1, 256], strides = [1, 1]} : vector<2x256xf32> to vector<1x256xf32>
    %812 = vector.extract_strided_slice %71 {offsets = [0, 10], sizes = [2, 1], strides = [1, 1]} : vector<2x49xf32> to vector<2x1xf32>
    %813 = vector.broadcast %811 : vector<1x256xf32> to vector<2x256xf32>
    %814 = vector.broadcast %812 : vector<2x1xf32> to vector<2x256xf32>
    %815 = arith.mulf %813, %814 : vector<2x256xf32>
    %816 = arith.addf %810, %815 : vector<2x256xf32>
    %817 = arith.addf %804, %816 : vector<2x256xf32>
    %c0_174 = arith.constant 0 : index
    %c112_175 = arith.constant 112 : index
    %818 = vector.load %arg18[%c0_174, %c112_175] : memref<2x512xf32, #tpu.memory_space<vmem>>, vector<2x256xf32>
    %819 = vector.extract_strided_slice %818 {offsets = [0, 0], sizes = [1, 256], strides = [1, 1]} : vector<2x256xf32> to vector<1x256xf32>
    %820 = vector.extract_strided_slice %70 {offsets = [0, 17], sizes = [2, 1], strides = [1, 1]} : vector<2x49xf32> to vector<2x1xf32>
    %821 = vector.broadcast %819 : vector<1x256xf32> to vector<2x256xf32>
    %822 = vector.broadcast %820 : vector<2x1xf32> to vector<2x256xf32>
    %823 = arith.mulf %821, %822 : vector<2x256xf32>
    %824 = vector.extract_strided_slice %818 {offsets = [1, 0], sizes = [1, 256], strides = [1, 1]} : vector<2x256xf32> to vector<1x256xf32>
    %825 = vector.extract_strided_slice %71 {offsets = [0, 17], sizes = [2, 1], strides = [1, 1]} : vector<2x49xf32> to vector<2x1xf32>
    %826 = vector.broadcast %824 : vector<1x256xf32> to vector<2x256xf32>
    %827 = vector.broadcast %825 : vector<2x1xf32> to vector<2x256xf32>
    %828 = arith.mulf %826, %827 : vector<2x256xf32>
    %829 = arith.addf %823, %828 : vector<2x256xf32>
    %830 = arith.addf %817, %829 : vector<2x256xf32>
    %c0_176 = arith.constant 0 : index
    %c128_177 = arith.constant 128 : index
    %831 = vector.load %arg18[%c0_176, %c128_177] : memref<2x512xf32, #tpu.memory_space<vmem>>, vector<2x256xf32>
    %832 = vector.extract_strided_slice %831 {offsets = [0, 0], sizes = [1, 256], strides = [1, 1]} : vector<2x256xf32> to vector<1x256xf32>
    %833 = vector.extract_strided_slice %70 {offsets = [0, 24], sizes = [2, 1], strides = [1, 1]} : vector<2x49xf32> to vector<2x1xf32>
    %834 = vector.broadcast %832 : vector<1x256xf32> to vector<2x256xf32>
    %835 = vector.broadcast %833 : vector<2x1xf32> to vector<2x256xf32>
    %836 = arith.mulf %834, %835 : vector<2x256xf32>
    %837 = vector.extract_strided_slice %831 {offsets = [1, 0], sizes = [1, 256], strides = [1, 1]} : vector<2x256xf32> to vector<1x256xf32>
    %838 = vector.extract_strided_slice %71 {offsets = [0, 24], sizes = [2, 1], strides = [1, 1]} : vector<2x49xf32> to vector<2x1xf32>
    %839 = vector.broadcast %837 : vector<1x256xf32> to vector<2x256xf32>
    %840 = vector.broadcast %838 : vector<2x1xf32> to vector<2x256xf32>
    %841 = arith.mulf %839, %840 : vector<2x256xf32>
    %842 = arith.addf %836, %841 : vector<2x256xf32>
    %843 = arith.addf %830, %842 : vector<2x256xf32>
    %c0_178 = arith.constant 0 : index
    %c144_179 = arith.constant 144 : index
    %844 = vector.load %arg18[%c0_178, %c144_179] : memref<2x512xf32, #tpu.memory_space<vmem>>, vector<2x256xf32>
    %845 = vector.extract_strided_slice %844 {offsets = [0, 0], sizes = [1, 256], strides = [1, 1]} : vector<2x256xf32> to vector<1x256xf32>
    %846 = vector.extract_strided_slice %70 {offsets = [0, 31], sizes = [2, 1], strides = [1, 1]} : vector<2x49xf32> to vector<2x1xf32>
    %847 = vector.broadcast %845 : vector<1x256xf32> to vector<2x256xf32>
    %848 = vector.broadcast %846 : vector<2x1xf32> to vector<2x256xf32>
    %849 = arith.mulf %847, %848 : vector<2x256xf32>
    %850 = vector.extract_strided_slice %844 {offsets = [1, 0], sizes = [1, 256], strides = [1, 1]} : vector<2x256xf32> to vector<1x256xf32>
    %851 = vector.extract_strided_slice %71 {offsets = [0, 31], sizes = [2, 1], strides = [1, 1]} : vector<2x49xf32> to vector<2x1xf32>
    %852 = vector.broadcast %850 : vector<1x256xf32> to vector<2x256xf32>
    %853 = vector.broadcast %851 : vector<2x1xf32> to vector<2x256xf32>
    %854 = arith.mulf %852, %853 : vector<2x256xf32>
    %855 = arith.addf %849, %854 : vector<2x256xf32>
    %856 = arith.addf %843, %855 : vector<2x256xf32>
    %c0_180 = arith.constant 0 : index
    %c160_181 = arith.constant 160 : index
    %857 = vector.load %arg18[%c0_180, %c160_181] : memref<2x512xf32, #tpu.memory_space<vmem>>, vector<2x256xf32>
    %858 = vector.extract_strided_slice %857 {offsets = [0, 0], sizes = [1, 256], strides = [1, 1]} : vector<2x256xf32> to vector<1x256xf32>
    %859 = vector.extract_strided_slice %70 {offsets = [0, 38], sizes = [2, 1], strides = [1, 1]} : vector<2x49xf32> to vector<2x1xf32>
    %860 = vector.broadcast %858 : vector<1x256xf32> to vector<2x256xf32>
    %861 = vector.broadcast %859 : vector<2x1xf32> to vector<2x256xf32>
    %862 = arith.mulf %860, %861 : vector<2x256xf32>
    %863 = vector.extract_strided_slice %857 {offsets = [1, 0], sizes = [1, 256], strides = [1, 1]} : vector<2x256xf32> to vector<1x256xf32>
    %864 = vector.extract_strided_slice %71 {offsets = [0, 38], sizes = [2, 1], strides = [1, 1]} : vector<2x49xf32> to vector<2x1xf32>
    %865 = vector.broadcast %863 : vector<1x256xf32> to vector<2x256xf32>
    %866 = vector.broadcast %864 : vector<2x1xf32> to vector<2x256xf32>
    %867 = arith.mulf %865, %866 : vector<2x256xf32>
    %868 = arith.addf %862, %867 : vector<2x256xf32>
    %869 = arith.addf %856, %868 : vector<2x256xf32>
    %c0_182 = arith.constant 0 : index
    %c176 = arith.constant 176 : index
    %870 = vector.load %arg18[%c0_182, %c176] : memref<2x512xf32, #tpu.memory_space<vmem>>, vector<2x256xf32>
    %871 = vector.extract_strided_slice %870 {offsets = [0, 0], sizes = [1, 256], strides = [1, 1]} : vector<2x256xf32> to vector<1x256xf32>
    %872 = vector.extract_strided_slice %70 {offsets = [0, 45], sizes = [2, 1], strides = [1, 1]} : vector<2x49xf32> to vector<2x1xf32>
    %873 = vector.broadcast %871 : vector<1x256xf32> to vector<2x256xf32>
    %874 = vector.broadcast %872 : vector<2x1xf32> to vector<2x256xf32>
    %875 = arith.mulf %873, %874 : vector<2x256xf32>
    %876 = vector.extract_strided_slice %870 {offsets = [1, 0], sizes = [1, 256], strides = [1, 1]} : vector<2x256xf32> to vector<1x256xf32>
    %877 = vector.extract_strided_slice %71 {offsets = [0, 45], sizes = [2, 1], strides = [1, 1]} : vector<2x49xf32> to vector<2x1xf32>
    %878 = vector.broadcast %876 : vector<1x256xf32> to vector<2x256xf32>
    %879 = vector.broadcast %877 : vector<2x1xf32> to vector<2x256xf32>
    %880 = arith.mulf %878, %879 : vector<2x256xf32>
    %881 = arith.addf %875, %880 : vector<2x256xf32>
    %882 = arith.addf %869, %881 : vector<2x256xf32>
    %883 = arith.addf %792, %882 : vector<2x256xf32>
    %c0_183 = arith.constant 0 : index
    %c81 = arith.constant 81 : index
    %884 = vector.load %arg18[%c0_183, %c81] : memref<2x512xf32, #tpu.memory_space<vmem>>, vector<2x256xf32>
    %885 = vector.extract_strided_slice %884 {offsets = [0, 0], sizes = [1, 256], strides = [1, 1]} : vector<2x256xf32> to vector<1x256xf32>
    %886 = vector.extract_strided_slice %70 {offsets = [0, 4], sizes = [2, 1], strides = [1, 1]} : vector<2x49xf32> to vector<2x1xf32>
    %887 = vector.broadcast %885 : vector<1x256xf32> to vector<2x256xf32>
    %888 = vector.broadcast %886 : vector<2x1xf32> to vector<2x256xf32>
    %889 = arith.mulf %887, %888 : vector<2x256xf32>
    %890 = vector.extract_strided_slice %884 {offsets = [1, 0], sizes = [1, 256], strides = [1, 1]} : vector<2x256xf32> to vector<1x256xf32>
    %891 = vector.extract_strided_slice %71 {offsets = [0, 4], sizes = [2, 1], strides = [1, 1]} : vector<2x49xf32> to vector<2x1xf32>
    %892 = vector.broadcast %890 : vector<1x256xf32> to vector<2x256xf32>
    %893 = vector.broadcast %891 : vector<2x1xf32> to vector<2x256xf32>
    %894 = arith.mulf %892, %893 : vector<2x256xf32>
    %895 = arith.addf %889, %894 : vector<2x256xf32>
    %c0_184 = arith.constant 0 : index
    %c97_185 = arith.constant 97 : index
    %896 = vector.load %arg18[%c0_184, %c97_185] : memref<2x512xf32, #tpu.memory_space<vmem>>, vector<2x256xf32>
    %897 = vector.extract_strided_slice %896 {offsets = [0, 0], sizes = [1, 256], strides = [1, 1]} : vector<2x256xf32> to vector<1x256xf32>
    %898 = vector.extract_strided_slice %70 {offsets = [0, 11], sizes = [2, 1], strides = [1, 1]} : vector<2x49xf32> to vector<2x1xf32>
    %899 = vector.broadcast %897 : vector<1x256xf32> to vector<2x256xf32>
    %900 = vector.broadcast %898 : vector<2x1xf32> to vector<2x256xf32>
    %901 = arith.mulf %899, %900 : vector<2x256xf32>
    %902 = vector.extract_strided_slice %896 {offsets = [1, 0], sizes = [1, 256], strides = [1, 1]} : vector<2x256xf32> to vector<1x256xf32>
    %903 = vector.extract_strided_slice %71 {offsets = [0, 11], sizes = [2, 1], strides = [1, 1]} : vector<2x49xf32> to vector<2x1xf32>
    %904 = vector.broadcast %902 : vector<1x256xf32> to vector<2x256xf32>
    %905 = vector.broadcast %903 : vector<2x1xf32> to vector<2x256xf32>
    %906 = arith.mulf %904, %905 : vector<2x256xf32>
    %907 = arith.addf %901, %906 : vector<2x256xf32>
    %908 = arith.addf %895, %907 : vector<2x256xf32>
    %c0_186 = arith.constant 0 : index
    %c113_187 = arith.constant 113 : index
    %909 = vector.load %arg18[%c0_186, %c113_187] : memref<2x512xf32, #tpu.memory_space<vmem>>, vector<2x256xf32>
    %910 = vector.extract_strided_slice %909 {offsets = [0, 0], sizes = [1, 256], strides = [1, 1]} : vector<2x256xf32> to vector<1x256xf32>
    %911 = vector.extract_strided_slice %70 {offsets = [0, 18], sizes = [2, 1], strides = [1, 1]} : vector<2x49xf32> to vector<2x1xf32>
    %912 = vector.broadcast %910 : vector<1x256xf32> to vector<2x256xf32>
    %913 = vector.broadcast %911 : vector<2x1xf32> to vector<2x256xf32>
    %914 = arith.mulf %912, %913 : vector<2x256xf32>
    %915 = vector.extract_strided_slice %909 {offsets = [1, 0], sizes = [1, 256], strides = [1, 1]} : vector<2x256xf32> to vector<1x256xf32>
    %916 = vector.extract_strided_slice %71 {offsets = [0, 18], sizes = [2, 1], strides = [1, 1]} : vector<2x49xf32> to vector<2x1xf32>
    %917 = vector.broadcast %915 : vector<1x256xf32> to vector<2x256xf32>
    %918 = vector.broadcast %916 : vector<2x1xf32> to vector<2x256xf32>
    %919 = arith.mulf %917, %918 : vector<2x256xf32>
    %920 = arith.addf %914, %919 : vector<2x256xf32>
    %921 = arith.addf %908, %920 : vector<2x256xf32>
    %c0_188 = arith.constant 0 : index
    %c129_189 = arith.constant 129 : index
    %922 = vector.load %arg18[%c0_188, %c129_189] : memref<2x512xf32, #tpu.memory_space<vmem>>, vector<2x256xf32>
    %923 = vector.extract_strided_slice %922 {offsets = [0, 0], sizes = [1, 256], strides = [1, 1]} : vector<2x256xf32> to vector<1x256xf32>
    %924 = vector.extract_strided_slice %70 {offsets = [0, 25], sizes = [2, 1], strides = [1, 1]} : vector<2x49xf32> to vector<2x1xf32>
    %925 = vector.broadcast %923 : vector<1x256xf32> to vector<2x256xf32>
    %926 = vector.broadcast %924 : vector<2x1xf32> to vector<2x256xf32>
    %927 = arith.mulf %925, %926 : vector<2x256xf32>
    %928 = vector.extract_strided_slice %922 {offsets = [1, 0], sizes = [1, 256], strides = [1, 1]} : vector<2x256xf32> to vector<1x256xf32>
    %929 = vector.extract_strided_slice %71 {offsets = [0, 25], sizes = [2, 1], strides = [1, 1]} : vector<2x49xf32> to vector<2x1xf32>
    %930 = vector.broadcast %928 : vector<1x256xf32> to vector<2x256xf32>
    %931 = vector.broadcast %929 : vector<2x1xf32> to vector<2x256xf32>
    %932 = arith.mulf %930, %931 : vector<2x256xf32>
    %933 = arith.addf %927, %932 : vector<2x256xf32>
    %934 = arith.addf %921, %933 : vector<2x256xf32>
    %c0_190 = arith.constant 0 : index
    %c145_191 = arith.constant 145 : index
    %935 = vector.load %arg18[%c0_190, %c145_191] : memref<2x512xf32, #tpu.memory_space<vmem>>, vector<2x256xf32>
    %936 = vector.extract_strided_slice %935 {offsets = [0, 0], sizes = [1, 256], strides = [1, 1]} : vector<2x256xf32> to vector<1x256xf32>
    %937 = vector.extract_strided_slice %70 {offsets = [0, 32], sizes = [2, 1], strides = [1, 1]} : vector<2x49xf32> to vector<2x1xf32>
    %938 = vector.broadcast %936 : vector<1x256xf32> to vector<2x256xf32>
    %939 = vector.broadcast %937 : vector<2x1xf32> to vector<2x256xf32>
    %940 = arith.mulf %938, %939 : vector<2x256xf32>
    %941 = vector.extract_strided_slice %935 {offsets = [1, 0], sizes = [1, 256], strides = [1, 1]} : vector<2x256xf32> to vector<1x256xf32>
    %942 = vector.extract_strided_slice %71 {offsets = [0, 32], sizes = [2, 1], strides = [1, 1]} : vector<2x49xf32> to vector<2x1xf32>
    %943 = vector.broadcast %941 : vector<1x256xf32> to vector<2x256xf32>
    %944 = vector.broadcast %942 : vector<2x1xf32> to vector<2x256xf32>
    %945 = arith.mulf %943, %944 : vector<2x256xf32>
    %946 = arith.addf %940, %945 : vector<2x256xf32>
    %947 = arith.addf %934, %946 : vector<2x256xf32>
    %c0_192 = arith.constant 0 : index
    %c161_193 = arith.constant 161 : index
    %948 = vector.load %arg18[%c0_192, %c161_193] : memref<2x512xf32, #tpu.memory_space<vmem>>, vector<2x256xf32>
    %949 = vector.extract_strided_slice %948 {offsets = [0, 0], sizes = [1, 256], strides = [1, 1]} : vector<2x256xf32> to vector<1x256xf32>
    %950 = vector.extract_strided_slice %70 {offsets = [0, 39], sizes = [2, 1], strides = [1, 1]} : vector<2x49xf32> to vector<2x1xf32>
    %951 = vector.broadcast %949 : vector<1x256xf32> to vector<2x256xf32>
    %952 = vector.broadcast %950 : vector<2x1xf32> to vector<2x256xf32>
    %953 = arith.mulf %951, %952 : vector<2x256xf32>
    %954 = vector.extract_strided_slice %948 {offsets = [1, 0], sizes = [1, 256], strides = [1, 1]} : vector<2x256xf32> to vector<1x256xf32>
    %955 = vector.extract_strided_slice %71 {offsets = [0, 39], sizes = [2, 1], strides = [1, 1]} : vector<2x49xf32> to vector<2x1xf32>
    %956 = vector.broadcast %954 : vector<1x256xf32> to vector<2x256xf32>
    %957 = vector.broadcast %955 : vector<2x1xf32> to vector<2x256xf32>
    %958 = arith.mulf %956, %957 : vector<2x256xf32>
    %959 = arith.addf %953, %958 : vector<2x256xf32>
    %960 = arith.addf %947, %959 : vector<2x256xf32>
    %c0_194 = arith.constant 0 : index
    %c177 = arith.constant 177 : index
    %961 = vector.load %arg18[%c0_194, %c177] : memref<2x512xf32, #tpu.memory_space<vmem>>, vector<2x256xf32>
    %962 = vector.extract_strided_slice %961 {offsets = [0, 0], sizes = [1, 256], strides = [1, 1]} : vector<2x256xf32> to vector<1x256xf32>
    %963 = vector.extract_strided_slice %70 {offsets = [0, 46], sizes = [2, 1], strides = [1, 1]} : vector<2x49xf32> to vector<2x1xf32>
    %964 = vector.broadcast %962 : vector<1x256xf32> to vector<2x256xf32>
    %965 = vector.broadcast %963 : vector<2x1xf32> to vector<2x256xf32>
    %966 = arith.mulf %964, %965 : vector<2x256xf32>
    %967 = vector.extract_strided_slice %961 {offsets = [1, 0], sizes = [1, 256], strides = [1, 1]} : vector<2x256xf32> to vector<1x256xf32>
    %968 = vector.extract_strided_slice %71 {offsets = [0, 46], sizes = [2, 1], strides = [1, 1]} : vector<2x49xf32> to vector<2x1xf32>
    %969 = vector.broadcast %967 : vector<1x256xf32> to vector<2x256xf32>
    %970 = vector.broadcast %968 : vector<2x1xf32> to vector<2x256xf32>
    %971 = arith.mulf %969, %970 : vector<2x256xf32>
    %972 = arith.addf %966, %971 : vector<2x256xf32>
    %973 = arith.addf %960, %972 : vector<2x256xf32>
    %cst_195 = arith.constant 0.000000e+00 : f32
    %974 = vector.shape_cast %47 : vector<1x256xi1> to vector<1x256xi1>
    %975 = vector.broadcast %974 : vector<1x256xi1> to vector<2x256xi1>
    %976 = vector.broadcast %cst_195 : f32 to vector<2x256xf32>
    %977 = arith.select %975, %973, %976 : vector<2x256xi1>, vector<2x256xf32>
    %978 = arith.addf %883, %977 : vector<2x256xf32>
    %c0_196 = arith.constant 0 : index
    %c82 = arith.constant 82 : index
    %979 = vector.load %arg18[%c0_196, %c82] : memref<2x512xf32, #tpu.memory_space<vmem>>, vector<2x256xf32>
    %980 = vector.extract_strided_slice %979 {offsets = [0, 0], sizes = [1, 256], strides = [1, 1]} : vector<2x256xf32> to vector<1x256xf32>
    %981 = vector.extract_strided_slice %70 {offsets = [0, 5], sizes = [2, 1], strides = [1, 1]} : vector<2x49xf32> to vector<2x1xf32>
    %982 = vector.broadcast %980 : vector<1x256xf32> to vector<2x256xf32>
    %983 = vector.broadcast %981 : vector<2x1xf32> to vector<2x256xf32>
    %984 = arith.mulf %982, %983 : vector<2x256xf32>
    %985 = vector.extract_strided_slice %979 {offsets = [1, 0], sizes = [1, 256], strides = [1, 1]} : vector<2x256xf32> to vector<1x256xf32>
    %986 = vector.extract_strided_slice %71 {offsets = [0, 5], sizes = [2, 1], strides = [1, 1]} : vector<2x49xf32> to vector<2x1xf32>
    %987 = vector.broadcast %985 : vector<1x256xf32> to vector<2x256xf32>
    %988 = vector.broadcast %986 : vector<2x1xf32> to vector<2x256xf32>
    %989 = arith.mulf %987, %988 : vector<2x256xf32>
    %990 = arith.addf %984, %989 : vector<2x256xf32>
    %c0_197 = arith.constant 0 : index
    %c98_198 = arith.constant 98 : index
    %991 = vector.load %arg18[%c0_197, %c98_198] : memref<2x512xf32, #tpu.memory_space<vmem>>, vector<2x256xf32>
    %992 = vector.extract_strided_slice %991 {offsets = [0, 0], sizes = [1, 256], strides = [1, 1]} : vector<2x256xf32> to vector<1x256xf32>
    %993 = vector.extract_strided_slice %70 {offsets = [0, 12], sizes = [2, 1], strides = [1, 1]} : vector<2x49xf32> to vector<2x1xf32>
    %994 = vector.broadcast %992 : vector<1x256xf32> to vector<2x256xf32>
    %995 = vector.broadcast %993 : vector<2x1xf32> to vector<2x256xf32>
    %996 = arith.mulf %994, %995 : vector<2x256xf32>
    %997 = vector.extract_strided_slice %991 {offsets = [1, 0], sizes = [1, 256], strides = [1, 1]} : vector<2x256xf32> to vector<1x256xf32>
    %998 = vector.extract_strided_slice %71 {offsets = [0, 12], sizes = [2, 1], strides = [1, 1]} : vector<2x49xf32> to vector<2x1xf32>
    %999 = vector.broadcast %997 : vector<1x256xf32> to vector<2x256xf32>
    %1000 = vector.broadcast %998 : vector<2x1xf32> to vector<2x256xf32>
    %1001 = arith.mulf %999, %1000 : vector<2x256xf32>
    %1002 = arith.addf %996, %1001 : vector<2x256xf32>
    %1003 = arith.addf %990, %1002 : vector<2x256xf32>
    %c0_199 = arith.constant 0 : index
    %c114_200 = arith.constant 114 : index
    %1004 = vector.load %arg18[%c0_199, %c114_200] : memref<2x512xf32, #tpu.memory_space<vmem>>, vector<2x256xf32>
    %1005 = vector.extract_strided_slice %1004 {offsets = [0, 0], sizes = [1, 256], strides = [1, 1]} : vector<2x256xf32> to vector<1x256xf32>
    %1006 = vector.extract_strided_slice %70 {offsets = [0, 19], sizes = [2, 1], strides = [1, 1]} : vector<2x49xf32> to vector<2x1xf32>
    %1007 = vector.broadcast %1005 : vector<1x256xf32> to vector<2x256xf32>
    %1008 = vector.broadcast %1006 : vector<2x1xf32> to vector<2x256xf32>
    %1009 = arith.mulf %1007, %1008 : vector<2x256xf32>
    %1010 = vector.extract_strided_slice %1004 {offsets = [1, 0], sizes = [1, 256], strides = [1, 1]} : vector<2x256xf32> to vector<1x256xf32>
    %1011 = vector.extract_strided_slice %71 {offsets = [0, 19], sizes = [2, 1], strides = [1, 1]} : vector<2x49xf32> to vector<2x1xf32>
    %1012 = vector.broadcast %1010 : vector<1x256xf32> to vector<2x256xf32>
    %1013 = vector.broadcast %1011 : vector<2x1xf32> to vector<2x256xf32>
    %1014 = arith.mulf %1012, %1013 : vector<2x256xf32>
    %1015 = arith.addf %1009, %1014 : vector<2x256xf32>
    %1016 = arith.addf %1003, %1015 : vector<2x256xf32>
    %c0_201 = arith.constant 0 : index
    %c130_202 = arith.constant 130 : index
    %1017 = vector.load %arg18[%c0_201, %c130_202] : memref<2x512xf32, #tpu.memory_space<vmem>>, vector<2x256xf32>
    %1018 = vector.extract_strided_slice %1017 {offsets = [0, 0], sizes = [1, 256], strides = [1, 1]} : vector<2x256xf32> to vector<1x256xf32>
    %1019 = vector.extract_strided_slice %70 {offsets = [0, 26], sizes = [2, 1], strides = [1, 1]} : vector<2x49xf32> to vector<2x1xf32>
    %1020 = vector.broadcast %1018 : vector<1x256xf32> to vector<2x256xf32>
    %1021 = vector.broadcast %1019 : vector<2x1xf32> to vector<2x256xf32>
    %1022 = arith.mulf %1020, %1021 : vector<2x256xf32>
    %1023 = vector.extract_strided_slice %1017 {offsets = [1, 0], sizes = [1, 256], strides = [1, 1]} : vector<2x256xf32> to vector<1x256xf32>
    %1024 = vector.extract_strided_slice %71 {offsets = [0, 26], sizes = [2, 1], strides = [1, 1]} : vector<2x49xf32> to vector<2x1xf32>
    %1025 = vector.broadcast %1023 : vector<1x256xf32> to vector<2x256xf32>
    %1026 = vector.broadcast %1024 : vector<2x1xf32> to vector<2x256xf32>
    %1027 = arith.mulf %1025, %1026 : vector<2x256xf32>
    %1028 = arith.addf %1022, %1027 : vector<2x256xf32>
    %1029 = arith.addf %1016, %1028 : vector<2x256xf32>
    %c0_203 = arith.constant 0 : index
    %c146_204 = arith.constant 146 : index
    %1030 = vector.load %arg18[%c0_203, %c146_204] : memref<2x512xf32, #tpu.memory_space<vmem>>, vector<2x256xf32>
    %1031 = vector.extract_strided_slice %1030 {offsets = [0, 0], sizes = [1, 256], strides = [1, 1]} : vector<2x256xf32> to vector<1x256xf32>
    %1032 = vector.extract_strided_slice %70 {offsets = [0, 33], sizes = [2, 1], strides = [1, 1]} : vector<2x49xf32> to vector<2x1xf32>
    %1033 = vector.broadcast %1031 : vector<1x256xf32> to vector<2x256xf32>
    %1034 = vector.broadcast %1032 : vector<2x1xf32> to vector<2x256xf32>
    %1035 = arith.mulf %1033, %1034 : vector<2x256xf32>
    %1036 = vector.extract_strided_slice %1030 {offsets = [1, 0], sizes = [1, 256], strides = [1, 1]} : vector<2x256xf32> to vector<1x256xf32>
    %1037 = vector.extract_strided_slice %71 {offsets = [0, 33], sizes = [2, 1], strides = [1, 1]} : vector<2x49xf32> to vector<2x1xf32>
    %1038 = vector.broadcast %1036 : vector<1x256xf32> to vector<2x256xf32>
    %1039 = vector.broadcast %1037 : vector<2x1xf32> to vector<2x256xf32>
    %1040 = arith.mulf %1038, %1039 : vector<2x256xf32>
    %1041 = arith.addf %1035, %1040 : vector<2x256xf32>
    %1042 = arith.addf %1029, %1041 : vector<2x256xf32>
    %c0_205 = arith.constant 0 : index
    %c162_206 = arith.constant 162 : index
    %1043 = vector.load %arg18[%c0_205, %c162_206] : memref<2x512xf32, #tpu.memory_space<vmem>>, vector<2x256xf32>
    %1044 = vector.extract_strided_slice %1043 {offsets = [0, 0], sizes = [1, 256], strides = [1, 1]} : vector<2x256xf32> to vector<1x256xf32>
    %1045 = vector.extract_strided_slice %70 {offsets = [0, 40], sizes = [2, 1], strides = [1, 1]} : vector<2x49xf32> to vector<2x1xf32>
    %1046 = vector.broadcast %1044 : vector<1x256xf32> to vector<2x256xf32>
    %1047 = vector.broadcast %1045 : vector<2x1xf32> to vector<2x256xf32>
    %1048 = arith.mulf %1046, %1047 : vector<2x256xf32>
    %1049 = vector.extract_strided_slice %1043 {offsets = [1, 0], sizes = [1, 256], strides = [1, 1]} : vector<2x256xf32> to vector<1x256xf32>
    %1050 = vector.extract_strided_slice %71 {offsets = [0, 40], sizes = [2, 1], strides = [1, 1]} : vector<2x49xf32> to vector<2x1xf32>
    %1051 = vector.broadcast %1049 : vector<1x256xf32> to vector<2x256xf32>
    %1052 = vector.broadcast %1050 : vector<2x1xf32> to vector<2x256xf32>
    %1053 = arith.mulf %1051, %1052 : vector<2x256xf32>
    %1054 = arith.addf %1048, %1053 : vector<2x256xf32>
    %1055 = arith.addf %1042, %1054 : vector<2x256xf32>
    %c0_207 = arith.constant 0 : index
    %c178 = arith.constant 178 : index
    %1056 = vector.load %arg18[%c0_207, %c178] : memref<2x512xf32, #tpu.memory_space<vmem>>, vector<2x256xf32>
    %1057 = vector.extract_strided_slice %1056 {offsets = [0, 0], sizes = [1, 256], strides = [1, 1]} : vector<2x256xf32> to vector<1x256xf32>
    %1058 = vector.extract_strided_slice %70 {offsets = [0, 47], sizes = [2, 1], strides = [1, 1]} : vector<2x49xf32> to vector<2x1xf32>
    %1059 = vector.broadcast %1057 : vector<1x256xf32> to vector<2x256xf32>
    %1060 = vector.broadcast %1058 : vector<2x1xf32> to vector<2x256xf32>
    %1061 = arith.mulf %1059, %1060 : vector<2x256xf32>
    %1062 = vector.extract_strided_slice %1056 {offsets = [1, 0], sizes = [1, 256], strides = [1, 1]} : vector<2x256xf32> to vector<1x256xf32>
    %1063 = vector.extract_strided_slice %71 {offsets = [0, 47], sizes = [2, 1], strides = [1, 1]} : vector<2x49xf32> to vector<2x1xf32>
    %1064 = vector.broadcast %1062 : vector<1x256xf32> to vector<2x256xf32>
    %1065 = vector.broadcast %1063 : vector<2x1xf32> to vector<2x256xf32>
    %1066 = arith.mulf %1064, %1065 : vector<2x256xf32>
    %1067 = arith.addf %1061, %1066 : vector<2x256xf32>
    %1068 = arith.addf %1055, %1067 : vector<2x256xf32>
    %cst_208 = arith.constant 0.000000e+00 : f32
    %1069 = vector.shape_cast %52 : vector<1x256xi1> to vector<1x256xi1>
    %1070 = vector.broadcast %1069 : vector<1x256xi1> to vector<2x256xi1>
    %1071 = vector.broadcast %cst_208 : f32 to vector<2x256xf32>
    %1072 = arith.select %1070, %1068, %1071 : vector<2x256xi1>, vector<2x256xf32>
    %1073 = arith.addf %978, %1072 : vector<2x256xf32>
    %c0_209 = arith.constant 0 : index
    %c83 = arith.constant 83 : index
    %1074 = vector.load %arg18[%c0_209, %c83] : memref<2x512xf32, #tpu.memory_space<vmem>>, vector<2x256xf32>
    %1075 = vector.extract_strided_slice %1074 {offsets = [0, 0], sizes = [1, 256], strides = [1, 1]} : vector<2x256xf32> to vector<1x256xf32>
    %1076 = vector.extract_strided_slice %70 {offsets = [0, 6], sizes = [2, 1], strides = [1, 1]} : vector<2x49xf32> to vector<2x1xf32>
    %1077 = vector.broadcast %1075 : vector<1x256xf32> to vector<2x256xf32>
    %1078 = vector.broadcast %1076 : vector<2x1xf32> to vector<2x256xf32>
    %1079 = arith.mulf %1077, %1078 : vector<2x256xf32>
    %1080 = vector.extract_strided_slice %1074 {offsets = [1, 0], sizes = [1, 256], strides = [1, 1]} : vector<2x256xf32> to vector<1x256xf32>
    %1081 = vector.extract_strided_slice %71 {offsets = [0, 6], sizes = [2, 1], strides = [1, 1]} : vector<2x49xf32> to vector<2x1xf32>
    %1082 = vector.broadcast %1080 : vector<1x256xf32> to vector<2x256xf32>
    %1083 = vector.broadcast %1081 : vector<2x1xf32> to vector<2x256xf32>
    %1084 = arith.mulf %1082, %1083 : vector<2x256xf32>
    %1085 = arith.addf %1079, %1084 : vector<2x256xf32>
    %c0_210 = arith.constant 0 : index
    %c99 = arith.constant 99 : index
    %1086 = vector.load %arg18[%c0_210, %c99] : memref<2x512xf32, #tpu.memory_space<vmem>>, vector<2x256xf32>
    %1087 = vector.extract_strided_slice %1086 {offsets = [0, 0], sizes = [1, 256], strides = [1, 1]} : vector<2x256xf32> to vector<1x256xf32>
    %1088 = vector.extract_strided_slice %70 {offsets = [0, 13], sizes = [2, 1], strides = [1, 1]} : vector<2x49xf32> to vector<2x1xf32>
    %1089 = vector.broadcast %1087 : vector<1x256xf32> to vector<2x256xf32>
    %1090 = vector.broadcast %1088 : vector<2x1xf32> to vector<2x256xf32>
    %1091 = arith.mulf %1089, %1090 : vector<2x256xf32>
    %1092 = vector.extract_strided_slice %1086 {offsets = [1, 0], sizes = [1, 256], strides = [1, 1]} : vector<2x256xf32> to vector<1x256xf32>
    %1093 = vector.extract_strided_slice %71 {offsets = [0, 13], sizes = [2, 1], strides = [1, 1]} : vector<2x49xf32> to vector<2x1xf32>
    %1094 = vector.broadcast %1092 : vector<1x256xf32> to vector<2x256xf32>
    %1095 = vector.broadcast %1093 : vector<2x1xf32> to vector<2x256xf32>
    %1096 = arith.mulf %1094, %1095 : vector<2x256xf32>
    %1097 = arith.addf %1091, %1096 : vector<2x256xf32>
    %1098 = arith.addf %1085, %1097 : vector<2x256xf32>
    %c0_211 = arith.constant 0 : index
    %c115_212 = arith.constant 115 : index
    %1099 = vector.load %arg18[%c0_211, %c115_212] : memref<2x512xf32, #tpu.memory_space<vmem>>, vector<2x256xf32>
    %1100 = vector.extract_strided_slice %1099 {offsets = [0, 0], sizes = [1, 256], strides = [1, 1]} : vector<2x256xf32> to vector<1x256xf32>
    %1101 = vector.extract_strided_slice %70 {offsets = [0, 20], sizes = [2, 1], strides = [1, 1]} : vector<2x49xf32> to vector<2x1xf32>
    %1102 = vector.broadcast %1100 : vector<1x256xf32> to vector<2x256xf32>
    %1103 = vector.broadcast %1101 : vector<2x1xf32> to vector<2x256xf32>
    %1104 = arith.mulf %1102, %1103 : vector<2x256xf32>
    %1105 = vector.extract_strided_slice %1099 {offsets = [1, 0], sizes = [1, 256], strides = [1, 1]} : vector<2x256xf32> to vector<1x256xf32>
    %1106 = vector.extract_strided_slice %71 {offsets = [0, 20], sizes = [2, 1], strides = [1, 1]} : vector<2x49xf32> to vector<2x1xf32>
    %1107 = vector.broadcast %1105 : vector<1x256xf32> to vector<2x256xf32>
    %1108 = vector.broadcast %1106 : vector<2x1xf32> to vector<2x256xf32>
    %1109 = arith.mulf %1107, %1108 : vector<2x256xf32>
    %1110 = arith.addf %1104, %1109 : vector<2x256xf32>
    %1111 = arith.addf %1098, %1110 : vector<2x256xf32>
    %c0_213 = arith.constant 0 : index
    %c131 = arith.constant 131 : index
    %1112 = vector.load %arg18[%c0_213, %c131] : memref<2x512xf32, #tpu.memory_space<vmem>>, vector<2x256xf32>
    %1113 = vector.extract_strided_slice %1112 {offsets = [0, 0], sizes = [1, 256], strides = [1, 1]} : vector<2x256xf32> to vector<1x256xf32>
    %1114 = vector.extract_strided_slice %70 {offsets = [0, 27], sizes = [2, 1], strides = [1, 1]} : vector<2x49xf32> to vector<2x1xf32>
    %1115 = vector.broadcast %1113 : vector<1x256xf32> to vector<2x256xf32>
    %1116 = vector.broadcast %1114 : vector<2x1xf32> to vector<2x256xf32>
    %1117 = arith.mulf %1115, %1116 : vector<2x256xf32>
    %1118 = vector.extract_strided_slice %1112 {offsets = [1, 0], sizes = [1, 256], strides = [1, 1]} : vector<2x256xf32> to vector<1x256xf32>
    %1119 = vector.extract_strided_slice %71 {offsets = [0, 27], sizes = [2, 1], strides = [1, 1]} : vector<2x49xf32> to vector<2x1xf32>
    %1120 = vector.broadcast %1118 : vector<1x256xf32> to vector<2x256xf32>
    %1121 = vector.broadcast %1119 : vector<2x1xf32> to vector<2x256xf32>
    %1122 = arith.mulf %1120, %1121 : vector<2x256xf32>
    %1123 = arith.addf %1117, %1122 : vector<2x256xf32>
    %1124 = arith.addf %1111, %1123 : vector<2x256xf32>
    %c0_214 = arith.constant 0 : index
    %c147 = arith.constant 147 : index
    %1125 = vector.load %arg18[%c0_214, %c147] : memref<2x512xf32, #tpu.memory_space<vmem>>, vector<2x256xf32>
    %1126 = vector.extract_strided_slice %1125 {offsets = [0, 0], sizes = [1, 256], strides = [1, 1]} : vector<2x256xf32> to vector<1x256xf32>
    %1127 = vector.extract_strided_slice %70 {offsets = [0, 34], sizes = [2, 1], strides = [1, 1]} : vector<2x49xf32> to vector<2x1xf32>
    %1128 = vector.broadcast %1126 : vector<1x256xf32> to vector<2x256xf32>
    %1129 = vector.broadcast %1127 : vector<2x1xf32> to vector<2x256xf32>
    %1130 = arith.mulf %1128, %1129 : vector<2x256xf32>
    %1131 = vector.extract_strided_slice %1125 {offsets = [1, 0], sizes = [1, 256], strides = [1, 1]} : vector<2x256xf32> to vector<1x256xf32>
    %1132 = vector.extract_strided_slice %71 {offsets = [0, 34], sizes = [2, 1], strides = [1, 1]} : vector<2x49xf32> to vector<2x1xf32>
    %1133 = vector.broadcast %1131 : vector<1x256xf32> to vector<2x256xf32>
    %1134 = vector.broadcast %1132 : vector<2x1xf32> to vector<2x256xf32>
    %1135 = arith.mulf %1133, %1134 : vector<2x256xf32>
    %1136 = arith.addf %1130, %1135 : vector<2x256xf32>
    %1137 = arith.addf %1124, %1136 : vector<2x256xf32>
    %c0_215 = arith.constant 0 : index
    %c163_216 = arith.constant 163 : index
    %1138 = vector.load %arg18[%c0_215, %c163_216] : memref<2x512xf32, #tpu.memory_space<vmem>>, vector<2x256xf32>
    %1139 = vector.extract_strided_slice %1138 {offsets = [0, 0], sizes = [1, 256], strides = [1, 1]} : vector<2x256xf32> to vector<1x256xf32>
    %1140 = vector.extract_strided_slice %70 {offsets = [0, 41], sizes = [2, 1], strides = [1, 1]} : vector<2x49xf32> to vector<2x1xf32>
    %1141 = vector.broadcast %1139 : vector<1x256xf32> to vector<2x256xf32>
    %1142 = vector.broadcast %1140 : vector<2x1xf32> to vector<2x256xf32>
    %1143 = arith.mulf %1141, %1142 : vector<2x256xf32>
    %1144 = vector.extract_strided_slice %1138 {offsets = [1, 0], sizes = [1, 256], strides = [1, 1]} : vector<2x256xf32> to vector<1x256xf32>
    %1145 = vector.extract_strided_slice %71 {offsets = [0, 41], sizes = [2, 1], strides = [1, 1]} : vector<2x49xf32> to vector<2x1xf32>
    %1146 = vector.broadcast %1144 : vector<1x256xf32> to vector<2x256xf32>
    %1147 = vector.broadcast %1145 : vector<2x1xf32> to vector<2x256xf32>
    %1148 = arith.mulf %1146, %1147 : vector<2x256xf32>
    %1149 = arith.addf %1143, %1148 : vector<2x256xf32>
    %1150 = arith.addf %1137, %1149 : vector<2x256xf32>
    %c0_217 = arith.constant 0 : index
    %c179 = arith.constant 179 : index
    %1151 = vector.load %arg18[%c0_217, %c179] : memref<2x512xf32, #tpu.memory_space<vmem>>, vector<2x256xf32>
    %1152 = vector.extract_strided_slice %1151 {offsets = [0, 0], sizes = [1, 256], strides = [1, 1]} : vector<2x256xf32> to vector<1x256xf32>
    %1153 = vector.extract_strided_slice %70 {offsets = [0, 48], sizes = [2, 1], strides = [1, 1]} : vector<2x49xf32> to vector<2x1xf32>
    %1154 = vector.broadcast %1152 : vector<1x256xf32> to vector<2x256xf32>
    %1155 = vector.broadcast %1153 : vector<2x1xf32> to vector<2x256xf32>
    %1156 = arith.mulf %1154, %1155 : vector<2x256xf32>
    %1157 = vector.extract_strided_slice %1151 {offsets = [1, 0], sizes = [1, 256], strides = [1, 1]} : vector<2x256xf32> to vector<1x256xf32>
    %1158 = vector.extract_strided_slice %71 {offsets = [0, 48], sizes = [2, 1], strides = [1, 1]} : vector<2x49xf32> to vector<2x1xf32>
    %1159 = vector.broadcast %1157 : vector<1x256xf32> to vector<2x256xf32>
    %1160 = vector.broadcast %1158 : vector<2x1xf32> to vector<2x256xf32>
    %1161 = arith.mulf %1159, %1160 : vector<2x256xf32>
    %1162 = arith.addf %1156, %1161 : vector<2x256xf32>
    %1163 = arith.addf %1150, %1162 : vector<2x256xf32>
    %cst_218 = arith.constant 0.000000e+00 : f32
    %1164 = vector.shape_cast %57 : vector<1x256xi1> to vector<1x256xi1>
    %1165 = vector.broadcast %1164 : vector<1x256xi1> to vector<2x256xi1>
    %1166 = vector.broadcast %cst_218 : f32 to vector<2x256xf32>
    %1167 = arith.select %1165, %1163, %1166 : vector<2x256xi1>, vector<2x256xf32>
    %1168 = arith.addf %1073, %1167 : vector<2x256xf32>
    %c0_219 = arith.constant 0 : index
    %c0_220 = arith.constant 0 : index
    %1169 = vector.load %arg12[%c0_219, %c0_220] : memref<2x1xf32, #tpu.memory_space<vmem>>, vector<2x1xf32>
    %1170 = vector.broadcast %1169 : vector<2x1xf32> to vector<2x256xf32>
    %1171 = arith.addf %1168, %1170 : vector<2x256xf32>
    %1172 = arith.negf %1171 : vector<2x256xf32>
    %1173 = math.exp %1172 : vector<2x256xf32>
    %cst_221 = arith.constant 1.000000e+00 : f32
    %1174 = vector.broadcast %cst_221 : f32 to vector<2x256xf32>
    %1175 = arith.addf %1174, %1173 : vector<2x256xf32>
    %1176 = arith.divf %1174, %1175 : vector<2x256xf32>
    %1177 = vector.extract_strided_slice %1176 {offsets = [0, 0], sizes = [1, 256], strides = [1, 1]} : vector<2x256xf32> to vector<1x256xf32>
    %1178 = vector.broadcast %1177 : vector<1x256xf32> to vector<2x256xf32>
    %1179 = arith.mulf %497, %1178 : vector<2x256xf32>
    %1180 = vector.extract_strided_slice %1176 {offsets = [1, 0], sizes = [1, 256], strides = [1, 1]} : vector<2x256xf32> to vector<1x256xf32>
    %1181 = vector.broadcast %1180 : vector<1x256xf32> to vector<2x256xf32>
    %1182 = arith.mulf %498, %1181 : vector<2x256xf32>
    %1183 = arith.addf %1179, %1182 : vector<2x256xf32>
    %c0_222 = arith.constant 0 : index
    %c0_223 = arith.constant 0 : index
    %1184 = vector.load %arg13[%c0_222, %c0_223] : memref<4x2xf32, #tpu.memory_space<vmem>>, vector<4x2xf32>
    %cst_224 = arith.constant dense<0.000000e+00> : vector<4x256xf32>
    %1185 = tpu.matmul %1184, %1183, %cst_224 {dimension_numbers = #tpu.dot_dimension_numbers<[1], [0], [0], [1], [0, 0, 1, 1], [], []>} : vector<4x2xf32>, vector<2x256xf32>, vector<4x256xf32> -> vector<4x256xf32>
    %c0_225 = arith.constant 0 : index
    %c0_226 = arith.constant 0 : index
    %1186 = vector.load %arg14[%c0_225, %c0_226] : memref<4x1xf32, #tpu.memory_space<vmem>>, vector<4x1xf32>
    %1187 = vector.broadcast %1186 : vector<4x1xf32> to vector<4x256xf32>
    %1188 = arith.addf %1185, %1187 : vector<4x256xf32>
    %c0_227 = arith.constant 0 : index
    %c0_228 = arith.constant 0 : index
    %c0_229 = arith.constant 0 : index
    %1189 = vector.load %arg1[%c0_227, %c0_228, %c0_229] : memref<1x4x256xf32, #tpu.memory_space<vmem>>, vector<1x4x256xf32>
    %1190 = vector.shape_cast %1189 : vector<1x4x256xf32> to vector<4x256xf32>
    %1191 = arith.mulf %1190, %1188 : vector<4x256xf32>
    %c0_230 = arith.constant 0 : index
    %c0_231 = arith.constant 0 : index
    %c0_232 = arith.constant 0 : index
    %1192 = vector.load %arg15[%c0_230, %c0_231, %c0_232] : memref<1x4x256xf32, #tpu.memory_space<vmem>>, vector<1x4x256xf32>
    %1193 = vector.shape_cast %1192 : vector<1x4x256xf32> to vector<4x256xf32>
    %1194 = vector.shape_cast %1191 : vector<4x256xf32> to vector<1x4x256xf32>
    tpu.vector_store %arg15[%c0_230, %c0_231, %c0_232], %1194 {strides = array<i32>} : memref<1x4x256xf32, #tpu.memory_space<vmem>>, vector<1x4x256xf32>,
    return
  }
  func.func @transform_0(%arg0: i32) -> (i32, i32, i32) {
    %c0_i32 = arith.constant 0 : i32
    %c0_i32_0 = arith.constant 0 : i32
    %c0_i32_1 = arith.constant 0 : i32
    return %arg0, %c0_i32, %c0_i32_0 : i32, i32, i32
  }
  func.func @transform_1(%arg0: i32) -> (i32, i32) {
    %c0_i32 = arith.constant 0 : i32
    %c0_i32_0 = arith.constant 0 : i32
    %c0_i32_1 = arith.constant 0 : i32
    return %c0_i32, %c0_i32_0 : i32, i32
  }
  func.func @transform_2(%arg0: i32) -> (i32, i32) {
    %c0_i32 = arith.constant 0 : i32
    %c0_i32_0 = arith.constant 0 : i32
    %c0_i32_1 = arith.constant 0 : i32
    return %c0_i32, %c0_i32_0 : i32, i32
  }
  func.func @transform_3(%arg0: i32) -> (i32, i32) {
    %c0_i32 = arith.constant 0 : i32
    %c0_i32_0 = arith.constant 0 : i32
    %c0_i32_1 = arith.constant 0 : i32
    return %c0_i32, %c0_i32_0 : i32, i32
  }
  func.func @transform_4(%arg0: i32) -> (i32, i32) {
    %c0_i32 = arith.constant 0 : i32
    %c0_i32_0 = arith.constant 0 : i32
    %c0_i32_1 = arith.constant 0 : i32
    return %c0_i32, %c0_i32_0 : i32, i32
  }
  func.func @transform_5(%arg0: i32) -> (i32, i32) {
    %c0_i32 = arith.constant 0 : i32
    %c0_i32_0 = arith.constant 0 : i32
    %c0_i32_1 = arith.constant 0 : i32
    return %c0_i32, %c0_i32_0 : i32, i32
  }
  func.func @transform_6(%arg0: i32) -> (i32, i32) {
    %c0_i32 = arith.constant 0 : i32
    %c0_i32_0 = arith.constant 0 : i32
    %c0_i32_1 = arith.constant 0 : i32
    return %c0_i32, %c0_i32_0 : i32, i32
  }
  func.func @transform_7(%arg0: i32) -> (i32, i32) {
    %c0_i32 = arith.constant 0 : i32
    %c0_i32_0 = arith.constant 0 : i32
    %c0_i32_1 = arith.constant 0 : i32
    return %c0_i32, %c0_i32_0 : i32, i32
  }
  func.func @transform_8(%arg0: i32) -> (i32, i32) {
    %c0_i32 = arith.constant 0 : i32
    %c0_i32_0 = arith.constant 0 : i32
    %c0_i32_1 = arith.constant 0 : i32
    return %c0_i32, %c0_i32_0 : i32, i32
  }
  func.func @transform_9(%arg0: i32) -> (i32, i32) {
    %c0_i32 = arith.constant 0 : i32
    %c0_i32_0 = arith.constant 0 : i32
    %c0_i32_1 = arith.constant 0 : i32
    return %c0_i32, %c0_i32_0 : i32, i32
  }
  func.func @transform_10(%arg0: i32) -> (i32, i32) {
    %c0_i32 = arith.constant 0 : i32
    %c0_i32_0 = arith.constant 0 : i32
    %c0_i32_1 = arith.constant 0 : i32
    return %c0_i32, %c0_i32_0 : i32, i32
  }
  func.func @transform_11(%arg0: i32) -> (i32, i32) {
    %c0_i32 = arith.constant 0 : i32
    %c0_i32_0 = arith.constant 0 : i32
    %c0_i32_1 = arith.constant 0 : i32
    return %c0_i32, %c0_i32_0 : i32, i32
  }
  func.func @transform_12(%arg0: i32) -> (i32, i32) {
    %c0_i32 = arith.constant 0 : i32
    %c0_i32_0 = arith.constant 0 : i32
    %c0_i32_1 = arith.constant 0 : i32
    return %c0_i32, %c0_i32_0 : i32, i32
  }
  func.func @transform_13(%arg0: i32) -> (i32, i32) {
    %c0_i32 = arith.constant 0 : i32
    %c0_i32_0 = arith.constant 0 : i32
    %c0_i32_1 = arith.constant 0 : i32
    return %c0_i32, %c0_i32_0 : i32, i32
  }
  func.func @transform_14(%arg0: i32) -> (i32, i32, i32) {
    %c0_i32 = arith.constant 0 : i32
    %c0_i32_0 = arith.constant 0 : i32
    %c0_i32_1 = arith.constant 0 : i32
    return %arg0, %c0_i32, %c0_i32_0 : i32, i32, i32
  }
}

</mosaic_0001>

<llo_original>
// kernel: tpu_custom_call.1
$region0: #{tpu_custom_call.1}
  #allocation0 [shape = 'u32[]', space=smem, size = 0x4, offset = 0x4, fixed_abs, tag = 'smem constant byte address 0x4 - core index']
  #allocation1 [shape = 'u32[144,128]{1,0:T(1,128)}', space=vmem, size = 0x12000, scoped, tag = 'internal scratch']
  #allocation2 [shape = 'f32[4,512]{1,0:T(4,128)}', space=vmem, size = 0x2000, scoped, tag = 'scratch operand']
  #allocation3 [shape = 'f32[4,768]{1,0:T(4,128)}', space=vmem, size = 0x3000, scoped, tag = 'scratch operand']
  #allocation4 [shape = 'f32[2,512]{1,0:T(2,128)}', space=vmem, size = 0x1000, scoped, tag = 'scratch operand']
  %s0 = inlined_call_operand.vmem [shape: f32[2,4,256], index: 0, kind: input, shape index: {}]
  %s1 = inlined_call_operand.vmem [shape: f32[4,25], index: 1, kind: input, shape index: {}]
  %s2 = inlined_call_operand.vmem [shape: f32[4,1], index: 2, kind: input, shape index: {}]
  %s3 = inlined_call_operand.vmem [shape: f32[4,49], index: 3, kind: input, shape index: {}]
  %s4 = inlined_call_operand.vmem [shape: f32[4,1], index: 4, kind: input, shape index: {}]
  %s5 = inlined_call_operand.vmem [shape: f32[3,4], index: 5, kind: input, shape index: {}]
  %s6 = inlined_call_operand.vmem [shape: f32[3,1], index: 6, kind: input, shape index: {}]
  %s7 = inlined_call_operand.vmem [shape: f32[3,4], index: 7, kind: input, shape index: {}]
  %s8 = inlined_call_operand.vmem [shape: f32[3,1], index: 8, kind: input, shape index: {}]
  %s9 = inlined_call_operand.vmem [shape: f32[2,49], index: 9, kind: input, shape index: {}]
  %s10 = inlined_call_operand.vmem [shape: f32[2,49], index: 10, kind: input, shape index: {}]
  %s11 = inlined_call_operand.vmem [shape: f32[2,1], index: 11, kind: input, shape index: {}]
  %s12 = inlined_call_operand.vmem [shape: f32[4,2], index: 12, kind: input, shape index: {}]
  %s13 = inlined_call_operand.vmem [shape: f32[4,1], index: 13, kind: input, shape index: {}]
  %s14 = inlined_call_operand.hbm [shape: f32[2,4,256], index: 14, kind: output, shape index: {}]
  %s15 = sld [smem:[#allocation0]]
  $region89: #{tpu_custom_call.1} parent=0
    _
  %s17 = ssub.s32 1, %s15
  %s18 = scalar_select 0, %s17, %s15
  $region1: #{tpu_custom_call.1} parent=0
    #allocation5 [shape = 'u8[8192]{0}', space=vmem, size = 0x2000, scoped, tag = 'output window, operand 0']
    #allocation6 [shape = 's32[2]{0}', space=sflag, size = 0x8, scoped, tag = 'scoped memory for tpu_custom_call.1']
    %19 = vsyncpa [#allocation6], 0
    %s20 = scalar_lea.sflag [#allocation6], 1
    %21 = vsyncpa %s20, 0
    loop: start=0, step=1, limit=4
    $region2: #{tpu_custom_call.1} parent=1 // loop_pre_header
      _
    $region3: #{tpu_custom_call.1} parent=1 // loop_header
      %s23 = sphi 0, %s27
      %p24 = scmp.ge.s32.totalorder %s23, 4
      %s33 = sphi 0, %s35
      %s36 = sphi 0, %s33
      %s37 = sphi 0, %s36
      %s53 = sphi 0, %s37
      %s57 = sphi 0, %s57
      %s59 = sphi 0, %s57
      %s60 = sphi 0, %s59
      %s74 = sphi 0, %s60
      %s78 = sphi 0, %s78
      %s80 = sphi 0, %s78
      %s81 = sphi 0, %s80
      %s95 = sphi 0, %s81
      %s99 = sphi 0, %s99
      %s101 = sphi 0, %s99
      %s102 = sphi 0, %s101
      %s116 = sphi 0, %s102
      %s120 = sphi 0, %s120
      %s122 = sphi 0, %s120
      %s123 = sphi 0, %s122
      %s137 = sphi 0, %s123
      %s141 = sphi 0, %s141
      %s143 = sphi 0, %s141
      %s144 = sphi 0, %s143
      %s158 = sphi 0, %s144
      %s162 = sphi 0, %s162
      %s164 = sphi 0, %s162
      %s165 = sphi 0, %s164
      %s179 = sphi 0, %s165
      %s183 = sphi 0, %s183
      %s185 = sphi 0, %s183
      %s186 = sphi 0, %s185
      %s200 = sphi 0, %s186
      %s204 = sphi 0, %s204
      %s206 = sphi 0, %s204
      %s207 = sphi 0, %s206
      %s221 = sphi 0, %s207
      %s225 = sphi 0, %s225
      %s227 = sphi 0, %s225
      %s228 = sphi 0, %s227
      %s242 = sphi 0, %s228
      %s246 = sphi 0, %s246
      %s248 = sphi 0, %s246
      %s249 = sphi 0, %s248
      %s263 = sphi 0, %s249
      %s267 = sphi 0, %s267
      %s269 = sphi 0, %s267
      %s270 = sphi 0, %s269
      %s284 = sphi 0, %s270
      %s288 = sphi 0, %s288
      %s290 = sphi 0, %s288
      %s291 = sphi 0, %s290
      %s305 = sphi 0, %s291
      %s309 = sphi 0, %s309
      %s311 = sphi 0, %s309
      %s312 = sphi 0, %s311
      %s326 = sphi 0, %s312
      %s332 = sphi 0, %s334
      %s335 = sphi 0, %s332
      %s336 = sphi 0, %s335
      %s352 = sphi 0, %s336
    $region4: #{tpu_custom_call.1} parent=1 // loop_header_branch
      %26 = sbr.rel (%p24) target = $region8
    $region5: #{tpu_custom_call.1} parent=1 // loop_body
      %s28 = ssub.s32 %s23, 1
      %s29 = ssub.s32 %s23, 2
      %s30 = sadd.s32 %s23, 1
      %s31 = ssub.s32 %s23, %s30
      %p32 = scmp.eq.s32.totalorder %s31, 0
      %s34 = sadd.s32 %s33, 1
      %s35 = scalar_select %p32, %s33, %s34
      %p38 = pneg %p32
      %p39 = scmp.eq.s32.totalorder %s23, 1
      %p40 = por %p38, %p39
      %p41 = scmp.ne.s32.totalorder %s33, %s36
      %p42 = scmp.eq.s32.totalorder %s23, 0
      %p43 = por %p41, %p42
      %p44 = scmp.ne.s32.totalorder %s33, %s36
      %p45 = scmp.eq.s32.totalorder %s28, 1
      %p46 = por %p44, %p45
      %p47 = scmp.ne.s32.totalorder %s36, %s37
      %p48 = scmp.eq.s32.totalorder %s28, 0
      %p49 = por %p47, %p48
      %p50 = scmp.ne.s32.totalorder %s36, %s37
      %p51 = scmp.eq.s32.totalorder %s29, 1
      %p52 = por %p50, %p51
      %p54 = scmp.ne.s32.totalorder %s37, %s53
      %p55 = scmp.eq.s32.totalorder %s29, 0
      %p56 = por %p54, %p55
      %s58 = sadd.s32 %s57, 1
      %p61 = scmp.eq.s32.totalorder %s23, 1
      %p62 = scmp.ne.s32.totalorder %s57, %s59
      %p63 = scmp.eq.s32.totalorder %s23, 0
      %p64 = por %p62, %p63
      %p65 = scmp.ne.s32.totalorder %s57, %s59
      %p66 = scmp.eq.s32.totalorder %s28, 1
      %p67 = por %p65, %p66
      %p68 = scmp.ne.s32.totalorder %s59, %s60
      %p69 = scmp.eq.s32.totalorder %s28, 0
      %p70 = por %p68, %p69
      %p71 = scmp.ne.s32.totalorder %s59, %s60
      %p72 = scmp.eq.s32.totalorder %s29, 1
      %p73 = por %p71, %p72
      %p75 = scmp.ne.s32.totalorder %s60, %s74
      %p76 = scmp.eq.s32.totalorder %s29, 0
      %p77 = por %p75, %p76
      %s79 = sadd.s32 %s78, 1
      %p82 = scmp.eq.s32.totalorder %s23, 1
      %p83 = scmp.ne.s32.totalorder %s78, %s80
      %p84 = scmp.eq.s32.totalorder %s23, 0
      %p85 = por %p83, %p84
      %p86 = scmp.ne.s32.totalorder %s78, %s80
      %p87 = scmp.eq.s32.totalorder %s28, 1
      %p88 = por %p86, %p87
      %p89 = scmp.ne.s32.totalorder %s80, %s81
      %p90 = scmp.eq.s32.totalorder %s28, 0
      %p91 = por %p89, %p90
      %p92 = scmp.ne.s32.totalorder %s80, %s81
      %p93 = scmp.eq.s32.totalorder %s29, 1
      %p94 = por %p92, %p93
      %p96 = scmp.ne.s32.totalorder %s81, %s95
      %p97 = scmp.eq.s32.totalorder %s29, 0
      %p98 = por %p96, %p97
      %s100 = sadd.s32 %s99, 1
      %p103 = scmp.eq.s32.totalorder %s23, 1
      %p104 = scmp.ne.s32.totalorder %s99, %s101
      %p105 = scmp.eq.s32.totalorder %s23, 0
      %p106 = por %p104, %p105
      %p107 = scmp.ne.s32.totalorder %s99, %s101
      %p108 = scmp.eq.s32.totalorder %s28, 1
      %p109 = por %p107, %p108
      %p110 = scmp.ne.s32.totalorder %s101, %s102
      %p111 = scmp.eq.s32.totalorder %s28, 0
      %p112 = por %p110, %p111
      %p113 = scmp.ne.s32.totalorder %s101, %s102
      %p114 = scmp.eq.s32.totalorder %s29, 1
      %p115 = por %p113, %p114
      %p117 = scmp.ne.s32.totalorder %s102, %s116
      %p118 = scmp.eq.s32.totalorder %s29, 0
      %p119 = por %p117, %p118
      %s121 = sadd.s32 %s120, 1
      %p124 = scmp.eq.s32.totalorder %s23, 1
      %p125 = scmp.ne.s32.totalorder %s120, %s122
      %p126 = scmp.eq.s32.totalorder %s23, 0
      %p127 = por %p125, %p126
      %p128 = scmp.ne.s32.totalorder %s120, %s122
      %p129 = scmp.eq.s32.totalorder %s28, 1
      %p130 = por %p128, %p129
      %p131 = scmp.ne.s32.totalorder %s122, %s123
      %p132 = scmp.eq.s32.totalorder %s28, 0
      %p133 = por %p131, %p132
      %p134 = scmp.ne.s32.totalorder %s122, %s123
      %p135 = scmp.eq.s32.totalorder %s29, 1
      %p136 = por %p134, %p135
      %p138 = scmp.ne.s32.totalorder %s123, %s137
      %p139 = scmp.eq.s32.totalorder %s29, 0
      %p140 = por %p138, %p139
      %s142 = sadd.s32 %s141, 1
      %p145 = scmp.eq.s32.totalorder %s23, 1
      %p146 = scmp.ne.s32.totalorder %s141, %s143
      %p147 = scmp.eq.s32.totalorder %s23, 0
      %p148 = por %p146, %p147
      %p149 = scmp.ne.s32.totalorder %s141, %s143
      %p150 = scmp.eq.s32.totalorder %s28, 1
      %p151 = por %p149, %p150
      %p152 = scmp.ne.s32.totalorder %s143, %s144
      %p153 = scmp.eq.s32.totalorder %s28, 0
      %p154 = por %p152, %p153
      %p155 = scmp.ne.s32.totalorder %s143, %s144
      %p156 = scmp.eq.s32.totalorder %s29, 1
      %p157 = por %p155, %p156
      %p159 = scmp.ne.s32.totalorder %s144, %s158
      %p160 = scmp.eq.s32.totalorder %s29, 0
      %p161 = por %p159, %p160
      %s163 = sadd.s32 %s162, 1
      %p166 = scmp.eq.s32.totalorder %s23, 1
      %p167 = scmp.ne.s32.totalorder %s162, %s164
      %p168 = scmp.eq.s32.totalorder %s23, 0
      %p169 = por %p167, %p168
      %p170 = scmp.ne.s32.totalorder %s162, %s164
      %p171 = scmp.eq.s32.totalorder %s28, 1
      %p172 = por %p170, %p171
      %p173 = scmp.ne.s32.totalorder %s164, %s165
      %p174 = scmp.eq.s32.totalorder %s28, 0
      %p175 = por %p173, %p174
      %p176 = scmp.ne.s32.totalorder %s164, %s165
      %p177 = scmp.eq.s32.totalorder %s29, 1
      %p178 = por %p176, %p177
      %p180 = scmp.ne.s32.totalorder %s165, %s179
      %p181 = scmp.eq.s32.totalorder %s29, 0
      %p182 = por %p180, %p181
      %s184 = sadd.s32 %s183, 1
      %p187 = scmp.eq.s32.totalorder %s23, 1
      %p188 = scmp.ne.s32.totalorder %s183, %s185
      %p189 = scmp.eq.s32.totalorder %s23, 0
      %p190 = por %p188, %p189
      %p191 = scmp.ne.s32.totalorder %s183, %s185
      %p192 = scmp.eq.s32.totalorder %s28, 1
      %p193 = por %p191, %p192
      %p194 = scmp.ne.s32.totalorder %s185, %s186
      %p195 = scmp.eq.s32.totalorder %s28, 0
      %p196 = por %p194, %p195
      %p197 = scmp.ne.s32.totalorder %s185, %s186
      %p198 = scmp.eq.s32.totalorder %s29, 1
      %p199 = por %p197, %p198
      %p201 = scmp.ne.s32.totalorder %s186, %s200
      %p202 = scmp.eq.s32.totalorder %s29, 0
      %p203 = por %p201, %p202
      %s205 = sadd.s32 %s204, 1
      %p208 = scmp.eq.s32.totalorder %s23, 1
      %p209 = scmp.ne.s32.totalorder %s204, %s206
      %p210 = scmp.eq.s32.totalorder %s23, 0
      %p211 = por %p209, %p210
      %p212 = scmp.ne.s32.totalorder %s204, %s206
      %p213 = scmp.eq.s32.totalorder %s28, 1
      %p214 = por %p212, %p213
      %p215 = scmp.ne.s32.totalorder %s206, %s207
      %p216 = scmp.eq.s32.totalorder %s28, 0
      %p217 = por %p215, %p216
      %p218 = scmp.ne.s32.totalorder %s206, %s207
      %p219 = scmp.eq.s32.totalorder %s29, 1
      %p220 = por %p218, %p219
      %p222 = scmp.ne.s32.totalorder %s207, %s221
      %p223 = scmp.eq.s32.totalorder %s29, 0
      %p224 = por %p222, %p223
      %s226 = sadd.s32 %s225, 1
      %p229 = scmp.eq.s32.totalorder %s23, 1
      %p230 = scmp.ne.s32.totalorder %s225, %s227
      %p231 = scmp.eq.s32.totalorder %s23, 0
      %p232 = por %p230, %p231
      %p233 = scmp.ne.s32.totalorder %s225, %s227
      %p234 = scmp.eq.s32.totalorder %s28, 1
      %p235 = por %p233, %p234
      %p236 = scmp.ne.s32.totalorder %s227, %s228
      %p237 = scmp.eq.s32.totalorder %s28, 0
      %p238 = por %p236, %p237
      %p239 = scmp.ne.s32.totalorder %s227, %s228
      %p240 = scmp.eq.s32.totalorder %s29, 1
      %p241 = por %p239, %p240
      %p243 = scmp.ne.s32.totalorder %s228, %s242
      %p244 = scmp.eq.s32.totalorder %s29, 0
      %p245 = por %p243, %p244
      %s247 = sadd.s32 %s246, 1
      %p250 = scmp.eq.s32.totalorder %s23, 1
      %p251 = scmp.ne.s32.totalorder %s246, %s248
      %p252 = scmp.eq.s32.totalorder %s23, 0
      %p253 = por %p251, %p252
      %p254 = scmp.ne.s32.totalorder %s246, %s248
      %p255 = scmp.eq.s32.totalorder %s28, 1
      %p256 = por %p254, %p255
      %p257 = scmp.ne.s32.totalorder %s248, %s249
      %p258 = scmp.eq.s32.totalorder %s28, 0
      %p259 = por %p257, %p258
      %p260 = scmp.ne.s32.totalorder %s248, %s249
      %p261 = scmp.eq.s32.totalorder %s29, 1
      %p262 = por %p260, %p261
      %p264 = scmp.ne.s32.totalorder %s249, %s263
      %p265 = scmp.eq.s32.totalorder %s29, 0
      %p266 = por %p264, %p265
      %s268 = sadd.s32 %s267, 1
      %p271 = scmp.eq.s32.totalorder %s23, 1
      %p272 = scmp.ne.s32.totalorder %s267, %s269
      %p273 = scmp.eq.s32.totalorder %s23, 0
      %p274 = por %p272, %p273
      %p275 = scmp.ne.s32.totalorder %s267, %s269
      %p276 = scmp.eq.s32.totalorder %s28, 1
      %p277 = por %p275, %p276
      %p278 = scmp.ne.s32.totalorder %s269, %s270
      %p279 = scmp.eq.s32.totalorder %s28, 0
      %p280 = por %p278, %p279
      %p281 = scmp.ne.s32.totalorder %s269, %s270
      %p282 = scmp.eq.s32.totalorder %s29, 1
      %p283 = por %p281, %p282
      %p285 = scmp.ne.s32.totalorder %s270, %s284
      %p286 = scmp.eq.s32.totalorder %s29, 0
      %p287 = por %p285, %p286
      %s289 = sadd.s32 %s288, 1
      %p292 = scmp.eq.s32.totalorder %s23, 1
      %p293 = scmp.ne.s32.totalorder %s288, %s290
      %p294 = scmp.eq.s32.totalorder %s23, 0
      %p295 = por %p293, %p294
      %p296 = scmp.ne.s32.totalorder %s288, %s290
      %p297 = scmp.eq.s32.totalorder %s28, 1
      %p298 = por %p296, %p297
      %p299 = scmp.ne.s32.totalorder %s290, %s291
      %p300 = scmp.eq.s32.totalorder %s28, 0
      %p301 = por %p299, %p300
      %p302 = scmp.ne.s32.totalorder %s290, %s291
      %p303 = scmp.eq.s32.totalorder %s29, 1
      %p304 = por %p302, %p303
      %p306 = scmp.ne.s32.totalorder %s291, %s305
      %p307 = scmp.eq.s32.totalorder %s29, 0
      %p308 = por %p306, %p307
      %s310 = sadd.s32 %s309, 1
      %p313 = scmp.eq.s32.totalorder %s23, 1
      %p314 = scmp.ne.s32.totalorder %s309, %s311
      %p315 = scmp.eq.s32.totalorder %s23, 0
      %p316 = por %p314, %p315
      %p317 = scmp.ne.s32.totalorder %s309, %s311
      %p318 = scmp.eq.s32.totalorder %s28, 1
      %p319 = por %p317, %p318
      %p320 = scmp.ne.s32.totalorder %s311, %s312
      %p321 = scmp.eq.s32.totalorder %s28, 0
      %p322 = por %p320, %p321
      %p323 = scmp.ne.s32.totalorder %s311, %s312
      %p324 = scmp.eq.s32.totalorder %s29, 1
      %p325 = por %p323, %p324
      %p327 = scmp.ne.s32.totalorder %s312, %s326
      %p328 = scmp.eq.s32.totalorder %s29, 0
      %p329 = por %p327, %p328
      %s330 = ssub.s32 %s23, %s30
      %p331 = scmp.eq.s32.totalorder %s330, 0
      %s333 = sadd.s32 %s332, 1
      %s334 = scalar_select %p331, %s332, %s333
      %p337 = pneg %p331
      %p338 = scmp.eq.s32.totalorder %s23, 1
      %p339 = por %p337, %p338
      %p340 = scmp.ne.s32.totalorder %s332, %s335
      %p341 = scmp.eq.s32.totalorder %s23, 0
      %p342 = por %p340, %p341
      %p343 = scmp.ne.s32.totalorder %s332, %s335
      %p344 = scmp.eq.s32.totalorder %s28, 1
      %p345 = por %p343, %p344
      %p346 = scmp.ne.s32.totalorder %s335, %s336
      %p347 = scmp.eq.s32.totalorder %s28, 0
      %p348 = por %p346, %p347
      %p349 = scmp.ne.s32.totalorder %s335, %s336
      %p350 = scmp.eq.s32.totalorder %s29, 1
      %p351 = por %p349, %p350
      %p353 = scmp.ne.s32.totalorder %s336, %s352
      %p354 = scmp.eq.s32.totalorder %s29, 0
      %p355 = por %p353, %p354
      %p356 = scmp.le.s32.totalorder 1, %s23
      %p357 = scmp.lt.s32.totalorder %s23, 3
      %p358 = pnand %p356, %p357
      %p359 = pneg %p358
      // Predicated region
      $region9: #{tpu_custom_call.1} parent=5 // pred_check
        _
      $region10: #{tpu_custom_call.1} parent=5 // pred_check_branch
        %361 = sbr.rel (%p358) target = $region12
      $region11: #{tpu_custom_call.1} parent=5 // pred_region
        %s362 = ssub.s32 %s23, 1
        // Predicated region
        $region13: #{tpu_custom_call.1} parent=11 // pred_check
          %p363 = pneg %p70
        $region14: #{tpu_custom_call.1} parent=11 // pred_check_branch
          %365 = sbr.rel (%p363) target = $region16
        $region15: #{tpu_custom_call.1} parent=11 // pred_region
          _
        $region16: #{tpu_custom_call.1} parent=11 // pred_fallthru
          _
        // Predicated region
        $region17: #{tpu_custom_call.1} parent=11 // pred_check
          %p366 = pneg %p91
        $region18: #{tpu_custom_call.1} parent=11 // pred_check_branch
          %368 = sbr.rel (%p366) target = $region20
        $region19: #{tpu_custom_call.1} parent=11 // pred_region
          _
        $region20: #{tpu_custom_call.1} parent=11 // pred_fallthru
          _
        // Predicated region
        $region21: #{tpu_custom_call.1} parent=11 // pred_check
          %p369 = pneg %p112
        $region22: #{tpu_custom_call.1} parent=11 // pred_check_branch
          %371 = sbr.rel (%p369) target = $region24
        $region23: #{tpu_custom_call.1} parent=11 // pred_region
          _
        $region24: #{tpu_custom_call.1} parent=11 // pred_fallthru
          _
        // Predicated region
        $region25: #{tpu_custom_call.1} parent=11 // pred_check
          %p372 = pneg %p133
        $region26: #{tpu_custom_call.1} parent=11 // pred_check_branch
          %374 = sbr.rel (%p372) target = $region28
        $region27: #{tpu_custom_call.1} parent=11 // pred_region
          _
        $region28: #{tpu_custom_call.1} parent=11 // pred_fallthru
          _
        // Predicated region
        $region29: #{tpu_custom_call.1} parent=11 // pred_check
          %p375 = pneg %p154
        $region30: #{tpu_custom_call.1} parent=11 // pred_check_branch
          %377 = sbr.rel (%p375) target = $region32
        $region31: #{tpu_custom_call.1} parent=11 // pred_region
          _
        $region32: #{tpu_custom_call.1} parent=11 // pred_fallthru
          _
        // Predicated region
        $region33: #{tpu_custom_call.1} parent=11 // pred_check
          %p378 = pneg %p175
        $region34: #{tpu_custom_call.1} parent=11 // pred_check_branch
          %380 = sbr.rel (%p378) target = $region36
        $region35: #{tpu_custom_call.1} parent=11 // pred_region
          _
        $region36: #{tpu_custom_call.1} parent=11 // pred_fallthru
          _
        // Predicated region
        $region37: #{tpu_custom_call.1} parent=11 // pred_check
          %p381 = pneg %p196
        $region38: #{tpu_custom_call.1} parent=11 // pred_check_branch
          %383 = sbr.rel (%p381) target = $region40
        $region39: #{tpu_custom_call.1} parent=11 // pred_region
          _
        $region40: #{tpu_custom_call.1} parent=11 // pred_fallthru
          _
        // Predicated region
        $region41: #{tpu_custom_call.1} parent=11 // pred_check
          %p384 = pneg %p217
        $region42: #{tpu_custom_call.1} parent=11 // pred_check_branch
          %386 = sbr.rel (%p384) target = $region44
        $region43: #{tpu_custom_call.1} parent=11 // pred_region
          _
        $region44: #{tpu_custom_call.1} parent=11 // pred_fallthru
          _
        // Predicated region
        $region45: #{tpu_custom_call.1} parent=11 // pred_check
          %p387 = pneg %p238
        $region46: #{tpu_custom_call.1} parent=11 // pred_check_branch
          %389 = sbr.rel (%p387) target = $region48
        $region47: #{tpu_custom_call.1} parent=11 // pred_region
          _
        $region48: #{tpu_custom_call.1} parent=11 // pred_fallthru
          _
        // Predicated region
        $region49: #{tpu_custom_call.1} parent=11 // pred_check
          %p390 = pneg %p259
        $region50: #{tpu_custom_call.1} parent=11 // pred_check_branch
          %392 = sbr.rel (%p390) target = $region52
        $region51: #{tpu_custom_call.1} parent=11 // pred_region
          _
        $region52: #{tpu_custom_call.1} parent=11 // pred_fallthru
          _
        // Predicated region
        $region53: #{tpu_custom_call.1} parent=11 // pred_check
          %p393 = pneg %p280
        $region54: #{tpu_custom_call.1} parent=11 // pred_check_branch
          %395 = sbr.rel (%p393) target = $region56
        $region55: #{tpu_custom_call.1} parent=11 // pred_region
          _
        $region56: #{tpu_custom_call.1} parent=11 // pred_fallthru
          _
        // Predicated region
        $region57: #{tpu_custom_call.1} parent=11 // pred_check
          %p396 = pneg %p301
        $region58: #{tpu_custom_call.1} parent=11 // pred_check_branch
          %398 = sbr.rel (%p396) target = $region60
        $region59: #{tpu_custom_call.1} parent=11 // pred_region
          _
        $region60: #{tpu_custom_call.1} parent=11 // pred_fallthru
          _
        // Predicated region
        $region61: #{tpu_custom_call.1} parent=11 // pred_check
          %p399 = pneg %p322
        $region62: #{tpu_custom_call.1} parent=11 // pred_check_branch
          %401 = sbr.rel (%p399) target = $region64
        $region63: #{tpu_custom_call.1} parent=11 // pred_region
          _
        $region64: #{tpu_custom_call.1} parent=11 // pred_fallthru
          _
      $region12: #{tpu_custom_call.1} parent=5 // pred_fallthru
        _
      %p402 = scmp.lt.s32.totalorder %s23, 2
      // Predicated region
      $region65: #{tpu_custom_call.1} parent=5 // pred_check
        %p403 = pneg %p402
      $region66: #{tpu_custom_call.1} parent=5 // pred_check_branch
        %405 = sbr.rel (%p403) target = $region68
      $region67: #{tpu_custom_call.1} parent=5 // pred_region
        // Predicated region
        $region69: #{tpu_custom_call.1} parent=67 // pred_check
          %p406 = pneg %p43
        $region70: #{tpu_custom_call.1} parent=67 // pred_check_branch
          %408 = sbr.rel (%p406) target = $region72
        $region71: #{tpu_custom_call.1} parent=67 // pred_region
          %p409 = scmp.lt.s32.totalorder %s23, 1
          %s410 = scalar_select %p409, %s23, 1
          %s411 = smul.addr %s410, 2
          %s412 = smul.addr %s411, 4
          %s413 = scalar_lea.vmem %s0, %s412
        $region72: #{tpu_custom_call.1} parent=67 // pred_fallthru
          _
      $region68: #{tpu_custom_call.1} parent=5 // pred_fallthru
        _
      %p414 = scmp.le.s32.totalorder 1, %s23
      %p415 = scmp.lt.s32.totalorder %s23, 3
      %p416 = pnand %p414, %p415
      %p417 = pneg %p416
      // Predicated region
      $region73: #{tpu_custom_call.1} parent=5 // pred_check
        _
      $region74: #{tpu_custom_call.1} parent=5 // pred_check_branch
        %419 = sbr.rel (%p416) target = $region76
      $region75: #{tpu_custom_call.1} parent=5 // pred_region
        %s420 = ssub.s32 %s23, 1
        %p421 = scmp.lt.s32.totalorder %s28, 1
        %s422 = scalar_select %p421, %s28, 1
        %s423 = smul.addr %s422, 2
        %s424 = smul.addr %s423, 4
        %s425 = scalar_lea.vmem %s0, %s424
        %p426 = pneg %p49
        %p427 = pneg %p46
        %p428 = pneg %p70
        %p429 = pneg %p67
        %p430 = pneg %p91
        %p431 = pneg %p88
        %p432 = pneg %p112
        %p433 = pneg %p109
        %p434 = pneg %p133
        %p435 = pneg %p130
        %p436 = pneg %p154
        %p437 = pneg %p151
        %p438 = pneg %p175
        %p439 = pneg %p172
        %p440 = pneg %p196
        %p441 = pneg %p193
        %p442 = pneg %p217
        %p443 = pneg %p214
        %p444 = pneg %p238
        %p445 = pneg %p235
        %p446 = pneg %p259
        %p447 = pneg %p256
        %p448 = pneg %p280
        %p449 = pneg %p277
        %p450 = pneg %p301
        %p451 = pneg %p298
        %p452 = pneg %p322
        %p453 = pneg %p319
        %p454 = pneg %p348
        %p455 = pneg %p345
        %s456 = sand.u32 %s335, 1
        %s457 = scalar_lea.sflag [#allocation6], %s456
        %s458 = sand.u32 %s335, 1
        %s459 = smul.addr %s458, 8
        %s460 = scalar_lea.vmem [#allocation5], %s459
        %p461 = scmp.lt.s32.totalorder %s28, 1
        %s462 = scalar_select %p461, %s28, 1
        %s463 = smul.addr %s462, 2
        %s464 = smul.addr %s463, 4
        %s465 = scalar_lea.vmem %s0, %s464
        %466 = vst [vmem:[#allocation2] sm:$0xf] 0.0
        %467 = vst [vmem:[#allocation2 + $0xc] sm:$0xf] 0.0
        %468 = vst [vmem:[#allocation3] sm:$0xff] 0.0
        %469 = vst [vmem:[#allocation3 + $0x10] sm:$0xff] 0.0
        %470 = vst [vmem:[#allocation4] sm:$0x3] 0.0
        %471 = vst [vmem:[#allocation4 + $0x6] sm:$0x3] 0.0
        %v472 = vld [vmem:[%s465] sm:$0xff]
        %473 = vst [vmem:[#allocation2 + $0x4] sm:$0xff] %v472
        %v474 = vlaneseq
        %v475 = vand.u32 %v474, 127
        %v476 = vadd.s32 %v475, 128
        %v477 = vand.u32 %v475, 15
        %v478 = vand.u32 %v476, 15
        %vm479 = vcmp.ge.s32.totalorder %v477, 9
        %vm480 = vcmp.ge.s32.totalorder %v478, 9
        %vm481 = vcmp.lt.s32.totalorder %v477, 25
        %vm482 = vcmp.lt.s32.totalorder %v478, 25
        %vm483 = vmand %vm479, %vm481
        %vm484 = vmand %vm480, %vm482
        %vm485 = vcmp.ge.s32.totalorder %v477, 6
        %vm486 = vcmp.ge.s32.totalorder %v478, 6
        %vm487 = vcmp.lt.s32.totalorder %v477, 22
        %vm488 = vcmp.lt.s32.totalorder %v478, 22
        %vm489 = vmand %vm485, %vm487
        %vm490 = vmand %vm486, %vm488
        %vm491 = vcmp.ge.s32.totalorder %v477, 3
        %vm492 = vcmp.ge.s32.totalorder %v478, 3
        %vm493 = vcmp.lt.s32.totalorder %v477, 19
        %vm494 = vcmp.lt.s32.totalorder %v478, 19
        %vm495 = vmand %vm491, %vm493
        %vm496 = vmand %vm492, %vm494
        %vm497 = vcmp.ge.s32.totalorder %v477, 2
        %vm498 = vcmp.ge.s32.totalorder %v478, 2
        %vm499 = vcmp.lt.s32.totalorder %v477, 18
        %vm500 = vcmp.lt.s32.totalorder %v478, 18
        %vm501 = vmand %vm497, %vm499
        %vm502 = vmand %vm498, %vm500
        %vm503 = vcmp.ge.s32.totalorder %v477, 1
        %vm504 = vcmp.ge.s32.totalorder %v478, 1
        %vm505 = vcmp.lt.s32.totalorder %v477, 17
        %vm506 = vcmp.lt.s32.totalorder %v478, 17
        %vm507 = vmand %vm503, %vm505
        %vm508 = vmand %vm504, %vm506
        %vm509 = vcmp.ge.s32.totalorder %v477, 4294967295
        %vm510 = vcmp.ge.s32.totalorder %v478, 4294967295
        %vm511 = vcmp.lt.s32.totalorder %v477, 15
        %vm512 = vcmp.lt.s32.totalorder %v478, 15
        %vm513 = vmand %vm509, %vm511
        %vm514 = vmand %vm510, %vm512
        %vm515 = vcmp.ge.s32.totalorder %v477, 4294967294
        %vm516 = vcmp.ge.s32.totalorder %v478, 4294967294
        %vm517 = vcmp.lt.s32.totalorder %v477, 14
        %vm518 = vcmp.lt.s32.totalorder %v478, 14
        %vm519 = vmand %vm515, %vm517
        %vm520 = vmand %vm516, %vm518
        %vm521 = vcmp.ge.s32.totalorder %v477, 4294967293
        %vm522 = vcmp.ge.s32.totalorder %v478, 4294967293
        %vm523 = vcmp.lt.s32.totalorder %v477, 13
        %vm524 = vcmp.lt.s32.totalorder %v478, 13
        %vm525 = vmand %vm521, %vm523
        %vm526 = vmand %vm522, %vm524
        %vm527 = vcmp.ge.s32.totalorder %v477, 4294967290
        %vm528 = vcmp.ge.s32.totalorder %v478, 4294967290
        %vm529 = vcmp.lt.s32.totalorder %v477, 10
        %vm530 = vcmp.lt.s32.totalorder %v478, 10
        %vm531 = vmand %vm527, %vm529
        %vm532 = vmand %vm528, %vm530
        %vm533 = vcmp.ge.s32.totalorder %v477, 4294967287
        %vm534 = vcmp.ge.s32.totalorder %v478, 4294967287
        %vm535 = vcmp.lt.s32.totalorder %v477, 7
        %vm536 = vcmp.lt.s32.totalorder %v478, 7
        %vm537 = vmand %vm533, %vm535
        %vm538 = vmand %vm534, %vm536
        %v539 = vld [vmem:[%s1] sm:$0xf]
        %v540 = vld [vmem:[%s3] sm:$0xf]
        %v541 = vld [vmem:[%s9] sm:$0x3]
        %v542 = vld [vmem:[%s10] sm:$0x3]
        %v543 = vld [vmem:[#allocation2] sm:$0xff]
        %v544 = vld [vmem:[#allocation2 + $0x8] sm:$0xf]
        %546 = vset.pattern.permute.xlu0 0
        %547 = vperm.xlu0 %546, %v539
        %v548 = vpop.permute.xlu0 %547
        %v550 = vunpack.c.l.s4 839922192
        %v551 = vunpack.c.0.s8 %v550
        %v552 = vlaneseq
        %v553 = vshrl.u32 %v552, 7
        %v554 = vsub.s32 %v551, %v553
        %v555 = vrot.slane %v548, %v554
        %v557 = vmul.f32 %v543, %v555
        %v558 = vmul.f32 %v544, %v555
        %559 = vset.pattern.permute.xlu0 5
        %560 = vperm.xlu0 %559, %v539
        %v561 = vpop.permute.xlu0 %560
        %v563 = vunpack.c.l.s4 839922192
        %v564 = vunpack.c.0.s8 %v563
        %v565 = vlaneseq
        %v566 = vshrl.u32 %v565, 7
        %v567 = vsub.s32 %v564, %v566
        %v568 = vrot.slane %v561, %v567
        %v570 = vmul.f32 %v543, %v568
        %v571 = vmul.f32 %v544, %v568
        %574 = vrot.lane.b32.xlu0 %v570, 112
        %v575 = vpop.permute.xlu0 %574
        %576 = vrot.lane.b32.xlu0 %v571, 112
        %v577 = vpop.permute.xlu0 %576
        %v578 = vrot.slane %v575, 4
        %v579 = vrot.slane %v577, 4
        %vm580 = vcmask 1043456
        %v581 = vsel %vm580, %v578, %v579
        %vm582 = vcmask 916480
        %v583 = vsel %vm582, %v575, %v581
        %v586 = vadd.f32 %v557, %v583
        %v587 = vadd.f32 %v558, %v577
        %588 = vset.pattern.permute.xlu0 10
        %589 = vperm.xlu0 %588, %v539
        %v590 = vpop.permute.xlu0 %589
        %v592 = vunpack.c.l.s4 839922192
        %v593 = vunpack.c.0.s8 %v592
        %v594 = vlaneseq
        %v595 = vshrl.u32 %v594, 7
        %v596 = vsub.s32 %v593, %v595
        %v597 = vrot.slane %v590, %v596
        %v599 = vmul.f32 %v543, %v597
        %v600 = vmul.f32 %v544, %v597
        %603 = vrot.lane.b32.xlu0 %v599, 96
        %v604 = vpop.permute.xlu0 %603
        %605 = vrot.lane.b32.xlu0 %v600, 96
        %v606 = vpop.permute.xlu0 %605
        %v607 = vrot.slane %v604, 4
        %v608 = vrot.slane %v606, 4
        %v609 = vsel %vm580, %v607, %v608
        %vm610 = vcmask 785408
        %v611 = vsel %vm610, %v604, %v609
        %v614 = vadd.f32 %v586, %v611
        %v615 = vadd.f32 %v587, %v606
        %v616 = vld [vmem:[#allocation2 + $0x4] sm:$0xff]
        %v617 = vld [vmem:[#allocation2 + $0xc] sm:$0xf]
        %618 = vset.pattern.permute.xlu0 15
        %619 = vperm.xlu0 %618, %v539
        %v620 = vpop.permute.xlu0 %619
        %v622 = vunpack.c.l.s4 839922192
        %v623 = vunpack.c.0.s8 %v622
        %v624 = vlaneseq
        %v625 = vshrl.u32 %v624, 7
        %v626 = vsub.s32 %v623, %v625
        %v627 = vrot.slane %v620, %v626
        %v629 = vmul.f32 %v616, %v627
        %v630 = vmul.f32 %v617, %v627
        %633 = vrot.lane.b32.xlu0 %v629, 80
        %v634 = vpop.permute.xlu0 %633
        %635 = vrot.lane.b32.xlu0 %v630, 80
        %v636 = vpop.permute.xlu0 %635
        %v637 = vrot.slane %v634, 4
        %vm638 = vcmask 654336
        %v639 = vsel %vm638, %v637, %v634
        %v640 = vsel %vm638, %v637, %v636
        %v643 = vadd.f32 %v614, %v639
        %v644 = vadd.f32 %v615, %v640
        %645 = vset.pattern.permute.xlu0 20
        %646 = vperm.xlu0 %645, %v539
        %v647 = vpop.permute.xlu0 %646
        %v649 = vunpack.c.l.s4 839922192
        %v650 = vunpack.c.0.s8 %v649
        %v651 = vlaneseq
        %v652 = vshrl.u32 %v651, 7
        %v653 = vsub.s32 %v650, %v652
        %v654 = vrot.slane %v647, %v653
        %v656 = vmul.f32 %v616, %v654
        %v657 = vmul.f32 %v617, %v654
        %660 = vrot.lane.b32.xlu0 %v656, 64
        %v661 = vpop.permute.xlu0 %660
        %662 = vrot.lane.b32.xlu0 %v657, 64
        %v663 = vpop.permute.xlu0 %662
        %v664 = vrot.slane %v661, 4
        %vm665 = vcmask 523264
        %v666 = vsel %vm665, %v664, %v661
        %v667 = vsel %vm665, %v664, %v663
        %v670 = vadd.f32 %v643, %v666
        %v671 = vadd.f32 %v644, %v667
        %v672 = vsel %vm501, 1, 0
        %v673 = vsel %vm502, 1, 0
        %vm674 = vcmp.eq.s32.totalorder %v672, 1
        %vm675 = vcmp.eq.s32.totalorder %v673, 1
        %v678 = vcombine.high %v670, %v670
        %679 = vrot.lane.b32.xlu0 %v670, 34
        %v680 = vpop.permute.xlu0 %679
        %681 = vrot.lane.b32.xlu0 %v678, 34
        %v682 = vpop.permute.xlu0 %681
        %683 = vrot.lane.b32.xlu0 %v671, 34
        %v684 = vpop.permute.xlu0 %683
        %vm685 = vcmask 277504
        %v686 = vsel %vm685, %v680, %v682
        %v687 = vsel %vm685, %v682, %v684
        %v690 = vsel %vm674, %v686, 0.0
        %v691 = vsel %vm675, %v687, 0.0
        %v692 = vld [vmem:[#allocation2] sm:$0xff]
        %v693 = vld [vmem:[#allocation2 + $0x8] sm:$0xf]
        %694 = vset.pattern.permute.xlu0 1
        %695 = vperm.xlu0 %694, %v539
        %v696 = vpop.permute.xlu0 %695
        %v698 = vunpack.c.l.s4 839922192
        %v699 = vunpack.c.0.s8 %v698
        %v700 = vlaneseq
        %v701 = vshrl.u32 %v700, 7
        %v702 = vsub.s32 %v699, %v701
        %v703 = vrot.slane %v696, %v702
        %v705 = vmul.f32 %v692, %v703
        %v706 = vmul.f32 %v693, %v703
        %707 = vset.pattern.permute.xlu0 6
        %708 = vperm.xlu0 %707, %v539
        %v709 = vpop.permute.xlu0 %708
        %v711 = vunpack.c.l.s4 839922192
        %v712 = vunpack.c.0.s8 %v711
        %v713 = vlaneseq
        %v714 = vshrl.u32 %v713, 7
        %v715 = vsub.s32 %v712, %v714
        %v716 = vrot.slane %v709, %v715
        %v718 = vmul.f32 %v692, %v716
        %v719 = vmul.f32 %v693, %v716
        %722 = vrot.lane.b32.xlu0 %v718, 112
        %v723 = vpop.permute.xlu0 %722
        %724 = vrot.lane.b32.xlu0 %v719, 112
        %v725 = vpop.permute.xlu0 %724
        %v726 = vrot.slane %v723, 4
        %v727 = vrot.slane %v725, 4
        %v728 = vsel %vm580, %v726, %v727
        %v729 = vsel %vm582, %v723, %v728
        %v732 = vadd.f32 %v705, %v729
        %v733 = vadd.f32 %v706, %v725
        %734 = vset.pattern.permute.xlu0 11
        %735 = vperm.xlu0 %734, %v539
        %v736 = vpop.permute.xlu0 %735
        %v738 = vunpack.c.l.s4 839922192
        %v739 = vunpack.c.0.s8 %v738
        %v740 = vlaneseq
        %v741 = vshrl.u32 %v740, 7
        %v742 = vsub.s32 %v739, %v741
        %v743 = vrot.slane %v736, %v742
        %v745 = vmul.f32 %v692, %v743
        %v746 = vmul.f32 %v693, %v743
        %749 = vrot.lane.b32.xlu0 %v745, 96
        %v750 = vpop.permute.xlu0 %749
        %751 = vrot.lane.b32.xlu0 %v746, 96
        %v752 = vpop.permute.xlu0 %751
        %v753 = vrot.slane %v750, 4
        %v754 = vrot.slane %v752, 4
        %v755 = vsel %vm580, %v753, %v754
        %v756 = vsel %vm610, %v750, %v755
        %v759 = vadd.f32 %v732, %v756
        %v760 = vadd.f32 %v733, %v752
        %v761 = vld [vmem:[#allocation2 + $0x4] sm:$0xff]
        %v762 = vld [vmem:[#allocation2 + $0xc] sm:$0xf]
        %763 = vset.pattern.permute.xlu0 16
        %764 = vperm.xlu0 %763, %v539
        %v765 = vpop.permute.xlu0 %764
        %v767 = vunpack.c.l.s4 839922192
        %v768 = vunpack.c.0.s8 %v767
        %v769 = vlaneseq
        %v770 = vshrl.u32 %v769, 7
        %v771 = vsub.s32 %v768, %v770
        %v772 = vrot.slane %v765, %v771
        %v774 = vmul.f32 %v761, %v772
        %v775 = vmul.f32 %v762, %v772
        %778 = vrot.lane.b32.xlu0 %v774, 80
        %v779 = vpop.permute.xlu0 %778
        %780 = vrot.lane.b32.xlu0 %v775, 80
        %v781 = vpop.permute.xlu0 %780
        %v782 = vrot.slane %v779, 4
        %v783 = vsel %vm638, %v782, %v779
        %v784 = vsel %vm638, %v782, %v781
        %v787 = vadd.f32 %v759, %v783
        %v788 = vadd.f32 %v760, %v784
        %789 = vset.pattern.permute.xlu0 21
        %790 = vperm.xlu0 %789, %v539
        %v791 = vpop.permute.xlu0 %790
        %v793 = vunpack.c.l.s4 839922192
        %v794 = vunpack.c.0.s8 %v793
        %v795 = vlaneseq
        %v796 = vshrl.u32 %v795, 7
        %v797 = vsub.s32 %v794, %v796
        %v798 = vrot.slane %v791, %v797
        %v800 = vmul.f32 %v761, %v798
        %v801 = vmul.f32 %v762, %v798
        %804 = vrot.lane.b32.xlu0 %v800, 64
        %v805 = vpop.permute.xlu0 %804
        %806 = vrot.lane.b32.xlu0 %v801, 64
        %v807 = vpop.permute.xlu0 %806
        %v808 = vrot.slane %v805, 4
        %v809 = vsel %vm665, %v808, %v805
        %v810 = vsel %vm665, %v808, %v807
        %v813 = vadd.f32 %v787, %v809
        %v814 = vadd.f32 %v788, %v810
        %v815 = vsel %vm507, 1, 0
        %v816 = vsel %vm508, 1, 0
        %vm817 = vcmp.eq.s32.totalorder %v815, 1
        %vm818 = vcmp.eq.s32.totalorder %v816, 1
        %v821 = vcombine.high %v813, %v813
        %822 = vrot.lane.b32.xlu0 %v813, 33
        %v823 = vpop.permute.xlu0 %822
        %824 = vrot.lane.b32.xlu0 %v821, 33
        %v825 = vpop.permute.xlu0 %824
        %826 = vrot.lane.b32.xlu0 %v814, 33
        %v827 = vpop.permute.xlu0 %826
        %vm828 = vcmask 269312
        %v829 = vsel %vm828, %v823, %v825
        %v830 = vsel %vm828, %v825, %v827
        %v833 = vsel %vm817, %v829, 0.0
        %v834 = vsel %vm818, %v830, 0.0
        %v835 = vadd.f32 %v690, %v833
        %v836 = vadd.f32 %v691, %v834
        %v837 = vld [vmem:[#allocation2] sm:$0xff]
        %v838 = vld [vmem:[#allocation2 + $0x8] sm:$0xf]
        %839 = vset.pattern.permute.xlu0 2
        %840 = vperm.xlu0 %839, %v539
        %v841 = vpop.permute.xlu0 %840
        %v843 = vunpack.c.l.s4 839922192
        %v844 = vunpack.c.0.s8 %v843
        %v845 = vlaneseq
        %v846 = vshrl.u32 %v845, 7
        %v847 = vsub.s32 %v844, %v846
        %v848 = vrot.slane %v841, %v847
        %v850 = vmul.f32 %v837, %v848
        %v851 = vmul.f32 %v838, %v848
        %852 = vset.pattern.permute.xlu0 7
        %853 = vperm.xlu0 %852, %v539
        %v854 = vpop.permute.xlu0 %853
        %v856 = vunpack.c.l.s4 839922192
        %v857 = vunpack.c.0.s8 %v856
        %v858 = vlaneseq
        %v859 = vshrl.u32 %v858, 7
        %v860 = vsub.s32 %v857, %v859
        %v861 = vrot.slane %v854, %v860
        %v863 = vmul.f32 %v837, %v861
        %v864 = vmul.f32 %v838, %v861
        %867 = vrot.lane.b32.xlu0 %v863, 112
        %v868 = vpop.permute.xlu0 %867
        %869 = vrot.lane.b32.xlu0 %v864, 112
        %v870 = vpop.permute.xlu0 %869
        %v871 = vrot.slane %v868, 4
        %v872 = vrot.slane %v870, 4
        %v873 = vsel %vm580, %v871, %v872
        %v874 = vsel %vm582, %v868, %v873
        %v877 = vadd.f32 %v850, %v874
        %v878 = vadd.f32 %v851, %v870
        %v879 = vld [vmem:[#allocation2 + $0x4] sm:$0xff]
        %880 = vset.pattern.permute.xlu0 12
        %881 = vperm.xlu0 %880, %v539
        %v882 = vpop.permute.xlu0 %881
        %v884 = vunpack.c.l.s4 839922192
        %v885 = vunpack.c.0.s8 %v884
        %v886 = vlaneseq
        %v887 = vshrl.u32 %v886, 7
        %v888 = vsub.s32 %v885, %v887
        %v889 = vrot.slane %v882, %v888
        %v891 = vmul.f32 %v879, %v889
        %893 = vrot.lane.b32.xlu0 %v891, 96
        %v894 = vpop.permute.xlu0 %893
        %v895 = vrot.slane %v894, 4
        %v896 = vsel %vm610, %v895, %v894
        %v899 = vadd.f32 %v877, %v896
        %v900 = vadd.f32 %v878, %v895
        %v901 = vld [vmem:[#allocation2 + $0x4] sm:$0xff]
        %v902 = vld [vmem:[#allocation2 + $0xc] sm:$0xf]
        %903 = vset.pattern.permute.xlu0 17
        %904 = vperm.xlu0 %903, %v539
        %v905 = vpop.permute.xlu0 %904
        %v907 = vunpack.c.l.s4 839922192
        %v908 = vunpack.c.0.s8 %v907
        %v909 = vlaneseq
        %v910 = vshrl.u32 %v909, 7
        %v911 = vsub.s32 %v908, %v910
        %v912 = vrot.slane %v905, %v911
        %v914 = vmul.f32 %v901, %v912
        %v915 = vmul.f32 %v902, %v912
        %918 = vrot.lane.b32.xlu0 %v914, 80
        %v919 = vpop.permute.xlu0 %918
        %920 = vrot.lane.b32.xlu0 %v915, 80
        %v921 = vpop.permute.xlu0 %920
        %v922 = vrot.slane %v919, 4
        %v923 = vsel %vm638, %v922, %v919
        %v924 = vsel %vm638, %v922, %v921
        %v927 = vadd.f32 %v899, %v923
        %v928 = vadd.f32 %v900, %v924
        %929 = vset.pattern.permute.xlu0 22
        %930 = vperm.xlu0 %929, %v539
        %v931 = vpop.permute.xlu0 %930
        %v933 = vunpack.c.l.s4 839922192
        %v934 = vunpack.c.0.s8 %v933
        %v935 = vlaneseq
        %v936 = vshrl.u32 %v935, 7
        %v937 = vsub.s32 %v934, %v936
        %v938 = vrot.slane %v931, %v937
        %v940 = vmul.f32 %v901, %v938
        %v941 = vmul.f32 %v902, %v938
        %944 = vrot.lane.b32.xlu0 %v940, 64
        %v945 = vpop.permute.xlu0 %944
        %946 = vrot.lane.b32.xlu0 %v941, 64
        %v947 = vpop.permute.xlu0 %946
        %v948 = vrot.slane %v945, 4
        %v949 = vsel %vm665, %v948, %v945
        %v950 = vsel %vm665, %v948, %v947
        %v953 = vadd.f32 %v927, %v949
        %v954 = vadd.f32 %v928, %v950
        %v957 = vcombine.high %v953, %v953
        %958 = vrot.lane.b32.xlu0 %v953, 32
        %v959 = vpop.permute.xlu0 %958
        %960 = vrot.lane.b32.xlu0 %v957, 32
        %v961 = vpop.permute.xlu0 %960
        %962 = vrot.lane.b32.xlu0 %v954, 32
        %v963 = vpop.permute.xlu0 %962
        %vm964 = vcmask 261120
        %v965 = vsel %vm964, %v959, %v961
        %v966 = vsel %vm964, %v961, %v963
        %v969 = vadd.f32 %v835, %v965
        %v970 = vadd.f32 %v836, %v966
        %v971 = vld [vmem:[#allocation2] sm:$0xff]
        %v972 = vld [vmem:[#allocation2 + $0x8] sm:$0xf]
        %973 = vset.pattern.permute.xlu0 3
        %974 = vperm.xlu0 %973, %v539
        %v975 = vpop.permute.xlu0 %974
        %v977 = vunpack.c.l.s4 839922192
        %v978 = vunpack.c.0.s8 %v977
        %v979 = vlaneseq
        %v980 = vshrl.u32 %v979, 7
        %v981 = vsub.s32 %v978, %v980
        %v982 = vrot.slane %v975, %v981
        %v984 = vmul.f32 %v971, %v982
        %v985 = vmul.f32 %v972, %v982
        %986 = vset.pattern.permute.xlu0 8
        %987 = vperm.xlu0 %986, %v539
        %v988 = vpop.permute.xlu0 %987
        %v990 = vunpack.c.l.s4 839922192
        %v991 = vunpack.c.0.s8 %v990
        %v992 = vlaneseq
        %v993 = vshrl.u32 %v992, 7
        %v994 = vsub.s32 %v991, %v993
        %v995 = vrot.slane %v988, %v994
        %v997 = vmul.f32 %v971, %v995
        %v998 = vmul.f32 %v972, %v995
        %1001 = vrot.lane.b32.xlu0 %v997, 112
        %v1002 = vpop.permute.xlu0 %1001
        %1003 = vrot.lane.b32.xlu0 %v998, 112
        %v1004 = vpop.permute.xlu0 %1003
        %v1005 = vrot.slane %v1002, 4
        %v1006 = vrot.slane %v1004, 4
        %v1007 = vsel %vm580, %v1005, %v1006
        %v1008 = vsel %vm582, %v1002, %v1007
        %v1011 = vadd.f32 %v984, %v1008
        %v1012 = vadd.f32 %v985, %v1004
        %v1013 = vld [vmem:[#allocation2 + $0x4] sm:$0xff]
        %v1014 = vld [vmem:[#allocation2 + $0xc] sm:$0xf]
        %1015 = vset.pattern.permute.xlu0 13
        %1016 = vperm.xlu0 %1015, %v539
        %v1017 = vpop.permute.xlu0 %1016
        %v1019 = vunpack.c.l.s4 839922192
        %v1020 = vunpack.c.0.s8 %v1019
        %v1021 = vlaneseq
        %v1022 = vshrl.u32 %v1021, 7
        %v1023 = vsub.s32 %v1020, %v1022
        %v1024 = vrot.slane %v1017, %v1023
        %v1026 = vmul.f32 %v1013, %v1024
        %v1027 = vmul.f32 %v1014, %v1024
        %1030 = vrot.lane.b32.xlu0 %v1026, 96
        %v1031 = vpop.permute.xlu0 %1030
        %1032 = vrot.lane.b32.xlu0 %v1027, 96
        %v1033 = vpop.permute.xlu0 %1032
        %v1034 = vrot.slane %v1031, 4
        %v1035 = vsel %vm610, %v1034, %v1031
        %v1036 = vsel %vm610, %v1034, %v1033
        %v1039 = vadd.f32 %v1011, %v1035
        %v1040 = vadd.f32 %v1012, %v1036
        %1041 = vset.pattern.permute.xlu0 18
        %1042 = vperm.xlu0 %1041, %v539
        %v1043 = vpop.permute.xlu0 %1042
        %v1045 = vunpack.c.l.s4 839922192
        %v1046 = vunpack.c.0.s8 %v1045
        %v1047 = vlaneseq
        %v1048 = vshrl.u32 %v1047, 7
        %v1049 = vsub.s32 %v1046, %v1048
        %v1050 = vrot.slane %v1043, %v1049
        %v1052 = vmul.f32 %v1013, %v1050
        %v1053 = vmul.f32 %v1014, %v1050
        %1056 = vrot.lane.b32.xlu0 %v1052, 80
        %v1057 = vpop.permute.xlu0 %1056
        %1058 = vrot.lane.b32.xlu0 %v1053, 80
        %v1059 = vpop.permute.xlu0 %1058
        %v1060 = vrot.slane %v1057, 4
        %v1061 = vsel %vm638, %v1060, %v1057
        %v1062 = vsel %vm638, %v1060, %v1059
        %v1065 = vadd.f32 %v1039, %v1061
        %v1066 = vadd.f32 %v1040, %v1062
        %1067 = vset.pattern.permute.xlu0 23
        %1068 = vperm.xlu0 %1067, %v539
        %v1069 = vpop.permute.xlu0 %1068
        %v1071 = vunpack.c.l.s4 839922192
        %v1072 = vunpack.c.0.s8 %v1071
        %v1073 = vlaneseq
        %v1074 = vshrl.u32 %v1073, 7
        %v1075 = vsub.s32 %v1072, %v1074
        %v1076 = vrot.slane %v1069, %v1075
        %v1078 = vmul.f32 %v1013, %v1076
        %v1079 = vmul.f32 %v1014, %v1076
        %1082 = vrot.lane.b32.xlu0 %v1078, 64
        %v1083 = vpop.permute.xlu0 %1082
        %1084 = vrot.lane.b32.xlu0 %v1079, 64
        %v1085 = vpop.permute.xlu0 %1084
        %v1086 = vrot.slane %v1083, 4
        %v1087 = vsel %vm665, %v1086, %v1083
        %v1088 = vsel %vm665, %v1086, %v1085
        %v1091 = vadd.f32 %v1065, %v1087
        %v1092 = vadd.f32 %v1066, %v1088
        %v1093 = vsel %vm513, 1, 0
        %v1094 = vsel %vm514, 1, 0
        %vm1095 = vcmp.eq.s32.totalorder %v1093, 1
        %vm1096 = vcmp.eq.s32.totalorder %v1094, 1
        %v1099 = vcombine.high %v1091, %v1091
        %1100 = vrot.lane.b32.xlu0 %v1091, 31
        %v1101 = vpop.permute.xlu0 %1100
        %1102 = vrot.lane.b32.xlu0 %v1099, 31
        %v1103 = vpop.permute.xlu0 %1102
        %1104 = vrot.lane.b32.xlu0 %v1092, 31
        %v1105 = vpop.permute.xlu0 %1104
        %vm1106 = vcmask 252928
        %v1107 = vsel %vm1106, %v1101, %v1103
        %v1108 = vsel %vm1106, %v1103, %v1105
        %v1111 = vsel %vm1095, %v1107, 0.0
        %v1112 = vsel %vm1096, %v1108, 0.0
        %v1113 = vadd.f32 %v969, %v1111
        %v1114 = vadd.f32 %v970, %v1112
        %v1115 = vld [vmem:[#allocation2] sm:$0xff]
        %v1116 = vld [vmem:[#allocation2 + $0x8] sm:$0xf]
        %1117 = vset.pattern.permute.xlu0 4
        %1118 = vperm.xlu0 %1117, %v539
        %v1119 = vpop.permute.xlu0 %1118
        %v1121 = vunpack.c.l.s4 839922192
        %v1122 = vunpack.c.0.s8 %v1121
        %v1123 = vlaneseq
        %v1124 = vshrl.u32 %v1123, 7
        %v1125 = vsub.s32 %v1122, %v1124
        %v1126 = vrot.slane %v1119, %v1125
        %v1128 = vmul.f32 %v1115, %v1126
        %v1129 = vmul.f32 %v1116, %v1126
        %1130 = vset.pattern.permute.xlu0 9
        %1131 = vperm.xlu0 %1130, %v539
        %v1132 = vpop.permute.xlu0 %1131
        %v1134 = vunpack.c.l.s4 839922192
        %v1135 = vunpack.c.0.s8 %v1134
        %v1136 = vlaneseq
        %v1137 = vshrl.u32 %v1136, 7
        %v1138 = vsub.s32 %v1135, %v1137
        %v1139 = vrot.slane %v1132, %v1138
        %v1141 = vmul.f32 %v1115, %v1139
        %v1142 = vmul.f32 %v1116, %v1139
        %1145 = vrot.lane.b32.xlu0 %v1141, 112
        %v1146 = vpop.permute.xlu0 %1145
        %1147 = vrot.lane.b32.xlu0 %v1142, 112
        %v1148 = vpop.permute.xlu0 %1147
        %v1149 = vrot.slane %v1146, 4
        %v1150 = vrot.slane %v1148, 4
        %v1151 = vsel %vm580, %v1149, %v1150
        %v1152 = vsel %vm582, %v1146, %v1151
        %v1155 = vadd.f32 %v1128, %v1152
        %v1156 = vadd.f32 %v1129, %v1148
        %v1157 = vld [vmem:[#allocation2 + $0x4] sm:$0xff]
        %v1158 = vld [vmem:[#allocation2 + $0xc] sm:$0xf]
        %1159 = vset.pattern.permute.xlu0 14
        %1160 = vperm.xlu0 %1159, %v539
        %v1161 = vpop.permute.xlu0 %1160
        %v1163 = vunpack.c.l.s4 839922192
        %v1164 = vunpack.c.0.s8 %v1163
        %v1165 = vlaneseq
        %v1166 = vshrl.u32 %v1165, 7
        %v1167 = vsub.s32 %v1164, %v1166
        %v1168 = vrot.slane %v1161, %v1167
        %v1170 = vmul.f32 %v1157, %v1168
        %v1171 = vmul.f32 %v1158, %v1168
        %1174 = vrot.lane.b32.xlu0 %v1170, 96
        %v1175 = vpop.permute.xlu0 %1174
        %1176 = vrot.lane.b32.xlu0 %v1171, 96
        %v1177 = vpop.permute.xlu0 %1176
        %v1178 = vrot.slane %v1175, 4
        %v1179 = vsel %vm610, %v1178, %v1175
        %v1180 = vsel %vm610, %v1178, %v1177
        %v1183 = vadd.f32 %v1155, %v1179
        %v1184 = vadd.f32 %v1156, %v1180
        %1185 = vset.pattern.permute.xlu0 19
        %1186 = vperm.xlu0 %1185, %v539
        %v1187 = vpop.permute.xlu0 %1186
        %v1189 = vunpack.c.l.s4 839922192
        %v1190 = vunpack.c.0.s8 %v1189
        %v1191 = vlaneseq
        %v1192 = vshrl.u32 %v1191, 7
        %v1193 = vsub.s32 %v1190, %v1192
        %v1194 = vrot.slane %v1187, %v1193
        %v1196 = vmul.f32 %v1157, %v1194
        %v1197 = vmul.f32 %v1158, %v1194
        %1200 = vrot.lane.b32.xlu0 %v1196, 80
        %v1201 = vpop.permute.xlu0 %1200
        %1202 = vrot.lane.b32.xlu0 %v1197, 80
        %v1203 = vpop.permute.xlu0 %1202
        %v1204 = vrot.slane %v1201, 4
        %v1205 = vsel %vm638, %v1204, %v1201
        %v1206 = vsel %vm638, %v1204, %v1203
        %v1209 = vadd.f32 %v1183, %v1205
        %v1210 = vadd.f32 %v1184, %v1206
        %1211 = vset.pattern.permute.xlu0 24
        %1212 = vperm.xlu0 %1211, %v539
        %v1213 = vpop.permute.xlu0 %1212
        %v1215 = vunpack.c.l.s4 839922192
        %v1216 = vunpack.c.0.s8 %v1215
        %v1217 = vlaneseq
        %v1218 = vshrl.u32 %v1217, 7
        %v1219 = vsub.s32 %v1216, %v1218
        %v1220 = vrot.slane %v1213, %v1219
        %v1222 = vmul.f32 %v1157, %v1220
        %v1223 = vmul.f32 %v1158, %v1220
        %1226 = vrot.lane.b32.xlu0 %v1222, 64
        %v1227 = vpop.permute.xlu0 %1226
        %1228 = vrot.lane.b32.xlu0 %v1223, 64
        %v1229 = vpop.permute.xlu0 %1228
        %v1230 = vrot.slane %v1227, 4
        %v1231 = vsel %vm665, %v1230, %v1227
        %v1232 = vsel %vm665, %v1230, %v1229
        %v1235 = vadd.f32 %v1209, %v1231
        %v1236 = vadd.f32 %v1210, %v1232
        %v1237 = vsel %vm519, 1, 0
        %v1238 = vsel %vm520, 1, 0
        %vm1239 = vcmp.eq.s32.totalorder %v1237, 1
        %vm1240 = vcmp.eq.s32.totalorder %v1238, 1
        %v1243 = vcombine.high %v1235, %v1235
        %1244 = vrot.lane.b32.xlu0 %v1235, 30
        %v1245 = vpop.permute.xlu0 %1244
        %1246 = vrot.lane.b32.xlu0 %v1243, 30
        %v1247 = vpop.permute.xlu0 %1246
        %1248 = vrot.lane.b32.xlu0 %v1236, 30
        %v1249 = vpop.permute.xlu0 %1248
        %vm1250 = vcmask 244736
        %v1251 = vsel %vm1250, %v1245, %v1247
        %v1252 = vsel %vm1250, %v1247, %v1249
        %v1255 = vsel %vm1239, %v1251, 0.0
        %v1256 = vsel %vm1240, %v1252, 0.0
        %v1257 = vadd.f32 %v1113, %v1255
        %v1258 = vadd.f32 %v1114, %v1256
        %v1259 = vld [vmem:[%s2] sm:$0xf]
        %1261 = vset.pattern.permute.xlu0 0
        %1262 = vperm.xlu0 %1261, %v1259
        %v1263 = vpop.permute.xlu0 %1262
        %v1265 = vadd.f32 %v1257, %v1263
        %v1266 = vadd.f32 %v1258, %v1263
        %v1269 = vcombine.low %v1265, %v1266
        %1271 = vst [vmem:[#allocation3 + $0x8] sm:$0xff] %v1269
        %v1272 = vld [vmem:[#allocation3] sm:$0xff]
        %v1273 = vld [vmem:[#allocation3 + $0x8] sm:$0xf]
        %1275 = vset.pattern.permute.xlu0 0
        %1276 = vperm.xlu0 %1275, %v540
        %v1277 = vpop.permute.xlu0 %1276
        %v1279 = vunpack.c.l.s4 839922192
        %v1280 = vunpack.c.0.s8 %v1279
        %v1281 = vlaneseq
        %v1282 = vshrl.u32 %v1281, 7
        %v1283 = vsub.s32 %v1280, %v1282
        %v1284 = vrot.slane %v1277, %v1283
        %v1286 = vmul.f32 %v1272, %v1284
        %v1287 = vmul.f32 %v1273, %v1284
        %v1288 = vld [vmem:[#allocation3 + $0x4] sm:$0xff]
        %v1289 = vld [vmem:[#allocation3 + $0xc] sm:$0xf]
        %1290 = vset.pattern.permute.xlu0 7
        %1291 = vperm.xlu0 %1290, %v540
        %v1292 = vpop.permute.xlu0 %1291
        %v1294 = vunpack.c.l.s4 839922192
        %v1295 = vunpack.c.0.s8 %v1294
        %v1296 = vlaneseq
        %v1297 = vshrl.u32 %v1296, 7
        %v1298 = vsub.s32 %v1295, %v1297
        %v1299 = vrot.slane %v1292, %v1298
        %v1301 = vmul.f32 %v1288, %v1299
        %v1302 = vmul.f32 %v1289, %v1299
        %1305 = vrot.lane.b32.xlu0 %v1301, 80
        %v1306 = vpop.permute.xlu0 %1305
        %1307 = vrot.lane.b32.xlu0 %v1302, 80
        %v1308 = vpop.permute.xlu0 %1307
        %v1309 = vrot.slane %v1306, 4
        %v1310 = vsel %vm638, %v1309, %v1306
        %v1311 = vsel %vm638, %v1309, %v1308
        %v1314 = vadd.f32 %v1286, %v1310
        %v1315 = vadd.f32 %v1287, %v1311
        %1316 = vset.pattern.permute.xlu0 14
        %1317 = vperm.xlu0 %1316, %v540
        %v1318 = vpop.permute.xlu0 %1317
        %v1320 = vunpack.c.l.s4 839922192
        %v1321 = vunpack.c.0.s8 %v1320
        %v1322 = vlaneseq
        %v1323 = vshrl.u32 %v1322, 7
        %v1324 = vsub.s32 %v1321, %v1323
        %v1325 = vrot.slane %v1318, %v1324
        %v1327 = vmul.f32 %v1288, %v1325
        %v1328 = vmul.f32 %v1289, %v1325
        %1331 = vrot.lane.b32.xlu0 %v1327, 32
        %v1332 = vpop.permute.xlu0 %1331
        %1333 = vrot.lane.b32.xlu0 %v1328, 32
        %v1334 = vpop.permute.xlu0 %1333
        %v1335 = vrot.slane %v1332, 4
        %v1336 = vsel %vm964, %v1335, %v1332
        %v1337 = vsel %vm964, %v1335, %v1334
        %v1340 = vadd.f32 %v1314, %v1336
        %v1341 = vadd.f32 %v1315, %v1337
        %1342 = vset.pattern.permute.xlu0 21
        %1343 = vperm.xlu0 %1342, %v540
        %v1344 = vpop.permute.xlu0 %1343
        %v1346 = vunpack.c.l.s4 839922192
        %v1347 = vunpack.c.0.s8 %v1346
        %v1348 = vlaneseq
        %v1349 = vshrl.u32 %v1348, 7
        %v1350 = vsub.s32 %v1347, %v1349
        %v1351 = vrot.slane %v1344, %v1350
        %v1353 = vmul.f32 %v1288, %v1351
        %v1354 = vmul.f32 %v1289, %v1351
        %1357 = vrot.lane.b32.xlu0 %v1353, 112
        %v1358 = vpop.permute.xlu0 %1357
        %1359 = vrot.lane.b32.xlu0 %v1354, 112
        %v1360 = vpop.permute.xlu0 %1359
        %v1361 = vrot.slane %v1358, 4
        %v1362 = vrot.slane %v1360, 4
        %v1363 = vsel %vm580, %v1361, %v1362
        %v1364 = vsel %vm582, %v1358, %v1363
        %v1367 = vadd.f32 %v1340, %v1364
        %v1368 = vadd.f32 %v1341, %v1360
        %v1369 = vld [vmem:[#allocation3 + $0x8] sm:$0xff]
        %v1370 = vld [vmem:[#allocation3 + $0x10] sm:$0xf]
        %1371 = vset.pattern.permute.xlu0 28
        %1372 = vperm.xlu0 %1371, %v540
        %v1373 = vpop.permute.xlu0 %1372
        %v1375 = vunpack.c.l.s4 839922192
        %v1376 = vunpack.c.0.s8 %v1375
        %v1377 = vlaneseq
        %v1378 = vshrl.u32 %v1377, 7
        %v1379 = vsub.s32 %v1376, %v1378
        %v1380 = vrot.slane %v1373, %v1379
        %v1382 = vmul.f32 %v1369, %v1380
        %v1383 = vmul.f32 %v1370, %v1380
        %1386 = vrot.lane.b32.xlu0 %v1382, 64
        %v1387 = vpop.permute.xlu0 %1386
        %1388 = vrot.lane.b32.xlu0 %v1383, 64
        %v1389 = vpop.permute.xlu0 %1388
        %v1390 = vrot.slane %v1387, 4
        %v1391 = vsel %vm665, %v1390, %v1387
        %v1392 = vsel %vm665, %v1390, %v1389
        %v1395 = vadd.f32 %v1367, %v1391
        %v1396 = vadd.f32 %v1368, %v1392
        %1397 = vset.pattern.permute.xlu0 35
        %1398 = vperm.xlu0 %1397, %v540
        %v1399 = vpop.permute.xlu0 %1398
        %v1401 = vunpack.c.l.s4 839922192
        %v1402 = vunpack.c.0.s8 %v1401
        %v1403 = vlaneseq
        %v1404 = vshrl.u32 %v1403, 7
        %v1405 = vsub.s32 %v1402, %v1404
        %v1406 = vrot.slane %v1399, %v1405
        %v1408 = vmul.f32 %v1369, %v1406
        %v1409 = vmul.f32 %v1370, %v1406
        %1412 = vrot.lane.b32.xlu0 %v1408, 16
        %v1413 = vpop.permute.xlu0 %1412
        %1414 = vrot.lane.b32.xlu0 %v1409, 16
        %v1415 = vpop.permute.xlu0 %1414
        %v1416 = vrot.slane %v1413, 4
        %vm1417 = vcmask 130048
        %v1418 = vsel %vm1417, %v1416, %v1413
        %v1419 = vsel %vm1417, %v1416, %v1415
        %v1422 = vadd.f32 %v1395, %v1418
        %v1423 = vadd.f32 %v1396, %v1419
        %v1424 = vld [vmem:[#allocation3 + $0xc] sm:$0xff]
        %v1425 = vld [vmem:[#allocation3 + $0x14] sm:$0xf]
        %1426 = vset.pattern.permute.xlu0 42
        %1427 = vperm.xlu0 %1426, %v540
        %v1428 = vpop.permute.xlu0 %1427
        %v1430 = vunpack.c.l.s4 839922192
        %v1431 = vunpack.c.0.s8 %v1430
        %v1432 = vlaneseq
        %v1433 = vshrl.u32 %v1432, 7
        %v1434 = vsub.s32 %v1431, %v1433
        %v1435 = vrot.slane %v1428, %v1434
        %v1437 = vmul.f32 %v1424, %v1435
        %v1438 = vmul.f32 %v1425, %v1435
        %1441 = vrot.lane.b32.xlu0 %v1437, 96
        %v1442 = vpop.permute.xlu0 %1441
        %1443 = vrot.lane.b32.xlu0 %v1438, 96
        %v1444 = vpop.permute.xlu0 %1443
        %v1445 = vrot.slane %v1442, 4
        %v1446 = vsel %vm610, %v1445, %v1442
        %v1447 = vsel %vm610, %v1445, %v1444
        %v1450 = vadd.f32 %v1422, %v1446
        %v1451 = vadd.f32 %v1423, %v1447
        %v1452 = vsel %vm483, 1, 0
        %v1453 = vsel %vm484, 1, 0
        %vm1454 = vcmp.eq.s32.totalorder %v1452, 1
        %vm1455 = vcmp.eq.s32.totalorder %v1453, 1
        %v1458 = vcombine.high %v1450, %v1450
        %1459 = vrot.lane.b32.xlu0 %v1450, 25
        %v1460 = vpop.permute.xlu0 %1459
        %1461 = vrot.lane.b32.xlu0 %v1458, 25
        %v1462 = vpop.permute.xlu0 %1461
        %1463 = vrot.lane.b32.xlu0 %v1451, 25
        %v1464 = vpop.permute.xlu0 %1463
        %vm1465 = vcmask 203776
        %v1466 = vsel %vm1465, %v1460, %v1462
        %v1467 = vsel %vm1465, %v1462, %v1464
        %v1470 = vsel %vm1454, %v1466, 0.0
        %v1471 = vsel %vm1455, %v1467, 0.0
        %v1472 = vld [vmem:[#allocation3] sm:$0xff]
        %v1473 = vld [vmem:[#allocation3 + $0x8] sm:$0xf]
        %1474 = vset.pattern.permute.xlu0 1
        %1475 = vperm.xlu0 %1474, %v540
        %v1476 = vpop.permute.xlu0 %1475
        %v1478 = vunpack.c.l.s4 839922192
        %v1479 = vunpack.c.0.s8 %v1478
        %v1480 = vlaneseq
        %v1481 = vshrl.u32 %v1480, 7
        %v1482 = vsub.s32 %v1479, %v1481
        %v1483 = vrot.slane %v1476, %v1482
        %v1485 = vmul.f32 %v1472, %v1483
        %v1486 = vmul.f32 %v1473, %v1483
        %v1487 = vld [vmem:[#allocation3 + $0x4] sm:$0xff]
        %v1488 = vld [vmem:[#allocation3 + $0xc] sm:$0xf]
        %1489 = vset.pattern.permute.xlu0 8
        %1490 = vperm.xlu0 %1489, %v540
        %v1491 = vpop.permute.xlu0 %1490
        %v1493 = vunpack.c.l.s4 839922192
        %v1494 = vunpack.c.0.s8 %v1493
        %v1495 = vlaneseq
        %v1496 = vshrl.u32 %v1495, 7
        %v1497 = vsub.s32 %v1494, %v1496
        %v1498 = vrot.slane %v1491, %v1497
        %v1500 = vmul.f32 %v1487, %v1498
        %v1501 = vmul.f32 %v1488, %v1498
        %1504 = vrot.lane.b32.xlu0 %v1500, 80
        %v1505 = vpop.permute.xlu0 %1504
        %1506 = vrot.lane.b32.xlu0 %v1501, 80
        %v1507 = vpop.permute.xlu0 %1506
        %v1508 = vrot.slane %v1505, 4
        %v1509 = vsel %vm638, %v1508, %v1505
        %v1510 = vsel %vm638, %v1508, %v1507
        %v1513 = vadd.f32 %v1485, %v1509
        %v1514 = vadd.f32 %v1486, %v1510
        %1515 = vset.pattern.permute.xlu0 15
        %1516 = vperm.xlu0 %1515, %v540
        %v1517 = vpop.permute.xlu0 %1516
        %v1519 = vunpack.c.l.s4 839922192
        %v1520 = vunpack.c.0.s8 %v1519
        %v1521 = vlaneseq
        %v1522 = vshrl.u32 %v1521, 7
        %v1523 = vsub.s32 %v1520, %v1522
        %v1524 = vrot.slane %v1517, %v1523
        %v1526 = vmul.f32 %v1487, %v1524
        %v1527 = vmul.f32 %v1488, %v1524
        %1530 = vrot.lane.b32.xlu0 %v1526, 32
        %v1531 = vpop.permute.xlu0 %1530
        %1532 = vrot.lane.b32.xlu0 %v1527, 32
        %v1533 = vpop.permute.xlu0 %1532
        %v1534 = vrot.slane %v1531, 4
        %v1535 = vsel %vm964, %v1534, %v1531
        %v1536 = vsel %vm964, %v1534, %v1533
        %v1539 = vadd.f32 %v1513, %v1535
        %v1540 = vadd.f32 %v1514, %v1536
        %1541 = vset.pattern.permute.xlu0 22
        %1542 = vperm.xlu0 %1541, %v540
        %v1543 = vpop.permute.xlu0 %1542
        %v1545 = vunpack.c.l.s4 839922192
        %v1546 = vunpack.c.0.s8 %v1545
        %v1547 = vlaneseq
        %v1548 = vshrl.u32 %v1547, 7
        %v1549 = vsub.s32 %v1546, %v1548
        %v1550 = vrot.slane %v1543, %v1549
        %v1552 = vmul.f32 %v1487, %v1550
        %v1553 = vmul.f32 %v1488, %v1550
        %1556 = vrot.lane.b32.xlu0 %v1552, 112
        %v1557 = vpop.permute.xlu0 %1556
        %1558 = vrot.lane.b32.xlu0 %v1553, 112
        %v1559 = vpop.permute.xlu0 %1558
        %v1560 = vrot.slane %v1557, 4
        %v1561 = vrot.slane %v1559, 4
        %v1562 = vsel %vm580, %v1560, %v1561
        %v1563 = vsel %vm582, %v1557, %v1562
        %v1566 = vadd.f32 %v1539, %v1563
        %v1567 = vadd.f32 %v1540, %v1559
        %v1568 = vld [vmem:[#allocation3 + $0x8] sm:$0xff]
        %v1569 = vld [vmem:[#allocation3 + $0x10] sm:$0xf]
        %1570 = vset.pattern.permute.xlu0 29
        %1571 = vperm.xlu0 %1570, %v540
        %v1572 = vpop.permute.xlu0 %1571
        %v1574 = vunpack.c.l.s4 839922192
        %v1575 = vunpack.c.0.s8 %v1574
        %v1576 = vlaneseq
        %v1577 = vshrl.u32 %v1576, 7
        %v1578 = vsub.s32 %v1575, %v1577
        %v1579 = vrot.slane %v1572, %v1578
        %v1581 = vmul.f32 %v1568, %v1579
        %v1582 = vmul.f32 %v1569, %v1579
        %1585 = vrot.lane.b32.xlu0 %v1581, 64
        %v1586 = vpop.permute.xlu0 %1585
        %1587 = vrot.lane.b32.xlu0 %v1582, 64
        %v1588 = vpop.permute.xlu0 %1587
        %v1589 = vrot.slane %v1586, 4
        %v1590 = vsel %vm665, %v1589, %v1586
        %v1591 = vsel %vm665, %v1589, %v1588
        %v1594 = vadd.f32 %v1566, %v1590
        %v1595 = vadd.f32 %v1567, %v1591
        %1596 = vset.pattern.permute.xlu0 36
        %1597 = vperm.xlu0 %1596, %v540
        %v1598 = vpop.permute.xlu0 %1597
        %v1600 = vunpack.c.l.s4 839922192
        %v1601 = vunpack.c.0.s8 %v1600
        %v1602 = vlaneseq
        %v1603 = vshrl.u32 %v1602, 7
        %v1604 = vsub.s32 %v1601, %v1603
        %v1605 = vrot.slane %v1598, %v1604
        %v1607 = vmul.f32 %v1568, %v1605
        %v1608 = vmul.f32 %v1569, %v1605
        %1611 = vrot.lane.b32.xlu0 %v1607, 16
        %v1612 = vpop.permute.xlu0 %1611
        %1613 = vrot.lane.b32.xlu0 %v1608, 16
        %v1614 = vpop.permute.xlu0 %1613
        %v1615 = vrot.slane %v1612, 4
        %v1616 = vsel %vm1417, %v1615, %v1612
        %v1617 = vsel %vm1417, %v1615, %v1614
        %v1620 = vadd.f32 %v1594, %v1616
        %v1621 = vadd.f32 %v1595, %v1617
        %v1622 = vld [vmem:[#allocation3 + $0xc] sm:$0xff]
        %v1623 = vld [vmem:[#allocation3 + $0x14] sm:$0xf]
        %1624 = vset.pattern.permute.xlu0 43
        %1625 = vperm.xlu0 %1624, %v540
        %v1626 = vpop.permute.xlu0 %1625
        %v1628 = vunpack.c.l.s4 839922192
        %v1629 = vunpack.c.0.s8 %v1628
        %v1630 = vlaneseq
        %v1631 = vshrl.u32 %v1630, 7
        %v1632 = vsub.s32 %v1629, %v1631
        %v1633 = vrot.slane %v1626, %v1632
        %v1635 = vmul.f32 %v1622, %v1633
        %v1636 = vmul.f32 %v1623, %v1633
        %1639 = vrot.lane.b32.xlu0 %v1635, 96
        %v1640 = vpop.permute.xlu0 %1639
        %1641 = vrot.lane.b32.xlu0 %v1636, 96
        %v1642 = vpop.permute.xlu0 %1641
        %v1643 = vrot.slane %v1640, 4
        %v1644 = vsel %vm610, %v1643, %v1640
        %v1645 = vsel %vm610, %v1643, %v1642
        %v1648 = vadd.f32 %v1620, %v1644
        %v1649 = vadd.f32 %v1621, %v1645
        %v1650 = vsel %vm489, 1, 0
        %v1651 = vsel %vm490, 1, 0
        %vm1652 = vcmp.eq.s32.totalorder %v1650, 1
        %vm1653 = vcmp.eq.s32.totalorder %v1651, 1
        %v1656 = vcombine.high %v1648, %v1648
        %1657 = vrot.lane.b32.xlu0 %v1648, 22
        %v1658 = vpop.permute.xlu0 %1657
        %1659 = vrot.lane.b32.xlu0 %v1656, 22
        %v1660 = vpop.permute.xlu0 %1659
        %1661 = vrot.lane.b32.xlu0 %v1649, 22
        %v1662 = vpop.permute.xlu0 %1661
        %vm1663 = vcmask 179200
        %v1664 = vsel %vm1663, %v1658, %v1660
        %v1665 = vsel %vm1663, %v1660, %v1662
        %v1668 = vsel %vm1652, %v1664, 0.0
        %v1669 = vsel %vm1653, %v1665, 0.0
        %v1670 = vadd.f32 %v1470, %v1668
        %v1671 = vadd.f32 %v1471, %v1669
        %v1672 = vld [vmem:[#allocation3] sm:$0xff]
        %v1673 = vld [vmem:[#allocation3 + $0x8] sm:$0xf]
        %1674 = vset.pattern.permute.xlu0 2
        %1675 = vperm.xlu0 %1674, %v540
        %v1676 = vpop.permute.xlu0 %1675
        %v1678 = vunpack.c.l.s4 839922192
        %v1679 = vunpack.c.0.s8 %v1678
        %v1680 = vlaneseq
        %v1681 = vshrl.u32 %v1680, 7
        %v1682 = vsub.s32 %v1679, %v1681
        %v1683 = vrot.slane %v1676, %v1682
        %v1685 = vmul.f32 %v1672, %v1683
        %v1686 = vmul.f32 %v1673, %v1683
        %v1687 = vld [vmem:[#allocation3 + $0x4] sm:$0xff]
        %v1688 = vld [vmem:[#allocation3 + $0xc] sm:$0xf]
        %1689 = vset.pattern.permute.xlu0 9
        %1690 = vperm.xlu0 %1689, %v540
        %v1691 = vpop.permute.xlu0 %1690
        %v1693 = vunpack.c.l.s4 839922192
        %v1694 = vunpack.c.0.s8 %v1693
        %v1695 = vlaneseq
        %v1696 = vshrl.u32 %v1695, 7
        %v1697 = vsub.s32 %v1694, %v1696
        %v1698 = vrot.slane %v1691, %v1697
        %v1700 = vmul.f32 %v1687, %v1698
        %v1701 = vmul.f32 %v1688, %v1698
        %1704 = vrot.lane.b32.xlu0 %v1700, 80
        %v1705 = vpop.permute.xlu0 %1704
        %1706 = vrot.lane.b32.xlu0 %v1701, 80
        %v1707 = vpop.permute.xlu0 %1706
        %v1708 = vrot.slane %v1705, 4
        %v1709 = vsel %vm638, %v1708, %v1705
        %v1710 = vsel %vm638, %v1708, %v1707
        %v1713 = vadd.f32 %v1685, %v1709
        %v1714 = vadd.f32 %v1686, %v1710
        %1715 = vset.pattern.permute.xlu0 16
        %1716 = vperm.xlu0 %1715, %v540
        %v1717 = vpop.permute.xlu0 %1716
        %v1719 = vunpack.c.l.s4 839922192
        %v1720 = vunpack.c.0.s8 %v1719
        %v1721 = vlaneseq
        %v1722 = vshrl.u32 %v1721, 7
        %v1723 = vsub.s32 %v1720, %v1722
        %v1724 = vrot.slane %v1717, %v1723
        %v1726 = vmul.f32 %v1687, %v1724
        %v1727 = vmul.f32 %v1688, %v1724
        %1730 = vrot.lane.b32.xlu0 %v1726, 32
        %v1731 = vpop.permute.xlu0 %1730
        %1732 = vrot.lane.b32.xlu0 %v1727, 32
        %v1733 = vpop.permute.xlu0 %1732
        %v1734 = vrot.slane %v1731, 4
        %v1735 = vsel %vm964, %v1734, %v1731
        %v1736 = vsel %vm964, %v1734, %v1733
        %v1739 = vadd.f32 %v1713, %v1735
        %v1740 = vadd.f32 %v1714, %v1736
        %1741 = vset.pattern.permute.xlu0 23
        %1742 = vperm.xlu0 %1741, %v540
        %v1743 = vpop.permute.xlu0 %1742
        %v1745 = vunpack.c.l.s4 839922192
        %v1746 = vunpack.c.0.s8 %v1745
        %v1747 = vlaneseq
        %v1748 = vshrl.u32 %v1747, 7
        %v1749 = vsub.s32 %v1746, %v1748
        %v1750 = vrot.slane %v1743, %v1749
        %v1752 = vmul.f32 %v1687, %v1750
        %v1753 = vmul.f32 %v1688, %v1750
        %1756 = vrot.lane.b32.xlu0 %v1752, 112
        %v1757 = vpop.permute.xlu0 %1756
        %1758 = vrot.lane.b32.xlu0 %v1753, 112
        %v1759 = vpop.permute.xlu0 %1758
        %v1760 = vrot.slane %v1757, 4
        %v1761 = vrot.slane %v1759, 4
        %v1762 = vsel %vm580, %v1760, %v1761
        %v1763 = vsel %vm582, %v1757, %v1762
        %v1766 = vadd.f32 %v1739, %v1763
        %v1767 = vadd.f32 %v1740, %v1759
        %v1768 = vld [vmem:[#allocation3 + $0x8] sm:$0xff]
        %v1769 = vld [vmem:[#allocation3 + $0x10] sm:$0xf]
        %1770 = vset.pattern.permute.xlu0 30
        %1771 = vperm.xlu0 %1770, %v540
        %v1772 = vpop.permute.xlu0 %1771
        %v1774 = vunpack.c.l.s4 839922192
        %v1775 = vunpack.c.0.s8 %v1774
        %v1776 = vlaneseq
        %v1777 = vshrl.u32 %v1776, 7
        %v1778 = vsub.s32 %v1775, %v1777
        %v1779 = vrot.slane %v1772, %v1778
        %v1781 = vmul.f32 %v1768, %v1779
        %v1782 = vmul.f32 %v1769, %v1779
        %1785 = vrot.lane.b32.xlu0 %v1781, 64
        %v1786 = vpop.permute.xlu0 %1785
        %1787 = vrot.lane.b32.xlu0 %v1782, 64
        %v1788 = vpop.permute.xlu0 %1787
        %v1789 = vrot.slane %v1786, 4
        %v1790 = vsel %vm665, %v1789, %v1786
        %v1791 = vsel %vm665, %v1789, %v1788
        %v1794 = vadd.f32 %v1766, %v1790
        %v1795 = vadd.f32 %v1767, %v1791
        %1796 = vset.pattern.permute.xlu0 37
        %1797 = vperm.xlu0 %1796, %v540
        %v1798 = vpop.permute.xlu0 %1797
        %v1800 = vunpack.c.l.s4 839922192
        %v1801 = vunpack.c.0.s8 %v1800
        %v1802 = vlaneseq
        %v1803 = vshrl.u32 %v1802, 7
        %v1804 = vsub.s32 %v1801, %v1803
        %v1805 = vrot.slane %v1798, %v1804
        %v1807 = vmul.f32 %v1768, %v1805
        %v1808 = vmul.f32 %v1769, %v1805
        %1811 = vrot.lane.b32.xlu0 %v1807, 16
        %v1812 = vpop.permute.xlu0 %1811
        %1813 = vrot.lane.b32.xlu0 %v1808, 16
        %v1814 = vpop.permute.xlu0 %1813
        %v1815 = vrot.slane %v1812, 4
        %v1816 = vsel %vm1417, %v1815, %v1812
        %v1817 = vsel %vm1417, %v1815, %v1814
        %v1820 = vadd.f32 %v1794, %v1816
        %v1821 = vadd.f32 %v1795, %v1817
        %v1822 = vld [vmem:[#allocation3 + $0xc] sm:$0xff]
        %v1823 = vld [vmem:[#allocation3 + $0x14] sm:$0xf]
        %1824 = vset.pattern.permute.xlu0 44
        %1825 = vperm.xlu0 %1824, %v540
        %v1826 = vpop.permute.xlu0 %1825
        %v1828 = vunpack.c.l.s4 839922192
        %v1829 = vunpack.c.0.s8 %v1828
        %v1830 = vlaneseq
        %v1831 = vshrl.u32 %v1830, 7
        %v1832 = vsub.s32 %v1829, %v1831
        %v1833 = vrot.slane %v1826, %v1832
        %v1835 = vmul.f32 %v1822, %v1833
        %v1836 = vmul.f32 %v1823, %v1833
        %1839 = vrot.lane.b32.xlu0 %v1835, 96
        %v1840 = vpop.permute.xlu0 %1839
        %1841 = vrot.lane.b32.xlu0 %v1836, 96
        %v1842 = vpop.permute.xlu0 %1841
        %v1843 = vrot.slane %v1840, 4
        %v1844 = vsel %vm610, %v1843, %v1840
        %v1845 = vsel %vm610, %v1843, %v1842
        %v1848 = vadd.f32 %v1820, %v1844
        %v1849 = vadd.f32 %v1821, %v1845
        %v1850 = vsel %vm495, 1, 0
        %v1851 = vsel %vm496, 1, 0
        %vm1852 = vcmp.eq.s32.totalorder %v1850, 1
        %vm1853 = vcmp.eq.s32.totalorder %v1851, 1
        %v1856 = vcombine.high %v1848, %v1848
        %1857 = vrot.lane.b32.xlu0 %v1848, 19
        %v1858 = vpop.permute.xlu0 %1857
        %1859 = vrot.lane.b32.xlu0 %v1856, 19
        %v1860 = vpop.permute.xlu0 %1859
        %1861 = vrot.lane.b32.xlu0 %v1849, 19
        %v1862 = vpop.permute.xlu0 %1861
        %vm1863 = vcmask 154624
        %v1864 = vsel %vm1863, %v1858, %v1860
        %v1865 = vsel %vm1863, %v1860, %v1862
        %v1868 = vsel %vm1852, %v1864, 0.0
        %v1869 = vsel %vm1853, %v1865, 0.0
        %v1870 = vadd.f32 %v1670, %v1868
        %v1871 = vadd.f32 %v1671, %v1869
        %v1872 = vld [vmem:[#allocation3] sm:$0xff]
        %v1873 = vld [vmem:[#allocation3 + $0x8] sm:$0xf]
        %1874 = vset.pattern.permute.xlu0 3
        %1875 = vperm.xlu0 %1874, %v540
        %v1876 = vpop.permute.xlu0 %1875
        %v1878 = vunpack.c.l.s4 839922192
        %v1879 = vunpack.c.0.s8 %v1878
        %v1880 = vlaneseq
        %v1881 = vshrl.u32 %v1880, 7
        %v1882 = vsub.s32 %v1879, %v1881
        %v1883 = vrot.slane %v1876, %v1882
        %v1885 = vmul.f32 %v1872, %v1883
        %v1886 = vmul.f32 %v1873, %v1883
        %v1887 = vld [vmem:[#allocation3 + $0x4] sm:$0xff]
        %v1888 = vld [vmem:[#allocation3 + $0xc] sm:$0xf]
        %1889 = vset.pattern.permute.xlu0 10
        %1890 = vperm.xlu0 %1889, %v540
        %v1891 = vpop.permute.xlu0 %1890
        %v1893 = vunpack.c.l.s4 839922192
        %v1894 = vunpack.c.0.s8 %v1893
        %v1895 = vlaneseq
        %v1896 = vshrl.u32 %v1895, 7
        %v1897 = vsub.s32 %v1894, %v1896
        %v1898 = vrot.slane %v1891, %v1897
        %v1900 = vmul.f32 %v1887, %v1898
        %v1901 = vmul.f32 %v1888, %v1898
        %1904 = vrot.lane.b32.xlu0 %v1900, 80
        %v1905 = vpop.permute.xlu0 %1904
        %1906 = vrot.lane.b32.xlu0 %v1901, 80
        %v1907 = vpop.permute.xlu0 %1906
        %v1908 = vrot.slane %v1905, 4
        %v1909 = vsel %vm638, %v1908, %v1905
        %v1910 = vsel %vm638, %v1908, %v1907
        %v1913 = vadd.f32 %v1885, %v1909
        %v1914 = vadd.f32 %v1886, %v1910
        %1915 = vset.pattern.permute.xlu0 17
        %1916 = vperm.xlu0 %1915, %v540
        %v1917 = vpop.permute.xlu0 %1916
        %v1919 = vunpack.c.l.s4 839922192
        %v1920 = vunpack.c.0.s8 %v1919
        %v1921 = vlaneseq
        %v1922 = vshrl.u32 %v1921, 7
        %v1923 = vsub.s32 %v1920, %v1922
        %v1924 = vrot.slane %v1917, %v1923
        %v1926 = vmul.f32 %v1887, %v1924
        %v1927 = vmul.f32 %v1888, %v1924
        %1930 = vrot.lane.b32.xlu0 %v1926, 32
        %v1931 = vpop.permute.xlu0 %1930
        %1932 = vrot.lane.b32.xlu0 %v1927, 32
        %v1933 = vpop.permute.xlu0 %1932
        %v1934 = vrot.slane %v1931, 4
        %v1935 = vsel %vm964, %v1934, %v1931
        %v1936 = vsel %vm964, %v1934, %v1933
        %v1939 = vadd.f32 %v1913, %v1935
        %v1940 = vadd.f32 %v1914, %v1936
        %v1941 = vld [vmem:[#allocation3 + $0x8] sm:$0xff]
        %1942 = vset.pattern.permute.xlu0 24
        %1943 = vperm.xlu0 %1942, %v540
        %v1944 = vpop.permute.xlu0 %1943
        %v1946 = vunpack.c.l.s4 839922192
        %v1947 = vunpack.c.0.s8 %v1946
        %v1948 = vlaneseq
        %v1949 = vshrl.u32 %v1948, 7
        %v1950 = vsub.s32 %v1947, %v1949
        %v1951 = vrot.slane %v1944, %v1950
        %v1953 = vmul.f32 %v1941, %v1951
        %1955 = vrot.lane.b32.xlu0 %v1953, 112
        %v1956 = vpop.permute.xlu0 %1955
        %v1957 = vrot.slane %v1956, 4
        %v1958 = vsel %vm582, %v1957, %v1956
        %v1961 = vadd.f32 %v1939, %v1958
        %v1962 = vadd.f32 %v1940, %v1957
        %v1963 = vld [vmem:[#allocation3 + $0x8] sm:$0xff]
        %v1964 = vld [vmem:[#allocation3 + $0x10] sm:$0xf]
        %1965 = vset.pattern.permute.xlu0 31
        %1966 = vperm.xlu0 %1965, %v540
        %v1967 = vpop.permute.xlu0 %1966
        %v1969 = vunpack.c.l.s4 839922192
        %v1970 = vunpack.c.0.s8 %v1969
        %v1971 = vlaneseq
        %v1972 = vshrl.u32 %v1971, 7
        %v1973 = vsub.s32 %v1970, %v1972
        %v1974 = vrot.slane %v1967, %v1973
        %v1976 = vmul.f32 %v1963, %v1974
        %v1977 = vmul.f32 %v1964, %v1974
        %1980 = vrot.lane.b32.xlu0 %v1976, 64
        %v1981 = vpop.permute.xlu0 %1980
        %1982 = vrot.lane.b32.xlu0 %v1977, 64
        %v1983 = vpop.permute.xlu0 %1982
        %v1984 = vrot.slane %v1981, 4
        %v1985 = vsel %vm665, %v1984, %v1981
        %v1986 = vsel %vm665, %v1984, %v1983
        %v1989 = vadd.f32 %v1961, %v1985
        %v1990 = vadd.f32 %v1962, %v1986
        %1991 = vset.pattern.permute.xlu0 38
        %1992 = vperm.xlu0 %1991, %v540
        %v1993 = vpop.permute.xlu0 %1992
        %v1995 = vunpack.c.l.s4 839922192
        %v1996 = vunpack.c.0.s8 %v1995
        %v1997 = vlaneseq
        %v1998 = vshrl.u32 %v1997, 7
        %v1999 = vsub.s32 %v1996, %v1998
        %v2000 = vrot.slane %v1993, %v1999
        %v2002 = vmul.f32 %v1963, %v2000
        %v2003 = vmul.f32 %v1964, %v2000
        %2006 = vrot.lane.b32.xlu0 %v2002, 16
        %v2007 = vpop.permute.xlu0 %2006
        %2008 = vrot.lane.b32.xlu0 %v2003, 16
        %v2009 = vpop.permute.xlu0 %2008
        %v2010 = vrot.slane %v2007, 4
        %v2011 = vsel %vm1417, %v2010, %v2007
        %v2012 = vsel %vm1417, %v2010, %v2009
        %v2015 = vadd.f32 %v1989, %v2011
        %v2016 = vadd.f32 %v1990, %v2012
        %v2017 = vld [vmem:[#allocation3 + $0xc] sm:$0xff]
        %v2018 = vld [vmem:[#allocation3 + $0x14] sm:$0xf]
        %2019 = vset.pattern.permute.xlu0 45
        %2020 = vperm.xlu0 %2019, %v540
        %v2021 = vpop.permute.xlu0 %2020
        %v2023 = vunpack.c.l.s4 839922192
        %v2024 = vunpack.c.0.s8 %v2023
        %v2025 = vlaneseq
        %v2026 = vshrl.u32 %v2025, 7
        %v2027 = vsub.s32 %v2024, %v2026
        %v2028 = vrot.slane %v2021, %v2027
        %v2030 = vmul.f32 %v2017, %v2028
        %v2031 = vmul.f32 %v2018, %v2028
        %2034 = vrot.lane.b32.xlu0 %v2030, 96
        %v2035 = vpop.permute.xlu0 %2034
        %2036 = vrot.lane.b32.xlu0 %v2031, 96
        %v2037 = vpop.permute.xlu0 %2036
        %v2038 = vrot.slane %v2035, 4
        %v2039 = vsel %vm610, %v2038, %v2035
        %v2040 = vsel %vm610, %v2038, %v2037
        %v2043 = vadd.f32 %v2015, %v2039
        %v2044 = vadd.f32 %v2016, %v2040
        %v2047 = vcombine.high %v2043, %v2043
        %2048 = vrot.lane.b32.xlu0 %v2043, 16
        %v2049 = vpop.permute.xlu0 %2048
        %2050 = vrot.lane.b32.xlu0 %v2047, 16
        %v2051 = vpop.permute.xlu0 %2050
        %2052 = vrot.lane.b32.xlu0 %v2044, 16
        %v2053 = vpop.permute.xlu0 %2052
        %v2054 = vsel %vm1417, %v2049, %v2051
        %v2055 = vsel %vm1417, %v2051, %v2053
        %v2058 = vadd.f32 %v1870, %v2054
        %v2059 = vadd.f32 %v1871, %v2055
        %v2060 = vld [vmem:[#allocation3] sm:$0xff]
        %v2061 = vld [vmem:[#allocation3 + $0x8] sm:$0xf]
        %2062 = vset.pattern.permute.xlu0 4
        %2063 = vperm.xlu0 %2062, %v540
        %v2064 = vpop.permute.xlu0 %2063
        %v2066 = vunpack.c.l.s4 839922192
        %v2067 = vunpack.c.0.s8 %v2066
        %v2068 = vlaneseq
        %v2069 = vshrl.u32 %v2068, 7
        %v2070 = vsub.s32 %v2067, %v2069
        %v2071 = vrot.slane %v2064, %v2070
        %v2073 = vmul.f32 %v2060, %v2071
        %v2074 = vmul.f32 %v2061, %v2071
        %v2075 = vld [vmem:[#allocation3 + $0x4] sm:$0xff]
        %v2076 = vld [vmem:[#allocation3 + $0xc] sm:$0xf]
        %2077 = vset.pattern.permute.xlu0 11
        %2078 = vperm.xlu0 %2077, %v540
        %v2079 = vpop.permute.xlu0 %2078
        %v2081 = vunpack.c.l.s4 839922192
        %v2082 = vunpack.c.0.s8 %v2081
        %v2083 = vlaneseq
        %v2084 = vshrl.u32 %v2083, 7
        %v2085 = vsub.s32 %v2082, %v2084
        %v2086 = vrot.slane %v2079, %v2085
        %v2088 = vmul.f32 %v2075, %v2086
        %v2089 = vmul.f32 %v2076, %v2086
        %2092 = vrot.lane.b32.xlu0 %v2088, 80
        %v2093 = vpop.permute.xlu0 %2092
        %2094 = vrot.lane.b32.xlu0 %v2089, 80
        %v2095 = vpop.permute.xlu0 %2094
        %v2096 = vrot.slane %v2093, 4
        %v2097 = vsel %vm638, %v2096, %v2093
        %v2098 = vsel %vm638, %v2096, %v2095
        %v2101 = vadd.f32 %v2073, %v2097
        %v2102 = vadd.f32 %v2074, %v2098
        %2103 = vset.pattern.permute.xlu0 18
        %2104 = vperm.xlu0 %2103, %v540
        %v2105 = vpop.permute.xlu0 %2104
        %v2107 = vunpack.c.l.s4 839922192
        %v2108 = vunpack.c.0.s8 %v2107
        %v2109 = vlaneseq
        %v2110 = vshrl.u32 %v2109, 7
        %v2111 = vsub.s32 %v2108, %v2110
        %v2112 = vrot.slane %v2105, %v2111
        %v2114 = vmul.f32 %v2075, %v2112
        %v2115 = vmul.f32 %v2076, %v2112
        %2118 = vrot.lane.b32.xlu0 %v2114, 32
        %v2119 = vpop.permute.xlu0 %2118
        %2120 = vrot.lane.b32.xlu0 %v2115, 32
        %v2121 = vpop.permute.xlu0 %2120
        %v2122 = vrot.slane %v2119, 4
        %v2123 = vsel %vm964, %v2122, %v2119
        %v2124 = vsel %vm964, %v2122, %v2121
        %v2127 = vadd.f32 %v2101, %v2123
        %v2128 = vadd.f32 %v2102, %v2124
        %v2129 = vld [vmem:[#allocation3 + $0x8] sm:$0xff]
        %v2130 = vld [vmem:[#allocation3 + $0x10] sm:$0xf]
        %2131 = vset.pattern.permute.xlu0 25
        %2132 = vperm.xlu0 %2131, %v540
        %v2133 = vpop.permute.xlu0 %2132
        %v2135 = vunpack.c.l.s4 839922192
        %v2136 = vunpack.c.0.s8 %v2135
        %v2137 = vlaneseq
        %v2138 = vshrl.u32 %v2137, 7
        %v2139 = vsub.s32 %v2136, %v2138
        %v2140 = vrot.slane %v2133, %v2139
        %v2142 = vmul.f32 %v2129, %v2140
        %v2143 = vmul.f32 %v2130, %v2140
        %2146 = vrot.lane.b32.xlu0 %v2142, 112
        %v2147 = vpop.permute.xlu0 %2146
        %2148 = vrot.lane.b32.xlu0 %v2143, 112
        %v2149 = vpop.permute.xlu0 %2148
        %v2150 = vrot.slane %v2147, 4
        %v2151 = vsel %vm582, %v2150, %v2147
        %v2152 = vsel %vm582, %v2150, %v2149
        %v2155 = vadd.f32 %v2127, %v2151
        %v2156 = vadd.f32 %v2128, %v2152
        %2157 = vset.pattern.permute.xlu0 32
        %2158 = vperm.xlu0 %2157, %v540
        %v2159 = vpop.permute.xlu0 %2158
        %v2161 = vunpack.c.l.s4 839922192
        %v2162 = vunpack.c.0.s8 %v2161
        %v2163 = vlaneseq
        %v2164 = vshrl.u32 %v2163, 7
        %v2165 = vsub.s32 %v2162, %v2164
        %v2166 = vrot.slane %v2159, %v2165
        %v2168 = vmul.f32 %v2129, %v2166
        %v2169 = vmul.f32 %v2130, %v2166
        %2172 = vrot.lane.b32.xlu0 %v2168, 64
        %v2173 = vpop.permute.xlu0 %2172
        %2174 = vrot.lane.b32.xlu0 %v2169, 64
        %v2175 = vpop.permute.xlu0 %2174
        %v2176 = vrot.slane %v2173, 4
        %v2177 = vsel %vm665, %v2176, %v2173
        %v2178 = vsel %vm665, %v2176, %v2175
        %v2181 = vadd.f32 %v2155, %v2177
        %v2182 = vadd.f32 %v2156, %v2178
        %2183 = vset.pattern.permute.xlu0 39
        %2184 = vperm.xlu0 %2183, %v540
        %v2185 = vpop.permute.xlu0 %2184
        %v2187 = vunpack.c.l.s4 839922192
        %v2188 = vunpack.c.0.s8 %v2187
        %v2189 = vlaneseq
        %v2190 = vshrl.u32 %v2189, 7
        %v2191 = vsub.s32 %v2188, %v2190
        %v2192 = vrot.slane %v2185, %v2191
        %v2194 = vmul.f32 %v2129, %v2192
        %v2195 = vmul.f32 %v2130, %v2192
        %2198 = vrot.lane.b32.xlu0 %v2194, 16
        %v2199 = vpop.permute.xlu0 %2198
        %2200 = vrot.lane.b32.xlu0 %v2195, 16
        %v2201 = vpop.permute.xlu0 %2200
        %v2202 = vrot.slane %v2199, 4
        %v2203 = vsel %vm1417, %v2202, %v2199
        %v2204 = vsel %vm1417, %v2202, %v2201
        %v2207 = vadd.f32 %v2181, %v2203
        %v2208 = vadd.f32 %v2182, %v2204
        %v2209 = vld [vmem:[#allocation3 + $0xc] sm:$0xff]
        %v2210 = vld [vmem:[#allocation3 + $0x14] sm:$0xf]
        %2211 = vset.pattern.permute.xlu0 46
        %2212 = vperm.xlu0 %2211, %v540
        %v2213 = vpop.permute.xlu0 %2212
        %v2215 = vunpack.c.l.s4 839922192
        %v2216 = vunpack.c.0.s8 %v2215
        %v2217 = vlaneseq
        %v2218 = vshrl.u32 %v2217, 7
        %v2219 = vsub.s32 %v2216, %v2218
        %v2220 = vrot.slane %v2213, %v2219
        %v2222 = vmul.f32 %v2209, %v2220
        %v2223 = vmul.f32 %v2210, %v2220
        %2226 = vrot.lane.b32.xlu0 %v2222, 96
        %v2227 = vpop.permute.xlu0 %2226
        %2228 = vrot.lane.b32.xlu0 %v2223, 96
        %v2229 = vpop.permute.xlu0 %2228
        %v2230 = vrot.slane %v2227, 4
        %v2231 = vsel %vm610, %v2230, %v2227
        %v2232 = vsel %vm610, %v2230, %v2229
        %v2235 = vadd.f32 %v2207, %v2231
        %v2236 = vadd.f32 %v2208, %v2232
        %v2237 = vsel %vm525, 1, 0
        %v2238 = vsel %vm526, 1, 0
        %vm2239 = vcmp.eq.s32.totalorder %v2237, 1
        %vm2240 = vcmp.eq.s32.totalorder %v2238, 1
        %v2243 = vcombine.high %v2235, %v2235
        %2244 = vrot.lane.b32.xlu0 %v2235, 13
        %v2245 = vpop.permute.xlu0 %2244
        %2246 = vrot.lane.b32.xlu0 %v2243, 13
        %v2247 = vpop.permute.xlu0 %2246
        %2248 = vrot.lane.b32.xlu0 %v2236, 13
        %v2249 = vpop.permute.xlu0 %2248
        %vm2250 = vcmask 105472
        %v2251 = vsel %vm2250, %v2245, %v2247
        %v2252 = vsel %vm2250, %v2247, %v2249
        %v2255 = vsel %vm2239, %v2251, 0.0
        %v2256 = vsel %vm2240, %v2252, 0.0
        %v2257 = vadd.f32 %v2058, %v2255
        %v2258 = vadd.f32 %v2059, %v2256
        %v2259 = vld [vmem:[#allocation3] sm:$0xff]
        %v2260 = vld [vmem:[#allocation3 + $0x8] sm:$0xf]
        %2261 = vset.pattern.permute.xlu0 5
        %2262 = vperm.xlu0 %2261, %v540
        %v2263 = vpop.permute.xlu0 %2262
        %v2265 = vunpack.c.l.s4 839922192
        %v2266 = vunpack.c.0.s8 %v2265
        %v2267 = vlaneseq
        %v2268 = vshrl.u32 %v2267, 7
        %v2269 = vsub.s32 %v2266, %v2268
        %v2270 = vrot.slane %v2263, %v2269
        %v2272 = vmul.f32 %v2259, %v2270
        %v2273 = vmul.f32 %v2260, %v2270
        %v2274 = vld [vmem:[#allocation3 + $0x4] sm:$0xff]
        %v2275 = vld [vmem:[#allocation3 + $0xc] sm:$0xf]
        %2276 = vset.pattern.permute.xlu0 12
        %2277 = vperm.xlu0 %2276, %v540
        %v2278 = vpop.permute.xlu0 %2277
        %v2280 = vunpack.c.l.s4 839922192
        %v2281 = vunpack.c.0.s8 %v2280
        %v2282 = vlaneseq
        %v2283 = vshrl.u32 %v2282, 7
        %v2284 = vsub.s32 %v2281, %v2283
        %v2285 = vrot.slane %v2278, %v2284
        %v2287 = vmul.f32 %v2274, %v2285
        %v2288 = vmul.f32 %v2275, %v2285
        %2291 = vrot.lane.b32.xlu0 %v2287, 80
        %v2292 = vpop.permute.xlu0 %2291
        %2293 = vrot.lane.b32.xlu0 %v2288, 80
        %v2294 = vpop.permute.xlu0 %2293
        %v2295 = vrot.slane %v2292, 4
        %v2296 = vsel %vm638, %v2295, %v2292
        %v2297 = vsel %vm638, %v2295, %v2294
        %v2300 = vadd.f32 %v2272, %v2296
        %v2301 = vadd.f32 %v2273, %v2297
        %2302 = vset.pattern.permute.xlu0 19
        %2303 = vperm.xlu0 %2302, %v540
        %v2304 = vpop.permute.xlu0 %2303
        %v2306 = vunpack.c.l.s4 839922192
        %v2307 = vunpack.c.0.s8 %v2306
        %v2308 = vlaneseq
        %v2309 = vshrl.u32 %v2308, 7
        %v2310 = vsub.s32 %v2307, %v2309
        %v2311 = vrot.slane %v2304, %v2310
        %v2313 = vmul.f32 %v2274, %v2311
        %v2314 = vmul.f32 %v2275, %v2311
        %2317 = vrot.lane.b32.xlu0 %v2313, 32
        %v2318 = vpop.permute.xlu0 %2317
        %2319 = vrot.lane.b32.xlu0 %v2314, 32
        %v2320 = vpop.permute.xlu0 %2319
        %v2321 = vrot.slane %v2318, 4
        %v2322 = vsel %vm964, %v2321, %v2318
        %v2323 = vsel %vm964, %v2321, %v2320
        %v2326 = vadd.f32 %v2300, %v2322
        %v2327 = vadd.f32 %v2301, %v2323
        %v2328 = vld [vmem:[#allocation3 + $0x8] sm:$0xff]
        %v2329 = vld [vmem:[#allocation3 + $0x10] sm:$0xf]
        %2330 = vset.pattern.permute.xlu0 26
        %2331 = vperm.xlu0 %2330, %v540
        %v2332 = vpop.permute.xlu0 %2331
        %v2334 = vunpack.c.l.s4 839922192
        %v2335 = vunpack.c.0.s8 %v2334
        %v2336 = vlaneseq
        %v2337 = vshrl.u32 %v2336, 7
        %v2338 = vsub.s32 %v2335, %v2337
        %v2339 = vrot.slane %v2332, %v2338
        %v2341 = vmul.f32 %v2328, %v2339
        %v2342 = vmul.f32 %v2329, %v2339
        %2345 = vrot.lane.b32.xlu0 %v2341, 112
        %v2346 = vpop.permute.xlu0 %2345
        %2347 = vrot.lane.b32.xlu0 %v2342, 112
        %v2348 = vpop.permute.xlu0 %2347
        %v2349 = vrot.slane %v2346, 4
        %v2350 = vsel %vm582, %v2349, %v2346
        %v2351 = vsel %vm582, %v2349, %v2348
        %v2354 = vadd.f32 %v2326, %v2350
        %v2355 = vadd.f32 %v2327, %v2351
        %2356 = vset.pattern.permute.xlu0 33
        %2357 = vperm.xlu0 %2356, %v540
        %v2358 = vpop.permute.xlu0 %2357
        %v2360 = vunpack.c.l.s4 839922192
        %v2361 = vunpack.c.0.s8 %v2360
        %v2362 = vlaneseq
        %v2363 = vshrl.u32 %v2362, 7
        %v2364 = vsub.s32 %v2361, %v2363
        %v2365 = vrot.slane %v2358, %v2364
        %v2367 = vmul.f32 %v2328, %v2365
        %v2368 = vmul.f32 %v2329, %v2365
        %2371 = vrot.lane.b32.xlu0 %v2367, 64
        %v2372 = vpop.permute.xlu0 %2371
        %2373 = vrot.lane.b32.xlu0 %v2368, 64
        %v2374 = vpop.permute.xlu0 %2373
        %v2375 = vrot.slane %v2372, 4
        %v2376 = vsel %vm665, %v2375, %v2372
        %v2377 = vsel %vm665, %v2375, %v2374
        %v2380 = vadd.f32 %v2354, %v2376
        %v2381 = vadd.f32 %v2355, %v2377
        %2382 = vset.pattern.permute.xlu0 40
        %2383 = vperm.xlu0 %2382, %v540
        %v2384 = vpop.permute.xlu0 %2383
        %v2386 = vunpack.c.l.s4 839922192
        %v2387 = vunpack.c.0.s8 %v2386
        %v2388 = vlaneseq
        %v2389 = vshrl.u32 %v2388, 7
        %v2390 = vsub.s32 %v2387, %v2389
        %v2391 = vrot.slane %v2384, %v2390
        %v2393 = vmul.f32 %v2328, %v2391
        %v2394 = vmul.f32 %v2329, %v2391
        %2397 = vrot.lane.b32.xlu0 %v2393, 16
        %v2398 = vpop.permute.xlu0 %2397
        %2399 = vrot.lane.b32.xlu0 %v2394, 16
        %v2400 = vpop.permute.xlu0 %2399
        %v2401 = vrot.slane %v2398, 4
        %v2402 = vsel %vm1417, %v2401, %v2398
        %v2403 = vsel %vm1417, %v2401, %v2400
        %v2406 = vadd.f32 %v2380, %v2402
        %v2407 = vadd.f32 %v2381, %v2403
        %v2408 = vld [vmem:[#allocation3 + $0xc] sm:$0xff]
        %v2409 = vld [vmem:[#allocation3 + $0x14] sm:$0xf]
        %2410 = vset.pattern.permute.xlu0 47
        %2411 = vperm.xlu0 %2410, %v540
        %v2412 = vpop.permute.xlu0 %2411
        %v2414 = vunpack.c.l.s4 839922192
        %v2415 = vunpack.c.0.s8 %v2414
        %v2416 = vlaneseq
        %v2417 = vshrl.u32 %v2416, 7
        %v2418 = vsub.s32 %v2415, %v2417
        %v2419 = vrot.slane %v2412, %v2418
        %v2421 = vmul.f32 %v2408, %v2419
        %v2422 = vmul.f32 %v2409, %v2419
        %2425 = vrot.lane.b32.xlu0 %v2421, 96
        %v2426 = vpop.permute.xlu0 %2425
        %2427 = vrot.lane.b32.xlu0 %v2422, 96
        %v2428 = vpop.permute.xlu0 %2427
        %v2429 = vrot.slane %v2426, 4
        %v2430 = vsel %vm610, %v2429, %v2426
        %v2431 = vsel %vm610, %v2429, %v2428
        %v2434 = vadd.f32 %v2406, %v2430
        %v2435 = vadd.f32 %v2407, %v2431
        %v2436 = vsel %vm531, 1, 0
        %v2437 = vsel %vm532, 1, 0
        %vm2438 = vcmp.eq.s32.totalorder %v2436, 1
        %vm2439 = vcmp.eq.s32.totalorder %v2437, 1
        %v2442 = vcombine.high %v2434, %v2434
        %2443 = vrot.lane.b32.xlu0 %v2434, 10
        %v2444 = vpop.permute.xlu0 %2443
        %2445 = vrot.lane.b32.xlu0 %v2442, 10
        %v2446 = vpop.permute.xlu0 %2445
        %2447 = vrot.lane.b32.xlu0 %v2435, 10
        %v2448 = vpop.permute.xlu0 %2447
        %vm2449 = vcmask 80896
        %v2450 = vsel %vm2449, %v2444, %v2446
        %v2451 = vsel %vm2449, %v2446, %v2448
        %v2454 = vsel %vm2438, %v2450, 0.0
        %v2455 = vsel %vm2439, %v2451, 0.0
        %v2456 = vadd.f32 %v2257, %v2454
        %v2457 = vadd.f32 %v2258, %v2455
        %v2458 = vld [vmem:[#allocation3] sm:$0xff]
        %v2459 = vld [vmem:[#allocation3 + $0x8] sm:$0xf]
        %2460 = vset.pattern.permute.xlu0 6
        %2461 = vperm.xlu0 %2460, %v540
        %v2462 = vpop.permute.xlu0 %2461
        %v2464 = vunpack.c.l.s4 839922192
        %v2465 = vunpack.c.0.s8 %v2464
        %v2466 = vlaneseq
        %v2467 = vshrl.u32 %v2466, 7
        %v2468 = vsub.s32 %v2465, %v2467
        %v2469 = vrot.slane %v2462, %v2468
        %v2471 = vmul.f32 %v2458, %v2469
        %v2472 = vmul.f32 %v2459, %v2469
        %v2473 = vld [vmem:[#allocation3 + $0x4] sm:$0xff]
        %v2474 = vld [vmem:[#allocation3 + $0xc] sm:$0xf]
        %2475 = vset.pattern.permute.xlu0 13
        %2476 = vperm.xlu0 %2475, %v540
        %v2477 = vpop.permute.xlu0 %2476
        %v2479 = vunpack.c.l.s4 839922192
        %v2480 = vunpack.c.0.s8 %v2479
        %v2481 = vlaneseq
        %v2482 = vshrl.u32 %v2481, 7
        %v2483 = vsub.s32 %v2480, %v2482
        %v2484 = vrot.slane %v2477, %v2483
        %v2486 = vmul.f32 %v2473, %v2484
        %v2487 = vmul.f32 %v2474, %v2484
        %2490 = vrot.lane.b32.xlu0 %v2486, 80
        %v2491 = vpop.permute.xlu0 %2490
        %2492 = vrot.lane.b32.xlu0 %v2487, 80
        %v2493 = vpop.permute.xlu0 %2492
        %v2494 = vrot.slane %v2491, 4
        %v2495 = vsel %vm638, %v2494, %v2491
        %v2496 = vsel %vm638, %v2494, %v2493
        %v2499 = vadd.f32 %v2471, %v2495
        %v2500 = vadd.f32 %v2472, %v2496
        %2501 = vset.pattern.permute.xlu0 20
        %2502 = vperm.xlu0 %2501, %v540
        %v2503 = vpop.permute.xlu0 %2502
        %v2505 = vunpack.c.l.s4 839922192
        %v2506 = vunpack.c.0.s8 %v2505
        %v2507 = vlaneseq
        %v2508 = vshrl.u32 %v2507, 7
        %v2509 = vsub.s32 %v2506, %v2508
        %v2510 = vrot.slane %v2503, %v2509
        %v2512 = vmul.f32 %v2473, %v2510
        %v2513 = vmul.f32 %v2474, %v2510
        %2516 = vrot.lane.b32.xlu0 %v2512, 32
        %v2517 = vpop.permute.xlu0 %2516
        %2518 = vrot.lane.b32.xlu0 %v2513, 32
        %v2519 = vpop.permute.xlu0 %2518
        %v2520 = vrot.slane %v2517, 4
        %v2521 = vsel %vm964, %v2520, %v2517
        %v2522 = vsel %vm964, %v2520, %v2519
        %v2525 = vadd.f32 %v2499, %v2521
        %v2526 = vadd.f32 %v2500, %v2522
        %v2527 = vld [vmem:[#allocation3 + $0x8] sm:$0xff]
        %v2528 = vld [vmem:[#allocation3 + $0x10] sm:$0xf]
        %2529 = vset.pattern.permute.xlu0 27
        %2530 = vperm.xlu0 %2529, %v540
        %v2531 = vpop.permute.xlu0 %2530
        %v2533 = vunpack.c.l.s4 839922192
        %v2534 = vunpack.c.0.s8 %v2533
        %v2535 = vlaneseq
        %v2536 = vshrl.u32 %v2535, 7
        %v2537 = vsub.s32 %v2534, %v2536
        %v2538 = vrot.slane %v2531, %v2537
        %v2540 = vmul.f32 %v2527, %v2538
        %v2541 = vmul.f32 %v2528, %v2538
        %2544 = vrot.lane.b32.xlu0 %v2540, 112
        %v2545 = vpop.permute.xlu0 %2544
        %2546 = vrot.lane.b32.xlu0 %v2541, 112
        %v2547 = vpop.permute.xlu0 %2546
        %v2548 = vrot.slane %v2545, 4
        %v2549 = vsel %vm582, %v2548, %v2545
        %v2550 = vsel %vm582, %v2548, %v2547
        %v2553 = vadd.f32 %v2525, %v2549
        %v2554 = vadd.f32 %v2526, %v2550
        %2555 = vset.pattern.permute.xlu0 34
        %2556 = vperm.xlu0 %2555, %v540
        %v2557 = vpop.permute.xlu0 %2556
        %v2559 = vunpack.c.l.s4 839922192
        %v2560 = vunpack.c.0.s8 %v2559
        %v2561 = vlaneseq
        %v2562 = vshrl.u32 %v2561, 7
        %v2563 = vsub.s32 %v2560, %v2562
        %v2564 = vrot.slane %v2557, %v2563
        %v2566 = vmul.f32 %v2527, %v2564
        %v2567 = vmul.f32 %v2528, %v2564
        %2570 = vrot.lane.b32.xlu0 %v2566, 64
        %v2571 = vpop.permute.xlu0 %2570
        %2572 = vrot.lane.b32.xlu0 %v2567, 64
        %v2573 = vpop.permute.xlu0 %2572
        %v2574 = vrot.slane %v2571, 4
        %v2575 = vsel %vm665, %v2574, %v2571
        %v2576 = vsel %vm665, %v2574, %v2573
        %v2579 = vadd.f32 %v2553, %v2575
        %v2580 = vadd.f32 %v2554, %v2576
        %2581 = vset.pattern.permute.xlu0 41
        %2582 = vperm.xlu0 %2581, %v540
        %v2583 = vpop.permute.xlu0 %2582
        %v2585 = vunpack.c.l.s4 839922192
        %v2586 = vunpack.c.0.s8 %v2585
        %v2587 = vlaneseq
        %v2588 = vshrl.u32 %v2587, 7
        %v2589 = vsub.s32 %v2586, %v2588
        %v2590 = vrot.slane %v2583, %v2589
        %v2592 = vmul.f32 %v2527, %v2590
        %v2593 = vmul.f32 %v2528, %v2590
        %2596 = vrot.lane.b32.xlu0 %v2592, 16
        %v2597 = vpop.permute.xlu0 %2596
        %2598 = vrot.lane.b32.xlu0 %v2593, 16
        %v2599 = vpop.permute.xlu0 %2598
        %v2600 = vrot.slane %v2597, 4
        %v2601 = vsel %vm1417, %v2600, %v2597
        %v2602 = vsel %vm1417, %v2600, %v2599
        %v2605 = vadd.f32 %v2579, %v2601
        %v2606 = vadd.f32 %v2580, %v2602
        %v2607 = vld [vmem:[#allocation3 + $0xc] sm:$0xff]
        %v2608 = vld [vmem:[#allocation3 + $0x14] sm:$0xf]
        %2609 = vset.pattern.permute.xlu0 48
        %2610 = vperm.xlu0 %2609, %v540
        %v2611 = vpop.permute.xlu0 %2610
        %v2613 = vunpack.c.l.s4 839922192
        %v2614 = vunpack.c.0.s8 %v2613
        %v2615 = vlaneseq
        %v2616 = vshrl.u32 %v2615, 7
        %v2617 = vsub.s32 %v2614, %v2616
        %v2618 = vrot.slane %v2611, %v2617
        %v2620 = vmul.f32 %v2607, %v2618
        %v2621 = vmul.f32 %v2608, %v2618
        %2624 = vrot.lane.b32.xlu0 %v2620, 96
        %v2625 = vpop.permute.xlu0 %2624
        %2626 = vrot.lane.b32.xlu0 %v2621, 96
        %v2627 = vpop.permute.xlu0 %2626
        %v2628 = vrot.slane %v2625, 4
        %v2629 = vsel %vm610, %v2628, %v2625
        %v2630 = vsel %vm610, %v2628, %v2627
        %v2633 = vadd.f32 %v2605, %v2629
        %v2634 = vadd.f32 %v2606, %v2630
        %v2635 = vsel %vm537, 1, 0
        %v2636 = vsel %vm538, 1, 0
        %vm2637 = vcmp.eq.s32.totalorder %v2635, 1
        %vm2638 = vcmp.eq.s32.totalorder %v2636, 1
        %v2641 = vcombine.high %v2633, %v2633
        %2642 = vrot.lane.b32.xlu0 %v2633, 7
        %v2643 = vpop.permute.xlu0 %2642
        %2644 = vrot.lane.b32.xlu0 %v2641, 7
        %v2645 = vpop.permute.xlu0 %2644
        %2646 = vrot.lane.b32.xlu0 %v2634, 7
        %v2647 = vpop.permute.xlu0 %2646
        %vm2648 = vcmask 56320
        %v2649 = vsel %vm2648, %v2643, %v2645
        %v2650 = vsel %vm2648, %v2645, %v2647
        %v2653 = vsel %vm2637, %v2649, 0.0
        %v2654 = vsel %vm2638, %v2650, 0.0
        %v2655 = vadd.f32 %v2456, %v2653
        %v2656 = vadd.f32 %v2457, %v2654
        %v2657 = vld [vmem:[%s4] sm:$0xf]
        %2659 = vset.pattern.permute.xlu0 0
        %2660 = vperm.xlu0 %2659, %v2657
        %v2661 = vpop.permute.xlu0 %2660
        %v2663 = vadd.f32 %v2655, %v2661
        %v2664 = vadd.f32 %v2656, %v2661
        %v2665 = vld [vmem:[%s5] sm:$0x7]
        %v2666 = vld [vmem:[%s6] sm:$0x7]
        %2668 = vset.pattern.permute.xlu0 0
        %2669 = vperm.xlu0 %2668, %v2666
        %v2670 = vpop.permute.xlu0 %2669
        %vm2672 = vcmask 31744
        %v2674 = vsel %vm2672, %v2665, 0
        %v2676 = vsel %vm580, %v1265, 0
        %v2678 = vsel %vm580, %v1266, 0
        %2680 = vmatprep.subr.mxu0 %v2678
        %2681 = vmatpush1.msra.mxu0 %v2676
        %2682 = vmatprep.subr.mxu0 0.0
        %2683 = vmatpush1.msra.mxu0 0.0
        %2684 = vmatprep.subr.mxu0 0.0
        %2685 = vmatpush1.msra.mxu0 0.0
        %2686 = vmatprep.subr.mxu0 0.0
        %2687 = vmatpush1.msra.mxu0 0.0
        %2688 = vmatprep.subr.mxu0 0.0
        %2689 = vmatpush1.msra.mxu0 0.0
        %2690 = vmatprep.subr.mxu0 0.0
        %2691 = vmatpush1.msra.mxu0 0.0
        %2692 = vmatprep.subr.mxu0 0.0
        %2693 = vmatpush1.msra.mxu0 0.0
        %2694 = vmatprep.subr.mxu0 0.0
        %2695 = vmatpush1.msra.mxu0 0.0
        %2696 = vmatprep.subr.mxu0 0.0
        %2697 = vmatpush1.msra.mxu0 0.0
        %2698 = vmatprep.subr.mxu0 0.0
        %2699 = vmatpush1.msra.mxu0 0.0
        %2700 = vmatprep.subr.mxu0 0.0
        %2701 = vmatpush1.msra.mxu0 0.0
        %2702 = vmatprep.subr.mxu0 0.0
        %2703 = vmatpush1.msra.mxu0 0.0
        %2704 = vmatprep.subr.mxu0 0.0
        %2705 = vmatpush1.msra.mxu0 0.0
        %2706 = vmatprep.subr.mxu0 0.0
        %2707 = vmatpush1.msra.mxu0 0.0
        %2708 = vmatprep.subr.mxu0 0.0
        %2709 = vmatpush1.msra.mxu0 0.0
        %2710 = vmatprep.subr.mxu0 0.0
        %2711 = vmatpush1.msra.mxu0 0.0
        %2712 = vmatprep.subr.mxu0 0.0
        %2713 = vmatpush1.msra.mxu0 0.0
        %2714 = vmatprep.subr.mxu0 0.0
        %2715 = vmatpush1.msra.mxu0 0.0
        %2716 = vmatprep.subr.mxu0 0.0
        %2717 = vmatpush1.msra.mxu0 0.0
        %2718 = vmatprep.subr.mxu0 0.0
        %2719 = vmatpush1.msra.mxu0 0.0
        %2720 = vmatprep.subr.mxu0 0.0
        %2721 = vmatpush1.msra.mxu0 0.0
        %2722 = vmatprep.subr.mxu0 0.0
        %2723 = vmatpush1.msra.mxu0 0.0
        %2724 = vmatprep.subr.mxu0 0.0
        %2725 = vmatpush1.msra.mxu0 0.0
        %2726 = vmatprep.subr.mxu0 0.0
        %2727 = vmatpush1.msra.mxu0 0.0
        %2728 = vmatprep.subr.mxu0 0.0
        %2729 = vmatpush1.msra.mxu0 0.0
        %2730 = vmatprep.subr.mxu0 0.0
        %2731 = vmatpush1.msra.mxu0 0.0
        %2732 = vmatprep.subr.mxu0 0.0
        %2733 = vmatpush1.msra.mxu0 0.0
        %2734 = vmatprep.subr.mxu0 0.0
        %2735 = vmatpush1.msra.mxu0 0.0
        %2736 = vmatprep.subr.mxu0 0.0
        %2737 = vmatpush1.msra.mxu0 0.0
        %2738 = vmatprep.subr.mxu0 0.0
        %2739 = vmatpush1.msra.mxu0 0.0
        %2740 = vmatprep.subr.mxu0 0.0
        %2741 = vmatpush1.msra.mxu0 0.0
        %2742 = vmatprep.subr.mxu0 0.0
        %2743 = vmatpush1.msra.mxu0 0.0
        %2744 = vmatprep.mubr.f32.mxu0 0.0
        %2745 = vmatmul.mubr.f32.gmra.mrb[0].mxu0 %v2674
        %v2746 = vpop.f32.mrb[0].mxu0
        %v2747 = vadd.f32 %v2670, %v2746
        %v2748 = vpop.f32.mrb[0].mxu0
        %v2749 = vadd.f32 %v2670, %v2748
        %2750 = vdwg.mxu0
        %v2751 = vld [vmem:[%s7] sm:$0x7]
        %v2752 = vld [vmem:[%s8] sm:$0x7]
        %2754 = vset.pattern.permute.xlu0 0
        %2755 = vperm.xlu0 %2754, %v2752
        %v2756 = vpop.permute.xlu0 %2755
        %v2759 = vsel %vm2672, %v2751, 0
        %v2762 = vsel %vm580, %v2663, 0
        %v2765 = vsel %vm580, %v2664, 0
        %2767 = vmatprep.subr.mxu0 %v2765
        %2768 = vmatpush1.msra.mxu0 %v2762
        %2769 = vmatprep.subr.mxu0 0.0
        %2770 = vmatpush1.msra.mxu0 0.0
        %2771 = vmatprep.subr.mxu0 0.0
        %2772 = vmatpush1.msra.mxu0 0.0
        %2773 = vmatprep.subr.mxu0 0.0
        %2774 = vmatpush1.msra.mxu0 0.0
        %2775 = vmatprep.subr.mxu0 0.0
        %2776 = vmatpush1.msra.mxu0 0.0
        %2777 = vmatprep.subr.mxu0 0.0
        %2778 = vmatpush1.msra.mxu0 0.0
        %2779 = vmatprep.subr.mxu0 0.0
        %2780 = vmatpush1.msra.mxu0 0.0
        %2781 = vmatprep.subr.mxu0 0.0
        %2782 = vmatpush1.msra.mxu0 0.0
        %2783 = vmatprep.subr.mxu0 0.0
        %2784 = vmatpush1.msra.mxu0 0.0
        %2785 = vmatprep.subr.mxu0 0.0
        %2786 = vmatpush1.msra.mxu0 0.0
        %2787 = vmatprep.subr.mxu0 0.0
        %2788 = vmatpush1.msra.mxu0 0.0
        %2789 = vmatprep.subr.mxu0 0.0
        %2790 = vmatpush1.msra.mxu0 0.0
        %2791 = vmatprep.subr.mxu0 0.0
        %2792 = vmatpush1.msra.mxu0 0.0
        %2793 = vmatprep.subr.mxu0 0.0
        %2794 = vmatpush1.msra.mxu0 0.0
        %2795 = vmatprep.subr.mxu0 0.0
        %2796 = vmatpush1.msra.mxu0 0.0
        %2797 = vmatprep.subr.mxu0 0.0
        %2798 = vmatpush1.msra.mxu0 0.0
        %2799 = vmatprep.subr.mxu0 0.0
        %2800 = vmatpush1.msra.mxu0 0.0
        %2801 = vmatprep.subr.mxu0 0.0
        %2802 = vmatpush1.msra.mxu0 0.0
        %2803 = vmatprep.subr.mxu0 0.0
        %2804 = vmatpush1.msra.mxu0 0.0
        %2805 = vmatprep.subr.mxu0 0.0
        %2806 = vmatpush1.msra.mxu0 0.0
        %2807 = vmatprep.subr.mxu0 0.0
        %2808 = vmatpush1.msra.mxu0 0.0
        %2809 = vmatprep.subr.mxu0 0.0
        %2810 = vmatpush1.msra.mxu0 0.0
        %2811 = vmatprep.subr.mxu0 0.0
        %2812 = vmatpush1.msra.mxu0 0.0
        %2813 = vmatprep.subr.mxu0 0.0
        %2814 = vmatpush1.msra.mxu0 0.0
        %2815 = vmatprep.subr.mxu0 0.0
        %2816 = vmatpush1.msra.mxu0 0.0
        %2817 = vmatprep.subr.mxu0 0.0
        %2818 = vmatpush1.msra.mxu0 0.0
        %2819 = vmatprep.subr.mxu0 0.0
        %2820 = vmatpush1.msra.mxu0 0.0
        %2821 = vmatprep.subr.mxu0 0.0
        %2822 = vmatpush1.msra.mxu0 0.0
        %2823 = vmatprep.subr.mxu0 0.0
        %2824 = vmatpush1.msra.mxu0 0.0
        %2825 = vmatprep.subr.mxu0 0.0
        %2826 = vmatpush1.msra.mxu0 0.0
        %2827 = vmatprep.subr.mxu0 0.0
        %2828 = vmatpush1.msra.mxu0 0.0
        %2829 = vmatprep.subr.mxu0 0.0
        %2830 = vmatpush1.msra.mxu0 0.0
        %2831 = vmatprep.mubr.f32.mxu0 0.0
        %2832 = vmatmul.mubr.f32.gmra.mrb[0].mxu0 %v2759
        %v2833 = vpop.f32.mrb[0].mxu0
        %v2834 = vadd.f32 %v2756, %v2833
        %v2835 = vpop.f32.mrb[0].mxu0
        %v2836 = vadd.f32 %v2756, %v2835
        %2837 = vdwg.mxu0
        %v2838 = vadd.f32 %v2747, %v2834
        %v2839 = vadd.f32 %v2749, %v2836
        %vm2840 = vcmask 1041408
        %v2841 = vsel %vm2840, %v2747, -inf
        %v2842 = vrot.slane %v2841, 4
        %v2843 = vmax.f32 %v2841, %v2842
        %v2844 = vrot.slane %v2843, 2
        %v2845 = vmax.f32 %v2843, %v2844
        %v2846 = vrot.slane %v2845, 1
        %v2847 = vmax.f32 %v2845, %v2846
        %v2848 = vsel %vm2840, %v2749, -inf
        %v2849 = vrot.slane %v2848, 4
        %v2850 = vmax.f32 %v2848, %v2849
        %v2851 = vrot.slane %v2850, 2
        %v2852 = vmax.f32 %v2850, %v2851
        %v2853 = vrot.slane %v2852, 1
        %v2854 = vmax.f32 %v2852, %v2853
        %v2855 = vsel %vm2840, %v2834, -inf
        %v2856 = vrot.slane %v2855, 4
        %v2857 = vmax.f32 %v2855, %v2856
        %v2858 = vrot.slane %v2857, 2
        %v2859 = vmax.f32 %v2857, %v2858
        %v2860 = vrot.slane %v2859, 1
        %v2861 = vmax.f32 %v2859, %v2860
        %v2862 = vsel %vm2840, %v2836, -inf
        %v2863 = vrot.slane %v2862, 4
        %v2864 = vmax.f32 %v2862, %v2863
        %v2865 = vrot.slane %v2864, 2
        %v2866 = vmax.f32 %v2864, %v2865
        %v2867 = vrot.slane %v2866, 1
        %v2868 = vmax.f32 %v2866, %v2867
        %v2869 = vmax.f32 %v2847, %v2861
        %v2870 = vmax.f32 %v2854, %v2868
        %v2873 = vcombine.low %v2838, %v2839
        %v2875 = vunpack.c.l.s4 1966171168
        %v2876 = vunpack.c.0.s8 %v2875
        %v2877 = vlaneseq
        %v2878 = vshrl.u32 %v2877, 7
        %v2879 = vsub.s32 %v2876, %v2878
        %v2880 = vrot.slane %v2873, %v2879
        %v2882 = vunpack.c.l.s4 1966171168
        %v2883 = vunpack.c.0.s8 %v2882
        %v2884 = vlaneseq
        %v2885 = vshrl.u32 %v2884, 7
        %v2886 = vsub.s32 %v2883, %v2885
        %v2887 = vrot.slane %v2880, %v2886
        %v2888 = vcombine.high %v2887, %v2887
        %v2890 = vlaneseq
        %vm2891 = vcmp.ge.s32.totalorder %v2890, 0
        %vm2892 = vcmp.lt.s32.totalorder %v2890, 256
        %vm2893 = vmand %vm2891, %vm2892
        %s2894 = scalar_lea.vmem [#allocation4], 2
        %2895 = vst.msk [vmem:[%s2894] ss:$2 sm:$0x3] %vm2893, %v2888
        %v2898 = vcombine.low %v2869, %v2870
        %v2900 = vunpack.c.l.s4 1966171168
        %v2901 = vunpack.c.0.s8 %v2900
        %v2902 = vlaneseq
        %v2903 = vshrl.u32 %v2902, 7
        %v2904 = vsub.s32 %v2901, %v2903
        %v2905 = vrot.slane %v2898, %v2904
        %v2907 = vunpack.c.l.s4 1966171168
        %v2908 = vunpack.c.0.s8 %v2907
        %v2909 = vlaneseq
        %v2910 = vshrl.u32 %v2909, 7
        %v2911 = vsub.s32 %v2908, %v2910
        %v2912 = vrot.slane %v2905, %v2911
        %s2914 = scalar_lea.vmem [#allocation4], 3
        %2915 = vst.msk [vmem:[%s2914] ss:$2 sm:$0x3] %vm2893, %v2912
        %v2916 = vld [vmem:[#allocation4] sm:$0x3f]
        %v2918 = vlaneseq
        %v2919 = vshrl.u32 %v2918, 7
        %v2920 = vsub.s32 0, %v2919
        %v2921 = vrot.slane %v2916, %v2920
        %v2922 = vlaneseq
        %v2923 = vshrl.u32 %v2922, 7
        %v2924 = vsub.s32 2, %v2923
        %v2925 = vrot.slane %v2916, %v2924
        %v2926 = vlaneseq
        %v2927 = vshrl.u32 %v2926, 7
        %v2928 = vsub.s32 4, %v2927
        %v2929 = vrot.slane %v2916, %v2928
        %v2933 = vlaneseq
        %v2934 = vshrl.u32 %v2933, 7
        %v2935 = vsub.s32 0, %v2934
        %v2936 = vrot.slane %v2921, %v2935
        %v2937 = vlaneseq
        %v2938 = vshrl.u32 %v2937, 7
        %v2939 = vsub.s32 0, %v2938
        %v2940 = vrot.slane %v2925, %v2939
        %v2941 = vlaneseq
        %v2942 = vshrl.u32 %v2941, 7
        %v2943 = vsub.s32 0, %v2942
        %v2944 = vrot.slane %v2929, %v2943
        %2946 = vset.pattern.permute.xlu0 0
        %2947 = vperm.xlu0 %2946, %v541
        %v2948 = vpop.permute.xlu0 %2947
        %v2950 = vmul.f32 %v2936, %v2948
        %v2951 = vmul.f32 %v2940, %v2948
        %v2952 = vmul.f32 %v2944, %v2948
        %v2953 = vlaneseq
        %v2954 = vshrl.u32 %v2953, 7
        %v2955 = vsub.s32 1, %v2954
        %v2956 = vrot.slane %v2916, %v2955
        %v2957 = vlaneseq
        %v2958 = vshrl.u32 %v2957, 7
        %v2959 = vsub.s32 3, %v2958
        %v2960 = vrot.slane %v2916, %v2959
        %v2961 = vlaneseq
        %v2962 = vshrl.u32 %v2961, 7
        %v2963 = vsub.s32 5, %v2962
        %v2964 = vrot.slane %v2916, %v2963
        %v2968 = vlaneseq
        %v2969 = vshrl.u32 %v2968, 7
        %v2970 = vsub.s32 1, %v2969
        %v2971 = vrot.slane %v2956, %v2970
        %v2972 = vlaneseq
        %v2973 = vshrl.u32 %v2972, 7
        %v2974 = vsub.s32 1, %v2973
        %v2975 = vrot.slane %v2960, %v2974
        %v2976 = vlaneseq
        %v2977 = vshrl.u32 %v2976, 7
        %v2978 = vsub.s32 1, %v2977
        %v2979 = vrot.slane %v2964, %v2978
        %2981 = vset.pattern.permute.xlu0 0
        %2982 = vperm.xlu0 %2981, %v542
        %v2983 = vpop.permute.xlu0 %2982
        %v2985 = vmul.f32 %v2971, %v2983
        %v2986 = vmul.f32 %v2975, %v2983
        %v2987 = vmul.f32 %v2979, %v2983
        %v2988 = vadd.f32 %v2950, %v2985
        %v2989 = vadd.f32 %v2951, %v2986
        %v2990 = vadd.f32 %v2952, %v2987
        %2991 = vset.pattern.permute.xlu0 7
        %2992 = vperm.xlu0 %2991, %v541
        %v2993 = vpop.permute.xlu0 %2992
        %v2995 = vmul.f32 %v2936, %v2993
        %v2996 = vmul.f32 %v2940, %v2993
        %v2997 = vmul.f32 %v2944, %v2993
        %2998 = vset.pattern.permute.xlu0 7
        %2999 = vperm.xlu0 %2998, %v542
        %v3000 = vpop.permute.xlu0 %2999
        %v3002 = vmul.f32 %v2971, %v3000
        %v3003 = vmul.f32 %v2975, %v3000
        %v3004 = vmul.f32 %v2979, %v3000
        %v3005 = vadd.f32 %v2995, %v3002
        %v3006 = vadd.f32 %v2996, %v3003
        %v3007 = vadd.f32 %v2997, %v3004
        %3011 = vrot.lane.b32.xlu0 %v3005, 112
        %v3012 = vpop.permute.xlu0 %3011
        %3013 = vrot.lane.b32.xlu0 %v3006, 112
        %v3014 = vpop.permute.xlu0 %3013
        %3015 = vrot.lane.b32.xlu0 %v3007, 112
        %v3016 = vpop.permute.xlu0 %3015
        %v3017 = vsel %vm582, %v3012, %v3014
        %v3018 = vsel %vm582, %v3014, %v3016
        %v3022 = vadd.f32 %v2988, %v3017
        %v3023 = vadd.f32 %v2989, %v3018
        %v3024 = vadd.f32 %v2990, %v3016
        %3025 = vset.pattern.permute.xlu0 14
        %3026 = vperm.xlu0 %3025, %v541
        %v3027 = vpop.permute.xlu0 %3026
        %v3029 = vmul.f32 %v2936, %v3027
        %v3030 = vmul.f32 %v2940, %v3027
        %v3031 = vmul.f32 %v2944, %v3027
        %3032 = vset.pattern.permute.xlu0 14
        %3033 = vperm.xlu0 %3032, %v542
        %v3034 = vpop.permute.xlu0 %3033
        %v3036 = vmul.f32 %v2971, %v3034
        %v3037 = vmul.f32 %v2975, %v3034
        %v3038 = vmul.f32 %v2979, %v3034
        %v3039 = vadd.f32 %v3029, %v3036
        %v3040 = vadd.f32 %v3030, %v3037
        %v3041 = vadd.f32 %v3031, %v3038
        %3045 = vrot.lane.b32.xlu0 %v3039, 96
        %v3046 = vpop.permute.xlu0 %3045
        %3047 = vrot.lane.b32.xlu0 %v3040, 96
        %v3048 = vpop.permute.xlu0 %3047
        %3049 = vrot.lane.b32.xlu0 %v3041, 96
        %v3050 = vpop.permute.xlu0 %3049
        %v3051 = vsel %vm610, %v3046, %v3048
        %v3052 = vsel %vm610, %v3048, %v3050
        %v3056 = vadd.f32 %v3022, %v3051
        %v3057 = vadd.f32 %v3023, %v3052
        %v3058 = vadd.f32 %v3024, %v3050
        %3059 = vset.pattern.permute.xlu0 21
        %3060 = vperm.xlu0 %3059, %v541
        %v3061 = vpop.permute.xlu0 %3060
        %v3063 = vmul.f32 %v2936, %v3061
        %v3064 = vmul.f32 %v2940, %v3061
        %v3065 = vmul.f32 %v2944, %v3061
        %3066 = vset.pattern.permute.xlu0 21
        %3067 = vperm.xlu0 %3066, %v542
        %v3068 = vpop.permute.xlu0 %3067
        %v3070 = vmul.f32 %v2971, %v3068
        %v3071 = vmul.f32 %v2975, %v3068
        %v3072 = vmul.f32 %v2979, %v3068
        %v3073 = vadd.f32 %v3063, %v3070
        %v3074 = vadd.f32 %v3064, %v3071
        %v3075 = vadd.f32 %v3065, %v3072
        %3079 = vrot.lane.b32.xlu0 %v3073, 80
        %v3080 = vpop.permute.xlu0 %3079
        %3081 = vrot.lane.b32.xlu0 %v3074, 80
        %v3082 = vpop.permute.xlu0 %3081
        %3083 = vrot.lane.b32.xlu0 %v3075, 80
        %v3084 = vpop.permute.xlu0 %3083
        %v3085 = vsel %vm638, %v3080, %v3082
        %v3086 = vsel %vm638, %v3082, %v3084
        %v3090 = vadd.f32 %v3056, %v3085
        %v3091 = vadd.f32 %v3057, %v3086
        %v3092 = vadd.f32 %v3058, %v3084
        %v3093 = vld [vmem:[#allocation4 + $0x2] sm:$0x3f]
        %v3095 = vlaneseq
        %v3096 = vshrl.u32 %v3095, 7
        %v3097 = vsub.s32 0, %v3096
        %v3098 = vrot.slane %v3093, %v3097
        %v3099 = vlaneseq
        %v3100 = vshrl.u32 %v3099, 7
        %v3101 = vsub.s32 2, %v3100
        %v3102 = vrot.slane %v3093, %v3101
        %v3103 = vlaneseq
        %v3104 = vshrl.u32 %v3103, 7
        %v3105 = vsub.s32 4, %v3104
        %v3106 = vrot.slane %v3093, %v3105
        %v3110 = vlaneseq
        %v3111 = vshrl.u32 %v3110, 7
        %v3112 = vsub.s32 0, %v3111
        %v3113 = vrot.slane %v3098, %v3112
        %v3114 = vlaneseq
        %v3115 = vshrl.u32 %v3114, 7
        %v3116 = vsub.s32 0, %v3115
        %v3117 = vrot.slane %v3102, %v3116
        %v3118 = vlaneseq
        %v3119 = vshrl.u32 %v3118, 7
        %v3120 = vsub.s32 0, %v3119
        %v3121 = vrot.slane %v3106, %v3120
        %3122 = vset.pattern.permute.xlu0 28
        %3123 = vperm.xlu0 %3122, %v541
        %v3124 = vpop.permute.xlu0 %3123
        %v3126 = vmul.f32 %v3113, %v3124
        %v3127 = vmul.f32 %v3117, %v3124
        %v3128 = vmul.f32 %v3121, %v3124
        %v3129 = vlaneseq
        %v3130 = vshrl.u32 %v3129, 7
        %v3131 = vsub.s32 1, %v3130
        %v3132 = vrot.slane %v3093, %v3131
        %v3133 = vlaneseq
        %v3134 = vshrl.u32 %v3133, 7
        %v3135 = vsub.s32 3, %v3134
        %v3136 = vrot.slane %v3093, %v3135
        %v3137 = vlaneseq
        %v3138 = vshrl.u32 %v3137, 7
        %v3139 = vsub.s32 5, %v3138
        %v3140 = vrot.slane %v3093, %v3139
        %v3144 = vlaneseq
        %v3145 = vshrl.u32 %v3144, 7
        %v3146 = vsub.s32 1, %v3145
        %v3147 = vrot.slane %v3132, %v3146
        %v3148 = vlaneseq
        %v3149 = vshrl.u32 %v3148, 7
        %v3150 = vsub.s32 1, %v3149
        %v3151 = vrot.slane %v3136, %v3150
        %v3152 = vlaneseq
        %v3153 = vshrl.u32 %v3152, 7
        %v3154 = vsub.s32 1, %v3153
        %v3155 = vrot.slane %v3140, %v3154
        %3156 = vset.pattern.permute.xlu0 28
        %3157 = vperm.xlu0 %3156, %v542
        %v3158 = vpop.permute.xlu0 %3157
        %v3160 = vmul.f32 %v3147, %v3158
        %v3161 = vmul.f32 %v3151, %v3158
        %v3162 = vmul.f32 %v3155, %v3158
        %v3163 = vadd.f32 %v3126, %v3160
        %v3164 = vadd.f32 %v3127, %v3161
        %v3165 = vadd.f32 %v3128, %v3162
        %3169 = vrot.lane.b32.xlu0 %v3163, 64
        %v3170 = vpop.permute.xlu0 %3169
        %3171 = vrot.lane.b32.xlu0 %v3164, 64
        %v3172 = vpop.permute.xlu0 %3171
        %3173 = vrot.lane.b32.xlu0 %v3165, 64
        %v3174 = vpop.permute.xlu0 %3173
        %v3175 = vsel %vm665, %v3170, %v3172
        %v3176 = vsel %vm665, %v3172, %v3174
        %v3180 = vadd.f32 %v3090, %v3170
        %v3181 = vadd.f32 %v3091, %v3175
        %v3182 = vadd.f32 %v3092, %v3176
        %3183 = vset.pattern.permute.xlu0 35
        %3184 = vperm.xlu0 %3183, %v541
        %v3185 = vpop.permute.xlu0 %3184
        %v3187 = vmul.f32 %v3113, %v3185
        %v3188 = vmul.f32 %v3117, %v3185
        %v3189 = vmul.f32 %v3121, %v3185
        %3190 = vset.pattern.permute.xlu0 35
        %3191 = vperm.xlu0 %3190, %v542
        %v3192 = vpop.permute.xlu0 %3191
        %v3194 = vmul.f32 %v3147, %v3192
        %v3195 = vmul.f32 %v3151, %v3192
        %v3196 = vmul.f32 %v3155, %v3192
        %v3197 = vadd.f32 %v3187, %v3194
        %v3198 = vadd.f32 %v3188, %v3195
        %v3199 = vadd.f32 %v3189, %v3196
        %3203 = vrot.lane.b32.xlu0 %v3197, 48
        %v3204 = vpop.permute.xlu0 %3203
        %3205 = vrot.lane.b32.xlu0 %v3198, 48
        %v3206 = vpop.permute.xlu0 %3205
        %3207 = vrot.lane.b32.xlu0 %v3199, 48
        %v3208 = vpop.permute.xlu0 %3207
        %vm3209 = vcmask 392192
        %v3210 = vsel %vm3209, %v3204, %v3206
        %v3211 = vsel %vm3209, %v3206, %v3208
        %v3215 = vadd.f32 %v3180, %v3204
        %v3216 = vadd.f32 %v3181, %v3210
        %v3217 = vadd.f32 %v3182, %v3211
        %3218 = vset.pattern.permute.xlu0 42
        %3219 = vperm.xlu0 %3218, %v541
        %v3220 = vpop.permute.xlu0 %3219
        %v3222 = vmul.f32 %v3113, %v3220
        %v3223 = vmul.f32 %v3117, %v3220
        %v3224 = vmul.f32 %v3121, %v3220
        %3225 = vset.pattern.permute.xlu0 42
        %3226 = vperm.xlu0 %3225, %v542
        %v3227 = vpop.permute.xlu0 %3226
        %v3229 = vmul.f32 %v3147, %v3227
        %v3230 = vmul.f32 %v3151, %v3227
        %v3231 = vmul.f32 %v3155, %v3227
        %v3232 = vadd.f32 %v3222, %v3229
        %v3233 = vadd.f32 %v3223, %v3230
        %v3234 = vadd.f32 %v3224, %v3231
        %3238 = vrot.lane.b32.xlu0 %v3232, 32
        %v3239 = vpop.permute.xlu0 %3238
        %3240 = vrot.lane.b32.xlu0 %v3233, 32
        %v3241 = vpop.permute.xlu0 %3240
        %3242 = vrot.lane.b32.xlu0 %v3234, 32
        %v3243 = vpop.permute.xlu0 %3242
        %v3244 = vsel %vm964, %v3239, %v3241
        %v3245 = vsel %vm964, %v3241, %v3243
        %v3249 = vadd.f32 %v3215, %v3239
        %v3250 = vadd.f32 %v3216, %v3244
        %v3251 = vadd.f32 %v3217, %v3245
        %3255 = vrot.lane.b32.xlu0 %v3249, 51
        %v3256 = vpop.permute.xlu0 %3255
        %3257 = vrot.lane.b32.xlu0 %v3250, 51
        %v3258 = vpop.permute.xlu0 %3257
        %3259 = vrot.lane.b32.xlu0 %v3251, 51
        %v3260 = vpop.permute.xlu0 %3259
        %vm3261 = vcmask 416768
        %v3262 = vsel %vm3261, %v3256, %v3258
        %v3263 = vsel %vm3261, %v3258, %v3260
        %v3266 = vsel %vm1852, %v3262, 0.0
        %v3267 = vsel %vm1853, %v3263, 0.0
        %3268 = vset.pattern.permute.xlu0 1
        %3269 = vperm.xlu0 %3268, %v541
        %v3270 = vpop.permute.xlu0 %3269
        %v3272 = vmul.f32 %v2936, %v3270
        %v3273 = vmul.f32 %v2940, %v3270
        %v3274 = vmul.f32 %v2944, %v3270
        %3275 = vset.pattern.permute.xlu0 1
        %3276 = vperm.xlu0 %3275, %v542
        %v3277 = vpop.permute.xlu0 %3276
        %v3279 = vmul.f32 %v2971, %v3277
        %v3280 = vmul.f32 %v2975, %v3277
        %v3281 = vmul.f32 %v2979, %v3277
        %v3282 = vadd.f32 %v3272, %v3279
        %v3283 = vadd.f32 %v3273, %v3280
        %v3284 = vadd.f32 %v3274, %v3281
        %3285 = vset.pattern.permute.xlu0 8
        %3286 = vperm.xlu0 %3285, %v541
        %v3287 = vpop.permute.xlu0 %3286
        %v3289 = vmul.f32 %v2936, %v3287
        %v3290 = vmul.f32 %v2940, %v3287
        %v3291 = vmul.f32 %v2944, %v3287
        %3292 = vset.pattern.permute.xlu0 8
        %3293 = vperm.xlu0 %3292, %v542
        %v3294 = vpop.permute.xlu0 %3293
        %v3296 = vmul.f32 %v2971, %v3294
        %v3297 = vmul.f32 %v2975, %v3294
        %v3298 = vmul.f32 %v2979, %v3294
        %v3299 = vadd.f32 %v3289, %v3296
        %v3300 = vadd.f32 %v3290, %v3297
        %v3301 = vadd.f32 %v3291, %v3298
        %3305 = vrot.lane.b32.xlu0 %v3299, 112
        %v3306 = vpop.permute.xlu0 %3305
        %3307 = vrot.lane.b32.xlu0 %v3300, 112
        %v3308 = vpop.permute.xlu0 %3307
        %3309 = vrot.lane.b32.xlu0 %v3301, 112
        %v3310 = vpop.permute.xlu0 %3309
        %v3311 = vsel %vm582, %v3306, %v3308
        %v3312 = vsel %vm582, %v3308, %v3310
        %v3316 = vadd.f32 %v3282, %v3311
        %v3317 = vadd.f32 %v3283, %v3312
        %v3318 = vadd.f32 %v3284, %v3310
        %3319 = vset.pattern.permute.xlu0 15
        %3320 = vperm.xlu0 %3319, %v541
        %v3321 = vpop.permute.xlu0 %3320
        %v3323 = vmul.f32 %v2936, %v3321
        %v3324 = vmul.f32 %v2940, %v3321
        %v3325 = vmul.f32 %v2944, %v3321
        %3326 = vset.pattern.permute.xlu0 15
        %3327 = vperm.xlu0 %3326, %v542
        %v3328 = vpop.permute.xlu0 %3327
        %v3330 = vmul.f32 %v2971, %v3328
        %v3331 = vmul.f32 %v2975, %v3328
        %v3332 = vmul.f32 %v2979, %v3328
        %v3333 = vadd.f32 %v3323, %v3330
        %v3334 = vadd.f32 %v3324, %v3331
        %v3335 = vadd.f32 %v3325, %v3332
        %3339 = vrot.lane.b32.xlu0 %v3333, 96
        %v3340 = vpop.permute.xlu0 %3339
        %3341 = vrot.lane.b32.xlu0 %v3334, 96
        %v3342 = vpop.permute.xlu0 %3341
        %3343 = vrot.lane.b32.xlu0 %v3335, 96
        %v3344 = vpop.permute.xlu0 %3343
        %v3345 = vsel %vm610, %v3340, %v3342
        %v3346 = vsel %vm610, %v3342, %v3344
        %v3350 = vadd.f32 %v3316, %v3345
        %v3351 = vadd.f32 %v3317, %v3346
        %v3352 = vadd.f32 %v3318, %v3344
        %3353 = vset.pattern.permute.xlu0 22
        %3354 = vperm.xlu0 %3353, %v541
        %v3355 = vpop.permute.xlu0 %3354
        %v3357 = vmul.f32 %v2936, %v3355
        %v3358 = vmul.f32 %v2940, %v3355
        %v3359 = vmul.f32 %v2944, %v3355
        %3360 = vset.pattern.permute.xlu0 22
        %3361 = vperm.xlu0 %3360, %v542
        %v3362 = vpop.permute.xlu0 %3361
        %v3364 = vmul.f32 %v2971, %v3362
        %v3365 = vmul.f32 %v2975, %v3362
        %v3366 = vmul.f32 %v2979, %v3362
        %v3367 = vadd.f32 %v3357, %v3364
        %v3368 = vadd.f32 %v3358, %v3365
        %v3369 = vadd.f32 %v3359, %v3366
        %3373 = vrot.lane.b32.xlu0 %v3367, 80
        %v3374 = vpop.permute.xlu0 %3373
        %3375 = vrot.lane.b32.xlu0 %v3368, 80
        %v3376 = vpop.permute.xlu0 %3375
        %3377 = vrot.lane.b32.xlu0 %v3369, 80
        %v3378 = vpop.permute.xlu0 %3377
        %v3379 = vsel %vm638, %v3374, %v3376
        %v3380 = vsel %vm638, %v3376, %v3378
        %v3384 = vadd.f32 %v3350, %v3379
        %v3385 = vadd.f32 %v3351, %v3380
        %v3386 = vadd.f32 %v3352, %v3378
        %3387 = vset.pattern.permute.xlu0 29
        %3388 = vperm.xlu0 %3387, %v541
        %v3389 = vpop.permute.xlu0 %3388
        %v3391 = vmul.f32 %v3113, %v3389
        %v3392 = vmul.f32 %v3117, %v3389
        %v3393 = vmul.f32 %v3121, %v3389
        %3394 = vset.pattern.permute.xlu0 29
        %3395 = vperm.xlu0 %3394, %v542
        %v3396 = vpop.permute.xlu0 %3395
        %v3398 = vmul.f32 %v3147, %v3396
        %v3399 = vmul.f32 %v3151, %v3396
        %v3400 = vmul.f32 %v3155, %v3396
        %v3401 = vadd.f32 %v3391, %v3398
        %v3402 = vadd.f32 %v3392, %v3399
        %v3403 = vadd.f32 %v3393, %v3400
        %3407 = vrot.lane.b32.xlu0 %v3401, 64
        %v3408 = vpop.permute.xlu0 %3407
        %3409 = vrot.lane.b32.xlu0 %v3402, 64
        %v3410 = vpop.permute.xlu0 %3409
        %3411 = vrot.lane.b32.xlu0 %v3403, 64
        %v3412 = vpop.permute.xlu0 %3411
        %v3413 = vsel %vm665, %v3408, %v3410
        %v3414 = vsel %vm665, %v3410, %v3412
        %v3418 = vadd.f32 %v3384, %v3408
        %v3419 = vadd.f32 %v3385, %v3413
        %v3420 = vadd.f32 %v3386, %v3414
        %3421 = vset.pattern.permute.xlu0 36
        %3422 = vperm.xlu0 %3421, %v541
        %v3423 = vpop.permute.xlu0 %3422
        %v3425 = vmul.f32 %v3113, %v3423
        %v3426 = vmul.f32 %v3117, %v3423
        %v3427 = vmul.f32 %v3121, %v3423
        %3428 = vset.pattern.permute.xlu0 36
        %3429 = vperm.xlu0 %3428, %v542
        %v3430 = vpop.permute.xlu0 %3429
        %v3432 = vmul.f32 %v3147, %v3430
        %v3433 = vmul.f32 %v3151, %v3430
        %v3434 = vmul.f32 %v3155, %v3430
        %v3435 = vadd.f32 %v3425, %v3432
        %v3436 = vadd.f32 %v3426, %v3433
        %v3437 = vadd.f32 %v3427, %v3434
        %3441 = vrot.lane.b32.xlu0 %v3435, 48
        %v3442 = vpop.permute.xlu0 %3441
        %3443 = vrot.lane.b32.xlu0 %v3436, 48
        %v3444 = vpop.permute.xlu0 %3443
        %3445 = vrot.lane.b32.xlu0 %v3437, 48
        %v3446 = vpop.permute.xlu0 %3445
        %v3447 = vsel %vm3209, %v3442, %v3444
        %v3448 = vsel %vm3209, %v3444, %v3446
        %v3452 = vadd.f32 %v3418, %v3442
        %v3453 = vadd.f32 %v3419, %v3447
        %v3454 = vadd.f32 %v3420, %v3448
        %3455 = vset.pattern.permute.xlu0 43
        %3456 = vperm.xlu0 %3455, %v541
        %v3457 = vpop.permute.xlu0 %3456
        %v3459 = vmul.f32 %v3113, %v3457
        %v3460 = vmul.f32 %v3117, %v3457
        %v3461 = vmul.f32 %v3121, %v3457
        %3462 = vset.pattern.permute.xlu0 43
        %3463 = vperm.xlu0 %3462, %v542
        %v3464 = vpop.permute.xlu0 %3463
        %v3466 = vmul.f32 %v3147, %v3464
        %v3467 = vmul.f32 %v3151, %v3464
        %v3468 = vmul.f32 %v3155, %v3464
        %v3469 = vadd.f32 %v3459, %v3466
        %v3470 = vadd.f32 %v3460, %v3467
        %v3471 = vadd.f32 %v3461, %v3468
        %3475 = vrot.lane.b32.xlu0 %v3469, 32
        %v3476 = vpop.permute.xlu0 %3475
        %3477 = vrot.lane.b32.xlu0 %v3470, 32
        %v3478 = vpop.permute.xlu0 %3477
        %3479 = vrot.lane.b32.xlu0 %v3471, 32
        %v3480 = vpop.permute.xlu0 %3479
        %v3481 = vsel %vm964, %v3476, %v3478
        %v3482 = vsel %vm964, %v3478, %v3480
        %v3486 = vadd.f32 %v3452, %v3476
        %v3487 = vadd.f32 %v3453, %v3481
        %v3488 = vadd.f32 %v3454, %v3482
        %3492 = vrot.lane.b32.xlu0 %v3486, 50
        %v3493 = vpop.permute.xlu0 %3492
        %3494 = vrot.lane.b32.xlu0 %v3487, 50
        %v3495 = vpop.permute.xlu0 %3494
        %3496 = vrot.lane.b32.xlu0 %v3488, 50
        %v3497 = vpop.permute.xlu0 %3496
        %vm3498 = vcmask 408576
        %v3499 = vsel %vm3498, %v3493, %v3495
        %v3500 = vsel %vm3498, %v3495, %v3497
        %v3503 = vsel %vm674, %v3499, 0.0
        %v3504 = vsel %vm675, %v3500, 0.0
        %v3505 = vadd.f32 %v3266, %v3503
        %v3506 = vadd.f32 %v3267, %v3504
        %3507 = vset.pattern.permute.xlu0 2
        %3508 = vperm.xlu0 %3507, %v541
        %v3509 = vpop.permute.xlu0 %3508
        %v3511 = vmul.f32 %v2936, %v3509
        %v3512 = vmul.f32 %v2940, %v3509
        %v3513 = vmul.f32 %v2944, %v3509
        %3514 = vset.pattern.permute.xlu0 2
        %3515 = vperm.xlu0 %3514, %v542
        %v3516 = vpop.permute.xlu0 %3515
        %v3518 = vmul.f32 %v2971, %v3516
        %v3519 = vmul.f32 %v2975, %v3516
        %v3520 = vmul.f32 %v2979, %v3516
        %v3521 = vadd.f32 %v3511, %v3518
        %v3522 = vadd.f32 %v3512, %v3519
        %v3523 = vadd.f32 %v3513, %v3520
        %3524 = vset.pattern.permute.xlu0 9
        %3525 = vperm.xlu0 %3524, %v541
        %v3526 = vpop.permute.xlu0 %3525
        %v3528 = vmul.f32 %v2936, %v3526
        %v3529 = vmul.f32 %v2940, %v3526
        %v3530 = vmul.f32 %v2944, %v3526
        %3531 = vset.pattern.permute.xlu0 9
        %3532 = vperm.xlu0 %3531, %v542
        %v3533 = vpop.permute.xlu0 %3532
        %v3535 = vmul.f32 %v2971, %v3533
        %v3536 = vmul.f32 %v2975, %v3533
        %v3537 = vmul.f32 %v2979, %v3533
        %v3538 = vadd.f32 %v3528, %v3535
        %v3539 = vadd.f32 %v3529, %v3536
        %v3540 = vadd.f32 %v3530, %v3537
        %3544 = vrot.lane.b32.xlu0 %v3538, 112
        %v3545 = vpop.permute.xlu0 %3544
        %3546 = vrot.lane.b32.xlu0 %v3539, 112
        %v3547 = vpop.permute.xlu0 %3546
        %3548 = vrot.lane.b32.xlu0 %v3540, 112
        %v3549 = vpop.permute.xlu0 %3548
        %v3550 = vsel %vm582, %v3545, %v3547
        %v3551 = vsel %vm582, %v3547, %v3549
        %v3555 = vadd.f32 %v3521, %v3550
        %v3556 = vadd.f32 %v3522, %v3551
        %v3557 = vadd.f32 %v3523, %v3549
        %3558 = vset.pattern.permute.xlu0 16
        %3559 = vperm.xlu0 %3558, %v541
        %v3560 = vpop.permute.xlu0 %3559
        %v3562 = vmul.f32 %v2936, %v3560
        %v3563 = vmul.f32 %v2940, %v3560
        %v3564 = vmul.f32 %v2944, %v3560
        %3565 = vset.pattern.permute.xlu0 16
        %3566 = vperm.xlu0 %3565, %v542
        %v3567 = vpop.permute.xlu0 %3566
        %v3569 = vmul.f32 %v2971, %v3567
        %v3570 = vmul.f32 %v2975, %v3567
        %v3571 = vmul.f32 %v2979, %v3567
        %v3572 = vadd.f32 %v3562, %v3569
        %v3573 = vadd.f32 %v3563, %v3570
        %v3574 = vadd.f32 %v3564, %v3571
        %3578 = vrot.lane.b32.xlu0 %v3572, 96
        %v3579 = vpop.permute.xlu0 %3578
        %3580 = vrot.lane.b32.xlu0 %v3573, 96
        %v3581 = vpop.permute.xlu0 %3580
        %3582 = vrot.lane.b32.xlu0 %v3574, 96
        %v3583 = vpop.permute.xlu0 %3582
        %v3584 = vsel %vm610, %v3579, %v3581
        %v3585 = vsel %vm610, %v3581, %v3583
        %v3589 = vadd.f32 %v3555, %v3584
        %v3590 = vadd.f32 %v3556, %v3585
        %v3591 = vadd.f32 %v3557, %v3583
        %3592 = vset.pattern.permute.xlu0 23
        %3593 = vperm.xlu0 %3592, %v541
        %v3594 = vpop.permute.xlu0 %3593
        %v3596 = vmul.f32 %v2936, %v3594
        %v3597 = vmul.f32 %v2940, %v3594
        %v3598 = vmul.f32 %v2944, %v3594
        %3599 = vset.pattern.permute.xlu0 23
        %3600 = vperm.xlu0 %3599, %v542
        %v3601 = vpop.permute.xlu0 %3600
        %v3603 = vmul.f32 %v2971, %v3601
        %v3604 = vmul.f32 %v2975, %v3601
        %v3605 = vmul.f32 %v2979, %v3601
        %v3606 = vadd.f32 %v3596, %v3603
        %v3607 = vadd.f32 %v3597, %v3604
        %v3608 = vadd.f32 %v3598, %v3605
        %3612 = vrot.lane.b32.xlu0 %v3606, 80
        %v3613 = vpop.permute.xlu0 %3612
        %3614 = vrot.lane.b32.xlu0 %v3607, 80
        %v3615 = vpop.permute.xlu0 %3614
        %3616 = vrot.lane.b32.xlu0 %v3608, 80
        %v3617 = vpop.permute.xlu0 %3616
        %v3618 = vsel %vm638, %v3613, %v3615
        %v3619 = vsel %vm638, %v3615, %v3617
        %v3623 = vadd.f32 %v3589, %v3618
        %v3624 = vadd.f32 %v3590, %v3619
        %v3625 = vadd.f32 %v3591, %v3617
        %3626 = vset.pattern.permute.xlu0 30
        %3627 = vperm.xlu0 %3626, %v541
        %v3628 = vpop.permute.xlu0 %3627
        %v3630 = vmul.f32 %v3113, %v3628
        %v3631 = vmul.f32 %v3117, %v3628
        %v3632 = vmul.f32 %v3121, %v3628
        %3633 = vset.pattern.permute.xlu0 30
        %3634 = vperm.xlu0 %3633, %v542
        %v3635 = vpop.permute.xlu0 %3634
        %v3637 = vmul.f32 %v3147, %v3635
        %v3638 = vmul.f32 %v3151, %v3635
        %v3639 = vmul.f32 %v3155, %v3635
        %v3640 = vadd.f32 %v3630, %v3637
        %v3641 = vadd.f32 %v3631, %v3638
        %v3642 = vadd.f32 %v3632, %v3639
        %3646 = vrot.lane.b32.xlu0 %v3640, 64
        %v3647 = vpop.permute.xlu0 %3646
        %3648 = vrot.lane.b32.xlu0 %v3641, 64
        %v3649 = vpop.permute.xlu0 %3648
        %3650 = vrot.lane.b32.xlu0 %v3642, 64
        %v3651 = vpop.permute.xlu0 %3650
        %v3652 = vsel %vm665, %v3647, %v3649
        %v3653 = vsel %vm665, %v3649, %v3651
        %v3657 = vadd.f32 %v3623, %v3647
        %v3658 = vadd.f32 %v3624, %v3652
        %v3659 = vadd.f32 %v3625, %v3653
        %3660 = vset.pattern.permute.xlu0 37
        %3661 = vperm.xlu0 %3660, %v541
        %v3662 = vpop.permute.xlu0 %3661
        %v3664 = vmul.f32 %v3113, %v3662
        %v3665 = vmul.f32 %v3117, %v3662
        %v3666 = vmul.f32 %v3121, %v3662
        %3667 = vset.pattern.permute.xlu0 37
        %3668 = vperm.xlu0 %3667, %v542
        %v3669 = vpop.permute.xlu0 %3668
        %v3671 = vmul.f32 %v3147, %v3669
        %v3672 = vmul.f32 %v3151, %v3669
        %v3673 = vmul.f32 %v3155, %v3669
        %v3674 = vadd.f32 %v3664, %v3671
        %v3675 = vadd.f32 %v3665, %v3672
        %v3676 = vadd.f32 %v3666, %v3673
        %3680 = vrot.lane.b32.xlu0 %v3674, 48
        %v3681 = vpop.permute.xlu0 %3680
        %3682 = vrot.lane.b32.xlu0 %v3675, 48
        %v3683 = vpop.permute.xlu0 %3682
        %3684 = vrot.lane.b32.xlu0 %v3676, 48
        %v3685 = vpop.permute.xlu0 %3684
        %v3686 = vsel %vm3209, %v3681, %v3683
        %v3687 = vsel %vm3209, %v3683, %v3685
        %v3691 = vadd.f32 %v3657, %v3681
        %v3692 = vadd.f32 %v3658, %v3686
        %v3693 = vadd.f32 %v3659, %v3687
        %3694 = vset.pattern.permute.xlu0 44
        %3695 = vperm.xlu0 %3694, %v541
        %v3696 = vpop.permute.xlu0 %3695
        %v3698 = vmul.f32 %v3113, %v3696
        %v3699 = vmul.f32 %v3117, %v3696
        %v3700 = vmul.f32 %v3121, %v3696
        %3701 = vset.pattern.permute.xlu0 44
        %3702 = vperm.xlu0 %3701, %v542
        %v3703 = vpop.permute.xlu0 %3702
        %v3705 = vmul.f32 %v3147, %v3703
        %v3706 = vmul.f32 %v3151, %v3703
        %v3707 = vmul.f32 %v3155, %v3703
        %v3708 = vadd.f32 %v3698, %v3705
        %v3709 = vadd.f32 %v3699, %v3706
        %v3710 = vadd.f32 %v3700, %v3707
        %3714 = vrot.lane.b32.xlu0 %v3708, 32
        %v3715 = vpop.permute.xlu0 %3714
        %3716 = vrot.lane.b32.xlu0 %v3709, 32
        %v3717 = vpop.permute.xlu0 %3716
        %3718 = vrot.lane.b32.xlu0 %v3710, 32
        %v3719 = vpop.permute.xlu0 %3718
        %v3720 = vsel %vm964, %v3715, %v3717
        %v3721 = vsel %vm964, %v3717, %v3719
        %v3725 = vadd.f32 %v3691, %v3715
        %v3726 = vadd.f32 %v3692, %v3720
        %v3727 = vadd.f32 %v3693, %v3721
        %3731 = vrot.lane.b32.xlu0 %v3725, 49
        %v3732 = vpop.permute.xlu0 %3731
        %3733 = vrot.lane.b32.xlu0 %v3726, 49
        %v3734 = vpop.permute.xlu0 %3733
        %3735 = vrot.lane.b32.xlu0 %v3727, 49
        %v3736 = vpop.permute.xlu0 %3735
        %vm3737 = vcmask 400384
        %v3738 = vsel %vm3737, %v3732, %v3734
        %v3739 = vsel %vm3737, %v3734, %v3736
        %v3742 = vsel %vm817, %v3738, 0.0
        %v3743 = vsel %vm818, %v3739, 0.0
        %v3744 = vadd.f32 %v3505, %v3742
        %v3745 = vadd.f32 %v3506, %v3743
        %3746 = vset.pattern.permute.xlu0 3
        %3747 = vperm.xlu0 %3746, %v541
        %v3748 = vpop.permute.xlu0 %3747
        %v3750 = vmul.f32 %v2936, %v3748
        %v3751 = vmul.f32 %v2940, %v3748
        %v3752 = vmul.f32 %v2944, %v3748
        %3753 = vset.pattern.permute.xlu0 3
        %3754 = vperm.xlu0 %3753, %v542
        %v3755 = vpop.permute.xlu0 %3754
        %v3757 = vmul.f32 %v2971, %v3755
        %v3758 = vmul.f32 %v2975, %v3755
        %v3759 = vmul.f32 %v2979, %v3755
        %v3760 = vadd.f32 %v3750, %v3757
        %v3761 = vadd.f32 %v3751, %v3758
        %v3762 = vadd.f32 %v3752, %v3759
        %3763 = vset.pattern.permute.xlu0 10
        %3764 = vperm.xlu0 %3763, %v541
        %v3765 = vpop.permute.xlu0 %3764
        %v3767 = vmul.f32 %v2936, %v3765
        %v3768 = vmul.f32 %v2940, %v3765
        %v3769 = vmul.f32 %v2944, %v3765
        %3770 = vset.pattern.permute.xlu0 10
        %3771 = vperm.xlu0 %3770, %v542
        %v3772 = vpop.permute.xlu0 %3771
        %v3774 = vmul.f32 %v2971, %v3772
        %v3775 = vmul.f32 %v2975, %v3772
        %v3776 = vmul.f32 %v2979, %v3772
        %v3777 = vadd.f32 %v3767, %v3774
        %v3778 = vadd.f32 %v3768, %v3775
        %v3779 = vadd.f32 %v3769, %v3776
        %3783 = vrot.lane.b32.xlu0 %v3777, 112
        %v3784 = vpop.permute.xlu0 %3783
        %3785 = vrot.lane.b32.xlu0 %v3778, 112
        %v3786 = vpop.permute.xlu0 %3785
        %3787 = vrot.lane.b32.xlu0 %v3779, 112
        %v3788 = vpop.permute.xlu0 %3787
        %v3789 = vsel %vm582, %v3784, %v3786
        %v3790 = vsel %vm582, %v3786, %v3788
        %v3794 = vadd.f32 %v3760, %v3789
        %v3795 = vadd.f32 %v3761, %v3790
        %v3796 = vadd.f32 %v3762, %v3788
        %3797 = vset.pattern.permute.xlu0 17
        %3798 = vperm.xlu0 %3797, %v541
        %v3799 = vpop.permute.xlu0 %3798
        %v3801 = vmul.f32 %v2936, %v3799
        %v3802 = vmul.f32 %v2940, %v3799
        %v3803 = vmul.f32 %v2944, %v3799
        %3804 = vset.pattern.permute.xlu0 17
        %3805 = vperm.xlu0 %3804, %v542
        %v3806 = vpop.permute.xlu0 %3805
        %v3808 = vmul.f32 %v2971, %v3806
        %v3809 = vmul.f32 %v2975, %v3806
        %v3810 = vmul.f32 %v2979, %v3806
        %v3811 = vadd.f32 %v3801, %v3808
        %v3812 = vadd.f32 %v3802, %v3809
        %v3813 = vadd.f32 %v3803, %v3810
        %3817 = vrot.lane.b32.xlu0 %v3811, 96
        %v3818 = vpop.permute.xlu0 %3817
        %3819 = vrot.lane.b32.xlu0 %v3812, 96
        %v3820 = vpop.permute.xlu0 %3819
        %3821 = vrot.lane.b32.xlu0 %v3813, 96
        %v3822 = vpop.permute.xlu0 %3821
        %v3823 = vsel %vm610, %v3818, %v3820
        %v3824 = vsel %vm610, %v3820, %v3822
        %v3828 = vadd.f32 %v3794, %v3823
        %v3829 = vadd.f32 %v3795, %v3824
        %v3830 = vadd.f32 %v3796, %v3822
        %v3831 = vld [vmem:[#allocation4 + $0x2] sm:$0xf]
        %v3833 = vlaneseq
        %v3834 = vshrl.u32 %v3833, 7
        %v3835 = vsub.s32 0, %v3834
        %v3836 = vrot.slane %v3831, %v3835
        %v3837 = vlaneseq
        %v3838 = vshrl.u32 %v3837, 7
        %v3839 = vsub.s32 2, %v3838
        %v3840 = vrot.slane %v3831, %v3839
        %v3843 = vlaneseq
        %v3844 = vshrl.u32 %v3843, 7
        %v3845 = vsub.s32 0, %v3844
        %v3846 = vrot.slane %v3836, %v3845
        %v3847 = vlaneseq
        %v3848 = vshrl.u32 %v3847, 7
        %v3849 = vsub.s32 0, %v3848
        %v3850 = vrot.slane %v3840, %v3849
        %3851 = vset.pattern.permute.xlu0 24
        %3852 = vperm.xlu0 %3851, %v541
        %v3853 = vpop.permute.xlu0 %3852
        %v3855 = vmul.f32 %v3846, %v3853
        %v3856 = vmul.f32 %v3850, %v3853
        %v3857 = vlaneseq
        %v3858 = vshrl.u32 %v3857, 7
        %v3859 = vsub.s32 1, %v3858
        %v3860 = vrot.slane %v3831, %v3859
        %v3861 = vlaneseq
        %v3862 = vshrl.u32 %v3861, 7
        %v3863 = vsub.s32 3, %v3862
        %v3864 = vrot.slane %v3831, %v3863
        %v3867 = vlaneseq
        %v3868 = vshrl.u32 %v3867, 7
        %v3869 = vsub.s32 1, %v3868
        %v3870 = vrot.slane %v3860, %v3869
        %v3871 = vlaneseq
        %v3872 = vshrl.u32 %v3871, 7
        %v3873 = vsub.s32 1, %v3872
        %v3874 = vrot.slane %v3864, %v3873
        %3875 = vset.pattern.permute.xlu0 24
        %3876 = vperm.xlu0 %3875, %v542
        %v3877 = vpop.permute.xlu0 %3876
        %v3879 = vmul.f32 %v3870, %v3877
        %v3880 = vmul.f32 %v3874, %v3877
        %v3881 = vadd.f32 %v3855, %v3879
        %v3882 = vadd.f32 %v3856, %v3880
        %3885 = vrot.lane.b32.xlu0 %v3881, 80
        %v3886 = vpop.permute.xlu0 %3885
        %3887 = vrot.lane.b32.xlu0 %v3882, 80
        %v3888 = vpop.permute.xlu0 %3887
        %v3889 = vsel %vm638, %v3886, %v3888
        %v3893 = vadd.f32 %v3828, %v3886
        %v3894 = vadd.f32 %v3829, %v3889
        %v3895 = vadd.f32 %v3830, %v3888
        %3896 = vset.pattern.permute.xlu0 31
        %3897 = vperm.xlu0 %3896, %v541
        %v3898 = vpop.permute.xlu0 %3897
        %v3900 = vmul.f32 %v3113, %v3898
        %v3901 = vmul.f32 %v3117, %v3898
        %v3902 = vmul.f32 %v3121, %v3898
        %3903 = vset.pattern.permute.xlu0 31
        %3904 = vperm.xlu0 %3903, %v542
        %v3905 = vpop.permute.xlu0 %3904
        %v3907 = vmul.f32 %v3147, %v3905
        %v3908 = vmul.f32 %v3151, %v3905
        %v3909 = vmul.f32 %v3155, %v3905
        %v3910 = vadd.f32 %v3900, %v3907
        %v3911 = vadd.f32 %v3901, %v3908
        %v3912 = vadd.f32 %v3902, %v3909
        %3916 = vrot.lane.b32.xlu0 %v3910, 64
        %v3917 = vpop.permute.xlu0 %3916
        %3918 = vrot.lane.b32.xlu0 %v3911, 64
        %v3919 = vpop.permute.xlu0 %3918
        %3920 = vrot.lane.b32.xlu0 %v3912, 64
        %v3921 = vpop.permute.xlu0 %3920
        %v3922 = vsel %vm665, %v3917, %v3919
        %v3923 = vsel %vm665, %v3919, %v3921
        %v3927 = vadd.f32 %v3893, %v3917
        %v3928 = vadd.f32 %v3894, %v3922
        %v3929 = vadd.f32 %v3895, %v3923
        %3930 = vset.pattern.permute.xlu0 38
        %3931 = vperm.xlu0 %3930, %v541
        %v3932 = vpop.permute.xlu0 %3931
        %v3934 = vmul.f32 %v3113, %v3932
        %v3935 = vmul.f32 %v3117, %v3932
        %v3936 = vmul.f32 %v3121, %v3932
        %3937 = vset.pattern.permute.xlu0 38
        %3938 = vperm.xlu0 %3937, %v542
        %v3939 = vpop.permute.xlu0 %3938
        %v3941 = vmul.f32 %v3147, %v3939
        %v3942 = vmul.f32 %v3151, %v3939
        %v3943 = vmul.f32 %v3155, %v3939
        %v3944 = vadd.f32 %v3934, %v3941
        %v3945 = vadd.f32 %v3935, %v3942
        %v3946 = vadd.f32 %v3936, %v3943
        %3950 = vrot.lane.b32.xlu0 %v3944, 48
        %v3951 = vpop.permute.xlu0 %3950
        %3952 = vrot.lane.b32.xlu0 %v3945, 48
        %v3953 = vpop.permute.xlu0 %3952
        %3954 = vrot.lane.b32.xlu0 %v3946, 48
        %v3955 = vpop.permute.xlu0 %3954
        %v3956 = vsel %vm3209, %v3951, %v3953
        %v3957 = vsel %vm3209, %v3953, %v3955
        %v3961 = vadd.f32 %v3927, %v3951
        %v3962 = vadd.f32 %v3928, %v3956
        %v3963 = vadd.f32 %v3929, %v3957
        %3964 = vset.pattern.permute.xlu0 45
        %3965 = vperm.xlu0 %3964, %v541
        %v3966 = vpop.permute.xlu0 %3965
        %v3968 = vmul.f32 %v3113, %v3966
        %v3969 = vmul.f32 %v3117, %v3966
        %v3970 = vmul.f32 %v3121, %v3966
        %3971 = vset.pattern.permute.xlu0 45
        %3972 = vperm.xlu0 %3971, %v542
        %v3973 = vpop.permute.xlu0 %3972
        %v3975 = vmul.f32 %v3147, %v3973
        %v3976 = vmul.f32 %v3151, %v3973
        %v3977 = vmul.f32 %v3155, %v3973
        %v3978 = vadd.f32 %v3968, %v3975
        %v3979 = vadd.f32 %v3969, %v3976
        %v3980 = vadd.f32 %v3970, %v3977
        %3984 = vrot.lane.b32.xlu0 %v3978, 32
        %v3985 = vpop.permute.xlu0 %3984
        %3986 = vrot.lane.b32.xlu0 %v3979, 32
        %v3987 = vpop.permute.xlu0 %3986
        %3988 = vrot.lane.b32.xlu0 %v3980, 32
        %v3989 = vpop.permute.xlu0 %3988
        %v3990 = vsel %vm964, %v3985, %v3987
        %v3991 = vsel %vm964, %v3987, %v3989
        %v3995 = vadd.f32 %v3961, %v3985
        %v3996 = vadd.f32 %v3962, %v3990
        %v3997 = vadd.f32 %v3963, %v3991
        %4001 = vrot.lane.b32.xlu0 %v3995, 48
        %v4002 = vpop.permute.xlu0 %4001
        %4003 = vrot.lane.b32.xlu0 %v3996, 48
        %v4004 = vpop.permute.xlu0 %4003
        %4005 = vrot.lane.b32.xlu0 %v3997, 48
        %v4006 = vpop.permute.xlu0 %4005
        %v4007 = vsel %vm3209, %v4002, %v4004
        %v4008 = vsel %vm3209, %v4004, %v4006
        %v4011 = vadd.f32 %v3744, %v4007
        %v4012 = vadd.f32 %v3745, %v4008
        %4013 = vset.pattern.permute.xlu0 4
        %4014 = vperm.xlu0 %4013, %v541
        %v4015 = vpop.permute.xlu0 %4014
        %v4017 = vmul.f32 %v2936, %v4015
        %v4018 = vmul.f32 %v2940, %v4015
        %v4019 = vmul.f32 %v2944, %v4015
        %4020 = vset.pattern.permute.xlu0 4
        %4021 = vperm.xlu0 %4020, %v542
        %v4022 = vpop.permute.xlu0 %4021
        %v4024 = vmul.f32 %v2971, %v4022
        %v4025 = vmul.f32 %v2975, %v4022
        %v4026 = vmul.f32 %v2979, %v4022
        %v4027 = vadd.f32 %v4017, %v4024
        %v4028 = vadd.f32 %v4018, %v4025
        %v4029 = vadd.f32 %v4019, %v4026
        %4030 = vset.pattern.permute.xlu0 11
        %4031 = vperm.xlu0 %4030, %v541
        %v4032 = vpop.permute.xlu0 %4031
        %v4034 = vmul.f32 %v2936, %v4032
        %v4035 = vmul.f32 %v2940, %v4032
        %v4036 = vmul.f32 %v2944, %v4032
        %4037 = vset.pattern.permute.xlu0 11
        %4038 = vperm.xlu0 %4037, %v542
        %v4039 = vpop.permute.xlu0 %4038
        %v4041 = vmul.f32 %v2971, %v4039
        %v4042 = vmul.f32 %v2975, %v4039
        %v4043 = vmul.f32 %v2979, %v4039
        %v4044 = vadd.f32 %v4034, %v4041
        %v4045 = vadd.f32 %v4035, %v4042
        %v4046 = vadd.f32 %v4036, %v4043
        %4050 = vrot.lane.b32.xlu0 %v4044, 112
        %v4051 = vpop.permute.xlu0 %4050
        %4052 = vrot.lane.b32.xlu0 %v4045, 112
        %v4053 = vpop.permute.xlu0 %4052
        %4054 = vrot.lane.b32.xlu0 %v4046, 112
        %v4055 = vpop.permute.xlu0 %4054
        %v4056 = vsel %vm582, %v4051, %v4053
        %v4057 = vsel %vm582, %v4053, %v4055
        %v4061 = vadd.f32 %v4027, %v4056
        %v4062 = vadd.f32 %v4028, %v4057
        %v4063 = vadd.f32 %v4029, %v4055
        %4064 = vset.pattern.permute.xlu0 18
        %4065 = vperm.xlu0 %4064, %v541
        %v4066 = vpop.permute.xlu0 %4065
        %v4068 = vmul.f32 %v2936, %v4066
        %v4069 = vmul.f32 %v2940, %v4066
        %v4070 = vmul.f32 %v2944, %v4066
        %4071 = vset.pattern.permute.xlu0 18
        %4072 = vperm.xlu0 %4071, %v542
        %v4073 = vpop.permute.xlu0 %4072
        %v4075 = vmul.f32 %v2971, %v4073
        %v4076 = vmul.f32 %v2975, %v4073
        %v4077 = vmul.f32 %v2979, %v4073
        %v4078 = vadd.f32 %v4068, %v4075
        %v4079 = vadd.f32 %v4069, %v4076
        %v4080 = vadd.f32 %v4070, %v4077
        %4084 = vrot.lane.b32.xlu0 %v4078, 96
        %v4085 = vpop.permute.xlu0 %4084
        %4086 = vrot.lane.b32.xlu0 %v4079, 96
        %v4087 = vpop.permute.xlu0 %4086
        %4088 = vrot.lane.b32.xlu0 %v4080, 96
        %v4089 = vpop.permute.xlu0 %4088
        %v4090 = vsel %vm610, %v4085, %v4087
        %v4091 = vsel %vm610, %v4087, %v4089
        %v4095 = vadd.f32 %v4061, %v4090
        %v4096 = vadd.f32 %v4062, %v4091
        %v4097 = vadd.f32 %v4063, %v4089
        %4098 = vset.pattern.permute.xlu0 25
        %4099 = vperm.xlu0 %4098, %v541
        %v4100 = vpop.permute.xlu0 %4099
        %v4102 = vmul.f32 %v3113, %v4100
        %v4103 = vmul.f32 %v3117, %v4100
        %v4104 = vmul.f32 %v3121, %v4100
        %4105 = vset.pattern.permute.xlu0 25
        %4106 = vperm.xlu0 %4105, %v542
        %v4107 = vpop.permute.xlu0 %4106
        %v4109 = vmul.f32 %v3147, %v4107
        %v4110 = vmul.f32 %v3151, %v4107
        %v4111 = vmul.f32 %v3155, %v4107
        %v4112 = vadd.f32 %v4102, %v4109
        %v4113 = vadd.f32 %v4103, %v4110
        %v4114 = vadd.f32 %v4104, %v4111
        %4118 = vrot.lane.b32.xlu0 %v4112, 80
        %v4119 = vpop.permute.xlu0 %4118
        %4120 = vrot.lane.b32.xlu0 %v4113, 80
        %v4121 = vpop.permute.xlu0 %4120
        %4122 = vrot.lane.b32.xlu0 %v4114, 80
        %v4123 = vpop.permute.xlu0 %4122
        %v4124 = vsel %vm638, %v4119, %v4121
        %v4125 = vsel %vm638, %v4121, %v4123
        %v4129 = vadd.f32 %v4095, %v4119
        %v4130 = vadd.f32 %v4096, %v4124
        %v4131 = vadd.f32 %v4097, %v4125
        %4132 = vset.pattern.permute.xlu0 32
        %4133 = vperm.xlu0 %4132, %v541
        %v4134 = vpop.permute.xlu0 %4133
        %v4136 = vmul.f32 %v3113, %v4134
        %v4137 = vmul.f32 %v3117, %v4134
        %v4138 = vmul.f32 %v3121, %v4134
        %4139 = vset.pattern.permute.xlu0 32
        %4140 = vperm.xlu0 %4139, %v542
        %v4141 = vpop.permute.xlu0 %4140
        %v4143 = vmul.f32 %v3147, %v4141
        %v4144 = vmul.f32 %v3151, %v4141
        %v4145 = vmul.f32 %v3155, %v4141
        %v4146 = vadd.f32 %v4136, %v4143
        %v4147 = vadd.f32 %v4137, %v4144
        %v4148 = vadd.f32 %v4138, %v4145
        %4152 = vrot.lane.b32.xlu0 %v4146, 64
        %v4153 = vpop.permute.xlu0 %4152
        %4154 = vrot.lane.b32.xlu0 %v4147, 64
        %v4155 = vpop.permute.xlu0 %4154
        %4156 = vrot.lane.b32.xlu0 %v4148, 64
        %v4157 = vpop.permute.xlu0 %4156
        %v4158 = vsel %vm665, %v4153, %v4155
        %v4159 = vsel %vm665, %v4155, %v4157
        %v4163 = vadd.f32 %v4129, %v4153
        %v4164 = vadd.f32 %v4130, %v4158
        %v4165 = vadd.f32 %v4131, %v4159
        %4166 = vset.pattern.permute.xlu0 39
        %4167 = vperm.xlu0 %4166, %v541
        %v4168 = vpop.permute.xlu0 %4167
        %v4170 = vmul.f32 %v3113, %v4168
        %v4171 = vmul.f32 %v3117, %v4168
        %v4172 = vmul.f32 %v3121, %v4168
        %4173 = vset.pattern.permute.xlu0 39
        %4174 = vperm.xlu0 %4173, %v542
        %v4175 = vpop.permute.xlu0 %4174
        %v4177 = vmul.f32 %v3147, %v4175
        %v4178 = vmul.f32 %v3151, %v4175
        %v4179 = vmul.f32 %v3155, %v4175
        %v4180 = vadd.f32 %v4170, %v4177
        %v4181 = vadd.f32 %v4171, %v4178
        %v4182 = vadd.f32 %v4172, %v4179
        %4186 = vrot.lane.b32.xlu0 %v4180, 48
        %v4187 = vpop.permute.xlu0 %4186
        %4188 = vrot.lane.b32.xlu0 %v4181, 48
        %v4189 = vpop.permute.xlu0 %4188
        %4190 = vrot.lane.b32.xlu0 %v4182, 48
        %v4191 = vpop.permute.xlu0 %4190
        %v4192 = vsel %vm3209, %v4187, %v4189
        %v4193 = vsel %vm3209, %v4189, %v4191
        %v4197 = vadd.f32 %v4163, %v4187
        %v4198 = vadd.f32 %v4164, %v4192
        %v4199 = vadd.f32 %v4165, %v4193
        %4200 = vset.pattern.permute.xlu0 46
        %4201 = vperm.xlu0 %4200, %v541
        %v4202 = vpop.permute.xlu0 %4201
        %v4204 = vmul.f32 %v3113, %v4202
        %v4205 = vmul.f32 %v3117, %v4202
        %v4206 = vmul.f32 %v3121, %v4202
        %4207 = vset.pattern.permute.xlu0 46
        %4208 = vperm.xlu0 %4207, %v542
        %v4209 = vpop.permute.xlu0 %4208
        %v4211 = vmul.f32 %v3147, %v4209
        %v4212 = vmul.f32 %v3151, %v4209
        %v4213 = vmul.f32 %v3155, %v4209
        %v4214 = vadd.f32 %v4204, %v4211
        %v4215 = vadd.f32 %v4205, %v4212
        %v4216 = vadd.f32 %v4206, %v4213
        %4220 = vrot.lane.b32.xlu0 %v4214, 32
        %v4221 = vpop.permute.xlu0 %4220
        %4222 = vrot.lane.b32.xlu0 %v4215, 32
        %v4223 = vpop.permute.xlu0 %4222
        %4224 = vrot.lane.b32.xlu0 %v4216, 32
        %v4225 = vpop.permute.xlu0 %4224
        %v4226 = vsel %vm964, %v4221, %v4223
        %v4227 = vsel %vm964, %v4223, %v4225
        %v4231 = vadd.f32 %v4197, %v4221
        %v4232 = vadd.f32 %v4198, %v4226
        %v4233 = vadd.f32 %v4199, %v4227
        %4237 = vrot.lane.b32.xlu0 %v4231, 47
        %v4238 = vpop.permute.xlu0 %4237
        %4239 = vrot.lane.b32.xlu0 %v4232, 47
        %v4240 = vpop.permute.xlu0 %4239
        %4241 = vrot.lane.b32.xlu0 %v4233, 47
        %v4242 = vpop.permute.xlu0 %4241
        %vm4243 = vcmask 384000
        %v4244 = vsel %vm4243, %v4238, %v4240
        %v4245 = vsel %vm4243, %v4240, %v4242
        %v4248 = vsel %vm1095, %v4244, 0.0
        %v4249 = vsel %vm1096, %v4245, 0.0
        %v4250 = vadd.f32 %v4011, %v4248
        %v4251 = vadd.f32 %v4012, %v4249
        %4252 = vset.pattern.permute.xlu0 5
        %4253 = vperm.xlu0 %4252, %v541
        %v4254 = vpop.permute.xlu0 %4253
        %v4256 = vmul.f32 %v2936, %v4254
        %v4257 = vmul.f32 %v2940, %v4254
        %v4258 = vmul.f32 %v2944, %v4254
        %4259 = vset.pattern.permute.xlu0 5
        %4260 = vperm.xlu0 %4259, %v542
        %v4261 = vpop.permute.xlu0 %4260
        %v4263 = vmul.f32 %v2971, %v4261
        %v4264 = vmul.f32 %v2975, %v4261
        %v4265 = vmul.f32 %v2979, %v4261
        %v4266 = vadd.f32 %v4256, %v4263
        %v4267 = vadd.f32 %v4257, %v4264
        %v4268 = vadd.f32 %v4258, %v4265
        %4269 = vset.pattern.permute.xlu0 12
        %4270 = vperm.xlu0 %4269, %v541
        %v4271 = vpop.permute.xlu0 %4270
        %v4273 = vmul.f32 %v2936, %v4271
        %v4274 = vmul.f32 %v2940, %v4271
        %v4275 = vmul.f32 %v2944, %v4271
        %4276 = vset.pattern.permute.xlu0 12
        %4277 = vperm.xlu0 %4276, %v542
        %v4278 = vpop.permute.xlu0 %4277
        %v4280 = vmul.f32 %v2971, %v4278
        %v4281 = vmul.f32 %v2975, %v4278
        %v4282 = vmul.f32 %v2979, %v4278
        %v4283 = vadd.f32 %v4273, %v4280
        %v4284 = vadd.f32 %v4274, %v4281
        %v4285 = vadd.f32 %v4275, %v4282
        %4289 = vrot.lane.b32.xlu0 %v4283, 112
        %v4290 = vpop.permute.xlu0 %4289
        %4291 = vrot.lane.b32.xlu0 %v4284, 112
        %v4292 = vpop.permute.xlu0 %4291
        %4293 = vrot.lane.b32.xlu0 %v4285, 112
        %v4294 = vpop.permute.xlu0 %4293
        %v4295 = vsel %vm582, %v4290, %v4292
        %v4296 = vsel %vm582, %v4292, %v4294
        %v4300 = vadd.f32 %v4266, %v4295
        %v4301 = vadd.f32 %v4267, %v4296
        %v4302 = vadd.f32 %v4268, %v4294
        %4303 = vset.pattern.permute.xlu0 19
        %4304 = vperm.xlu0 %4303, %v541
        %v4305 = vpop.permute.xlu0 %4304
        %v4307 = vmul.f32 %v2936, %v4305
        %v4308 = vmul.f32 %v2940, %v4305
        %v4309 = vmul.f32 %v2944, %v4305
        %4310 = vset.pattern.permute.xlu0 19
        %4311 = vperm.xlu0 %4310, %v542
        %v4312 = vpop.permute.xlu0 %4311
        %v4314 = vmul.f32 %v2971, %v4312
        %v4315 = vmul.f32 %v2975, %v4312
        %v4316 = vmul.f32 %v2979, %v4312
        %v4317 = vadd.f32 %v4307, %v4314
        %v4318 = vadd.f32 %v4308, %v4315
        %v4319 = vadd.f32 %v4309, %v4316
        %4323 = vrot.lane.b32.xlu0 %v4317, 96
        %v4324 = vpop.permute.xlu0 %4323
        %4325 = vrot.lane.b32.xlu0 %v4318, 96
        %v4326 = vpop.permute.xlu0 %4325
        %4327 = vrot.lane.b32.xlu0 %v4319, 96
        %v4328 = vpop.permute.xlu0 %4327
        %v4329 = vsel %vm610, %v4324, %v4326
        %v4330 = vsel %vm610, %v4326, %v4328
        %v4334 = vadd.f32 %v4300, %v4329
        %v4335 = vadd.f32 %v4301, %v4330
        %v4336 = vadd.f32 %v4302, %v4328
        %4337 = vset.pattern.permute.xlu0 26
        %4338 = vperm.xlu0 %4337, %v541
        %v4339 = vpop.permute.xlu0 %4338
        %v4341 = vmul.f32 %v3113, %v4339
        %v4342 = vmul.f32 %v3117, %v4339
        %v4343 = vmul.f32 %v3121, %v4339
        %4344 = vset.pattern.permute.xlu0 26
        %4345 = vperm.xlu0 %4344, %v542
        %v4346 = vpop.permute.xlu0 %4345
        %v4348 = vmul.f32 %v3147, %v4346
        %v4349 = vmul.f32 %v3151, %v4346
        %v4350 = vmul.f32 %v3155, %v4346
        %v4351 = vadd.f32 %v4341, %v4348
        %v4352 = vadd.f32 %v4342, %v4349
        %v4353 = vadd.f32 %v4343, %v4350
        %4357 = vrot.lane.b32.xlu0 %v4351, 80
        %v4358 = vpop.permute.xlu0 %4357
        %4359 = vrot.lane.b32.xlu0 %v4352, 80
        %v4360 = vpop.permute.xlu0 %4359
        %4361 = vrot.lane.b32.xlu0 %v4353, 80
        %v4362 = vpop.permute.xlu0 %4361
        %v4363 = vsel %vm638, %v4358, %v4360
        %v4364 = vsel %vm638, %v4360, %v4362
        %v4368 = vadd.f32 %v4334, %v4358
        %v4369 = vadd.f32 %v4335, %v4363
        %v4370 = vadd.f32 %v4336, %v4364
        %4371 = vset.pattern.permute.xlu0 33
        %4372 = vperm.xlu0 %4371, %v541
        %v4373 = vpop.permute.xlu0 %4372
        %v4375 = vmul.f32 %v3113, %v4373
        %v4376 = vmul.f32 %v3117, %v4373
        %v4377 = vmul.f32 %v3121, %v4373
        %4378 = vset.pattern.permute.xlu0 33
        %4379 = vperm.xlu0 %4378, %v542
        %v4380 = vpop.permute.xlu0 %4379
        %v4382 = vmul.f32 %v3147, %v4380
        %v4383 = vmul.f32 %v3151, %v4380
        %v4384 = vmul.f32 %v3155, %v4380
        %v4385 = vadd.f32 %v4375, %v4382
        %v4386 = vadd.f32 %v4376, %v4383
        %v4387 = vadd.f32 %v4377, %v4384
        %4391 = vrot.lane.b32.xlu0 %v4385, 64
        %v4392 = vpop.permute.xlu0 %4391
        %4393 = vrot.lane.b32.xlu0 %v4386, 64
        %v4394 = vpop.permute.xlu0 %4393
        %4395 = vrot.lane.b32.xlu0 %v4387, 64
        %v4396 = vpop.permute.xlu0 %4395
        %v4397 = vsel %vm665, %v4392, %v4394
        %v4398 = vsel %vm665, %v4394, %v4396
        %v4402 = vadd.f32 %v4368, %v4392
        %v4403 = vadd.f32 %v4369, %v4397
        %v4404 = vadd.f32 %v4370, %v4398
        %4405 = vset.pattern.permute.xlu0 40
        %4406 = vperm.xlu0 %4405, %v541
        %v4407 = vpop.permute.xlu0 %4406
        %v4409 = vmul.f32 %v3113, %v4407
        %v4410 = vmul.f32 %v3117, %v4407
        %v4411 = vmul.f32 %v3121, %v4407
        %4412 = vset.pattern.permute.xlu0 40
        %4413 = vperm.xlu0 %4412, %v542
        %v4414 = vpop.permute.xlu0 %4413
        %v4416 = vmul.f32 %v3147, %v4414
        %v4417 = vmul.f32 %v3151, %v4414
        %v4418 = vmul.f32 %v3155, %v4414
        %v4419 = vadd.f32 %v4409, %v4416
        %v4420 = vadd.f32 %v4410, %v4417
        %v4421 = vadd.f32 %v4411, %v4418
        %4425 = vrot.lane.b32.xlu0 %v4419, 48
        %v4426 = vpop.permute.xlu0 %4425
        %4427 = vrot.lane.b32.xlu0 %v4420, 48
        %v4428 = vpop.permute.xlu0 %4427
        %4429 = vrot.lane.b32.xlu0 %v4421, 48
        %v4430 = vpop.permute.xlu0 %4429
        %v4431 = vsel %vm3209, %v4426, %v4428
        %v4432 = vsel %vm3209, %v4428, %v4430
        %v4436 = vadd.f32 %v4402, %v4426
        %v4437 = vadd.f32 %v4403, %v4431
        %v4438 = vadd.f32 %v4404, %v4432
        %4439 = vset.pattern.permute.xlu0 47
        %4440 = vperm.xlu0 %4439, %v541
        %v4441 = vpop.permute.xlu0 %4440
        %v4443 = vmul.f32 %v3113, %v4441
        %v4444 = vmul.f32 %v3117, %v4441
        %v4445 = vmul.f32 %v3121, %v4441
        %4446 = vset.pattern.permute.xlu0 47
        %4447 = vperm.xlu0 %4446, %v542
        %v4448 = vpop.permute.xlu0 %4447
        %v4450 = vmul.f32 %v3147, %v4448
        %v4451 = vmul.f32 %v3151, %v4448
        %v4452 = vmul.f32 %v3155, %v4448
        %v4453 = vadd.f32 %v4443, %v4450
        %v4454 = vadd.f32 %v4444, %v4451
        %v4455 = vadd.f32 %v4445, %v4452
        %4459 = vrot.lane.b32.xlu0 %v4453, 32
        %v4460 = vpop.permute.xlu0 %4459
        %4461 = vrot.lane.b32.xlu0 %v4454, 32
        %v4462 = vpop.permute.xlu0 %4461
        %4463 = vrot.lane.b32.xlu0 %v4455, 32
        %v4464 = vpop.permute.xlu0 %4463
        %v4465 = vsel %vm964, %v4460, %v4462
        %v4466 = vsel %vm964, %v4462, %v4464
        %v4470 = vadd.f32 %v4436, %v4460
        %v4471 = vadd.f32 %v4437, %v4465
        %v4472 = vadd.f32 %v4438, %v4466
        %4476 = vrot.lane.b32.xlu0 %v4470, 46
        %v4477 = vpop.permute.xlu0 %4476
        %4478 = vrot.lane.b32.xlu0 %v4471, 46
        %v4479 = vpop.permute.xlu0 %4478
        %4480 = vrot.lane.b32.xlu0 %v4472, 46
        %v4481 = vpop.permute.xlu0 %4480
        %vm4482 = vcmask 375808
        %v4483 = vsel %vm4482, %v4477, %v4479
        %v4484 = vsel %vm4482, %v4479, %v4481
        %v4487 = vsel %vm1239, %v4483, 0.0
        %v4488 = vsel %vm1240, %v4484, 0.0
        %v4489 = vadd.f32 %v4250, %v4487
        %v4490 = vadd.f32 %v4251, %v4488
        %4491 = vset.pattern.permute.xlu0 6
        %4492 = vperm.xlu0 %4491, %v541
        %v4493 = vpop.permute.xlu0 %4492
        %v4495 = vmul.f32 %v2936, %v4493
        %v4496 = vmul.f32 %v2940, %v4493
        %v4497 = vmul.f32 %v2944, %v4493
        %4498 = vset.pattern.permute.xlu0 6
        %4499 = vperm.xlu0 %4498, %v542
        %v4500 = vpop.permute.xlu0 %4499
        %v4502 = vmul.f32 %v2971, %v4500
        %v4503 = vmul.f32 %v2975, %v4500
        %v4504 = vmul.f32 %v2979, %v4500
        %v4505 = vadd.f32 %v4495, %v4502
        %v4506 = vadd.f32 %v4496, %v4503
        %v4507 = vadd.f32 %v4497, %v4504
        %4508 = vset.pattern.permute.xlu0 13
        %4509 = vperm.xlu0 %4508, %v541
        %v4510 = vpop.permute.xlu0 %4509
        %v4512 = vmul.f32 %v2936, %v4510
        %v4513 = vmul.f32 %v2940, %v4510
        %v4514 = vmul.f32 %v2944, %v4510
        %4515 = vset.pattern.permute.xlu0 13
        %4516 = vperm.xlu0 %4515, %v542
        %v4517 = vpop.permute.xlu0 %4516
        %v4519 = vmul.f32 %v2971, %v4517
        %v4520 = vmul.f32 %v2975, %v4517
        %v4521 = vmul.f32 %v2979, %v4517
        %v4522 = vadd.f32 %v4512, %v4519
        %v4523 = vadd.f32 %v4513, %v4520
        %v4524 = vadd.f32 %v4514, %v4521
        %4528 = vrot.lane.b32.xlu0 %v4522, 112
        %v4529 = vpop.permute.xlu0 %4528
        %4530 = vrot.lane.b32.xlu0 %v4523, 112
        %v4531 = vpop.permute.xlu0 %4530
        %4532 = vrot.lane.b32.xlu0 %v4524, 112
        %v4533 = vpop.permute.xlu0 %4532
        %v4534 = vsel %vm582, %v4529, %v4531
        %v4535 = vsel %vm582, %v4531, %v4533
        %v4539 = vadd.f32 %v4505, %v4534
        %v4540 = vadd.f32 %v4506, %v4535
        %v4541 = vadd.f32 %v4507, %v4533
        %4542 = vset.pattern.permute.xlu0 20
        %4543 = vperm.xlu0 %4542, %v541
        %v4544 = vpop.permute.xlu0 %4543
        %v4546 = vmul.f32 %v2936, %v4544
        %v4547 = vmul.f32 %v2940, %v4544
        %v4548 = vmul.f32 %v2944, %v4544
        %4549 = vset.pattern.permute.xlu0 20
        %4550 = vperm.xlu0 %4549, %v542
        %v4551 = vpop.permute.xlu0 %4550
        %v4553 = vmul.f32 %v2971, %v4551
        %v4554 = vmul.f32 %v2975, %v4551
        %v4555 = vmul.f32 %v2979, %v4551
        %v4556 = vadd.f32 %v4546, %v4553
        %v4557 = vadd.f32 %v4547, %v4554
        %v4558 = vadd.f32 %v4548, %v4555
        %4562 = vrot.lane.b32.xlu0 %v4556, 96
        %v4563 = vpop.permute.xlu0 %4562
        %4564 = vrot.lane.b32.xlu0 %v4557, 96
        %v4565 = vpop.permute.xlu0 %4564
        %4566 = vrot.lane.b32.xlu0 %v4558, 96
        %v4567 = vpop.permute.xlu0 %4566
        %v4568 = vsel %vm610, %v4563, %v4565
        %v4569 = vsel %vm610, %v4565, %v4567
        %v4573 = vadd.f32 %v4539, %v4568
        %v4574 = vadd.f32 %v4540, %v4569
        %v4575 = vadd.f32 %v4541, %v4567
        %4576 = vset.pattern.permute.xlu0 27
        %4577 = vperm.xlu0 %4576, %v541
        %v4578 = vpop.permute.xlu0 %4577
        %v4580 = vmul.f32 %v3113, %v4578
        %v4581 = vmul.f32 %v3117, %v4578
        %v4582 = vmul.f32 %v3121, %v4578
        %4583 = vset.pattern.permute.xlu0 27
        %4584 = vperm.xlu0 %4583, %v542
        %v4585 = vpop.permute.xlu0 %4584
        %v4587 = vmul.f32 %v3147, %v4585
        %v4588 = vmul.f32 %v3151, %v4585
        %v4589 = vmul.f32 %v3155, %v4585
        %v4590 = vadd.f32 %v4580, %v4587
        %v4591 = vadd.f32 %v4581, %v4588
        %v4592 = vadd.f32 %v4582, %v4589
        %4596 = vrot.lane.b32.xlu0 %v4590, 80
        %v4597 = vpop.permute.xlu0 %4596
        %4598 = vrot.lane.b32.xlu0 %v4591, 80
        %v4599 = vpop.permute.xlu0 %4598
        %4600 = vrot.lane.b32.xlu0 %v4592, 80
        %v4601 = vpop.permute.xlu0 %4600
        %v4602 = vsel %vm638, %v4597, %v4599
        %v4603 = vsel %vm638, %v4599, %v4601
        %v4607 = vadd.f32 %v4573, %v4597
        %v4608 = vadd.f32 %v4574, %v4602
        %v4609 = vadd.f32 %v4575, %v4603
        %4610 = vset.pattern.permute.xlu0 34
        %4611 = vperm.xlu0 %4610, %v541
        %v4612 = vpop.permute.xlu0 %4611
        %v4614 = vmul.f32 %v3113, %v4612
        %v4615 = vmul.f32 %v3117, %v4612
        %v4616 = vmul.f32 %v3121, %v4612
        %4617 = vset.pattern.permute.xlu0 34
        %4618 = vperm.xlu0 %4617, %v542
        %v4619 = vpop.permute.xlu0 %4618
        %v4621 = vmul.f32 %v3147, %v4619
        %v4622 = vmul.f32 %v3151, %v4619
        %v4623 = vmul.f32 %v3155, %v4619
        %v4624 = vadd.f32 %v4614, %v4621
        %v4625 = vadd.f32 %v4615, %v4622
        %v4626 = vadd.f32 %v4616, %v4623
        %4630 = vrot.lane.b32.xlu0 %v4624, 64
        %v4631 = vpop.permute.xlu0 %4630
        %4632 = vrot.lane.b32.xlu0 %v4625, 64
        %v4633 = vpop.permute.xlu0 %4632
        %4634 = vrot.lane.b32.xlu0 %v4626, 64
        %v4635 = vpop.permute.xlu0 %4634
        %v4636 = vsel %vm665, %v4631, %v4633
        %v4637 = vsel %vm665, %v4633, %v4635
        %v4641 = vadd.f32 %v4607, %v4631
        %v4642 = vadd.f32 %v4608, %v4636
        %v4643 = vadd.f32 %v4609, %v4637
        %4644 = vset.pattern.permute.xlu0 41
        %4645 = vperm.xlu0 %4644, %v541
        %v4646 = vpop.permute.xlu0 %4645
        %v4648 = vmul.f32 %v3113, %v4646
        %v4649 = vmul.f32 %v3117, %v4646
        %v4650 = vmul.f32 %v3121, %v4646
        %4651 = vset.pattern.permute.xlu0 41
        %4652 = vperm.xlu0 %4651, %v542
        %v4653 = vpop.permute.xlu0 %4652
        %v4655 = vmul.f32 %v3147, %v4653
        %v4656 = vmul.f32 %v3151, %v4653
        %v4657 = vmul.f32 %v3155, %v4653
        %v4658 = vadd.f32 %v4648, %v4655
        %v4659 = vadd.f32 %v4649, %v4656
        %v4660 = vadd.f32 %v4650, %v4657
        %4664 = vrot.lane.b32.xlu0 %v4658, 48
        %v4665 = vpop.permute.xlu0 %4664
        %4666 = vrot.lane.b32.xlu0 %v4659, 48
        %v4667 = vpop.permute.xlu0 %4666
        %4668 = vrot.lane.b32.xlu0 %v4660, 48
        %v4669 = vpop.permute.xlu0 %4668
        %v4670 = vsel %vm3209, %v4665, %v4667
        %v4671 = vsel %vm3209, %v4667, %v4669
        %v4675 = vadd.f32 %v4641, %v4665
        %v4676 = vadd.f32 %v4642, %v4670
        %v4677 = vadd.f32 %v4643, %v4671
        %4678 = vset.pattern.permute.xlu0 48
        %4679 = vperm.xlu0 %4678, %v541
        %v4680 = vpop.permute.xlu0 %4679
        %v4682 = vmul.f32 %v3113, %v4680
        %v4683 = vmul.f32 %v3117, %v4680
        %v4684 = vmul.f32 %v3121, %v4680
        %4685 = vset.pattern.permute.xlu0 48
        %4686 = vperm.xlu0 %4685, %v542
        %v4687 = vpop.permute.xlu0 %4686
        %v4689 = vmul.f32 %v3147, %v4687
        %v4690 = vmul.f32 %v3151, %v4687
        %v4691 = vmul.f32 %v3155, %v4687
        %v4692 = vadd.f32 %v4682, %v4689
        %v4693 = vadd.f32 %v4683, %v4690
        %v4694 = vadd.f32 %v4684, %v4691
        %4698 = vrot.lane.b32.xlu0 %v4692, 32
        %v4699 = vpop.permute.xlu0 %4698
        %4700 = vrot.lane.b32.xlu0 %v4693, 32
        %v4701 = vpop.permute.xlu0 %4700
        %4702 = vrot.lane.b32.xlu0 %v4694, 32
        %v4703 = vpop.permute.xlu0 %4702
        %v4704 = vsel %vm964, %v4699, %v4701
        %v4705 = vsel %vm964, %v4701, %v4703
        %v4709 = vadd.f32 %v4675, %v4699
        %v4710 = vadd.f32 %v4676, %v4704
        %v4711 = vadd.f32 %v4677, %v4705
        %4715 = vrot.lane.b32.xlu0 %v4709, 45
        %v4716 = vpop.permute.xlu0 %4715
        %4717 = vrot.lane.b32.xlu0 %v4710, 45
        %v4718 = vpop.permute.xlu0 %4717
        %4719 = vrot.lane.b32.xlu0 %v4711, 45
        %v4720 = vpop.permute.xlu0 %4719
        %vm4721 = vcmask 367616
        %v4722 = vsel %vm4721, %v4716, %v4718
        %v4723 = vsel %vm4721, %v4718, %v4720
        %v4726 = vsel %vm2239, %v4722, 0.0
        %v4727 = vsel %vm2240, %v4723, 0.0
        %v4728 = vadd.f32 %v4489, %v4726
        %v4729 = vadd.f32 %v4490, %v4727
        %v4730 = vld [vmem:[%s11] sm:$0x3]
        %4732 = vset.pattern.permute.xlu0 0
        %4733 = vperm.xlu0 %4732, %v4730
        %v4734 = vpop.permute.xlu0 %4733
        %v4736 = vadd.f32 %v4728, %v4734
        %v4737 = vadd.f32 %v4729, %v4734
        %v4738 = vxor.u32 %v4736, 2147483648
        %v4739 = vxor.u32 %v4737, 2147483648
        %v4740 = vmul.f32 %v4738, 1.442695
        %v4741 = vpow.pop %v4740
        %v4742 = vmul.f32 %v4739, 1.442695
        %v4743 = vpow.pop %v4742
        %v4744 = vadd.f32 %v4741, 1.0
        %v4745 = vadd.f32 %v4743, 1.0
        %v4746 = vrcp.pop %v4744
        %v4747 = vmul.f32 1.0, %v4746
        %v4748 = vrcp.pop %v4745
        %v4749 = vmul.f32 1.0, %v4748
        %v4750 = vlaneseq
        %v4751 = vshrl.u32 %v4750, 7
        %v4752 = vsub.s32 0, %v4751
        %v4753 = vrot.slane %v4747, %v4752
        %v4754 = vlaneseq
        %v4755 = vshrl.u32 %v4754, 7
        %v4756 = vsub.s32 0, %v4755
        %v4757 = vrot.slane %v4749, %v4756
        %v4758 = vmul.f32 %v2747, %v4753
        %v4759 = vmul.f32 %v2749, %v4757
        %v4760 = vlaneseq
        %v4761 = vshrl.u32 %v4760, 7
        %v4762 = vsub.s32 1, %v4761
        %v4763 = vrot.slane %v4747, %v4762
        %v4764 = vlaneseq
        %v4765 = vshrl.u32 %v4764, 7
        %v4766 = vsub.s32 1, %v4765
        %v4767 = vrot.slane %v4749, %v4766
        %v4768 = vmul.f32 %v2834, %v4763
        %v4769 = vmul.f32 %v2836, %v4767
        %v4770 = vadd.f32 %v4758, %v4768
        %v4771 = vadd.f32 %v4759, %v4769
        %v4772 = vld [vmem:[%s12] sm:$0xf]
        %v4773 = vld [vmem:[%s13] sm:$0xf]
        %4775 = vset.pattern.permute.xlu0 0
        %4776 = vperm.xlu0 %4775, %v4773
        %v4777 = vpop.permute.xlu0 %4776
        %vm4779 = vcmask 15360
        %v4781 = vsel %vm4779, %v4772, 0
        %v4784 = vsel %vm2840, %v4770, 0
        %v4787 = vsel %vm2840, %v4771, 0
        %4789 = vmatprep.subr.mxu0 %v4787
        %4790 = vmatpush1.msra.mxu0 %v4784
        %4791 = vmatprep.subr.mxu0 0.0
        %4792 = vmatpush1.msra.mxu0 0.0
        %4793 = vmatprep.subr.mxu0 0.0
        %4794 = vmatpush1.msra.mxu0 0.0
        %4795 = vmatprep.subr.mxu0 0.0
        %4796 = vmatpush1.msra.mxu0 0.0
        %4797 = vmatprep.subr.mxu0 0.0
        %4798 = vmatpush1.msra.mxu0 0.0
        %4799 = vmatprep.subr.mxu0 0.0
        %4800 = vmatpush1.msra.mxu0 0.0
        %4801 = vmatprep.subr.mxu0 0.0
        %4802 = vmatpush1.msra.mxu0 0.0
        %4803 = vmatprep.subr.mxu0 0.0
        %4804 = vmatpush1.msra.mxu0 0.0
        %4805 = vmatprep.subr.mxu0 0.0
        %4806 = vmatpush1.msra.mxu0 0.0
        %4807 = vmatprep.subr.mxu0 0.0
        %4808 = vmatpush1.msra.mxu0 0.0
        %4809 = vmatprep.subr.mxu0 0.0
        %4810 = vmatpush1.msra.mxu0 0.0
        %4811 = vmatprep.subr.mxu0 0.0
        %4812 = vmatpush1.msra.mxu0 0.0
        %4813 = vmatprep.subr.mxu0 0.0
        %4814 = vmatpush1.msra.mxu0 0.0
        %4815 = vmatprep.subr.mxu0 0.0
        %4816 = vmatpush1.msra.mxu0 0.0
        %4817 = vmatprep.subr.mxu0 0.0
        %4818 = vmatpush1.msra.mxu0 0.0
        %4819 = vmatprep.subr.mxu0 0.0
        %4820 = vmatpush1.msra.mxu0 0.0
        %4821 = vmatprep.subr.mxu0 0.0
        %4822 = vmatpush1.msra.mxu0 0.0
        %4823 = vmatprep.subr.mxu0 0.0
        %4824 = vmatpush1.msra.mxu0 0.0
        %4825 = vmatprep.subr.mxu0 0.0
        %4826 = vmatpush1.msra.mxu0 0.0
        %4827 = vmatprep.subr.mxu0 0.0
        %4828 = vmatpush1.msra.mxu0 0.0
        %4829 = vmatprep.subr.mxu0 0.0
        %4830 = vmatpush1.msra.mxu0 0.0
        %4831 = vmatprep.subr.mxu0 0.0
        %4832 = vmatpush1.msra.mxu0 0.0
        %4833 = vmatprep.subr.mxu0 0.0
        %4834 = vmatpush1.msra.mxu0 0.0
        %4835 = vmatprep.subr.mxu0 0.0
        %4836 = vmatpush1.msra.mxu0 0.0
        %4837 = vmatprep.subr.mxu0 0.0
        %4838 = vmatpush1.msra.mxu0 0.0
        %4839 = vmatprep.subr.mxu0 0.0
        %4840 = vmatpush1.msra.mxu0 0.0
        %4841 = vmatprep.subr.mxu0 0.0
        %4842 = vmatpush1.msra.mxu0 0.0
        %4843 = vmatprep.subr.mxu0 0.0
        %4844 = vmatpush1.msra.mxu0 0.0
        %4845 = vmatprep.subr.mxu0 0.0
        %4846 = vmatpush1.msra.mxu0 0.0
        %4847 = vmatprep.subr.mxu0 0.0
        %4848 = vmatpush1.msra.mxu0 0.0
        %4849 = vmatprep.subr.mxu0 0.0
        %4850 = vmatpush1.msra.mxu0 0.0
        %4851 = vmatprep.subr.mxu0 0.0
        %4852 = vmatpush1.msra.mxu0 0.0
        %4853 = vmatprep.mubr.f32.mxu0 0.0
        %4854 = vmatmul.mubr.f32.gmra.mrb[0].mxu0 %v4781
        %v4855 = vpop.f32.mrb[0].mxu0
        %v4856 = vadd.f32 %v4777, %v4855
        %v4857 = vpop.f32.mrb[0].mxu0
        %v4858 = vadd.f32 %v4777, %v4857
        %4859 = vdwg.mxu0
        %v4860 = vld [vmem:[%s465] sm:$0xff]
        %v4863 = vcombine.low %v4856, %v4858
        %v4865 = vmul.f32 %v4860, %v4863
        %4866 = vst [vmem:[%s460] sm:$0xff] %v4865
        %s4867 = sand.u32 %s335, 1
        %s4868 = scalar_lea.sflag [#allocation6], %s4867
        %s4869 = sand.u32 %s335, 1
        %s4870 = smul.addr %s4869, 8
        %s4871 = scalar_lea.vmem [#allocation5], %s4870
        // Predicated region
        $region77: #{tpu_custom_call.1} parent=75 // pred_check
          %p4872 = pneg %p345
        $region78: #{tpu_custom_call.1} parent=75 // pred_check_branch
          %4874 = sbr.rel (%p4872) target = $region80
        $region79: #{tpu_custom_call.1} parent=75 // pred_region
          %s4876 = ssub.s32 128, 128
          %4877 = vsyncadd %s4868, %s4876
          %s4878 = smul.addr %s28, 2
          %s4879 = smul.addr %s4878, 64
          %s4880 = scalar_lea.hbm %s14, %s4879
          %s4882 = sshll.u32 %s4871, 4
          %s4883 = int_to_ptr.vmem [resolvable:$true] %s4882
          %4885 = dma.vmem_to_hbm [thread:$0]  %s4883, 128, %s4880, %s4868
        $region80: #{tpu_custom_call.1} parent=75 // pred_fallthru
          _
      $region76: #{tpu_custom_call.1} parent=5 // pred_fallthru
        _
      %p4886 = scmp.le.s32.totalorder 2, %s23
      // Predicated region
      $region81: #{tpu_custom_call.1} parent=5 // pred_check
        %p4887 = pneg %p4886
      $region82: #{tpu_custom_call.1} parent=5 // pred_check_branch
        %4889 = sbr.rel (%p4887) target = $region84
      $region83: #{tpu_custom_call.1} parent=5 // pred_region
        %s4890 = ssub.s32 %s23, 2
        // Predicated region
        $region85: #{tpu_custom_call.1} parent=83 // pred_check
          %p4891 = pneg %p351
        $region86: #{tpu_custom_call.1} parent=83 // pred_check_branch
          %4893 = sbr.rel (%p4891) target = $region88
        $region87: #{tpu_custom_call.1} parent=83 // pred_region
          %s4894 = sand.u32 %s336, 1
          %s4895 = scalar_lea.sflag [#allocation6], %s4894
          %s4896 = sand.u32 %s336, 1
          %s4897 = smul.addr %s4896, 8
          %s4898 = scalar_lea.vmem [#allocation5], %s4897
          %4899 = dma.done %s4895, 128
        $region88: #{tpu_custom_call.1} parent=83 // pred_fallthru
          _
      $region84: #{tpu_custom_call.1} parent=5 // pred_fallthru
        _
    $region6: #{tpu_custom_call.1} parent=1 // loop_footer
      %s27 = sadd.s32 1, %s23
    $region7: #{tpu_custom_call.1} parent=1 // loop_footer_branch
      %22 = sbr.rel target = $region3
    $region8: #{tpu_custom_call.1} parent=1 // loop_exit
      _
    %4900 = vsyncpa [#allocation6], 1
    %s4901 = scalar_lea.sflag [#allocation6], 1
    %4902 = vsyncpa %s4901, 1

</llo_original>
